<compile_context>
chip_gen: v5e
topology: v5e:2x2
jax: 0.10.0
libtpu: 0.0.40
codegen_flags: <defaults>
</compile_context>

<pallas_src>
import math

import numpy as np
import jax
import jax.numpy as jnp
from jax.experimental import pallas as pl
from jax.experimental.pallas import tpu as pltpu


# ----------------------------- activation container -------------------------

class Act:
    """Channel-major flattened activation: data is (C, N*H*W) float32."""
    __slots__ = ("data", "n", "h", "w")

    def __init__(self, data, n, h, w):
        self.data = data
        self.n = n
        self.h = h
        self.w = w


# --------------------------- tap / mask bookkeeping --------------------------

def _conv_taps(N, H, W, KH, KW, pad):
    """Tap bookkeeping for a stride-1 'same' conv on a (C, N*H*W) flattened map.

    Returns (maxoff, taps, masks):
      maxoff : lane padding applied on each side of the flattened axis,
      taps   : list of (kept_idx, flat_offset, need_mask, orig_tap_idx),
      masks  : float32 numpy (T_kept, N*H*W) validity masks (trace-time constants).
    Taps whose mask is identically zero are dropped.
    """
    maxoff = pad * W + pad
    hh = np.arange(H)[:, None]
    ww = np.arange(W)[None, :]
    taps, rows = [], []
    for di in range(KH):
        for dj in range(KW):
            oh, ow = di - pad, dj - pad
            valid = ((hh + oh >= 0) & (hh + oh < H) &
                     (ww + ow >= 0) & (ww + ow < W))
            if not bool(valid.any()):
                continue
            taps.append((len(taps), oh * W + ow, not bool(valid.all()),
                         di * KW + dj))
            rows.append(np.tile(valid.reshape(-1), N).astype(np.float32))
    masks = np.stack(rows, axis=0)
    return maxoff, taps, masks


# ------------------------------- Pallas kernels ------------------------------

_CALL_CACHE = {}


def _conv_call(Cin, O, M, maxoff, taps, use_mask, has_add, do_bn):
    """Cached pallas_call: fused dense conv (+optional addend, +optional BN+PReLU).

    acc[o, m] = sum_t  W[t, o, :] @ (mask_t * x[:, m + off_t])   (single block)
    Output (O, M) keeps M = N*H*W in the lane axis (lane-dense).
    """
    key = ("conv", Cin, O, M, maxoff,
           tuple((o, nm) for (_, o, nm, _) in taps), use_mask, has_add, do_bn)
    if key in _CALL_CACHE:
        return _CALL_CACHE[key]

    T = len(taps)
    Mp = M + 2 * maxoff

    def kernel(*refs):
        it = iter(refs)
        x_ref = next(it)
        w_ref = next(it)
        mask_ref = next(it) if use_mask else None
        add_ref = next(it) if has_add else None
        if do_bn:
            g_ref, b_ref, a_ref = next(it), next(it), next(it)
        o_ref = next(it)

        acc = jnp.zeros((O, M), jnp.float32)
        for (t, off, need_mask, _orig) in taps:
            start = maxoff + off
            xt = x_ref[:, start:start + M]
            if need_mask:
                xt = xt * mask_ref[t:t + 1, :]
            acc = acc + jnp.dot(w_ref[t], xt,
                                preferred_element_type=jnp.float32)
        if has_add:
            acc = acc + add_ref[...]
        if do_bn:
            inv_m = 1.0 / float(M)
            mean = jnp.sum(acc, axis=1, keepdims=True) * inv_m
            xc = acc - mean
            var = jnp.sum(xc * xc, axis=1, keepdims=True) * inv_m
            y = xc * jax.lax.rsqrt(var + 1e-5)
            y = y * g_ref[...] + b_ref[...]
            acc = jnp.where(y >= 0.0, y, a_ref[...] * y)
        o_ref[...] = acc

    in_specs = [pl.BlockSpec((Cin, Mp), lambda i: (0, 0)),
                pl.BlockSpec((T, O, Cin), lambda i: (0, 0, 0))]
    if use_mask:
        in_specs.append(pl.BlockSpec((T, M), lambda i: (0, 0)))
    if has_add:
        in_specs.append(pl.BlockSpec((O, M), lambda i: (0, 0)))
    if do_bn:
        in_specs += [pl.BlockSpec((O, 1), lambda i: (0, 0)) for _ in range(3)]

    call = pl.pallas_call(
        kernel,
        out_shape=jax.ShapeDtypeStruct((O, M), jnp.float32),
        grid=(1,),
        in_specs=in_specs,
        out_specs=pl.BlockSpec((O, M), lambda i: (0, 0)),
        compiler_params=pltpu.CompilerParams(
            dimension_semantics=("arbitrary",)),
    )
    _CALL_CACHE[key] = call
    return call


def _dw_call(C, M, maxoff, taps, use_mask):
    """Cached pallas_call: fused depthwise 3x3 (stride 1, pad 1) + BN + PReLU."""
    key = ("dw", C, M, maxoff,
           tuple((o, nm) for (_, o, nm, _) in taps), use_mask)
    if key in _CALL_CACHE:
        return _CALL_CACHE[key]

    T = len(taps)
    Mp = M + 2 * maxoff

    def kernel(*refs):
        it = iter(refs)
        x_ref = next(it)
        w_ref = next(it)
        mask_ref = next(it) if use_mask else None
        g_ref, b_ref, a_ref = next(it), next(it), next(it)
        o_ref = next(it)

        acc = jnp.zeros((C, M), jnp.float32)
        for (t, off, need_mask, _orig) in taps:
            start = maxoff + off
            xt = x_ref[:, start:start + M]
            if need_mask:
                xt = xt * mask_ref[t:t + 1, :]
            acc = acc + xt * w_ref[:, t:t + 1]
        inv_m = 1.0 / float(M)
        mean = jnp.sum(acc, axis=1, keepdims=True) * inv_m
        xc = acc - mean
        var = jnp.sum(xc * xc, axis=1, keepdims=True) * inv_m
        y = xc * jax.lax.rsqrt(var + 1e-5)
        y = y * g_ref[...] + b_ref[...]
        o_ref[...] = jnp.where(y >= 0.0, y, a_ref[...] * y)

    in_specs = [pl.BlockSpec((C, Mp), lambda i: (0, 0)),
                pl.BlockSpec((C, T), lambda i: (0, 0))]
    if use_mask:
        in_specs.append(pl.BlockSpec((T, M), lambda i: (0, 0)))
    in_specs += [pl.BlockSpec((C, 1), lambda i: (0, 0)) for _ in range(3)]

    call = pl.pallas_call(
        kernel,
        out_shape=jax.ShapeDtypeStruct((C, M), jnp.float32),
        grid=(1,),
        in_specs=in_specs,
        out_specs=pl.BlockSpec((C, M), lambda i: (0, 0)),
        compiler_params=pltpu.CompilerParams(
            dimension_semantics=("arbitrary",)),
    )
    _CALL_CACHE[key] = call
    return call


def _bn_call(C, M):
    """Cached pallas_call: standalone BN+PReLU (fallback path, rarely used)."""
    key = ("bn", C, M)
    if key in _CALL_CACHE:
        return _CALL_CACHE[key]

    def kernel(x_ref, g_ref, b_ref, a_ref, o_ref):
        acc = x_ref[...]
        inv_m = 1.0 / float(M)
        mean = jnp.sum(acc, axis=1, keepdims=True) * inv_m
        xc = acc - mean
        var = jnp.sum(xc * xc, axis=1, keepdims=True) * inv_m
        y = xc * jax.lax.rsqrt(var + 1e-5)
        y = y * g_ref[...] + b_ref[...]
        o_ref[...] = jnp.where(y >= 0.0, y, a_ref[...] * y)

    call = pl.pallas_call(
        kernel,
        out_shape=jax.ShapeDtypeStruct((C, M), jnp.float32),
        grid=(1,),
        in_specs=[pl.BlockSpec((C, M), lambda i: (0, 0))]
                 + [pl.BlockSpec((C, 1), lambda i: (0, 0)) for _ in range(3)],
        out_specs=pl.BlockSpec((C, M), lambda i: (0, 0)),
        compiler_params=pltpu.CompilerParams(
            dimension_semantics=("arbitrary",)),
    )
    _CALL_CACHE[key] = call
    return call


# ------------------------------ kernel wrappers ------------------------------

def conv_dense(x, w_oihw, pad, addend=None, bn=None):
    """Stride-1 'same' dense conv (groups=1, no bias) in (C, N*H*W) layout,
    optionally fused with an elementwise addend and BatchNorm+PReLU."""
    O, Cin, KH, KW = w_oihw.shape
    assert KH == 2 * pad + 1 and KW == 2 * pad + 1
    N, H, W = x.n, x.h, x.w
    M = N * H * W
    maxoff, taps, masks = _conv_taps(N, H, W, KH, KW, pad)
    xpad = x.data if maxoff == 0 else jnp.pad(x.data, ((0, 0), (maxoff, maxoff)))
    w_taps = jnp.transpose(w_oihw, (2, 3, 0, 1)).reshape(KH * KW, O, Cin)
    if len(taps) != KH * KW:
        w_taps = w_taps[np.asarray([t[3] for t in taps])]
    use_mask = any(t[2] for t in taps)
    has_add = addend is not None
    do_bn = bn is not None
    call = _conv_call(Cin, O, M, maxoff, taps, use_mask, has_add, do_bn)
    args = [xpad, w_taps]
    if use_mask:
        args.append(jnp.asarray(masks))
    if has_add:
        args.append(addend)
    if do_bn:
        args += [bn['gamma'], bn['beta'], bn['prelu']]
    return Act(call(*args), N, H, W)


def depthwise_bn_prelu(x, w_c9, bn):
    """Fused depthwise 3x3 (stride 1, pad 1, no bias) + BatchNorm + PReLU."""
    C = w_c9.shape[0]
    N, H, W = x.n, x.h, x.w
    M = N * H * W
    maxoff, taps, masks = _conv_taps(N, H, W, 3, 3, 1)
    xpad = jnp.pad(x.data, ((0, 0), (maxoff, maxoff)))
    w = w_c9 if len(taps) == 9 else w_c9[:, np.asarray([t[3] for t in taps])]
    use_mask = any(t[2] for t in taps)
    call = _dw_call(C, M, maxoff, taps, use_mask)
    args = [xpad, w]
    if use_mask:
        args.append(jnp.asarray(masks))
    args += [bn['gamma'], bn['beta'], bn['prelu']]
    return Act(call(*args), N, H, W)


def bn_prelu_only(x, bn):
    call = _bn_call(x.data.shape[0], x.n * x.h * x.w)
    return Act(call(x.data, bn['gamma'], bn['beta'], bn['prelu']), x.n, x.h, x.w)


# ------------------------------ layout glue ops -------------------------------

def avg_pool2(x):
    C = x.data.shape[0]
    N, H, W = x.n, x.h, x.w
    v = x.data.reshape(C, N, H // 2, 2, W // 2, 2)
    return Act(jnp.mean(v, axis=(3, 5)).reshape(C, -1), N, H // 2, W // 2)


def max_pool_k(x, k):
    if k == 1:
        return x
    C = x.data.shape[0]
    N, H, W = x.n, x.h, x.w
    v = x.data.reshape(C, N, H // k, k, W // k, k)
    return Act(jnp.max(v, axis=(3, 5)).reshape(C, -1), N, H // k, W // k)


def bilinear_upsample(x, scale):
    """F.interpolate(mode='bilinear', align_corners=False), integer scale factor."""
    C = x.data.shape[0]
    N, H, W = x.n, x.h, x.w
    Ho, Wo = H * scale, W * scale
    v = x.data.reshape(C, N, H, W)

    def idx_w(out_size, in_size):
        s = in_size / out_size
        src = np.maximum((np.arange(out_size) + 0.5) * s - 0.5, 0.0)
        i0 = np.minimum(np.floor(src).astype(np.int32), in_size - 1)
        i1 = np.minimum(i0 + 1, in_size - 1)
        w1 = (src - i0).astype(np.float32)
        return i0, i1, (1.0 - w1).astype(np.float32), w1

    hi0, hi1, hw0, hw1 = idx_w(Ho, H)
    wi0, wi1, ww0, ww1 = idx_w(Wo, W)
    vh = (jnp.take(v, jnp.asarray(hi0), axis=2) * hw0[None, None, :, None]
          + jnp.take(v, jnp.asarray(hi1), axis=2) * hw1[None, None, :, None])
    vo = (jnp.take(vh, jnp.asarray(wi0), axis=3) * ww0[None, None, None, :]
          + jnp.take(vh, jnp.asarray(wi1), axis=3) * ww1[None, None, None, :])
    return Act(vo.reshape(C, -1), N, Ho, Wo)


# --------------------------- parameter construction --------------------------

class KeyGen:
    def __init__(self, seed):
        self.key = jax.random.PRNGKey(seed)

    def next(self):
        self.key, sub = jax.random.split(self.key)
        return sub


def _bn_prelu_params(c):
    return {'gamma': jnp.ones((c, 1), jnp.float32),
            'beta': jnp.zeros((c, 1), jnp.float32),
            'prelu': jnp.full((c, 1), 0.25, jnp.float32)}


def init_octconv(kg, in_ch, out_ch, ksize, alpha_in, alpha_out, stride, padding):
    kh, kw = ksize
    fan_in = in_ch * kh * kw            # groups = 1
    bound = 1.0 / math.sqrt(fan_in)     # kaiming_uniform_(a=sqrt(5))
    weight = jax.random.uniform(kg.next(), (out_ch, in_ch, kh, kw),
                                jnp.float32, -bound, bound)
    bns = []
    for a in alpha_out:
        c = int(round(out_ch * a))
        bns.append(_bn_prelu_params(c) if c != 0 else None)
    cfg = dict(in_ch=in_ch, out_ch=out_ch, stride=stride, padding=padding,
               alpha_in=list(alpha_in), alpha_out=list(alpha_out))
    return {'weight': weight, 'bn': bns, 'cfg': cfg}


def init_dpconv(kg, in_ch, out_ch, alpha, padding=1):
    convs, bns = [], []
    for a in alpha:
        ci = int(round(in_ch * a))
        co = int(round(out_ch * a))
        if ci >= 1:
            bound = 1.0 / math.sqrt(1 * 3 * 3)   # depthwise: fan_in = 9
            w = jax.random.uniform(kg.next(), (co, 1, 3, 3), jnp.float32, -bound, bound)
            convs.append(w.reshape(co, 9))        # (C, 9) tap-major weights
            bns.append(_bn_prelu_params(co))
        else:
            convs.append(None)
            bns.append(None)
    return {'convs': convs, 'bn': bns}


def init_ocblock(kg, inlist, outlist, stride=1, first=False, decode=False):
    ninput = int(round(sum(inlist)))
    noutput = int(round(sum(outlist)))
    alpha_in = [c / ninput for c in inlist]
    alpha_out = [c / noutput for c in outlist]
    if first or stride == 2:
        ks, pad = (3, 3), 1
    else:
        ks, pad = (1, 1), 0
    blk = {'decode': decode,
           'conv1x1': init_octconv(kg, ninput, noutput, ks, alpha_in, alpha_out,
                                   stride, pad),
           'conv3x3_1': init_dpconv(kg, noutput, noutput, alpha_out, padding=1)}
    if not decode:
        blk['conv3x3_2'] = init_dpconv(kg, noutput, noutput, alpha_out, padding=1)
    return blk


def init_backbone(kg, layer_config, in_channel=3):
    stages = layer_config[-1]
    idx = 0
    bb = {'stages': stages, 'stage0': [], 'stage1': [], 'stage2': [],
          'stage3': [], 'stage4': []}
    bb['stage0'].append(init_ocblock(kg, [in_channel], layer_config[idx][1],
                                     stride=1, first=True)); idx += 1
    bb['stage1'].append(init_ocblock(kg, layer_config[idx][0], layer_config[idx][1])); idx += 1
    for _ in range(1, stages[0]):
        bb['stage1'].append(init_ocblock(kg, layer_config[idx][0], layer_config[idx][1])); idx += 1
    bb['stage2'].append(init_ocblock(kg, layer_config[idx][0], layer_config[idx][1], stride=2)); idx += 1
    for _ in range(1, stages[1]):
        bb['stage2'].append(init_ocblock(kg, layer_config[idx][0], layer_config[idx][1])); idx += 1
    bb['stage3'].append(init_ocblock(kg, layer_config[idx][0], layer_config[idx][1], stride=2)); idx += 1
    for _ in range(1, stages[2]):
        bb['stage3'].append(init_ocblock(kg, layer_config[idx][0], layer_config[idx][1])); idx += 1
    bb['stage4'].append(init_ocblock(kg, layer_config[idx][0], layer_config[idx][1], stride=2)); idx += 1
    for _ in range(1, stages[3]):
        bb['stage4'].append(init_ocblock(kg, layer_config[idx][0], layer_config[idx][1])); idx += 1
    return bb


# --------------------------------- forwards ----------------------------------

def octconv_forward(p, xset):
    """Fused OctaveConv + per-output-branch BatchNorm + PReLU.

    For every input branch, output branches that share the same conv input are
    computed with one merged matmul (contiguous output-channel range) and split
    afterwards.  The contribution whose resolution matches the output branch is
    fused with the BN+PReLU epilogue; everything else enters as a precomputed
    addend of the fused kernel.
    """
    # TODO(synk): Conv2dX100 (std_conv, single-branch alphas) is undefined in the
    # source and never exercised by this layer_config; only the OctaveConv path runs.
    cfg = p['cfg']
    weight = p['weight']
    in_ch, out_ch = cfg['in_ch'], cfg['out_ch']
    stride, pad = cfg['stride'], cfg['padding']
    alpha_in, alpha_out = cfg['alpha_in'], cfg['alpha_out']
    inb, outb = len(alpha_in), len(alpha_out)
    if not isinstance(xset, (list, tuple)):
        xset = [xset]

    acum = np.cumsum([0.0] + list(alpha_in))
    bcum = np.cumsum([0.0] + list(alpha_out))
    bx = [int(round(in_ch * acum[i])) for i in range(inb + 1)]
    by = [int(round(out_ch * bcum[j])) for j in range(outb + 1)]

    fused = [None] * outb                  # (input Act, weight slice) fused with BN
    addends = [[] for _ in range(outb)]    # precomputed Act addends per output branch

    for i in range(inb):
        if xset[i] is None or bx[i] == bx[i + 1]:
            continue
        x = avg_pool2(xset[i]) if stride == 2 else xset[i]
        wi = weight[:, bx[i]:bx[i + 1]]

        # output branches at lower resolution than input i (max-pool before conv)
        for j in range(i + 1, outb):
            if by[j] == by[j + 1]:
                continue
            xp = max_pool_k(x, 2 ** (j - i))
            wij = wi[by[j]:by[j + 1]]
            if fused[j] is None:
                fused[j] = (xp, wij)
            else:
                addends[j].append(conv_dense(xp, wij, pad))

        # output branches at same/higher resolution (conv at input resolution,
        # bilinear upsample afterwards for j < i) -- merged into one matmul.
        js = [j for j in range(i + 1) if by[j] != by[j + 1]]
        if not js:
            continue
        if js == [i]:
            wij = wi[by[i]:by[i + 1]]
            if fused[i] is None:
                fused[i] = (x, wij)
            else:
                addends[i].append(conv_dense(x, wij, pad))
        else:
            lo, hi = by[js[0]], by[js[-1] + 1]
            y_all = conv_dense(x, wi[lo:hi], pad)
            for j in js:
                yj = Act(y_all.data[by[j] - lo:by[j + 1] - lo],
                         y_all.n, y_all.h, y_all.w)
                if j < i:
                    yj = bilinear_upsample(yj, 2 ** (i - j))
                addends[j].append(yj)

    out = []
    for j in range(outb):
        add = None
        if addends[j]:
            add = addends[j][0].data
            for extra in addends[j][1:]:
                add = add + extra.data
        if fused[j] is not None:
            xj, wj = fused[j]
            out.append(conv_dense(xj, wj, pad, addend=add, bn=p['bn'][j]))
        elif add is not None:
            ref = addends[j][0]
            out.append(bn_prelu_only(Act(add, ref.n, ref.h, ref.w), p['bn'][j]))
        else:
            out.append(None)
    return out


def dpconv_forward(p, xs):
    if not isinstance(xs, (list, tuple)):
        xs = [xs]
    out = []
    for i in range(len(p['convs'])):
        if xs[i] is not None and p['convs'][i] is not None:
            out.append(depthwise_bn_prelu(xs[i], p['convs'][i], p['bn'][i]))
        else:
            out.append(None)
    return out


def ocblock_forward(blk, xset):
    out = octconv_forward(blk['conv1x1'], xset)
    out = dpconv_forward(blk['conv3x3_1'], out)
    if not blk['decode']:
        out = dpconv_forward(blk['conv3x3_2'], out)
    return out


def backbone_forward(params, x_nchw):
    n, c, h, w = x_nchw.shape
    x = Act(jnp.transpose(x_nchw, (1, 0, 2, 3)).reshape(c, n * h * w), n, h, w)
    stages = params['stages']
    x0 = ocblock_forward(params['stage0'][0], x)
    x1 = x0
    for i in range(stages[0]):
        x1 = ocblock_forward(params['stage1'][i], x1)
    x2 = x1
    for i in range(stages[1]):
        x2 = ocblock_forward(params['stage2'][i], x2)
    x3 = x2
    for i in range(stages[2]):
        x3 = ocblock_forward(params['stage3'][i], x3)
    # TODO(synk): non_local / key_feature / value_feature / un branch not implemented
    # (reference forward defaults them to None, so the branch is skipped).
    x4 = x3
    for i in range(stages[3]):
        x4 = ocblock_forward(params['stage4'][i], x4)

    def to_nchw(branches):
        res = []
        for b in branches:
            if b is None:
                res.append(None)
            else:
                res.append(jnp.transpose(
                    b.data.reshape(b.data.shape[0], b.n, b.h, b.w), (1, 0, 2, 3)))
        return res

    return tuple(to_nchw(s) for s in (x0, x1, x2, x3, x4))


# ---------------------------------- config -----------------------------------

LAYER_CONFIG = [
    [[3],    [4, 4]],    # stage0 (inlist is replaced by [in_channel] in __init__)
    [[4, 4], [4, 4]],    # stage1 block 0
    [[4, 4], [8, 8]],    # stage2 block 0 (stride 2)
    [[8, 8], [8, 8]],    # stage3 block 0 (stride 2)
    [[8, 8], [8, 8]],    # stage4 block 0 (stride 2)
    [1, 1, 1, 1],        # stages
]


if __name__ == "__main__":
    kg = KeyGen(42)
    params = init_backbone(kg, LAYER_CONFIG, in_channel=3)
    x = jax.random.normal(jax.random.PRNGKey(0), (2, 3, 16, 16), dtype=jnp.float32)

    fwd = jax.jit(lambda inp: backbone_forward(params, inp))
    outs = fwd(x)
    jax.block_until_ready(jax.tree_util.tree_leaves(outs))
    print("KERNEL_OK")
</pallas_src>

<mosaic_0001>
module attributes {stable_mosaic.version = 11 : i64} {
  func.func @kernel(%arg0: i32, %arg1: memref<4x146xf32, #tpu.memory_space<vmem>>, %arg2: memref<4x9xf32, #tpu.memory_space<vmem>>, %arg3: memref<9x128xf32, #tpu.memory_space<vmem>>, %arg4: memref<4x1xf32, #tpu.memory_space<vmem>>, %arg5: memref<4x1xf32, #tpu.memory_space<vmem>>, %arg6: memref<4x1xf32, #tpu.memory_space<vmem>>, %arg7: memref<4x128xf32, #tpu.memory_space<vmem>>) attributes {dimension_semantics = [#tpu.dimension_semantics<arbitrary>], iteration_bounds = array<i64: 1>, scalar_prefetch = 0 : i64, scratch_operands = 0 : i64, tpu.core_type = #tpu.core_type<tc>, window_params = [{pipeline_mode = #tpu.pipeline_mode<synchronous>, transform_indices = @transform_0, window_bounds = array<i64: 4, 146>}, {pipeline_mode = #tpu.pipeline_mode<synchronous>, transform_indices = @transform_1, window_bounds = array<i64: 4, 9>}, {pipeline_mode = #tpu.pipeline_mode<synchronous>, transform_indices = @transform_2, window_bounds = array<i64: 9, 128>}, {pipeline_mode = #tpu.pipeline_mode<synchronous>, transform_indices = @transform_3, window_bounds = array<i64: 4, 1>}, {pipeline_mode = #tpu.pipeline_mode<synchronous>, transform_indices = @transform_4, window_bounds = array<i64: 4, 1>}, {pipeline_mode = #tpu.pipeline_mode<synchronous>, transform_indices = @transform_5, window_bounds = array<i64: 4, 1>}, {pipeline_mode = #tpu.pipeline_mode<synchronous>, transform_indices = @transform_6, window_bounds = array<i64: 4, 128>}]} {
    %cst = arith.constant 0.000000e+00 : f32
    %0 = vector.broadcast %cst : f32 to vector<4x128xf32>
    %c0 = arith.constant 0 : index
    %c0_0 = arith.constant 0 : index
    %1 = vector.load %arg1[%c0, %c0_0] : memref<4x146xf32, #tpu.memory_space<vmem>>, vector<4x128xf32>
    %c0_1 = arith.constant 0 : index
    %c0_2 = arith.constant 0 : index
    %2 = vector.load %arg3[%c0_1, %c0_2] : memref<9x128xf32, #tpu.memory_space<vmem>>, vector<1x128xf32>
    %3 = vector.broadcast %2 : vector<1x128xf32> to vector<4x128xf32>
    %4 = arith.mulf %1, %3 : vector<4x128xf32>
    %c0_3 = arith.constant 0 : index
    %c0_4 = arith.constant 0 : index
    %5 = vector.load %arg2[%c0_3, %c0_4] : memref<4x9xf32, #tpu.memory_space<vmem>>, vector<4x1xf32>
    %6 = vector.broadcast %5 : vector<4x1xf32> to vector<4x128xf32>
    %7 = arith.mulf %4, %6 : vector<4x128xf32>
    %8 = arith.addf %0, %7 : vector<4x128xf32>
    %c0_5 = arith.constant 0 : index
    %c1 = arith.constant 1 : index
    %9 = vector.load %arg1[%c0_5, %c1] : memref<4x146xf32, #tpu.memory_space<vmem>>, vector<4x128xf32>
    %c1_6 = arith.constant 1 : index
    %c0_7 = arith.constant 0 : index
    %10 = vector.load %arg3[%c1_6, %c0_7] : memref<9x128xf32, #tpu.memory_space<vmem>>, vector<1x128xf32>
    %11 = vector.broadcast %10 : vector<1x128xf32> to vector<4x128xf32>
    %12 = arith.mulf %9, %11 : vector<4x128xf32>
    %c0_8 = arith.constant 0 : index
    %c1_9 = arith.constant 1 : index
    %13 = vector.load %arg2[%c0_8, %c1_9] : memref<4x9xf32, #tpu.memory_space<vmem>>, vector<4x1xf32>
    %14 = vector.broadcast %13 : vector<4x1xf32> to vector<4x128xf32>
    %15 = arith.mulf %12, %14 : vector<4x128xf32>
    %16 = arith.addf %8, %15 : vector<4x128xf32>
    %c0_10 = arith.constant 0 : index
    %c2 = arith.constant 2 : index
    %17 = vector.load %arg1[%c0_10, %c2] : memref<4x146xf32, #tpu.memory_space<vmem>>, vector<4x128xf32>
    %c2_11 = arith.constant 2 : index
    %c0_12 = arith.constant 0 : index
    %18 = vector.load %arg3[%c2_11, %c0_12] : memref<9x128xf32, #tpu.memory_space<vmem>>, vector<1x128xf32>
    %19 = vector.broadcast %18 : vector<1x128xf32> to vector<4x128xf32>
    %20 = arith.mulf %17, %19 : vector<4x128xf32>
    %c0_13 = arith.constant 0 : index
    %c2_14 = arith.constant 2 : index
    %21 = vector.load %arg2[%c0_13, %c2_14] : memref<4x9xf32, #tpu.memory_space<vmem>>, vector<4x1xf32>
    %22 = vector.broadcast %21 : vector<4x1xf32> to vector<4x128xf32>
    %23 = arith.mulf %20, %22 : vector<4x128xf32>
    %24 = arith.addf %16, %23 : vector<4x128xf32>
    %c0_15 = arith.constant 0 : index
    %c8 = arith.constant 8 : index
    %25 = vector.load %arg1[%c0_15, %c8] : memref<4x146xf32, #tpu.memory_space<vmem>>, vector<4x128xf32>
    %c3 = arith.constant 3 : index
    %c0_16 = arith.constant 0 : index
    %26 = vector.load %arg3[%c3, %c0_16] : memref<9x128xf32, #tpu.memory_space<vmem>>, vector<1x128xf32>
    %27 = vector.broadcast %26 : vector<1x128xf32> to vector<4x128xf32>
    %28 = arith.mulf %25, %27 : vector<4x128xf32>
    %c0_17 = arith.constant 0 : index
    %c3_18 = arith.constant 3 : index
    %29 = vector.load %arg2[%c0_17, %c3_18] : memref<4x9xf32, #tpu.memory_space<vmem>>, vector<4x1xf32>
    %30 = vector.broadcast %29 : vector<4x1xf32> to vector<4x128xf32>
    %31 = arith.mulf %28, %30 : vector<4x128xf32>
    %32 = arith.addf %24, %31 : vector<4x128xf32>
    %c0_19 = arith.constant 0 : index
    %c9 = arith.constant 9 : index
    %33 = vector.load %arg1[%c0_19, %c9] : memref<4x146xf32, #tpu.memory_space<vmem>>, vector<4x128xf32>
    %c0_20 = arith.constant 0 : index
    %c4 = arith.constant 4 : index
    %34 = vector.load %arg2[%c0_20, %c4] : memref<4x9xf32, #tpu.memory_space<vmem>>, vector<4x1xf32>
    %35 = vector.broadcast %34 : vector<4x1xf32> to vector<4x128xf32>
    %36 = arith.mulf %33, %35 : vector<4x128xf32>
    %37 = arith.addf %32, %36 : vector<4x128xf32>
    %c0_21 = arith.constant 0 : index
    %c10 = arith.constant 10 : index
    %38 = vector.load %arg1[%c0_21, %c10] : memref<4x146xf32, #tpu.memory_space<vmem>>, vector<4x128xf32>
    %c5 = arith.constant 5 : index
    %c0_22 = arith.constant 0 : index
    %39 = vector.load %arg3[%c5, %c0_22] : memref<9x128xf32, #tpu.memory_space<vmem>>, vector<1x128xf32>
    %40 = vector.broadcast %39 : vector<1x128xf32> to vector<4x128xf32>
    %41 = arith.mulf %38, %40 : vector<4x128xf32>
    %c0_23 = arith.constant 0 : index
    %c5_24 = arith.constant 5 : index
    %42 = vector.load %arg2[%c0_23, %c5_24] : memref<4x9xf32, #tpu.memory_space<vmem>>, vector<4x1xf32>
    %43 = vector.broadcast %42 : vector<4x1xf32> to vector<4x128xf32>
    %44 = arith.mulf %41, %43 : vector<4x128xf32>
    %45 = arith.addf %37, %44 : vector<4x128xf32>
    %c0_25 = arith.constant 0 : index
    %c16 = arith.constant 16 : index
    %46 = vector.load %arg1[%c0_25, %c16] : memref<4x146xf32, #tpu.memory_space<vmem>>, vector<4x128xf32>
    %c6 = arith.constant 6 : index
    %c0_26 = arith.constant 0 : index
    %47 = vector.load %arg3[%c6, %c0_26] : memref<9x128xf32, #tpu.memory_space<vmem>>, vector<1x128xf32>
    %48 = vector.broadcast %47 : vector<1x128xf32> to vector<4x128xf32>
    %49 = arith.mulf %46, %48 : vector<4x128xf32>
    %c0_27 = arith.constant 0 : index
    %c6_28 = arith.constant 6 : index
    %50 = vector.load %arg2[%c0_27, %c6_28] : memref<4x9xf32, #tpu.memory_space<vmem>>, vector<4x1xf32>
    %51 = vector.broadcast %50 : vector<4x1xf32> to vector<4x128xf32>
    %52 = arith.mulf %49, %51 : vector<4x128xf32>
    %53 = arith.addf %45, %52 : vector<4x128xf32>
    %c0_29 = arith.constant 0 : index
    %c17 = arith.constant 17 : index
    %54 = vector.load %arg1[%c0_29, %c17] : memref<4x146xf32, #tpu.memory_space<vmem>>, vector<4x128xf32>
    %c7 = arith.constant 7 : index
    %c0_30 = arith.constant 0 : index
    %55 = vector.load %arg3[%c7, %c0_30] : memref<9x128xf32, #tpu.memory_space<vmem>>, vector<1x128xf32>
    %56 = vector.broadcast %55 : vector<1x128xf32> to vector<4x128xf32>
    %57 = arith.mulf %54, %56 : vector<4x128xf32>
    %c0_31 = arith.constant 0 : index
    %c7_32 = arith.constant 7 : index
    %58 = vector.load %arg2[%c0_31, %c7_32] : memref<4x9xf32, #tpu.memory_space<vmem>>, vector<4x1xf32>
    %59 = vector.broadcast %58 : vector<4x1xf32> to vector<4x128xf32>
    %60 = arith.mulf %57, %59 : vector<4x128xf32>
    %61 = arith.addf %53, %60 : vector<4x128xf32>
    %c0_33 = arith.constant 0 : index
    %c18 = arith.constant 18 : index
    %62 = vector.load %arg1[%c0_33, %c18] : memref<4x146xf32, #tpu.memory_space<vmem>>, vector<4x128xf32>
    %c8_34 = arith.constant 8 : index
    %c0_35 = arith.constant 0 : index
    %63 = vector.load %arg3[%c8_34, %c0_35] : memref<9x128xf32, #tpu.memory_space<vmem>>, vector<1x128xf32>
    %64 = vector.broadcast %63 : vector<1x128xf32> to vector<4x128xf32>
    %65 = arith.mulf %62, %64 : vector<4x128xf32>
    %c0_36 = arith.constant 0 : index
    %c8_37 = arith.constant 8 : index
    %66 = vector.load %arg2[%c0_36, %c8_37] : memref<4x9xf32, #tpu.memory_space<vmem>>, vector<4x1xf32>
    %67 = vector.broadcast %66 : vector<4x1xf32> to vector<4x128xf32>
    %68 = arith.mulf %65, %67 : vector<4x128xf32>
    %69 = arith.addf %61, %68 : vector<4x128xf32>
    %cst_38 = arith.constant dense<0.000000e+00> : vector<4xf32>
    %70 = vector.multi_reduction <add>, %69, %cst_38 [1] : vector<4x128xf32> to vector<4xf32>
    %71 = vector.shape_cast %70 : vector<4xf32> to vector<4x1xf32>
    %cst_39 = arith.constant 7.812500e-03 : f32
    %72 = vector.broadcast %cst_39 : f32 to vector<4x1xf32>
    %73 = arith.mulf %71, %72 : vector<4x1xf32>
    %74 = vector.broadcast %73 : vector<4x1xf32> to vector<4x128xf32>
    %75 = arith.subf %69, %74 : vector<4x128xf32>
    %76 = arith.mulf %75, %75 : vector<4x128xf32>
    %cst_40 = arith.constant dense<0.000000e+00> : vector<4xf32>
    %77 = vector.multi_reduction <add>, %76, %cst_40 [1] : vector<4x128xf32> to vector<4xf32>
    %78 = vector.shape_cast %77 : vector<4xf32> to vector<4x1xf32>
    %cst_41 = arith.constant 7.812500e-03 : f32
    %79 = vector.broadcast %cst_41 : f32 to vector<4x1xf32>
    %80 = arith.mulf %78, %79 : vector<4x1xf32>
    %cst_42 = arith.constant 9.99999974E-6 : f32
    %81 = vector.broadcast %cst_42 : f32 to vector<4x1xf32>
    %82 = arith.addf %80, %81 : vector<4x1xf32>
    %83 = math.rsqrt %82 : vector<4x1xf32>
    %84 = vector.broadcast %83 : vector<4x1xf32> to vector<4x128xf32>
    %85 = arith.mulf %75, %84 : vector<4x128xf32>
    %c0_43 = arith.constant 0 : index
    %c0_44 = arith.constant 0 : index
    %86 = vector.load %arg4[%c0_43, %c0_44] : memref<4x1xf32, #tpu.memory_space<vmem>>, vector<4x1xf32>
    %87 = vector.broadcast %86 : vector<4x1xf32> to vector<4x128xf32>
    %88 = arith.mulf %85, %87 : vector<4x128xf32>
    %c0_45 = arith.constant 0 : index
    %c0_46 = arith.constant 0 : index
    %89 = vector.load %arg5[%c0_45, %c0_46] : memref<4x1xf32, #tpu.memory_space<vmem>>, vector<4x1xf32>
    %90 = vector.broadcast %89 : vector<4x1xf32> to vector<4x128xf32>
    %91 = arith.addf %88, %90 : vector<4x128xf32>
    %cst_47 = arith.constant 0.000000e+00 : f32
    %92 = vector.broadcast %cst_47 : f32 to vector<4x128xf32>
    %93 = arith.cmpf oge, %91, %92 : vector<4x128xf32>
    %c0_48 = arith.constant 0 : index
    %c0_49 = arith.constant 0 : index
    %94 = vector.load %arg6[%c0_48, %c0_49] : memref<4x1xf32, #tpu.memory_space<vmem>>, vector<4x1xf32>
    %95 = vector.broadcast %94 : vector<4x1xf32> to vector<4x128xf32>
    %96 = arith.mulf %95, %91 : vector<4x128xf32>
    %97 = arith.select %93, %91, %96 : vector<4x128xi1>, vector<4x128xf32>
    %c0_50 = arith.constant 0 : index
    %c0_51 = arith.constant 0 : index
    %98 = vector.load %arg7[%c0_50, %c0_51] : memref<4x128xf32, #tpu.memory_space<vmem>>, vector<4x128xf32>
    tpu.vector_store %arg7[%c0_50, %c0_51], %97 {strides = array<i32>} : memref<4x128xf32, #tpu.memory_space<vmem>>, vector<4x128xf32>,
    return
  }
  func.func @transform_0(%arg0: i32) -> (i32, i32) {
    %c0_i32 = arith.constant 0 : i32
    %c0_i32_0 = arith.constant 0 : i32
    %c0_i32_1 = arith.constant 0 : i32
    return %c0_i32, %c0_i32_0 : i32, i32
  }
  func.func @transform_1(%arg0: i32) -> (i32, i32) {
    %c0_i32 = arith.constant 0 : i32
    %c0_i32_0 = arith.constant 0 : i32
    %c0_i32_1 = arith.constant 0 : i32
    return %c0_i32, %c0_i32_0 : i32, i32
  }
  func.func @transform_2(%arg0: i32) -> (i32, i32) {
    %c0_i32 = arith.constant 0 : i32
    %c0_i32_0 = arith.constant 0 : i32
    %c0_i32_1 = arith.constant 0 : i32
    return %c0_i32, %c0_i32_0 : i32, i32
  }
  func.func @transform_3(%arg0: i32) -> (i32, i32) {
    %c0_i32 = arith.constant 0 : i32
    %c0_i32_0 = arith.constant 0 : i32
    %c0_i32_1 = arith.constant 0 : i32
    return %c0_i32, %c0_i32_0 : i32, i32
  }
  func.func @transform_4(%arg0: i32) -> (i32, i32) {
    %c0_i32 = arith.constant 0 : i32
    %c0_i32_0 = arith.constant 0 : i32
    %c0_i32_1 = arith.constant 0 : i32
    return %c0_i32, %c0_i32_0 : i32, i32
  }
  func.func @transform_5(%arg0: i32) -> (i32, i32) {
    %c0_i32 = arith.constant 0 : i32
    %c0_i32_0 = arith.constant 0 : i32
    %c0_i32_1 = arith.constant 0 : i32
    return %c0_i32, %c0_i32_0 : i32, i32
  }
  func.func @transform_6(%arg0: i32) -> (i32, i32) {
    %c0_i32 = arith.constant 0 : i32
    %c0_i32_0 = arith.constant 0 : i32
    %c0_i32_1 = arith.constant 0 : i32
    return %c0_i32, %c0_i32_0 : i32, i32
  }
}

module attributes {stable_mosaic.version = 11 : i64} {
  func.func @kernel(%arg0: i32, %arg1: memref<3x146xf32, #tpu.memory_space<vmem>>, %arg2: memref<9x4x3xf32, #tpu.memory_space<vmem>>, %arg3: memref<9x128xf32, #tpu.memory_space<vmem>>, %arg4: memref<4x1xf32, #tpu.memory_space<vmem>>, %arg5: memref<4x1xf32, #tpu.memory_space<vmem>>, %arg6: memref<4x1xf32, #tpu.memory_space<vmem>>, %arg7: memref<4x128xf32, #tpu.memory_space<vmem>>) attributes {dimension_semantics = [#tpu.dimension_semantics<arbitrary>], iteration_bounds = array<i64: 1>, scalar_prefetch = 0 : i64, scratch_operands = 0 : i64, tpu.core_type = #tpu.core_type<tc>, window_params = [{pipeline_mode = #tpu.pipeline_mode<synchronous>, transform_indices = @transform_0, window_bounds = array<i64: 3, 146>}, {pipeline_mode = #tpu.pipeline_mode<synchronous>, transform_indices = @transform_1, window_bounds = array<i64: 9, 4, 3>}, {pipeline_mode = #tpu.pipeline_mode<synchronous>, transform_indices = @transform_2, window_bounds = array<i64: 9, 128>}, {pipeline_mode = #tpu.pipeline_mode<synchronous>, transform_indices = @transform_3, window_bounds = array<i64: 4, 1>}, {pipeline_mode = #tpu.pipeline_mode<synchronous>, transform_indices = @transform_4, window_bounds = array<i64: 4, 1>}, {pipeline_mode = #tpu.pipeline_mode<synchronous>, transform_indices = @transform_5, window_bounds = array<i64: 4, 1>}, {pipeline_mode = #tpu.pipeline_mode<synchronous>, transform_indices = @transform_6, window_bounds = array<i64: 4, 128>}]} {
    %cst = arith.constant 0.000000e+00 : f32
    %0 = vector.broadcast %cst : f32 to vector<4x128xf32>
    %c0 = arith.constant 0 : index
    %c0_0 = arith.constant 0 : index
    %1 = vector.load %arg1[%c0, %c0_0] : memref<3x146xf32, #tpu.memory_space<vmem>>, vector<3x128xf32>
    %c0_1 = arith.constant 0 : index
    %c0_2 = arith.constant 0 : index
    %2 = vector.load %arg3[%c0_1, %c0_2] : memref<9x128xf32, #tpu.memory_space<vmem>>, vector<1x128xf32>
    %3 = vector.broadcast %2 : vector<1x128xf32> to vector<3x128xf32>
    %4 = arith.mulf %1, %3 : vector<3x128xf32>
    %c0_3 = arith.constant 0 : index
    %c0_4 = arith.constant 0 : index
    %c0_5 = arith.constant 0 : index
    %5 = vector.load %arg2[%c0_3, %c0_4, %c0_5] : memref<9x4x3xf32, #tpu.memory_space<vmem>>, vector<1x4x3xf32>
    %6 = vector.shape_cast %5 : vector<1x4x3xf32> to vector<4x3xf32>
    %cst_6 = arith.constant dense<0.000000e+00> : vector<4x128xf32>
    %7 = tpu.matmul %6, %4, %cst_6 {dimension_numbers = #tpu.dot_dimension_numbers<[1], [0], [0], [1], [0, 0, 1, 1], [], []>} : vector<4x3xf32>, vector<3x128xf32>, vector<4x128xf32> -> vector<4x128xf32>
    %8 = arith.addf %0, %7 : vector<4x128xf32>
    %c0_7 = arith.constant 0 : index
    %c1 = arith.constant 1 : index
    %9 = vector.load %arg1[%c0_7, %c1] : memref<3x146xf32, #tpu.memory_space<vmem>>, vector<3x128xf32>
    %c1_8 = arith.constant 1 : index
    %c0_9 = arith.constant 0 : index
    %10 = vector.load %arg3[%c1_8, %c0_9] : memref<9x128xf32, #tpu.memory_space<vmem>>, vector<1x128xf32>
    %11 = vector.broadcast %10 : vector<1x128xf32> to vector<3x128xf32>
    %12 = arith.mulf %9, %11 : vector<3x128xf32>
    %c1_10 = arith.constant 1 : index
    %c0_11 = arith.constant 0 : index
    %c0_12 = arith.constant 0 : index
    %13 = vector.load %arg2[%c1_10, %c0_11, %c0_12] : memref<9x4x3xf32, #tpu.memory_space<vmem>>, vector<1x4x3xf32>
    %14 = vector.shape_cast %13 : vector<1x4x3xf32> to vector<4x3xf32>
    %cst_13 = arith.constant dense<0.000000e+00> : vector<4x128xf32>
    %15 = tpu.matmul %14, %12, %cst_13 {dimension_numbers = #tpu.dot_dimension_numbers<[1], [0], [0], [1], [0, 0, 1, 1], [], []>} : vector<4x3xf32>, vector<3x128xf32>, vector<4x128xf32> -> vector<4x128xf32>
    %16 = arith.addf %8, %15 : vector<4x128xf32>
    %c0_14 = arith.constant 0 : index
    %c2 = arith.constant 2 : index
    %17 = vector.load %arg1[%c0_14, %c2] : memref<3x146xf32, #tpu.memory_space<vmem>>, vector<3x128xf32>
    %c2_15 = arith.constant 2 : index
    %c0_16 = arith.constant 0 : index
    %18 = vector.load %arg3[%c2_15, %c0_16] : memref<9x128xf32, #tpu.memory_space<vmem>>, vector<1x128xf32>
    %19 = vector.broadcast %18 : vector<1x128xf32> to vector<3x128xf32>
    %20 = arith.mulf %17, %19 : vector<3x128xf32>
    %c2_17 = arith.constant 2 : index
    %c0_18 = arith.constant 0 : index
    %c0_19 = arith.constant 0 : index
    %21 = vector.load %arg2[%c2_17, %c0_18, %c0_19] : memref<9x4x3xf32, #tpu.memory_space<vmem>>, vector<1x4x3xf32>
    %22 = vector.shape_cast %21 : vector<1x4x3xf32> to vector<4x3xf32>
    %cst_20 = arith.constant dense<0.000000e+00> : vector<4x128xf32>
    %23 = tpu.matmul %22, %20, %cst_20 {dimension_numbers = #tpu.dot_dimension_numbers<[1], [0], [0], [1], [0, 0, 1, 1], [], []>} : vector<4x3xf32>, vector<3x128xf32>, vector<4x128xf32> -> vector<4x128xf32>
    %24 = arith.addf %16, %23 : vector<4x128xf32>
    %c0_21 = arith.constant 0 : index
    %c8 = arith.constant 8 : index
    %25 = vector.load %arg1[%c0_21, %c8] : memref<3x146xf32, #tpu.memory_space<vmem>>, vector<3x128xf32>
    %c3 = arith.constant 3 : index
    %c0_22 = arith.constant 0 : index
    %26 = vector.load %arg3[%c3, %c0_22] : memref<9x128xf32, #tpu.memory_space<vmem>>, vector<1x128xf32>
    %27 = vector.broadcast %26 : vector<1x128xf32> to vector<3x128xf32>
    %28 = arith.mulf %25, %27 : vector<3x128xf32>
    %c3_23 = arith.constant 3 : index
    %c0_24 = arith.constant 0 : index
    %c0_25 = arith.constant 0 : index
    %29 = vector.load %arg2[%c3_23, %c0_24, %c0_25] : memref<9x4x3xf32, #tpu.memory_space<vmem>>, vector<1x4x3xf32>
    %30 = vector.shape_cast %29 : vector<1x4x3xf32> to vector<4x3xf32>
    %cst_26 = arith.constant dense<0.000000e+00> : vector<4x128xf32>
    %31 = tpu.matmul %30, %28, %cst_26 {dimension_numbers = #tpu.dot_dimension_numbers<[1], [0], [0], [1], [0, 0, 1, 1], [], []>} : vector<4x3xf32>, vector<3x128xf32>, vector<4x128xf32> -> vector<4x128xf32>
    %32 = arith.addf %24, %31 : vector<4x128xf32>
    %c0_27 = arith.constant 0 : index
    %c9 = arith.constant 9 : index
    %33 = vector.load %arg1[%c0_27, %c9] : memref<3x146xf32, #tpu.memory_space<vmem>>, vector<3x128xf32>
    %c4 = arith.constant 4 : index
    %c0_28 = arith.constant 0 : index
    %c0_29 = arith.constant 0 : index
    %34 = vector.load %arg2[%c4, %c0_28, %c0_29] : memref<9x4x3xf32, #tpu.memory_space<vmem>>, vector<1x4x3xf32>
    %35 = vector.shape_cast %34 : vector<1x4x3xf32> to vector<4x3xf32>
    %cst_30 = arith.constant dense<0.000000e+00> : vector<4x128xf32>
    %36 = tpu.matmul %35, %33, %cst_30 {dimension_numbers = #tpu.dot_dimension_numbers<[1], [0], [0], [1], [0, 0, 1, 1], [], []>} : vector<4x3xf32>, vector<3x128xf32>, vector<4x128xf32> -> vector<4x128xf32>
    %37 = arith.addf %32, %36 : vector<4x128xf32>
    %c0_31 = arith.constant 0 : index
    %c10 = arith.constant 10 : index
    %38 = vector.load %arg1[%c0_31, %c10] : memref<3x146xf32, #tpu.memory_space<vmem>>, vector<3x128xf32>
    %c5 = arith.constant 5 : index
    %c0_32 = arith.constant 0 : index
    %39 = vector.load %arg3[%c5, %c0_32] : memref<9x128xf32, #tpu.memory_space<vmem>>, vector<1x128xf32>
    %40 = vector.broadcast %39 : vector<1x128xf32> to vector<3x128xf32>
    %41 = arith.mulf %38, %40 : vector<3x128xf32>
    %c5_33 = arith.constant 5 : index
    %c0_34 = arith.constant 0 : index
    %c0_35 = arith.constant 0 : index
    %42 = vector.load %arg2[%c5_33, %c0_34, %c0_35] : memref<9x4x3xf32, #tpu.memory_space<vmem>>, vector<1x4x3xf32>
    %43 = vector.shape_cast %42 : vector<1x4x3xf32> to vector<4x3xf32>
    %cst_36 = arith.constant dense<0.000000e+00> : vector<4x128xf32>
    %44 = tpu.matmul %43, %41, %cst_36 {dimension_numbers = #tpu.dot_dimension_numbers<[1], [0], [0], [1], [0, 0, 1, 1], [], []>} : vector<4x3xf32>, vector<3x128xf32>, vector<4x128xf32> -> vector<4x128xf32>
    %45 = arith.addf %37, %44 : vector<4x128xf32>
    %c0_37 = arith.constant 0 : index
    %c16 = arith.constant 16 : index
    %46 = vector.load %arg1[%c0_37, %c16] : memref<3x146xf32, #tpu.memory_space<vmem>>, vector<3x128xf32>
    %c6 = arith.constant 6 : index
    %c0_38 = arith.constant 0 : index
    %47 = vector.load %arg3[%c6, %c0_38] : memref<9x128xf32, #tpu.memory_space<vmem>>, vector<1x128xf32>
    %48 = vector.broadcast %47 : vector<1x128xf32> to vector<3x128xf32>
    %49 = arith.mulf %46, %48 : vector<3x128xf32>
    %c6_39 = arith.constant 6 : index
    %c0_40 = arith.constant 0 : index
    %c0_41 = arith.constant 0 : index
    %50 = vector.load %arg2[%c6_39, %c0_40, %c0_41] : memref<9x4x3xf32, #tpu.memory_space<vmem>>, vector<1x4x3xf32>
    %51 = vector.shape_cast %50 : vector<1x4x3xf32> to vector<4x3xf32>
    %cst_42 = arith.constant dense<0.000000e+00> : vector<4x128xf32>
    %52 = tpu.matmul %51, %49, %cst_42 {dimension_numbers = #tpu.dot_dimension_numbers<[1], [0], [0], [1], [0, 0, 1, 1], [], []>} : vector<4x3xf32>, vector<3x128xf32>, vector<4x128xf32> -> vector<4x128xf32>
    %53 = arith.addf %45, %52 : vector<4x128xf32>
    %c0_43 = arith.constant 0 : index
    %c17 = arith.constant 17 : index
    %54 = vector.load %arg1[%c0_43, %c17] : memref<3x146xf32, #tpu.memory_space<vmem>>, vector<3x128xf32>
    %c7 = arith.constant 7 : index
    %c0_44 = arith.constant 0 : index
    %55 = vector.load %arg3[%c7, %c0_44] : memref<9x128xf32, #tpu.memory_space<vmem>>, vector<1x128xf32>
    %56 = vector.broadcast %55 : vector<1x128xf32> to vector<3x128xf32>
    %57 = arith.mulf %54, %56 : vector<3x128xf32>
    %c7_45 = arith.constant 7 : index
    %c0_46 = arith.constant 0 : index
    %c0_47 = arith.constant 0 : index
    %58 = vector.load %arg2[%c7_45, %c0_46, %c0_47] : memref<9x4x3xf32, #tpu.memory_space<vmem>>, vector<1x4x3xf32>
    %59 = vector.shape_cast %58 : vector<1x4x3xf32> to vector<4x3xf32>
    %cst_48 = arith.constant dense<0.000000e+00> : vector<4x128xf32>
    %60 = tpu.matmul %59, %57, %cst_48 {dimension_numbers = #tpu.dot_dimension_numbers<[1], [0], [0], [1], [0, 0, 1, 1], [], []>} : vector<4x3xf32>, vector<3x128xf32>, vector<4x128xf32> -> vector<4x128xf32>
    %61 = arith.addf %53, %60 : vector<4x128xf32>
    %c0_49 = arith.constant 0 : index
    %c18 = arith.constant 18 : index
    %62 = vector.load %arg1[%c0_49, %c18] : memref<3x146xf32, #tpu.memory_space<vmem>>, vector<3x128xf32>
    %c8_50 = arith.constant 8 : index
    %c0_51 = arith.constant 0 : index
    %63 = vector.load %arg3[%c8_50, %c0_51] : memref<9x128xf32, #tpu.memory_space<vmem>>, vector<1x128xf32>
    %64 = vector.broadcast %63 : vector<1x128xf32> to vector<3x128xf32>
    %65 = arith.mulf %62, %64 : vector<3x128xf32>
    %c8_52 = arith.constant 8 : index
    %c0_53 = arith.constant 0 : index
    %c0_54 = arith.constant 0 : index
    %66 = vector.load %arg2[%c8_52, %c0_53, %c0_54] : memref<9x4x3xf32, #tpu.memory_space<vmem>>, vector<1x4x3xf32>
    %67 = vector.shape_cast %66 : vector<1x4x3xf32> to vector<4x3xf32>
    %cst_55 = arith.constant dense<0.000000e+00> : vector<4x128xf32>
    %68 = tpu.matmul %67, %65, %cst_55 {dimension_numbers = #tpu.dot_dimension_numbers<[1], [0], [0], [1], [0, 0, 1, 1], [], []>} : vector<4x3xf32>, vector<3x128xf32>, vector<4x128xf32> -> vector<4x128xf32>
    %69 = arith.addf %61, %68 : vector<4x128xf32>
    %cst_56 = arith.constant dense<0.000000e+00> : vector<4xf32>
    %70 = vector.multi_reduction <add>, %69, %cst_56 [1] : vector<4x128xf32> to vector<4xf32>
    %71 = vector.shape_cast %70 : vector<4xf32> to vector<4x1xf32>
    %cst_57 = arith.constant 7.812500e-03 : f32
    %72 = vector.broadcast %cst_57 : f32 to vector<4x1xf32>
    %73 = arith.mulf %71, %72 : vector<4x1xf32>
    %74 = vector.broadcast %73 : vector<4x1xf32> to vector<4x128xf32>
    %75 = arith.subf %69, %74 : vector<4x128xf32>
    %76 = arith.mulf %75, %75 : vector<4x128xf32>
    %cst_58 = arith.constant dense<0.000000e+00> : vector<4xf32>
    %77 = vector.multi_reduction <add>, %76, %cst_58 [1] : vector<4x128xf32> to vector<4xf32>
    %78 = vector.shape_cast %77 : vector<4xf32> to vector<4x1xf32>
    %cst_59 = arith.constant 7.812500e-03 : f32
    %79 = vector.broadcast %cst_59 : f32 to vector<4x1xf32>
    %80 = arith.mulf %78, %79 : vector<4x1xf32>
    %cst_60 = arith.constant 9.99999974E-6 : f32
    %81 = vector.broadcast %cst_60 : f32 to vector<4x1xf32>
    %82 = arith.addf %80, %81 : vector<4x1xf32>
    %83 = math.rsqrt %82 : vector<4x1xf32>
    %84 = vector.broadcast %83 : vector<4x1xf32> to vector<4x128xf32>
    %85 = arith.mulf %75, %84 : vector<4x128xf32>
    %c0_61 = arith.constant 0 : index
    %c0_62 = arith.constant 0 : index
    %86 = vector.load %arg4[%c0_61, %c0_62] : memref<4x1xf32, #tpu.memory_space<vmem>>, vector<4x1xf32>
    %87 = vector.broadcast %86 : vector<4x1xf32> to vector<4x128xf32>
    %88 = arith.mulf %85, %87 : vector<4x128xf32>
    %c0_63 = arith.constant 0 : index
    %c0_64 = arith.constant 0 : index
    %89 = vector.load %arg5[%c0_63, %c0_64] : memref<4x1xf32, #tpu.memory_space<vmem>>, vector<4x1xf32>
    %90 = vector.broadcast %89 : vector<4x1xf32> to vector<4x128xf32>
    %91 = arith.addf %88, %90 : vector<4x128xf32>
    %cst_65 = arith.constant 0.000000e+00 : f32
    %92 = vector.broadcast %cst_65 : f32 to vector<4x128xf32>
    %93 = arith.cmpf oge, %91, %92 : vector<4x128xf32>
    %c0_66 = arith.constant 0 : index
    %c0_67 = arith.constant 0 : index
    %94 = vector.load %arg6[%c0_66, %c0_67] : memref<4x1xf32, #tpu.memory_space<vmem>>, vector<4x1xf32>
    %95 = vector.broadcast %94 : vector<4x1xf32> to vector<4x128xf32>
    %96 = arith.mulf %95, %91 : vector<4x128xf32>
    %97 = arith.select %93, %91, %96 : vector<4x128xi1>, vector<4x128xf32>
    %c0_68 = arith.constant 0 : index
    %c0_69 = arith.constant 0 : index
    %98 = vector.load %arg7[%c0_68, %c0_69] : memref<4x128xf32, #tpu.memory_space<vmem>>, vector<4x128xf32>
    tpu.vector_store %arg7[%c0_68, %c0_69], %97 {strides = array<i32>} : memref<4x128xf32, #tpu.memory_space<vmem>>, vector<4x128xf32>,
    return
  }
  func.func @transform_0(%arg0: i32) -> (i32, i32) {
    %c0_i32 = arith.constant 0 : i32
    %c0_i32_0 = arith.constant 0 : i32
    %c0_i32_1 = arith.constant 0 : i32
    return %c0_i32, %c0_i32_0 : i32, i32
  }
  func.func @transform_1(%arg0: i32) -> (i32, i32, i32) {
    %c0_i32 = arith.constant 0 : i32
    %c0_i32_0 = arith.constant 0 : i32
    %c0_i32_1 = arith.constant 0 : i32
    %c0_i32_2 = arith.constant 0 : i32
    return %c0_i32, %c0_i32_0, %c0_i32_1 : i32, i32, i32
  }
  func.func @transform_2(%arg0: i32) -> (i32, i32) {
    %c0_i32 = arith.constant 0 : i32
    %c0_i32_0 = arith.constant 0 : i32
    %c0_i32_1 = arith.constant 0 : i32
    return %c0_i32, %c0_i32_0 : i32, i32
  }
  func.func @transform_3(%arg0: i32) -> (i32, i32) {
    %c0_i32 = arith.constant 0 : i32
    %c0_i32_0 = arith.constant 0 : i32
    %c0_i32_1 = arith.constant 0 : i32
    return %c0_i32, %c0_i32_0 : i32, i32
  }
  func.func @transform_4(%arg0: i32) -> (i32, i32) {
    %c0_i32 = arith.constant 0 : i32
    %c0_i32_0 = arith.constant 0 : i32
    %c0_i32_1 = arith.constant 0 : i32
    return %c0_i32, %c0_i32_0 : i32, i32
  }
  func.func @transform_5(%arg0: i32) -> (i32, i32) {
    %c0_i32 = arith.constant 0 : i32
    %c0_i32_0 = arith.constant 0 : i32
    %c0_i32_1 = arith.constant 0 : i32
    return %c0_i32, %c0_i32_0 : i32, i32
  }
  func.func @transform_6(%arg0: i32) -> (i32, i32) {
    %c0_i32 = arith.constant 0 : i32
    %c0_i32_0 = arith.constant 0 : i32
    %c0_i32_1 = arith.constant 0 : i32
    return %c0_i32, %c0_i32_0 : i32, i32
  }
}

module attributes {stable_mosaic.version = 11 : i64} {
  func.func @kernel(%arg0: i32, %arg1: memref<4x128xf32, #tpu.memory_space<vmem>>, %arg2: memref<1x8x4xf32, #tpu.memory_space<vmem>>, %arg3: memref<8x128xf32, #tpu.memory_space<vmem>>) attributes {dimension_semantics = [#tpu.dimension_semantics<arbitrary>], iteration_bounds = array<i64: 1>, scalar_prefetch = 0 : i64, scratch_operands = 0 : i64, tpu.core_type = #tpu.core_type<tc>, window_params = [{pipeline_mode = #tpu.pipeline_mode<synchronous>, transform_indices = @transform_0, window_bounds = array<i64: 4, 128>}, {pipeline_mode = #tpu.pipeline_mode<synchronous>, transform_indices = @transform_1, window_bounds = array<i64: 1, 8, 4>}, {pipeline_mode = #tpu.pipeline_mode<synchronous>, transform_indices = @transform_2, window_bounds = array<i64: 8, 128>}]} {
    %cst = arith.constant 0.000000e+00 : f32
    %0 = vector.broadcast %cst : f32 to vector<8x128xf32>
    %c0 = arith.constant 0 : index
    %c0_0 = arith.constant 0 : index
    %1 = vector.load %arg1[%c0, %c0_0] : memref<4x128xf32, #tpu.memory_space<vmem>>, vector<4x128xf32>
    %c0_1 = arith.constant 0 : index
    %c0_2 = arith.constant 0 : index
    %c0_3 = arith.constant 0 : index
    %2 = vector.load %arg2[%c0_1, %c0_2, %c0_3] : memref<1x8x4xf32, #tpu.memory_space<vmem>>, vector<1x8x4xf32>
    %3 = vector.shape_cast %2 : vector<1x8x4xf32> to vector<8x4xf32>
    %cst_4 = arith.constant dense<0.000000e+00> : vector<8x128xf32>
    %4 = tpu.matmul %3, %1, %cst_4 {dimension_numbers = #tpu.dot_dimension_numbers<[1], [0], [0], [1], [0, 0, 1, 1], [], []>} : vector<8x4xf32>, vector<4x128xf32>, vector<8x128xf32> -> vector<8x128xf32>
    %5 = arith.addf %0, %4 : vector<8x128xf32>
    %c0_5 = arith.constant 0 : index
    %c0_6 = arith.constant 0 : index
    %6 = vector.load %arg3[%c0_5, %c0_6] : memref<8x128xf32, #tpu.memory_space<vmem>>, vector<8x128xf32>
    tpu.vector_store %arg3[%c0_5, %c0_6], %5 {strides = array<i32>} : memref<8x128xf32, #tpu.memory_space<vmem>>, vector<8x128xf32>,
    return
  }
  func.func @transform_0(%arg0: i32) -> (i32, i32) {
    %c0_i32 = arith.constant 0 : i32
    %c0_i32_0 = arith.constant 0 : i32
    %c0_i32_1 = arith.constant 0 : i32
    return %c0_i32, %c0_i32_0 : i32, i32
  }
  func.func @transform_1(%arg0: i32) -> (i32, i32, i32) {
    %c0_i32 = arith.constant 0 : i32
    %c0_i32_0 = arith.constant 0 : i32
    %c0_i32_1 = arith.constant 0 : i32
    %c0_i32_2 = arith.constant 0 : i32
    return %c0_i32, %c0_i32_0, %c0_i32_1 : i32, i32, i32
  }
  func.func @transform_2(%arg0: i32) -> (i32, i32) {
    %c0_i32 = arith.constant 0 : i32
    %c0_i32_0 = arith.constant 0 : i32
    %c0_i32_1 = arith.constant 0 : i32
    return %c0_i32, %c0_i32_0 : i32, i32
  }
}

module attributes {stable_mosaic.version = 11 : i64} {
  func.func @kernel(%arg0: i32, %arg1: memref<3x546xf32, #tpu.memory_space<vmem>>, %arg2: memref<9x4x3xf32, #tpu.memory_space<vmem>>, %arg3: memref<9x512xf32, #tpu.memory_space<vmem>>, %arg4: memref<4x1xf32, #tpu.memory_space<vmem>>, %arg5: memref<4x1xf32, #tpu.memory_space<vmem>>, %arg6: memref<4x1xf32, #tpu.memory_space<vmem>>, %arg7: memref<4x512xf32, #tpu.memory_space<vmem>>) attributes {dimension_semantics = [#tpu.dimension_semantics<arbitrary>], iteration_bounds = array<i64: 1>, scalar_prefetch = 0 : i64, scratch_operands = 0 : i64, tpu.core_type = #tpu.core_type<tc>, window_params = [{pipeline_mode = #tpu.pipeline_mode<synchronous>, transform_indices = @transform_0, window_bounds = array<i64: 3, 546>}, {pipeline_mode = #tpu.pipeline_mode<synchronous>, transform_indices = @transform_1, window_bounds = array<i64: 9, 4, 3>}, {pipeline_mode = #tpu.pipeline_mode<synchronous>, transform_indices = @transform_2, window_bounds = array<i64: 9, 512>}, {pipeline_mode = #tpu.pipeline_mode<synchronous>, transform_indices = @transform_3, window_bounds = array<i64: 4, 1>}, {pipeline_mode = #tpu.pipeline_mode<synchronous>, transform_indices = @transform_4, window_bounds = array<i64: 4, 1>}, {pipeline_mode = #tpu.pipeline_mode<synchronous>, transform_indices = @transform_5, window_bounds = array<i64: 4, 1>}, {pipeline_mode = #tpu.pipeline_mode<synchronous>, transform_indices = @transform_6, window_bounds = array<i64: 4, 512>}]} {
    %cst = arith.constant 0.000000e+00 : f32
    %0 = vector.broadcast %cst : f32 to vector<4x512xf32>
    %c0 = arith.constant 0 : index
    %c0_0 = arith.constant 0 : index
    %1 = vector.load %arg1[%c0, %c0_0] : memref<3x546xf32, #tpu.memory_space<vmem>>, vector<3x512xf32>
    %c0_1 = arith.constant 0 : index
    %c0_2 = arith.constant 0 : index
    %2 = vector.load %arg3[%c0_1, %c0_2] : memref<9x512xf32, #tpu.memory_space<vmem>>, vector<1x512xf32>
    %3 = vector.broadcast %2 : vector<1x512xf32> to vector<3x512xf32>
    %4 = arith.mulf %1, %3 : vector<3x512xf32>
    %c0_3 = arith.constant 0 : index
    %c0_4 = arith.constant 0 : index
    %c0_5 = arith.constant 0 : index
    %5 = vector.load %arg2[%c0_3, %c0_4, %c0_5] : memref<9x4x3xf32, #tpu.memory_space<vmem>>, vector<1x4x3xf32>
    %6 = vector.shape_cast %5 : vector<1x4x3xf32> to vector<4x3xf32>
    %cst_6 = arith.constant dense<0.000000e+00> : vector<4x512xf32>
    %7 = tpu.matmul %6, %4, %cst_6 {dimension_numbers = #tpu.dot_dimension_numbers<[1], [0], [0], [1], [0, 0, 1, 1], [], []>} : vector<4x3xf32>, vector<3x512xf32>, vector<4x512xf32> -> vector<4x512xf32>
    %8 = arith.addf %0, %7 : vector<4x512xf32>
    %c0_7 = arith.constant 0 : index
    %c1 = arith.constant 1 : index
    %9 = vector.load %arg1[%c0_7, %c1] : memref<3x546xf32, #tpu.memory_space<vmem>>, vector<3x512xf32>
    %c1_8 = arith.constant 1 : index
    %c0_9 = arith.constant 0 : index
    %10 = vector.load %arg3[%c1_8, %c0_9] : memref<9x512xf32, #tpu.memory_space<vmem>>, vector<1x512xf32>
    %11 = vector.broadcast %10 : vector<1x512xf32> to vector<3x512xf32>
    %12 = arith.mulf %9, %11 : vector<3x512xf32>
    %c1_10 = arith.constant 1 : index
    %c0_11 = arith.constant 0 : index
    %c0_12 = arith.constant 0 : index
    %13 = vector.load %arg2[%c1_10, %c0_11, %c0_12] : memref<9x4x3xf32, #tpu.memory_space<vmem>>, vector<1x4x3xf32>
    %14 = vector.shape_cast %13 : vector<1x4x3xf32> to vector<4x3xf32>
    %cst_13 = arith.constant dense<0.000000e+00> : vector<4x512xf32>
    %15 = tpu.matmul %14, %12, %cst_13 {dimension_numbers = #tpu.dot_dimension_numbers<[1], [0], [0], [1], [0, 0, 1, 1], [], []>} : vector<4x3xf32>, vector<3x512xf32>, vector<4x512xf32> -> vector<4x512xf32>
    %16 = arith.addf %8, %15 : vector<4x512xf32>
    %c0_14 = arith.constant 0 : index
    %c2 = arith.constant 2 : index
    %17 = vector.load %arg1[%c0_14, %c2] : memref<3x546xf32, #tpu.memory_space<vmem>>, vector<3x512xf32>
    %c2_15 = arith.constant 2 : index
    %c0_16 = arith.constant 0 : index
    %18 = vector.load %arg3[%c2_15, %c0_16] : memref<9x512xf32, #tpu.memory_space<vmem>>, vector<1x512xf32>
    %19 = vector.broadcast %18 : vector<1x512xf32> to vector<3x512xf32>
    %20 = arith.mulf %17, %19 : vector<3x512xf32>
    %c2_17 = arith.constant 2 : index
    %c0_18 = arith.constant 0 : index
    %c0_19 = arith.constant 0 : index
    %21 = vector.load %arg2[%c2_17, %c0_18, %c0_19] : memref<9x4x3xf32, #tpu.memory_space<vmem>>, vector<1x4x3xf32>
    %22 = vector.shape_cast %21 : vector<1x4x3xf32> to vector<4x3xf32>
    %cst_20 = arith.constant dense<0.000000e+00> : vector<4x512xf32>
    %23 = tpu.matmul %22, %20, %cst_20 {dimension_numbers = #tpu.dot_dimension_numbers<[1], [0], [0], [1], [0, 0, 1, 1], [], []>} : vector<4x3xf32>, vector<3x512xf32>, vector<4x512xf32> -> vector<4x512xf32>
    %24 = arith.addf %16, %23 : vector<4x512xf32>
    %c0_21 = arith.constant 0 : index
    %c16 = arith.constant 16 : index
    %25 = vector.load %arg1[%c0_21, %c16] : memref<3x546xf32, #tpu.memory_space<vmem>>, vector<3x512xf32>
    %c3 = arith.constant 3 : index
    %c0_22 = arith.constant 0 : index
    %26 = vector.load %arg3[%c3, %c0_22] : memref<9x512xf32, #tpu.memory_space<vmem>>, vector<1x512xf32>
    %27 = vector.broadcast %26 : vector<1x512xf32> to vector<3x512xf32>
    %28 = arith.mulf %25, %27 : vector<3x512xf32>
    %c3_23 = arith.constant 3 : index
    %c0_24 = arith.constant 0 : index
    %c0_25 = arith.constant 0 : index
    %29 = vector.load %arg2[%c3_23, %c0_24, %c0_25] : memref<9x4x3xf32, #tpu.memory_space<vmem>>, vector<1x4x3xf32>
    %30 = vector.shape_cast %29 : vector<1x4x3xf32> to vector<4x3xf32>
    %cst_26 = arith.constant dense<0.000000e+00> : vector<4x512xf32>
    %31 = tpu.matmul %30, %28, %cst_26 {dimension_numbers = #tpu.dot_dimension_numbers<[1], [0], [0], [1], [0, 0, 1, 1], [], []>} : vector<4x3xf32>, vector<3x512xf32>, vector<4x512xf32> -> vector<4x512xf32>
    %32 = arith.addf %24, %31 : vector<4x512xf32>
    %c0_27 = arith.constant 0 : index
    %c17 = arith.constant 17 : index
    %33 = vector.load %arg1[%c0_27, %c17] : memref<3x546xf32, #tpu.memory_space<vmem>>, vector<3x512xf32>
    %c4 = arith.constant 4 : index
    %c0_28 = arith.constant 0 : index
    %c0_29 = arith.constant 0 : index
    %34 = vector.load %arg2[%c4, %c0_28, %c0_29] : memref<9x4x3xf32, #tpu.memory_space<vmem>>, vector<1x4x3xf32>
    %35 = vector.shape_cast %34 : vector<1x4x3xf32> to vector<4x3xf32>
    %cst_30 = arith.constant dense<0.000000e+00> : vector<4x512xf32>
    %36 = tpu.matmul %35, %33, %cst_30 {dimension_numbers = #tpu.dot_dimension_numbers<[1], [0], [0], [1], [0, 0, 1, 1], [], []>} : vector<4x3xf32>, vector<3x512xf32>, vector<4x512xf32> -> vector<4x512xf32>
    %37 = arith.addf %32, %36 : vector<4x512xf32>
    %c0_31 = arith.constant 0 : index
    %c18 = arith.constant 18 : index
    %38 = vector.load %arg1[%c0_31, %c18] : memref<3x546xf32, #tpu.memory_space<vmem>>, vector<3x512xf32>
    %c5 = arith.constant 5 : index
    %c0_32 = arith.constant 0 : index
    %39 = vector.load %arg3[%c5, %c0_32] : memref<9x512xf32, #tpu.memory_space<vmem>>, vector<1x512xf32>
    %40 = vector.broadcast %39 : vector<1x512xf32> to vector<3x512xf32>
    %41 = arith.mulf %38, %40 : vector<3x512xf32>
    %c5_33 = arith.constant 5 : index
    %c0_34 = arith.constant 0 : index
    %c0_35 = arith.constant 0 : index
    %42 = vector.load %arg2[%c5_33, %c0_34, %c0_35] : memref<9x4x3xf32, #tpu.memory_space<vmem>>, vector<1x4x3xf32>
    %43 = vector.shape_cast %42 : vector<1x4x3xf32> to vector<4x3xf32>
    %cst_36 = arith.constant dense<0.000000e+00> : vector<4x512xf32>
    %44 = tpu.matmul %43, %41, %cst_36 {dimension_numbers = #tpu.dot_dimension_numbers<[1], [0], [0], [1], [0, 0, 1, 1], [], []>} : vector<4x3xf32>, vector<3x512xf32>, vector<4x512xf32> -> vector<4x512xf32>
    %45 = arith.addf %37, %44 : vector<4x512xf32>
    %c0_37 = arith.constant 0 : index
    %c32 = arith.constant 32 : index
    %46 = vector.load %arg1[%c0_37, %c32] : memref<3x546xf32, #tpu.memory_space<vmem>>, vector<3x512xf32>
    %c6 = arith.constant 6 : index
    %c0_38 = arith.constant 0 : index
    %47 = vector.load %arg3[%c6, %c0_38] : memref<9x512xf32, #tpu.memory_space<vmem>>, vector<1x512xf32>
    %48 = vector.broadcast %47 : vector<1x512xf32> to vector<3x512xf32>
    %49 = arith.mulf %46, %48 : vector<3x512xf32>
    %c6_39 = arith.constant 6 : index
    %c0_40 = arith.constant 0 : index
    %c0_41 = arith.constant 0 : index
    %50 = vector.load %arg2[%c6_39, %c0_40, %c0_41] : memref<9x4x3xf32, #tpu.memory_space<vmem>>, vector<1x4x3xf32>
    %51 = vector.shape_cast %50 : vector<1x4x3xf32> to vector<4x3xf32>
    %cst_42 = arith.constant dense<0.000000e+00> : vector<4x512xf32>
    %52 = tpu.matmul %51, %49, %cst_42 {dimension_numbers = #tpu.dot_dimension_numbers<[1], [0], [0], [1], [0, 0, 1, 1], [], []>} : vector<4x3xf32>, vector<3x512xf32>, vector<4x512xf32> -> vector<4x512xf32>
    %53 = arith.addf %45, %52 : vector<4x512xf32>
    %c0_43 = arith.constant 0 : index
    %c33 = arith.constant 33 : index
    %54 = vector.load %arg1[%c0_43, %c33] : memref<3x546xf32, #tpu.memory_space<vmem>>, vector<3x512xf32>
    %c7 = arith.constant 7 : index
    %c0_44 = arith.constant 0 : index
    %55 = vector.load %arg3[%c7, %c0_44] : memref<9x512xf32, #tpu.memory_space<vmem>>, vector<1x512xf32>
    %56 = vector.broadcast %55 : vector<1x512xf32> to vector<3x512xf32>
    %57 = arith.mulf %54, %56 : vector<3x512xf32>
    %c7_45 = arith.constant 7 : index
    %c0_46 = arith.constant 0 : index
    %c0_47 = arith.constant 0 : index
    %58 = vector.load %arg2[%c7_45, %c0_46, %c0_47] : memref<9x4x3xf32, #tpu.memory_space<vmem>>, vector<1x4x3xf32>
    %59 = vector.shape_cast %58 : vector<1x4x3xf32> to vector<4x3xf32>
    %cst_48 = arith.constant dense<0.000000e+00> : vector<4x512xf32>
    %60 = tpu.matmul %59, %57, %cst_48 {dimension_numbers = #tpu.dot_dimension_numbers<[1], [0], [0], [1], [0, 0, 1, 1], [], []>} : vector<4x3xf32>, vector<3x512xf32>, vector<4x512xf32> -> vector<4x512xf32>
    %61 = arith.addf %53, %60 : vector<4x512xf32>
    %c0_49 = arith.constant 0 : index
    %c34 = arith.constant 34 : index
    %62 = vector.load %arg1[%c0_49, %c34] : memref<3x546xf32, #tpu.memory_space<vmem>>, vector<3x512xf32>
    %c8 = arith.constant 8 : index
    %c0_50 = arith.constant 0 : index
    %63 = vector.load %arg3[%c8, %c0_50] : memref<9x512xf32, #tpu.memory_space<vmem>>, vector<1x512xf32>
    %64 = vector.broadcast %63 : vector<1x512xf32> to vector<3x512xf32>
    %65 = arith.mulf %62, %64 : vector<3x512xf32>
    %c8_51 = arith.constant 8 : index
    %c0_52 = arith.constant 0 : index
    %c0_53 = arith.constant 0 : index
    %66 = vector.load %arg2[%c8_51, %c0_52, %c0_53] : memref<9x4x3xf32, #tpu.memory_space<vmem>>, vector<1x4x3xf32>
    %67 = vector.shape_cast %66 : vector<1x4x3xf32> to vector<4x3xf32>
    %cst_54 = arith.constant dense<0.000000e+00> : vector<4x512xf32>
    %68 = tpu.matmul %67, %65, %cst_54 {dimension_numbers = #tpu.dot_dimension_numbers<[1], [0], [0], [1], [0, 0, 1, 1], [], []>} : vector<4x3xf32>, vector<3x512xf32>, vector<4x512xf32> -> vector<4x512xf32>
    %69 = arith.addf %61, %68 : vector<4x512xf32>
    %cst_55 = arith.constant dense<0.000000e+00> : vector<4xf32>
    %70 = vector.multi_reduction <add>, %69, %cst_55 [1] : vector<4x512xf32> to vector<4xf32>
    %71 = vector.shape_cast %70 : vector<4xf32> to vector<4x1xf32>
    %cst_56 = arith.constant 0.001953125 : f32
    %72 = vector.broadcast %cst_56 : f32 to vector<4x1xf32>
    %73 = arith.mulf %71, %72 : vector<4x1xf32>
    %74 = vector.broadcast %73 : vector<4x1xf32> to vector<4x512xf32>
    %75 = arith.subf %69, %74 : vector<4x512xf32>
    %76 = arith.mulf %75, %75 : vector<4x512xf32>
    %cst_57 = arith.constant dense<0.000000e+00> : vector<4xf32>
    %77 = vector.multi_reduction <add>, %76, %cst_57 [1] : vector<4x512xf32> to vector<4xf32>
    %78 = vector.shape_cast %77 : vector<4xf32> to vector<4x1xf32>
    %cst_58 = arith.constant 0.001953125 : f32
    %79 = vector.broadcast %cst_58 : f32 to vector<4x1xf32>
    %80 = arith.mulf %78, %79 : vector<4x1xf32>
    %cst_59 = arith.constant 9.99999974E-6 : f32
    %81 = vector.broadcast %cst_59 : f32 to vector<4x1xf32>
    %82 = arith.addf %80, %81 : vector<4x1xf32>
    %83 = math.rsqrt %82 : vector<4x1xf32>
    %84 = vector.broadcast %83 : vector<4x1xf32> to vector<4x512xf32>
    %85 = arith.mulf %75, %84 : vector<4x512xf32>
    %c0_60 = arith.constant 0 : index
    %c0_61 = arith.constant 0 : index
    %86 = vector.load %arg4[%c0_60, %c0_61] : memref<4x1xf32, #tpu.memory_space<vmem>>, vector<4x1xf32>
    %87 = vector.broadcast %86 : vector<4x1xf32> to vector<4x512xf32>
    %88 = arith.mulf %85, %87 : vector<4x512xf32>
    %c0_62 = arith.constant 0 : index
    %c0_63 = arith.constant 0 : index
    %89 = vector.load %arg5[%c0_62, %c0_63] : memref<4x1xf32, #tpu.memory_space<vmem>>, vector<4x1xf32>
    %90 = vector.broadcast %89 : vector<4x1xf32> to vector<4x512xf32>
    %91 = arith.addf %88, %90 : vector<4x512xf32>
    %cst_64 = arith.constant 0.000000e+00 : f32
    %92 = vector.broadcast %cst_64 : f32 to vector<4x512xf32>
    %93 = arith.cmpf oge, %91, %92 : vector<4x512xf32>
    %c0_65 = arith.constant 0 : index
    %c0_66 = arith.constant 0 : index
    %94 = vector.load %arg6[%c0_65, %c0_66] : memref<4x1xf32, #tpu.memory_space<vmem>>, vector<4x1xf32>
    %95 = vector.broadcast %94 : vector<4x1xf32> to vector<4x512xf32>
    %96 = arith.mulf %95, %91 : vector<4x512xf32>
    %97 = arith.select %93, %91, %96 : vector<4x512xi1>, vector<4x512xf32>
    %c0_67 = arith.constant 0 : index
    %c0_68 = arith.constant 0 : index
    %98 = vector.load %arg7[%c0_67, %c0_68] : memref<4x512xf32, #tpu.memory_space<vmem>>, vector<4x512xf32>
    tpu.vector_store %arg7[%c0_67, %c0_68], %97 {strides = array<i32>} : memref<4x512xf32, #tpu.memory_space<vmem>>, vector<4x512xf32>,
    return
  }
  func.func @transform_0(%arg0: i32) -> (i32, i32) {
    %c0_i32 = arith.constant 0 : i32
    %c0_i32_0 = arith.constant 0 : i32
    %c0_i32_1 = arith.constant 0 : i32
    return %c0_i32, %c0_i32_0 : i32, i32
  }
  func.func @transform_1(%arg0: i32) -> (i32, i32, i32) {
    %c0_i32 = arith.constant 0 : i32
    %c0_i32_0 = arith.constant 0 : i32
    %c0_i32_1 = arith.constant 0 : i32
    %c0_i32_2 = arith.constant 0 : i32
    return %c0_i32, %c0_i32_0, %c0_i32_1 : i32, i32, i32
  }
  func.func @transform_2(%arg0: i32) -> (i32, i32) {
    %c0_i32 = arith.constant 0 : i32
    %c0_i32_0 = arith.constant 0 : i32
    %c0_i32_1 = arith.constant 0 : i32
    return %c0_i32, %c0_i32_0 : i32, i32
  }
  func.func @transform_3(%arg0: i32) -> (i32, i32) {
    %c0_i32 = arith.constant 0 : i32
    %c0_i32_0 = arith.constant 0 : i32
    %c0_i32_1 = arith.constant 0 : i32
    return %c0_i32, %c0_i32_0 : i32, i32
  }
  func.func @transform_4(%arg0: i32) -> (i32, i32) {
    %c0_i32 = arith.constant 0 : i32
    %c0_i32_0 = arith.constant 0 : i32
    %c0_i32_1 = arith.constant 0 : i32
    return %c0_i32, %c0_i32_0 : i32, i32
  }
  func.func @transform_5(%arg0: i32) -> (i32, i32) {
    %c0_i32 = arith.constant 0 : i32
    %c0_i32_0 = arith.constant 0 : i32
    %c0_i32_1 = arith.constant 0 : i32
    return %c0_i32, %c0_i32_0 : i32, i32
  }
  func.func @transform_6(%arg0: i32) -> (i32, i32) {
    %c0_i32 = arith.constant 0 : i32
    %c0_i32_0 = arith.constant 0 : i32
    %c0_i32_1 = arith.constant 0 : i32
    return %c0_i32, %c0_i32_0 : i32, i32
  }
}

module attributes {stable_mosaic.version = 11 : i64} {
  func.func @kernel(%arg0: i32, %arg1: memref<4x546xf32, #tpu.memory_space<vmem>>, %arg2: memref<4x9xf32, #tpu.memory_space<vmem>>, %arg3: memref<9x512xf32, #tpu.memory_space<vmem>>, %arg4: memref<4x1xf32, #tpu.memory_space<vmem>>, %arg5: memref<4x1xf32, #tpu.memory_space<vmem>>, %arg6: memref<4x1xf32, #tpu.memory_space<vmem>>, %arg7: memref<4x512xf32, #tpu.memory_space<vmem>>) attributes {dimension_semantics = [#tpu.dimension_semantics<arbitrary>], iteration_bounds = array<i64: 1>, scalar_prefetch = 0 : i64, scratch_operands = 0 : i64, tpu.core_type = #tpu.core_type<tc>, window_params = [{pipeline_mode = #tpu.pipeline_mode<synchronous>, transform_indices = @transform_0, window_bounds = array<i64: 4, 546>}, {pipeline_mode = #tpu.pipeline_mode<synchronous>, transform_indices = @transform_1, window_bounds = array<i64: 4, 9>}, {pipeline_mode = #tpu.pipeline_mode<synchronous>, transform_indices = @transform_2, window_bounds = array<i64: 9, 512>}, {pipeline_mode = #tpu.pipeline_mode<synchronous>, transform_indices = @transform_3, window_bounds = array<i64: 4, 1>}, {pipeline_mode = #tpu.pipeline_mode<synchronous>, transform_indices = @transform_4, window_bounds = array<i64: 4, 1>}, {pipeline_mode = #tpu.pipeline_mode<synchronous>, transform_indices = @transform_5, window_bounds = array<i64: 4, 1>}, {pipeline_mode = #tpu.pipeline_mode<synchronous>, transform_indices = @transform_6, window_bounds = array<i64: 4, 512>}]} {
    %cst = arith.constant 0.000000e+00 : f32
    %0 = vector.broadcast %cst : f32 to vector<4x512xf32>
    %c0 = arith.constant 0 : index
    %c0_0 = arith.constant 0 : index
    %1 = vector.load %arg1[%c0, %c0_0] : memref<4x546xf32, #tpu.memory_space<vmem>>, vector<4x512xf32>
    %c0_1 = arith.constant 0 : index
    %c0_2 = arith.constant 0 : index
    %2 = vector.load %arg3[%c0_1, %c0_2] : memref<9x512xf32, #tpu.memory_space<vmem>>, vector<1x512xf32>
    %3 = vector.broadcast %2 : vector<1x512xf32> to vector<4x512xf32>
    %4 = arith.mulf %1, %3 : vector<4x512xf32>
    %c0_3 = arith.constant 0 : index
    %c0_4 = arith.constant 0 : index
    %5 = vector.load %arg2[%c0_3, %c0_4] : memref<4x9xf32, #tpu.memory_space<vmem>>, vector<4x1xf32>
    %6 = vector.broadcast %5 : vector<4x1xf32> to vector<4x512xf32>
    %7 = arith.mulf %4, %6 : vector<4x512xf32>
    %8 = arith.addf %0, %7 : vector<4x512xf32>
    %c0_5 = arith.constant 0 : index
    %c1 = arith.constant 1 : index
    %9 = vector.load %arg1[%c0_5, %c1] : memref<4x546xf32, #tpu.memory_space<vmem>>, vector<4x512xf32>
    %c1_6 = arith.constant 1 : index
    %c0_7 = arith.constant 0 : index
    %10 = vector.load %arg3[%c1_6, %c0_7] : memref<9x512xf32, #tpu.memory_space<vmem>>, vector<1x512xf32>
    %11 = vector.broadcast %10 : vector<1x512xf32> to vector<4x512xf32>
    %12 = arith.mulf %9, %11 : vector<4x512xf32>
    %c0_8 = arith.constant 0 : index
    %c1_9 = arith.constant 1 : index
    %13 = vector.load %arg2[%c0_8, %c1_9] : memref<4x9xf32, #tpu.memory_space<vmem>>, vector<4x1xf32>
    %14 = vector.broadcast %13 : vector<4x1xf32> to vector<4x512xf32>
    %15 = arith.mulf %12, %14 : vector<4x512xf32>
    %16 = arith.addf %8, %15 : vector<4x512xf32>
    %c0_10 = arith.constant 0 : index
    %c2 = arith.constant 2 : index
    %17 = vector.load %arg1[%c0_10, %c2] : memref<4x546xf32, #tpu.memory_space<vmem>>, vector<4x512xf32>
    %c2_11 = arith.constant 2 : index
    %c0_12 = arith.constant 0 : index
    %18 = vector.load %arg3[%c2_11, %c0_12] : memref<9x512xf32, #tpu.memory_space<vmem>>, vector<1x512xf32>
    %19 = vector.broadcast %18 : vector<1x512xf32> to vector<4x512xf32>
    %20 = arith.mulf %17, %19 : vector<4x512xf32>
    %c0_13 = arith.constant 0 : index
    %c2_14 = arith.constant 2 : index
    %21 = vector.load %arg2[%c0_13, %c2_14] : memref<4x9xf32, #tpu.memory_space<vmem>>, vector<4x1xf32>
    %22 = vector.broadcast %21 : vector<4x1xf32> to vector<4x512xf32>
    %23 = arith.mulf %20, %22 : vector<4x512xf32>
    %24 = arith.addf %16, %23 : vector<4x512xf32>
    %c0_15 = arith.constant 0 : index
    %c16 = arith.constant 16 : index
    %25 = vector.load %arg1[%c0_15, %c16] : memref<4x546xf32, #tpu.memory_space<vmem>>, vector<4x512xf32>
    %c3 = arith.constant 3 : index
    %c0_16 = arith.constant 0 : index
    %26 = vector.load %arg3[%c3, %c0_16] : memref<9x512xf32, #tpu.memory_space<vmem>>, vector<1x512xf32>
    %27 = vector.broadcast %26 : vector<1x512xf32> to vector<4x512xf32>
    %28 = arith.mulf %25, %27 : vector<4x512xf32>
    %c0_17 = arith.constant 0 : index
    %c3_18 = arith.constant 3 : index
    %29 = vector.load %arg2[%c0_17, %c3_18] : memref<4x9xf32, #tpu.memory_space<vmem>>, vector<4x1xf32>
    %30 = vector.broadcast %29 : vector<4x1xf32> to vector<4x512xf32>
    %31 = arith.mulf %28, %30 : vector<4x512xf32>
    %32 = arith.addf %24, %31 : vector<4x512xf32>
    %c0_19 = arith.constant 0 : index
    %c17 = arith.constant 17 : index
    %33 = vector.load %arg1[%c0_19, %c17] : memref<4x546xf32, #tpu.memory_space<vmem>>, vector<4x512xf32>
    %c0_20 = arith.constant 0 : index
    %c4 = arith.constant 4 : index
    %34 = vector.load %arg2[%c0_20, %c4] : memref<4x9xf32, #tpu.memory_space<vmem>>, vector<4x1xf32>
    %35 = vector.broadcast %34 : vector<4x1xf32> to vector<4x512xf32>
    %36 = arith.mulf %33, %35 : vector<4x512xf32>
    %37 = arith.addf %32, %36 : vector<4x512xf32>
    %c0_21 = arith.constant 0 : index
    %c18 = arith.constant 18 : index
    %38 = vector.load %arg1[%c0_21, %c18] : memref<4x546xf32, #tpu.memory_space<vmem>>, vector<4x512xf32>
    %c5 = arith.constant 5 : index
    %c0_22 = arith.constant 0 : index
    %39 = vector.load %arg3[%c5, %c0_22] : memref<9x512xf32, #tpu.memory_space<vmem>>, vector<1x512xf32>
    %40 = vector.broadcast %39 : vector<1x512xf32> to vector<4x512xf32>
    %41 = arith.mulf %38, %40 : vector<4x512xf32>
    %c0_23 = arith.constant 0 : index
    %c5_24 = arith.constant 5 : index
    %42 = vector.load %arg2[%c0_23, %c5_24] : memref<4x9xf32, #tpu.memory_space<vmem>>, vector<4x1xf32>
    %43 = vector.broadcast %42 : vector<4x1xf32> to vector<4x512xf32>
    %44 = arith.mulf %41, %43 : vector<4x512xf32>
    %45 = arith.addf %37, %44 : vector<4x512xf32>
    %c0_25 = arith.constant 0 : index
    %c32 = arith.constant 32 : index
    %46 = vector.load %arg1[%c0_25, %c32] : memref<4x546xf32, #tpu.memory_space<vmem>>, vector<4x512xf32>
    %c6 = arith.constant 6 : index
    %c0_26 = arith.constant 0 : index
    %47 = vector.load %arg3[%c6, %c0_26] : memref<9x512xf32, #tpu.memory_space<vmem>>, vector<1x512xf32>
    %48 = vector.broadcast %47 : vector<1x512xf32> to vector<4x512xf32>
    %49 = arith.mulf %46, %48 : vector<4x512xf32>
    %c0_27 = arith.constant 0 : index
    %c6_28 = arith.constant 6 : index
    %50 = vector.load %arg2[%c0_27, %c6_28] : memref<4x9xf32, #tpu.memory_space<vmem>>, vector<4x1xf32>
    %51 = vector.broadcast %50 : vector<4x1xf32> to vector<4x512xf32>
    %52 = arith.mulf %49, %51 : vector<4x512xf32>
    %53 = arith.addf %45, %52 : vector<4x512xf32>
    %c0_29 = arith.constant 0 : index
    %c33 = arith.constant 33 : index
    %54 = vector.load %arg1[%c0_29, %c33] : memref<4x546xf32, #tpu.memory_space<vmem>>, vector<4x512xf32>
    %c7 = arith.constant 7 : index
    %c0_30 = arith.constant 0 : index
    %55 = vector.load %arg3[%c7, %c0_30] : memref<9x512xf32, #tpu.memory_space<vmem>>, vector<1x512xf32>
    %56 = vector.broadcast %55 : vector<1x512xf32> to vector<4x512xf32>
    %57 = arith.mulf %54, %56 : vector<4x512xf32>
    %c0_31 = arith.constant 0 : index
    %c7_32 = arith.constant 7 : index
    %58 = vector.load %arg2[%c0_31, %c7_32] : memref<4x9xf32, #tpu.memory_space<vmem>>, vector<4x1xf32>
    %59 = vector.broadcast %58 : vector<4x1xf32> to vector<4x512xf32>
    %60 = arith.mulf %57, %59 : vector<4x512xf32>
    %61 = arith.addf %53, %60 : vector<4x512xf32>
    %c0_33 = arith.constant 0 : index
    %c34 = arith.constant 34 : index
    %62 = vector.load %arg1[%c0_33, %c34] : memref<4x546xf32, #tpu.memory_space<vmem>>, vector<4x512xf32>
    %c8 = arith.constant 8 : index
    %c0_34 = arith.constant 0 : index
    %63 = vector.load %arg3[%c8, %c0_34] : memref<9x512xf32, #tpu.memory_space<vmem>>, vector<1x512xf32>
    %64 = vector.broadcast %63 : vector<1x512xf32> to vector<4x512xf32>
    %65 = arith.mulf %62, %64 : vector<4x512xf32>
    %c0_35 = arith.constant 0 : index
    %c8_36 = arith.constant 8 : index
    %66 = vector.load %arg2[%c0_35, %c8_36] : memref<4x9xf32, #tpu.memory_space<vmem>>, vector<4x1xf32>
    %67 = vector.broadcast %66 : vector<4x1xf32> to vector<4x512xf32>
    %68 = arith.mulf %65, %67 : vector<4x512xf32>
    %69 = arith.addf %61, %68 : vector<4x512xf32>
    %cst_37 = arith.constant dense<0.000000e+00> : vector<4xf32>
    %70 = vector.multi_reduction <add>, %69, %cst_37 [1] : vector<4x512xf32> to vector<4xf32>
    %71 = vector.shape_cast %70 : vector<4xf32> to vector<4x1xf32>
    %cst_38 = arith.constant 0.001953125 : f32
    %72 = vector.broadcast %cst_38 : f32 to vector<4x1xf32>
    %73 = arith.mulf %71, %72 : vector<4x1xf32>
    %74 = vector.broadcast %73 : vector<4x1xf32> to vector<4x512xf32>
    %75 = arith.subf %69, %74 : vector<4x512xf32>
    %76 = arith.mulf %75, %75 : vector<4x512xf32>
    %cst_39 = arith.constant dense<0.000000e+00> : vector<4xf32>
    %77 = vector.multi_reduction <add>, %76, %cst_39 [1] : vector<4x512xf32> to vector<4xf32>
    %78 = vector.shape_cast %77 : vector<4xf32> to vector<4x1xf32>
    %cst_40 = arith.constant 0.001953125 : f32
    %79 = vector.broadcast %cst_40 : f32 to vector<4x1xf32>
    %80 = arith.mulf %78, %79 : vector<4x1xf32>
    %cst_41 = arith.constant 9.99999974E-6 : f32
    %81 = vector.broadcast %cst_41 : f32 to vector<4x1xf32>
    %82 = arith.addf %80, %81 : vector<4x1xf32>
    %83 = math.rsqrt %82 : vector<4x1xf32>
    %84 = vector.broadcast %83 : vector<4x1xf32> to vector<4x512xf32>
    %85 = arith.mulf %75, %84 : vector<4x512xf32>
    %c0_42 = arith.constant 0 : index
    %c0_43 = arith.constant 0 : index
    %86 = vector.load %arg4[%c0_42, %c0_43] : memref<4x1xf32, #tpu.memory_space<vmem>>, vector<4x1xf32>
    %87 = vector.broadcast %86 : vector<4x1xf32> to vector<4x512xf32>
    %88 = arith.mulf %85, %87 : vector<4x512xf32>
    %c0_44 = arith.constant 0 : index
    %c0_45 = arith.constant 0 : index
    %89 = vector.load %arg5[%c0_44, %c0_45] : memref<4x1xf32, #tpu.memory_space<vmem>>, vector<4x1xf32>
    %90 = vector.broadcast %89 : vector<4x1xf32> to vector<4x512xf32>
    %91 = arith.addf %88, %90 : vector<4x512xf32>
    %cst_46 = arith.constant 0.000000e+00 : f32
    %92 = vector.broadcast %cst_46 : f32 to vector<4x512xf32>
    %93 = arith.cmpf oge, %91, %92 : vector<4x512xf32>
    %c0_47 = arith.constant 0 : index
    %c0_48 = arith.constant 0 : index
    %94 = vector.load %arg6[%c0_47, %c0_48] : memref<4x1xf32, #tpu.memory_space<vmem>>, vector<4x1xf32>
    %95 = vector.broadcast %94 : vector<4x1xf32> to vector<4x512xf32>
    %96 = arith.mulf %95, %91 : vector<4x512xf32>
    %97 = arith.select %93, %91, %96 : vector<4x512xi1>, vector<4x512xf32>
    %c0_49 = arith.constant 0 : index
    %c0_50 = arith.constant 0 : index
    %98 = vector.load %arg7[%c0_49, %c0_50] : memref<4x512xf32, #tpu.memory_space<vmem>>, vector<4x512xf32>
    tpu.vector_store %arg7[%c0_49, %c0_50], %97 {strides = array<i32>} : memref<4x512xf32, #tpu.memory_space<vmem>>, vector<4x512xf32>,
    return
  }
  func.func @transform_0(%arg0: i32) -> (i32, i32) {
    %c0_i32 = arith.constant 0 : i32
    %c0_i32_0 = arith.constant 0 : i32
    %c0_i32_1 = arith.constant 0 : i32
    return %c0_i32, %c0_i32_0 : i32, i32
  }
  func.func @transform_1(%arg0: i32) -> (i32, i32) {
    %c0_i32 = arith.constant 0 : i32
    %c0_i32_0 = arith.constant 0 : i32
    %c0_i32_1 = arith.constant 0 : i32
    return %c0_i32, %c0_i32_0 : i32, i32
  }
  func.func @transform_2(%arg0: i32) -> (i32, i32) {
    %c0_i32 = arith.constant 0 : i32
    %c0_i32_0 = arith.constant 0 : i32
    %c0_i32_1 = arith.constant 0 : i32
    return %c0_i32, %c0_i32_0 : i32, i32
  }
  func.func @transform_3(%arg0: i32) -> (i32, i32) {
    %c0_i32 = arith.constant 0 : i32
    %c0_i32_0 = arith.constant 0 : i32
    %c0_i32_1 = arith.constant 0 : i32
    return %c0_i32, %c0_i32_0 : i32, i32
  }
  func.func @transform_4(%arg0: i32) -> (i32, i32) {
    %c0_i32 = arith.constant 0 : i32
    %c0_i32_0 = arith.constant 0 : i32
    %c0_i32_1 = arith.constant 0 : i32
    return %c0_i32, %c0_i32_0 : i32, i32
  }
  func.func @transform_5(%arg0: i32) -> (i32, i32) {
    %c0_i32 = arith.constant 0 : i32
    %c0_i32_0 = arith.constant 0 : i32
    %c0_i32_1 = arith.constant 0 : i32
    return %c0_i32, %c0_i32_0 : i32, i32
  }
  func.func @transform_6(%arg0: i32) -> (i32, i32) {
    %c0_i32 = arith.constant 0 : i32
    %c0_i32_0 = arith.constant 0 : i32
    %c0_i32_1 = arith.constant 0 : i32
    return %c0_i32, %c0_i32_0 : i32, i32
  }
}

module attributes {stable_mosaic.version = 11 : i64} {
  func.func @kernel(%arg0: i32, %arg1: memref<4x128xf32, #tpu.memory_space<vmem>>, %arg2: memref<1x4x4xf32, #tpu.memory_space<vmem>>, %arg3: memref<4x128xf32, #tpu.memory_space<vmem>>, %arg4: memref<4x1xf32, #tpu.memory_space<vmem>>, %arg5: memref<4x1xf32, #tpu.memory_space<vmem>>, %arg6: memref<4x1xf32, #tpu.memory_space<vmem>>, %arg7: memref<4x128xf32, #tpu.memory_space<vmem>>) attributes {dimension_semantics = [#tpu.dimension_semantics<arbitrary>], iteration_bounds = array<i64: 1>, scalar_prefetch = 0 : i64, scratch_operands = 0 : i64, tpu.core_type = #tpu.core_type<tc>, window_params = [{pipeline_mode = #tpu.pipeline_mode<synchronous>, transform_indices = @transform_0, window_bounds = array<i64: 4, 128>}, {pipeline_mode = #tpu.pipeline_mode<synchronous>, transform_indices = @transform_1, window_bounds = array<i64: 1, 4, 4>}, {pipeline_mode = #tpu.pipeline_mode<synchronous>, transform_indices = @transform_2, window_bounds = array<i64: 4, 128>}, {pipeline_mode = #tpu.pipeline_mode<synchronous>, transform_indices = @transform_3, window_bounds = array<i64: 4, 1>}, {pipeline_mode = #tpu.pipeline_mode<synchronous>, transform_indices = @transform_4, window_bounds = array<i64: 4, 1>}, {pipeline_mode = #tpu.pipeline_mode<synchronous>, transform_indices = @transform_5, window_bounds = array<i64: 4, 1>}, {pipeline_mode = #tpu.pipeline_mode<synchronous>, transform_indices = @transform_6, window_bounds = array<i64: 4, 128>}]} {
    %cst = arith.constant 0.000000e+00 : f32
    %0 = vector.broadcast %cst : f32 to vector<4x128xf32>
    %c0 = arith.constant 0 : index
    %c0_0 = arith.constant 0 : index
    %1 = vector.load %arg1[%c0, %c0_0] : memref<4x128xf32, #tpu.memory_space<vmem>>, vector<4x128xf32>
    %c0_1 = arith.constant 0 : index
    %c0_2 = arith.constant 0 : index
    %c0_3 = arith.constant 0 : index
    %2 = vector.load %arg2[%c0_1, %c0_2, %c0_3] : memref<1x4x4xf32, #tpu.memory_space<vmem>>, vector<1x4x4xf32>
    %3 = vector.shape_cast %2 : vector<1x4x4xf32> to vector<4x4xf32>
    %cst_4 = arith.constant dense<0.000000e+00> : vector<4x128xf32>
    %4 = tpu.matmul %3, %1, %cst_4 {dimension_numbers = #tpu.dot_dimension_numbers<[1], [0], [0], [1], [0, 0, 1, 1], [], []>} : vector<4x4xf32>, vector<4x128xf32>, vector<4x128xf32> -> vector<4x128xf32>
    %5 = arith.addf %0, %4 : vector<4x128xf32>
    %c0_5 = arith.constant 0 : index
    %c0_6 = arith.constant 0 : index
    %6 = vector.load %arg3[%c0_5, %c0_6] : memref<4x128xf32, #tpu.memory_space<vmem>>, vector<4x128xf32>
    %7 = arith.addf %5, %6 : vector<4x128xf32>
    %cst_7 = arith.constant dense<0.000000e+00> : vector<4xf32>
    %8 = vector.multi_reduction <add>, %7, %cst_7 [1] : vector<4x128xf32> to vector<4xf32>
    %9 = vector.shape_cast %8 : vector<4xf32> to vector<4x1xf32>
    %cst_8 = arith.constant 7.812500e-03 : f32
    %10 = vector.broadcast %cst_8 : f32 to vector<4x1xf32>
    %11 = arith.mulf %9, %10 : vector<4x1xf32>
    %12 = vector.broadcast %11 : vector<4x1xf32> to vector<4x128xf32>
    %13 = arith.subf %7, %12 : vector<4x128xf32>
    %14 = arith.mulf %13, %13 : vector<4x128xf32>
    %cst_9 = arith.constant dense<0.000000e+00> : vector<4xf32>
    %15 = vector.multi_reduction <add>, %14, %cst_9 [1] : vector<4x128xf32> to vector<4xf32>
    %16 = vector.shape_cast %15 : vector<4xf32> to vector<4x1xf32>
    %cst_10 = arith.constant 7.812500e-03 : f32
    %17 = vector.broadcast %cst_10 : f32 to vector<4x1xf32>
    %18 = arith.mulf %16, %17 : vector<4x1xf32>
    %cst_11 = arith.constant 9.99999974E-6 : f32
    %19 = vector.broadcast %cst_11 : f32 to vector<4x1xf32>
    %20 = arith.addf %18, %19 : vector<4x1xf32>
    %21 = math.rsqrt %20 : vector<4x1xf32>
    %22 = vector.broadcast %21 : vector<4x1xf32> to vector<4x128xf32>
    %23 = arith.mulf %13, %22 : vector<4x128xf32>
    %c0_12 = arith.constant 0 : index
    %c0_13 = arith.constant 0 : index
    %24 = vector.load %arg4[%c0_12, %c0_13] : memref<4x1xf32, #tpu.memory_space<vmem>>, vector<4x1xf32>
    %25 = vector.broadcast %24 : vector<4x1xf32> to vector<4x128xf32>
    %26 = arith.mulf %23, %25 : vector<4x128xf32>
    %c0_14 = arith.constant 0 : index
    %c0_15 = arith.constant 0 : index
    %27 = vector.load %arg5[%c0_14, %c0_15] : memref<4x1xf32, #tpu.memory_space<vmem>>, vector<4x1xf32>
    %28 = vector.broadcast %27 : vector<4x1xf32> to vector<4x128xf32>
    %29 = arith.addf %26, %28 : vector<4x128xf32>
    %cst_16 = arith.constant 0.000000e+00 : f32
    %30 = vector.broadcast %cst_16 : f32 to vector<4x128xf32>
    %31 = arith.cmpf oge, %29, %30 : vector<4x128xf32>
    %c0_17 = arith.constant 0 : index
    %c0_18 = arith.constant 0 : index
    %32 = vector.load %arg6[%c0_17, %c0_18] : memref<4x1xf32, #tpu.memory_space<vmem>>, vector<4x1xf32>
    %33 = vector.broadcast %32 : vector<4x1xf32> to vector<4x128xf32>
    %34 = arith.mulf %33, %29 : vector<4x128xf32>
    %35 = arith.select %31, %29, %34 : vector<4x128xi1>, vector<4x128xf32>
    %c0_19 = arith.constant 0 : index
    %c0_20 = arith.constant 0 : index
    %36 = vector.load %arg7[%c0_19, %c0_20] : memref<4x128xf32, #tpu.memory_space<vmem>>, vector<4x128xf32>
    tpu.vector_store %arg7[%c0_19, %c0_20], %35 {strides = array<i32>} : memref<4x128xf32, #tpu.memory_space<vmem>>, vector<4x128xf32>,
    return
  }
  func.func @transform_0(%arg0: i32) -> (i32, i32) {
    %c0_i32 = arith.constant 0 : i32
    %c0_i32_0 = arith.constant 0 : i32
    %c0_i32_1 = arith.constant 0 : i32
    return %c0_i32, %c0_i32_0 : i32, i32
  }
  func.func @transform_1(%arg0: i32) -> (i32, i32, i32) {
    %c0_i32 = arith.constant 0 : i32
    %c0_i32_0 = arith.constant 0 : i32
    %c0_i32_1 = arith.constant 0 : i32
    %c0_i32_2 = arith.constant 0 : i32
    return %c0_i32, %c0_i32_0, %c0_i32_1 : i32, i32, i32
  }
  func.func @transform_2(%arg0: i32) -> (i32, i32) {
    %c0_i32 = arith.constant 0 : i32
    %c0_i32_0 = arith.constant 0 : i32
    %c0_i32_1 = arith.constant 0 : i32
    return %c0_i32, %c0_i32_0 : i32, i32
  }
  func.func @transform_3(%arg0: i32) -> (i32, i32) {
    %c0_i32 = arith.constant 0 : i32
    %c0_i32_0 = arith.constant 0 : i32
    %c0_i32_1 = arith.constant 0 : i32
    return %c0_i32, %c0_i32_0 : i32, i32
  }
  func.func @transform_4(%arg0: i32) -> (i32, i32) {
    %c0_i32 = arith.constant 0 : i32
    %c0_i32_0 = arith.constant 0 : i32
    %c0_i32_1 = arith.constant 0 : i32
    return %c0_i32, %c0_i32_0 : i32, i32
  }
  func.func @transform_5(%arg0: i32) -> (i32, i32) {
    %c0_i32 = arith.constant 0 : i32
    %c0_i32_0 = arith.constant 0 : i32
    %c0_i32_1 = arith.constant 0 : i32
    return %c0_i32, %c0_i32_0 : i32, i32
  }
  func.func @transform_6(%arg0: i32) -> (i32, i32) {
    %c0_i32 = arith.constant 0 : i32
    %c0_i32_0 = arith.constant 0 : i32
    %c0_i32_1 = arith.constant 0 : i32
    return %c0_i32, %c0_i32_0 : i32, i32
  }
}

module attributes {stable_mosaic.version = 11 : i64} {
  func.func @kernel(%arg0: i32, %arg1: memref<4x42xf32, #tpu.memory_space<vmem>>, %arg2: memref<9x16x4xf32, #tpu.memory_space<vmem>>, %arg3: memref<9x32xf32, #tpu.memory_space<vmem>>, %arg4: memref<16x32xf32, #tpu.memory_space<vmem>>) attributes {dimension_semantics = [#tpu.dimension_semantics<arbitrary>], iteration_bounds = array<i64: 1>, scalar_prefetch = 0 : i64, scratch_operands = 0 : i64, tpu.core_type = #tpu.core_type<tc>, window_params = [{pipeline_mode = #tpu.pipeline_mode<synchronous>, transform_indices = @transform_0, window_bounds = array<i64: 4, 42>}, {pipeline_mode = #tpu.pipeline_mode<synchronous>, transform_indices = @transform_1, window_bounds = array<i64: 9, 16, 4>}, {pipeline_mode = #tpu.pipeline_mode<synchronous>, transform_indices = @transform_2, window_bounds = array<i64: 9, 32>}, {pipeline_mode = #tpu.pipeline_mode<synchronous>, transform_indices = @transform_3, window_bounds = array<i64: 16, 32>}]} {
    %cst = arith.constant 0.000000e+00 : f32
    %0 = vector.broadcast %cst : f32 to vector<16x32xf32>
    %c0 = arith.constant 0 : index
    %c0_0 = arith.constant 0 : index
    %1 = vector.load %arg1[%c0, %c0_0] : memref<4x42xf32, #tpu.memory_space<vmem>>, vector<4x32xf32>
    %c0_1 = arith.constant 0 : index
    %c0_2 = arith.constant 0 : index
    %2 = vector.load %arg3[%c0_1, %c0_2] : memref<9x32xf32, #tpu.memory_space<vmem>>, vector<1x32xf32>
    %3 = vector.broadcast %2 : vector<1x32xf32> to vector<4x32xf32>
    %4 = arith.mulf %1, %3 : vector<4x32xf32>
    %c0_3 = arith.constant 0 : index
    %c0_4 = arith.constant 0 : index
    %c0_5 = arith.constant 0 : index
    %5 = vector.load %arg2[%c0_3, %c0_4, %c0_5] : memref<9x16x4xf32, #tpu.memory_space<vmem>>, vector<1x16x4xf32>
    %6 = vector.shape_cast %5 : vector<1x16x4xf32> to vector<16x4xf32>
    %cst_6 = arith.constant dense<0.000000e+00> : vector<16x32xf32>
    %7 = tpu.matmul %6, %4, %cst_6 {dimension_numbers = #tpu.dot_dimension_numbers<[1], [0], [0], [1], [0, 0, 1, 1], [], []>} : vector<16x4xf32>, vector<4x32xf32>, vector<16x32xf32> -> vector<16x32xf32>
    %8 = arith.addf %0, %7 : vector<16x32xf32>
    %c0_7 = arith.constant 0 : index
    %c1 = arith.constant 1 : index
    %9 = vector.load %arg1[%c0_7, %c1] : memref<4x42xf32, #tpu.memory_space<vmem>>, vector<4x32xf32>
    %c1_8 = arith.constant 1 : index
    %c0_9 = arith.constant 0 : index
    %10 = vector.load %arg3[%c1_8, %c0_9] : memref<9x32xf32, #tpu.memory_space<vmem>>, vector<1x32xf32>
    %11 = vector.broadcast %10 : vector<1x32xf32> to vector<4x32xf32>
    %12 = arith.mulf %9, %11 : vector<4x32xf32>
    %c1_10 = arith.constant 1 : index
    %c0_11 = arith.constant 0 : index
    %c0_12 = arith.constant 0 : index
    %13 = vector.load %arg2[%c1_10, %c0_11, %c0_12] : memref<9x16x4xf32, #tpu.memory_space<vmem>>, vector<1x16x4xf32>
    %14 = vector.shape_cast %13 : vector<1x16x4xf32> to vector<16x4xf32>
    %cst_13 = arith.constant dense<0.000000e+00> : vector<16x32xf32>
    %15 = tpu.matmul %14, %12, %cst_13 {dimension_numbers = #tpu.dot_dimension_numbers<[1], [0], [0], [1], [0, 0, 1, 1], [], []>} : vector<16x4xf32>, vector<4x32xf32>, vector<16x32xf32> -> vector<16x32xf32>
    %16 = arith.addf %8, %15 : vector<16x32xf32>
    %c0_14 = arith.constant 0 : index
    %c2 = arith.constant 2 : index
    %17 = vector.load %arg1[%c0_14, %c2] : memref<4x42xf32, #tpu.memory_space<vmem>>, vector<4x32xf32>
    %c2_15 = arith.constant 2 : index
    %c0_16 = arith.constant 0 : index
    %18 = vector.load %arg3[%c2_15, %c0_16] : memref<9x32xf32, #tpu.memory_space<vmem>>, vector<1x32xf32>
    %19 = vector.broadcast %18 : vector<1x32xf32> to vector<4x32xf32>
    %20 = arith.mulf %17, %19 : vector<4x32xf32>
    %c2_17 = arith.constant 2 : index
    %c0_18 = arith.constant 0 : index
    %c0_19 = arith.constant 0 : index
    %21 = vector.load %arg2[%c2_17, %c0_18, %c0_19] : memref<9x16x4xf32, #tpu.memory_space<vmem>>, vector<1x16x4xf32>
    %22 = vector.shape_cast %21 : vector<1x16x4xf32> to vector<16x4xf32>
    %cst_20 = arith.constant dense<0.000000e+00> : vector<16x32xf32>
    %23 = tpu.matmul %22, %20, %cst_20 {dimension_numbers = #tpu.dot_dimension_numbers<[1], [0], [0], [1], [0, 0, 1, 1], [], []>} : vector<16x4xf32>, vector<4x32xf32>, vector<16x32xf32> -> vector<16x32xf32>
    %24 = arith.addf %16, %23 : vector<16x32xf32>
    %c0_21 = arith.constant 0 : index
    %c4 = arith.constant 4 : index
    %25 = vector.load %arg1[%c0_21, %c4] : memref<4x42xf32, #tpu.memory_space<vmem>>, vector<4x32xf32>
    %c3 = arith.constant 3 : index
    %c0_22 = arith.constant 0 : index
    %26 = vector.load %arg3[%c3, %c0_22] : memref<9x32xf32, #tpu.memory_space<vmem>>, vector<1x32xf32>
    %27 = vector.broadcast %26 : vector<1x32xf32> to vector<4x32xf32>
    %28 = arith.mulf %25, %27 : vector<4x32xf32>
    %c3_23 = arith.constant 3 : index
    %c0_24 = arith.constant 0 : index
    %c0_25 = arith.constant 0 : index
    %29 = vector.load %arg2[%c3_23, %c0_24, %c0_25] : memref<9x16x4xf32, #tpu.memory_space<vmem>>, vector<1x16x4xf32>
    %30 = vector.shape_cast %29 : vector<1x16x4xf32> to vector<16x4xf32>
    %cst_26 = arith.constant dense<0.000000e+00> : vector<16x32xf32>
    %31 = tpu.matmul %30, %28, %cst_26 {dimension_numbers = #tpu.dot_dimension_numbers<[1], [0], [0], [1], [0, 0, 1, 1], [], []>} : vector<16x4xf32>, vector<4x32xf32>, vector<16x32xf32> -> vector<16x32xf32>
    %32 = arith.addf %24, %31 : vector<16x32xf32>
    %c0_27 = arith.constant 0 : index
    %c5 = arith.constant 5 : index
    %33 = vector.load %arg1[%c0_27, %c5] : memref<4x42xf32, #tpu.memory_space<vmem>>, vector<4x32xf32>
    %c4_28 = arith.constant 4 : index
    %c0_29 = arith.constant 0 : index
    %c0_30 = arith.constant 0 : index
    %34 = vector.load %arg2[%c4_28, %c0_29, %c0_30] : memref<9x16x4xf32, #tpu.memory_space<vmem>>, vector<1x16x4xf32>
    %35 = vector.shape_cast %34 : vector<1x16x4xf32> to vector<16x4xf32>
    %cst_31 = arith.constant dense<0.000000e+00> : vector<16x32xf32>
    %36 = tpu.matmul %35, %33, %cst_31 {dimension_numbers = #tpu.dot_dimension_numbers<[1], [0], [0], [1], [0, 0, 1, 1], [], []>} : vector<16x4xf32>, vector<4x32xf32>, vector<16x32xf32> -> vector<16x32xf32>
    %37 = arith.addf %32, %36 : vector<16x32xf32>
    %c0_32 = arith.constant 0 : index
    %c6 = arith.constant 6 : index
    %38 = vector.load %arg1[%c0_32, %c6] : memref<4x42xf32, #tpu.memory_space<vmem>>, vector<4x32xf32>
    %c5_33 = arith.constant 5 : index
    %c0_34 = arith.constant 0 : index
    %39 = vector.load %arg3[%c5_33, %c0_34] : memref<9x32xf32, #tpu.memory_space<vmem>>, vector<1x32xf32>
    %40 = vector.broadcast %39 : vector<1x32xf32> to vector<4x32xf32>
    %41 = arith.mulf %38, %40 : vector<4x32xf32>
    %c5_35 = arith.constant 5 : index
    %c0_36 = arith.constant 0 : index
    %c0_37 = arith.constant 0 : index
    %42 = vector.load %arg2[%c5_35, %c0_36, %c0_37] : memref<9x16x4xf32, #tpu.memory_space<vmem>>, vector<1x16x4xf32>
    %43 = vector.shape_cast %42 : vector<1x16x4xf32> to vector<16x4xf32>
    %cst_38 = arith.constant dense<0.000000e+00> : vector<16x32xf32>
    %44 = tpu.matmul %43, %41, %cst_38 {dimension_numbers = #tpu.dot_dimension_numbers<[1], [0], [0], [1], [0, 0, 1, 1], [], []>} : vector<16x4xf32>, vector<4x32xf32>, vector<16x32xf32> -> vector<16x32xf32>
    %45 = arith.addf %37, %44 : vector<16x32xf32>
    %c0_39 = arith.constant 0 : index
    %c8 = arith.constant 8 : index
    %46 = vector.load %arg1[%c0_39, %c8] : memref<4x42xf32, #tpu.memory_space<vmem>>, vector<4x32xf32>
    %c6_40 = arith.constant 6 : index
    %c0_41 = arith.constant 0 : index
    %47 = vector.load %arg3[%c6_40, %c0_41] : memref<9x32xf32, #tpu.memory_space<vmem>>, vector<1x32xf32>
    %48 = vector.broadcast %47 : vector<1x32xf32> to vector<4x32xf32>
    %49 = arith.mulf %46, %48 : vector<4x32xf32>
    %c6_42 = arith.constant 6 : index
    %c0_43 = arith.constant 0 : index
    %c0_44 = arith.constant 0 : index
    %50 = vector.load %arg2[%c6_42, %c0_43, %c0_44] : memref<9x16x4xf32, #tpu.memory_space<vmem>>, vector<1x16x4xf32>
    %51 = vector.shape_cast %50 : vector<1x16x4xf32> to vector<16x4xf32>
    %cst_45 = arith.constant dense<0.000000e+00> : vector<16x32xf32>
    %52 = tpu.matmul %51, %49, %cst_45 {dimension_numbers = #tpu.dot_dimension_numbers<[1], [0], [0], [1], [0, 0, 1, 1], [], []>} : vector<16x4xf32>, vector<4x32xf32>, vector<16x32xf32> -> vector<16x32xf32>
    %53 = arith.addf %45, %52 : vector<16x32xf32>
    %c0_46 = arith.constant 0 : index
    %c9 = arith.constant 9 : index
    %54 = vector.load %arg1[%c0_46, %c9] : memref<4x42xf32, #tpu.memory_space<vmem>>, vector<4x32xf32>
    %c7 = arith.constant 7 : index
    %c0_47 = arith.constant 0 : index
    %55 = vector.load %arg3[%c7, %c0_47] : memref<9x32xf32, #tpu.memory_space<vmem>>, vector<1x32xf32>
    %56 = vector.broadcast %55 : vector<1x32xf32> to vector<4x32xf32>
    %57 = arith.mulf %54, %56 : vector<4x32xf32>
    %c7_48 = arith.constant 7 : index
    %c0_49 = arith.constant 0 : index
    %c0_50 = arith.constant 0 : index
    %58 = vector.load %arg2[%c7_48, %c0_49, %c0_50] : memref<9x16x4xf32, #tpu.memory_space<vmem>>, vector<1x16x4xf32>
    %59 = vector.shape_cast %58 : vector<1x16x4xf32> to vector<16x4xf32>
    %cst_51 = arith.constant dense<0.000000e+00> : vector<16x32xf32>
    %60 = tpu.matmul %59, %57, %cst_51 {dimension_numbers = #tpu.dot_dimension_numbers<[1], [0], [0], [1], [0, 0, 1, 1], [], []>} : vector<16x4xf32>, vector<4x32xf32>, vector<16x32xf32> -> vector<16x32xf32>
    %61 = arith.addf %53, %60 : vector<16x32xf32>
    %c0_52 = arith.constant 0 : index
    %c10 = arith.constant 10 : index
    %62 = vector.load %arg1[%c0_52, %c10] : memref<4x42xf32, #tpu.memory_space<vmem>>, vector<4x32xf32>
    %c8_53 = arith.constant 8 : index
    %c0_54 = arith.constant 0 : index
    %63 = vector.load %arg3[%c8_53, %c0_54] : memref<9x32xf32, #tpu.memory_space<vmem>>, vector<1x32xf32>
    %64 = vector.broadcast %63 : vector<1x32xf32> to vector<4x32xf32>
    %65 = arith.mulf %62, %64 : vector<4x32xf32>
    %c8_55 = arith.constant 8 : index
    %c0_56 = arith.constant 0 : index
    %c0_57 = arith.constant 0 : index
    %66 = vector.load %arg2[%c8_55, %c0_56, %c0_57] : memref<9x16x4xf32, #tpu.memory_space<vmem>>, vector<1x16x4xf32>
    %67 = vector.shape_cast %66 : vector<1x16x4xf32> to vector<16x4xf32>
    %cst_58 = arith.constant dense<0.000000e+00> : vector<16x32xf32>
    %68 = tpu.matmul %67, %65, %cst_58 {dimension_numbers = #tpu.dot_dimension_numbers<[1], [0], [0], [1], [0, 0, 1, 1], [], []>} : vector<16x4xf32>, vector<4x32xf32>, vector<16x32xf32> -> vector<16x32xf32>
    %69 = arith.addf %61, %68 : vector<16x32xf32>
    %c0_59 = arith.constant 0 : index
    %c0_60 = arith.constant 0 : index
    %70 = vector.load %arg4[%c0_59, %c0_60] : memref<16x32xf32, #tpu.memory_space<vmem>>, vector<16x32xf32>
    tpu.vector_store %arg4[%c0_59, %c0_60], %69 {strides = array<i32>} : memref<16x32xf32, #tpu.memory_space<vmem>>, vector<16x32xf32>,
    return
  }
  func.func @transform_0(%arg0: i32) -> (i32, i32) {
    %c0_i32 = arith.constant 0 : i32
    %c0_i32_0 = arith.constant 0 : i32
    %c0_i32_1 = arith.constant 0 : i32
    return %c0_i32, %c0_i32_0 : i32, i32
  }
  func.func @transform_1(%arg0: i32) -> (i32, i32, i32) {
    %c0_i32 = arith.constant 0 : i32
    %c0_i32_0 = arith.constant 0 : i32
    %c0_i32_1 = arith.constant 0 : i32
    %c0_i32_2 = arith.constant 0 : i32
    return %c0_i32, %c0_i32_0, %c0_i32_1 : i32, i32, i32
  }
  func.func @transform_2(%arg0: i32) -> (i32, i32) {
    %c0_i32 = arith.constant 0 : i32
    %c0_i32_0 = arith.constant 0 : i32
    %c0_i32_1 = arith.constant 0 : i32
    return %c0_i32, %c0_i32_0 : i32, i32
  }
  func.func @transform_3(%arg0: i32) -> (i32, i32) {
    %c0_i32 = arith.constant 0 : i32
    %c0_i32_0 = arith.constant 0 : i32
    %c0_i32_1 = arith.constant 0 : i32
    return %c0_i32, %c0_i32_0 : i32, i32
  }
}

module attributes {stable_mosaic.version = 11 : i64} {
  func.func @kernel(%arg0: i32, %arg1: memref<4x512xf32, #tpu.memory_space<vmem>>, %arg2: memref<1x4x4xf32, #tpu.memory_space<vmem>>, %arg3: memref<4x512xf32, #tpu.memory_space<vmem>>, %arg4: memref<4x1xf32, #tpu.memory_space<vmem>>, %arg5: memref<4x1xf32, #tpu.memory_space<vmem>>, %arg6: memref<4x1xf32, #tpu.memory_space<vmem>>, %arg7: memref<4x512xf32, #tpu.memory_space<vmem>>) attributes {dimension_semantics = [#tpu.dimension_semantics<arbitrary>], iteration_bounds = array<i64: 1>, scalar_prefetch = 0 : i64, scratch_operands = 0 : i64, tpu.core_type = #tpu.core_type<tc>, window_params = [{pipeline_mode = #tpu.pipeline_mode<synchronous>, transform_indices = @transform_0, window_bounds = array<i64: 4, 512>}, {pipeline_mode = #tpu.pipeline_mode<synchronous>, transform_indices = @transform_1, window_bounds = array<i64: 1, 4, 4>}, {pipeline_mode = #tpu.pipeline_mode<synchronous>, transform_indices = @transform_2, window_bounds = array<i64: 4, 512>}, {pipeline_mode = #tpu.pipeline_mode<synchronous>, transform_indices = @transform_3, window_bounds = array<i64: 4, 1>}, {pipeline_mode = #tpu.pipeline_mode<synchronous>, transform_indices = @transform_4, window_bounds = array<i64: 4, 1>}, {pipeline_mode = #tpu.pipeline_mode<synchronous>, transform_indices = @transform_5, window_bounds = array<i64: 4, 1>}, {pipeline_mode = #tpu.pipeline_mode<synchronous>, transform_indices = @transform_6, window_bounds = array<i64: 4, 512>}]} {
    %cst = arith.constant 0.000000e+00 : f32
    %0 = vector.broadcast %cst : f32 to vector<4x512xf32>
    %c0 = arith.constant 0 : index
    %c0_0 = arith.constant 0 : index
    %1 = vector.load %arg1[%c0, %c0_0] : memref<4x512xf32, #tpu.memory_space<vmem>>, vector<4x512xf32>
    %c0_1 = arith.constant 0 : index
    %c0_2 = arith.constant 0 : index
    %c0_3 = arith.constant 0 : index
    %2 = vector.load %arg2[%c0_1, %c0_2, %c0_3] : memref<1x4x4xf32, #tpu.memory_space<vmem>>, vector<1x4x4xf32>
    %3 = vector.shape_cast %2 : vector<1x4x4xf32> to vector<4x4xf32>
    %cst_4 = arith.constant dense<0.000000e+00> : vector<4x512xf32>
    %4 = tpu.matmul %3, %1, %cst_4 {dimension_numbers = #tpu.dot_dimension_numbers<[1], [0], [0], [1], [0, 0, 1, 1], [], []>} : vector<4x4xf32>, vector<4x512xf32>, vector<4x512xf32> -> vector<4x512xf32>
    %5 = arith.addf %0, %4 : vector<4x512xf32>
    %c0_5 = arith.constant 0 : index
    %c0_6 = arith.constant 0 : index
    %6 = vector.load %arg3[%c0_5, %c0_6] : memref<4x512xf32, #tpu.memory_space<vmem>>, vector<4x512xf32>
    %7 = arith.addf %5, %6 : vector<4x512xf32>
    %cst_7 = arith.constant dense<0.000000e+00> : vector<4xf32>
    %8 = vector.multi_reduction <add>, %7, %cst_7 [1] : vector<4x512xf32> to vector<4xf32>
    %9 = vector.shape_cast %8 : vector<4xf32> to vector<4x1xf32>
    %cst_8 = arith.constant 0.001953125 : f32
    %10 = vector.broadcast %cst_8 : f32 to vector<4x1xf32>
    %11 = arith.mulf %9, %10 : vector<4x1xf32>
    %12 = vector.broadcast %11 : vector<4x1xf32> to vector<4x512xf32>
    %13 = arith.subf %7, %12 : vector<4x512xf32>
    %14 = arith.mulf %13, %13 : vector<4x512xf32>
    %cst_9 = arith.constant dense<0.000000e+00> : vector<4xf32>
    %15 = vector.multi_reduction <add>, %14, %cst_9 [1] : vector<4x512xf32> to vector<4xf32>
    %16 = vector.shape_cast %15 : vector<4xf32> to vector<4x1xf32>
    %cst_10 = arith.constant 0.001953125 : f32
    %17 = vector.broadcast %cst_10 : f32 to vector<4x1xf32>
    %18 = arith.mulf %16, %17 : vector<4x1xf32>
    %cst_11 = arith.constant 9.99999974E-6 : f32
    %19 = vector.broadcast %cst_11 : f32 to vector<4x1xf32>
    %20 = arith.addf %18, %19 : vector<4x1xf32>
    %21 = math.rsqrt %20 : vector<4x1xf32>
    %22 = vector.broadcast %21 : vector<4x1xf32> to vector<4x512xf32>
    %23 = arith.mulf %13, %22 : vector<4x512xf32>
    %c0_12 = arith.constant 0 : index
    %c0_13 = arith.constant 0 : index
    %24 = vector.load %arg4[%c0_12, %c0_13] : memref<4x1xf32, #tpu.memory_space<vmem>>, vector<4x1xf32>
    %25 = vector.broadcast %24 : vector<4x1xf32> to vector<4x512xf32>
    %26 = arith.mulf %23, %25 : vector<4x512xf32>
    %c0_14 = arith.constant 0 : index
    %c0_15 = arith.constant 0 : index
    %27 = vector.load %arg5[%c0_14, %c0_15] : memref<4x1xf32, #tpu.memory_space<vmem>>, vector<4x1xf32>
    %28 = vector.broadcast %27 : vector<4x1xf32> to vector<4x512xf32>
    %29 = arith.addf %26, %28 : vector<4x512xf32>
    %cst_16 = arith.constant 0.000000e+00 : f32
    %30 = vector.broadcast %cst_16 : f32 to vector<4x512xf32>
    %31 = arith.cmpf oge, %29, %30 : vector<4x512xf32>
    %c0_17 = arith.constant 0 : index
    %c0_18 = arith.constant 0 : index
    %32 = vector.load %arg6[%c0_17, %c0_18] : memref<4x1xf32, #tpu.memory_space<vmem>>, vector<4x1xf32>
    %33 = vector.broadcast %32 : vector<4x1xf32> to vector<4x512xf32>
    %34 = arith.mulf %33, %29 : vector<4x512xf32>
    %35 = arith.select %31, %29, %34 : vector<4x512xi1>, vector<4x512xf32>
    %c0_19 = arith.constant 0 : index
    %c0_20 = arith.constant 0 : index
    %36 = vector.load %arg7[%c0_19, %c0_20] : memref<4x512xf32, #tpu.memory_space<vmem>>, vector<4x512xf32>
    tpu.vector_store %arg7[%c0_19, %c0_20], %35 {strides = array<i32>} : memref<4x512xf32, #tpu.memory_space<vmem>>, vector<4x512xf32>,
    return
  }
  func.func @transform_0(%arg0: i32) -> (i32, i32) {
    %c0_i32 = arith.constant 0 : i32
    %c0_i32_0 = arith.constant 0 : i32
    %c0_i32_1 = arith.constant 0 : i32
    return %c0_i32, %c0_i32_0 : i32, i32
  }
  func.func @transform_1(%arg0: i32) -> (i32, i32, i32) {
    %c0_i32 = arith.constant 0 : i32
    %c0_i32_0 = arith.constant 0 : i32
    %c0_i32_1 = arith.constant 0 : i32
    %c0_i32_2 = arith.constant 0 : i32
    return %c0_i32, %c0_i32_0, %c0_i32_1 : i32, i32, i32
  }
  func.func @transform_2(%arg0: i32) -> (i32, i32) {
    %c0_i32 = arith.constant 0 : i32
    %c0_i32_0 = arith.constant 0 : i32
    %c0_i32_1 = arith.constant 0 : i32
    return %c0_i32, %c0_i32_0 : i32, i32
  }
  func.func @transform_3(%arg0: i32) -> (i32, i32) {
    %c0_i32 = arith.constant 0 : i32
    %c0_i32_0 = arith.constant 0 : i32
    %c0_i32_1 = arith.constant 0 : i32
    return %c0_i32, %c0_i32_0 : i32, i32
  }
  func.func @transform_4(%arg0: i32) -> (i32, i32) {
    %c0_i32 = arith.constant 0 : i32
    %c0_i32_0 = arith.constant 0 : i32
    %c0_i32_1 = arith.constant 0 : i32
    return %c0_i32, %c0_i32_0 : i32, i32
  }
  func.func @transform_5(%arg0: i32) -> (i32, i32) {
    %c0_i32 = arith.constant 0 : i32
    %c0_i32_0 = arith.constant 0 : i32
    %c0_i32_1 = arith.constant 0 : i32
    return %c0_i32, %c0_i32_0 : i32, i32
  }
  func.func @transform_6(%arg0: i32) -> (i32, i32) {
    %c0_i32 = arith.constant 0 : i32
    %c0_i32_0 = arith.constant 0 : i32
    %c0_i32_1 = arith.constant 0 : i32
    return %c0_i32, %c0_i32_0 : i32, i32
  }
}

module attributes {stable_mosaic.version = 11 : i64} {
  func.func @kernel(%arg0: i32, %arg1: memref<8x146xf32, #tpu.memory_space<vmem>>, %arg2: memref<8x9xf32, #tpu.memory_space<vmem>>, %arg3: memref<9x128xf32, #tpu.memory_space<vmem>>, %arg4: memref<8x1xf32, #tpu.memory_space<vmem>>, %arg5: memref<8x1xf32, #tpu.memory_space<vmem>>, %arg6: memref<8x1xf32, #tpu.memory_space<vmem>>, %arg7: memref<8x128xf32, #tpu.memory_space<vmem>>) attributes {dimension_semantics = [#tpu.dimension_semantics<arbitrary>], iteration_bounds = array<i64: 1>, scalar_prefetch = 0 : i64, scratch_operands = 0 : i64, tpu.core_type = #tpu.core_type<tc>, window_params = [{pipeline_mode = #tpu.pipeline_mode<synchronous>, transform_indices = @transform_0, window_bounds = array<i64: 8, 146>}, {pipeline_mode = #tpu.pipeline_mode<synchronous>, transform_indices = @transform_1, window_bounds = array<i64: 8, 9>}, {pipeline_mode = #tpu.pipeline_mode<synchronous>, transform_indices = @transform_2, window_bounds = array<i64: 9, 128>}, {pipeline_mode = #tpu.pipeline_mode<synchronous>, transform_indices = @transform_3, window_bounds = array<i64: 8, 1>}, {pipeline_mode = #tpu.pipeline_mode<synchronous>, transform_indices = @transform_4, window_bounds = array<i64: 8, 1>}, {pipeline_mode = #tpu.pipeline_mode<synchronous>, transform_indices = @transform_5, window_bounds = array<i64: 8, 1>}, {pipeline_mode = #tpu.pipeline_mode<synchronous>, transform_indices = @transform_6, window_bounds = array<i64: 8, 128>}]} {
    %cst = arith.constant 0.000000e+00 : f32
    %0 = vector.broadcast %cst : f32 to vector<8x128xf32>
    %c0 = arith.constant 0 : index
    %c0_0 = arith.constant 0 : index
    %1 = vector.load %arg1[%c0, %c0_0] : memref<8x146xf32, #tpu.memory_space<vmem>>, vector<8x128xf32>
    %c0_1 = arith.constant 0 : index
    %c0_2 = arith.constant 0 : index
    %2 = vector.load %arg3[%c0_1, %c0_2] : memref<9x128xf32, #tpu.memory_space<vmem>>, vector<1x128xf32>
    %3 = vector.broadcast %2 : vector<1x128xf32> to vector<8x128xf32>
    %4 = arith.mulf %1, %3 : vector<8x128xf32>
    %c0_3 = arith.constant 0 : index
    %c0_4 = arith.constant 0 : index
    %5 = vector.load %arg2[%c0_3, %c0_4] : memref<8x9xf32, #tpu.memory_space<vmem>>, vector<8x1xf32>
    %6 = vector.broadcast %5 : vector<8x1xf32> to vector<8x128xf32>
    %7 = arith.mulf %4, %6 : vector<8x128xf32>
    %8 = arith.addf %0, %7 : vector<8x128xf32>
    %c0_5 = arith.constant 0 : index
    %c1 = arith.constant 1 : index
    %9 = vector.load %arg1[%c0_5, %c1] : memref<8x146xf32, #tpu.memory_space<vmem>>, vector<8x128xf32>
    %c1_6 = arith.constant 1 : index
    %c0_7 = arith.constant 0 : index
    %10 = vector.load %arg3[%c1_6, %c0_7] : memref<9x128xf32, #tpu.memory_space<vmem>>, vector<1x128xf32>
    %11 = vector.broadcast %10 : vector<1x128xf32> to vector<8x128xf32>
    %12 = arith.mulf %9, %11 : vector<8x128xf32>
    %c0_8 = arith.constant 0 : index
    %c1_9 = arith.constant 1 : index
    %13 = vector.load %arg2[%c0_8, %c1_9] : memref<8x9xf32, #tpu.memory_space<vmem>>, vector<8x1xf32>
    %14 = vector.broadcast %13 : vector<8x1xf32> to vector<8x128xf32>
    %15 = arith.mulf %12, %14 : vector<8x128xf32>
    %16 = arith.addf %8, %15 : vector<8x128xf32>
    %c0_10 = arith.constant 0 : index
    %c2 = arith.constant 2 : index
    %17 = vector.load %arg1[%c0_10, %c2] : memref<8x146xf32, #tpu.memory_space<vmem>>, vector<8x128xf32>
    %c2_11 = arith.constant 2 : index
    %c0_12 = arith.constant 0 : index
    %18 = vector.load %arg3[%c2_11, %c0_12] : memref<9x128xf32, #tpu.memory_space<vmem>>, vector<1x128xf32>
    %19 = vector.broadcast %18 : vector<1x128xf32> to vector<8x128xf32>
    %20 = arith.mulf %17, %19 : vector<8x128xf32>
    %c0_13 = arith.constant 0 : index
    %c2_14 = arith.constant 2 : index
    %21 = vector.load %arg2[%c0_13, %c2_14] : memref<8x9xf32, #tpu.memory_space<vmem>>, vector<8x1xf32>
    %22 = vector.broadcast %21 : vector<8x1xf32> to vector<8x128xf32>
    %23 = arith.mulf %20, %22 : vector<8x128xf32>
    %24 = arith.addf %16, %23 : vector<8x128xf32>
    %c0_15 = arith.constant 0 : index
    %c8 = arith.constant 8 : index
    %25 = vector.load %arg1[%c0_15, %c8] : memref<8x146xf32, #tpu.memory_space<vmem>>, vector<8x128xf32>
    %c3 = arith.constant 3 : index
    %c0_16 = arith.constant 0 : index
    %26 = vector.load %arg3[%c3, %c0_16] : memref<9x128xf32, #tpu.memory_space<vmem>>, vector<1x128xf32>
    %27 = vector.broadcast %26 : vector<1x128xf32> to vector<8x128xf32>
    %28 = arith.mulf %25, %27 : vector<8x128xf32>
    %c0_17 = arith.constant 0 : index
    %c3_18 = arith.constant 3 : index
    %29 = vector.load %arg2[%c0_17, %c3_18] : memref<8x9xf32, #tpu.memory_space<vmem>>, vector<8x1xf32>
    %30 = vector.broadcast %29 : vector<8x1xf32> to vector<8x128xf32>
    %31 = arith.mulf %28, %30 : vector<8x128xf32>
    %32 = arith.addf %24, %31 : vector<8x128xf32>
    %c0_19 = arith.constant 0 : index
    %c9 = arith.constant 9 : index
    %33 = vector.load %arg1[%c0_19, %c9] : memref<8x146xf32, #tpu.memory_space<vmem>>, vector<8x128xf32>
    %c0_20 = arith.constant 0 : index
    %c4 = arith.constant 4 : index
    %34 = vector.load %arg2[%c0_20, %c4] : memref<8x9xf32, #tpu.memory_space<vmem>>, vector<8x1xf32>
    %35 = vector.broadcast %34 : vector<8x1xf32> to vector<8x128xf32>
    %36 = arith.mulf %33, %35 : vector<8x128xf32>
    %37 = arith.addf %32, %36 : vector<8x128xf32>
    %c0_21 = arith.constant 0 : index
    %c10 = arith.constant 10 : index
    %38 = vector.load %arg1[%c0_21, %c10] : memref<8x146xf32, #tpu.memory_space<vmem>>, vector<8x128xf32>
    %c5 = arith.constant 5 : index
    %c0_22 = arith.constant 0 : index
    %39 = vector.load %arg3[%c5, %c0_22] : memref<9x128xf32, #tpu.memory_space<vmem>>, vector<1x128xf32>
    %40 = vector.broadcast %39 : vector<1x128xf32> to vector<8x128xf32>
    %41 = arith.mulf %38, %40 : vector<8x128xf32>
    %c0_23 = arith.constant 0 : index
    %c5_24 = arith.constant 5 : index
    %42 = vector.load %arg2[%c0_23, %c5_24] : memref<8x9xf32, #tpu.memory_space<vmem>>, vector<8x1xf32>
    %43 = vector.broadcast %42 : vector<8x1xf32> to vector<8x128xf32>
    %44 = arith.mulf %41, %43 : vector<8x128xf32>
    %45 = arith.addf %37, %44 : vector<8x128xf32>
    %c0_25 = arith.constant 0 : index
    %c16 = arith.constant 16 : index
    %46 = vector.load %arg1[%c0_25, %c16] : memref<8x146xf32, #tpu.memory_space<vmem>>, vector<8x128xf32>
    %c6 = arith.constant 6 : index
    %c0_26 = arith.constant 0 : index
    %47 = vector.load %arg3[%c6, %c0_26] : memref<9x128xf32, #tpu.memory_space<vmem>>, vector<1x128xf32>
    %48 = vector.broadcast %47 : vector<1x128xf32> to vector<8x128xf32>
    %49 = arith.mulf %46, %48 : vector<8x128xf32>
    %c0_27 = arith.constant 0 : index
    %c6_28 = arith.constant 6 : index
    %50 = vector.load %arg2[%c0_27, %c6_28] : memref<8x9xf32, #tpu.memory_space<vmem>>, vector<8x1xf32>
    %51 = vector.broadcast %50 : vector<8x1xf32> to vector<8x128xf32>
    %52 = arith.mulf %49, %51 : vector<8x128xf32>
    %53 = arith.addf %45, %52 : vector<8x128xf32>
    %c0_29 = arith.constant 0 : index
    %c17 = arith.constant 17 : index
    %54 = vector.load %arg1[%c0_29, %c17] : memref<8x146xf32, #tpu.memory_space<vmem>>, vector<8x128xf32>
    %c7 = arith.constant 7 : index
    %c0_30 = arith.constant 0 : index
    %55 = vector.load %arg3[%c7, %c0_30] : memref<9x128xf32, #tpu.memory_space<vmem>>, vector<1x128xf32>
    %56 = vector.broadcast %55 : vector<1x128xf32> to vector<8x128xf32>
    %57 = arith.mulf %54, %56 : vector<8x128xf32>
    %c0_31 = arith.constant 0 : index
    %c7_32 = arith.constant 7 : index
    %58 = vector.load %arg2[%c0_31, %c7_32] : memref<8x9xf32, #tpu.memory_space<vmem>>, vector<8x1xf32>
    %59 = vector.broadcast %58 : vector<8x1xf32> to vector<8x128xf32>
    %60 = arith.mulf %57, %59 : vector<8x128xf32>
    %61 = arith.addf %53, %60 : vector<8x128xf32>
    %c0_33 = arith.constant 0 : index
    %c18 = arith.constant 18 : index
    %62 = vector.load %arg1[%c0_33, %c18] : memref<8x146xf32, #tpu.memory_space<vmem>>, vector<8x128xf32>
    %c8_34 = arith.constant 8 : index
    %c0_35 = arith.constant 0 : index
    %63 = vector.load %arg3[%c8_34, %c0_35] : memref<9x128xf32, #tpu.memory_space<vmem>>, vector<1x128xf32>
    %64 = vector.broadcast %63 : vector<1x128xf32> to vector<8x128xf32>
    %65 = arith.mulf %62, %64 : vector<8x128xf32>
    %c0_36 = arith.constant 0 : index
    %c8_37 = arith.constant 8 : index
    %66 = vector.load %arg2[%c0_36, %c8_37] : memref<8x9xf32, #tpu.memory_space<vmem>>, vector<8x1xf32>
    %67 = vector.broadcast %66 : vector<8x1xf32> to vector<8x128xf32>
    %68 = arith.mulf %65, %67 : vector<8x128xf32>
    %69 = arith.addf %61, %68 : vector<8x128xf32>
    %cst_38 = arith.constant dense<0.000000e+00> : vector<8xf32>
    %70 = vector.multi_reduction <add>, %69, %cst_38 [1] : vector<8x128xf32> to vector<8xf32>
    %71 = vector.shape_cast %70 : vector<8xf32> to vector<8x1xf32>
    %cst_39 = arith.constant 7.812500e-03 : f32
    %72 = vector.broadcast %cst_39 : f32 to vector<8x1xf32>
    %73 = arith.mulf %71, %72 : vector<8x1xf32>
    %74 = vector.broadcast %73 : vector<8x1xf32> to vector<8x128xf32>
    %75 = arith.subf %69, %74 : vector<8x128xf32>
    %76 = arith.mulf %75, %75 : vector<8x128xf32>
    %cst_40 = arith.constant dense<0.000000e+00> : vector<8xf32>
    %77 = vector.multi_reduction <add>, %76, %cst_40 [1] : vector<8x128xf32> to vector<8xf32>
    %78 = vector.shape_cast %77 : vector<8xf32> to vector<8x1xf32>
    %cst_41 = arith.constant 7.812500e-03 : f32
    %79 = vector.broadcast %cst_41 : f32 to vector<8x1xf32>
    %80 = arith.mulf %78, %79 : vector<8x1xf32>
    %cst_42 = arith.constant 9.99999974E-6 : f32
    %81 = vector.broadcast %cst_42 : f32 to vector<8x1xf32>
    %82 = arith.addf %80, %81 : vector<8x1xf32>
    %83 = math.rsqrt %82 : vector<8x1xf32>
    %84 = vector.broadcast %83 : vector<8x1xf32> to vector<8x128xf32>
    %85 = arith.mulf %75, %84 : vector<8x128xf32>
    %c0_43 = arith.constant 0 : index
    %c0_44 = arith.constant 0 : index
    %86 = vector.load %arg4[%c0_43, %c0_44] : memref<8x1xf32, #tpu.memory_space<vmem>>, vector<8x1xf32>
    %87 = vector.broadcast %86 : vector<8x1xf32> to vector<8x128xf32>
    %88 = arith.mulf %85, %87 : vector<8x128xf32>
    %c0_45 = arith.constant 0 : index
    %c0_46 = arith.constant 0 : index
    %89 = vector.load %arg5[%c0_45, %c0_46] : memref<8x1xf32, #tpu.memory_space<vmem>>, vector<8x1xf32>
    %90 = vector.broadcast %89 : vector<8x1xf32> to vector<8x128xf32>
    %91 = arith.addf %88, %90 : vector<8x128xf32>
    %cst_47 = arith.constant 0.000000e+00 : f32
    %92 = vector.broadcast %cst_47 : f32 to vector<8x128xf32>
    %93 = arith.cmpf oge, %91, %92 : vector<8x128xf32>
    %c0_48 = arith.constant 0 : index
    %c0_49 = arith.constant 0 : index
    %94 = vector.load %arg6[%c0_48, %c0_49] : memref<8x1xf32, #tpu.memory_space<vmem>>, vector<8x1xf32>
    %95 = vector.broadcast %94 : vector<8x1xf32> to vector<8x128xf32>
    %96 = arith.mulf %95, %91 : vector<8x128xf32>
    %97 = arith.select %93, %91, %96 : vector<8x128xi1>, vector<8x128xf32>
    %c0_50 = arith.constant 0 : index
    %c0_51 = arith.constant 0 : index
    %98 = vector.load %arg7[%c0_50, %c0_51] : memref<8x128xf32, #tpu.memory_space<vmem>>, vector<8x128xf32>
    tpu.vector_store %arg7[%c0_50, %c0_51], %97 {strides = array<i32>} : memref<8x128xf32, #tpu.memory_space<vmem>>, vector<8x128xf32>,
    return
  }
  func.func @transform_0(%arg0: i32) -> (i32, i32) {
    %c0_i32 = arith.constant 0 : i32
    %c0_i32_0 = arith.constant 0 : i32
    %c0_i32_1 = arith.constant 0 : i32
    return %c0_i32, %c0_i32_0 : i32, i32
  }
  func.func @transform_1(%arg0: i32) -> (i32, i32) {
    %c0_i32 = arith.constant 0 : i32
    %c0_i32_0 = arith.constant 0 : i32
    %c0_i32_1 = arith.constant 0 : i32
    return %c0_i32, %c0_i32_0 : i32, i32
  }
  func.func @transform_2(%arg0: i32) -> (i32, i32) {
    %c0_i32 = arith.constant 0 : i32
    %c0_i32_0 = arith.constant 0 : i32
    %c0_i32_1 = arith.constant 0 : i32
    return %c0_i32, %c0_i32_0 : i32, i32
  }
  func.func @transform_3(%arg0: i32) -> (i32, i32) {
    %c0_i32 = arith.constant 0 : i32
    %c0_i32_0 = arith.constant 0 : i32
    %c0_i32_1 = arith.constant 0 : i32
    return %c0_i32, %c0_i32_0 : i32, i32
  }
  func.func @transform_4(%arg0: i32) -> (i32, i32) {
    %c0_i32 = arith.constant 0 : i32
    %c0_i32_0 = arith.constant 0 : i32
    %c0_i32_1 = arith.constant 0 : i32
    return %c0_i32, %c0_i32_0 : i32, i32
  }
  func.func @transform_5(%arg0: i32) -> (i32, i32) {
    %c0_i32 = arith.constant 0 : i32
    %c0_i32_0 = arith.constant 0 : i32
    %c0_i32_1 = arith.constant 0 : i32
    return %c0_i32, %c0_i32_0 : i32, i32
  }
  func.func @transform_6(%arg0: i32) -> (i32, i32) {
    %c0_i32 = arith.constant 0 : i32
    %c0_i32_0 = arith.constant 0 : i32
    %c0_i32_1 = arith.constant 0 : i32
    return %c0_i32, %c0_i32_0 : i32, i32
  }
}

module attributes {stable_mosaic.version = 11 : i64} {
  func.func @kernel(%arg0: i32, %arg1: memref<4x146xf32, #tpu.memory_space<vmem>>, %arg2: memref<9x8x4xf32, #tpu.memory_space<vmem>>, %arg3: memref<9x128xf32, #tpu.memory_space<vmem>>, %arg4: memref<8x128xf32, #tpu.memory_space<vmem>>, %arg5: memref<8x1xf32, #tpu.memory_space<vmem>>, %arg6: memref<8x1xf32, #tpu.memory_space<vmem>>, %arg7: memref<8x1xf32, #tpu.memory_space<vmem>>, %arg8: memref<8x128xf32, #tpu.memory_space<vmem>>) attributes {dimension_semantics = [#tpu.dimension_semantics<arbitrary>], iteration_bounds = array<i64: 1>, scalar_prefetch = 0 : i64, scratch_operands = 0 : i64, tpu.core_type = #tpu.core_type<tc>, window_params = [{pipeline_mode = #tpu.pipeline_mode<synchronous>, transform_indices = @transform_0, window_bounds = array<i64: 4, 146>}, {pipeline_mode = #tpu.pipeline_mode<synchronous>, transform_indices = @transform_1, window_bounds = array<i64: 9, 8, 4>}, {pipeline_mode = #tpu.pipeline_mode<synchronous>, transform_indices = @transform_2, window_bounds = array<i64: 9, 128>}, {pipeline_mode = #tpu.pipeline_mode<synchronous>, transform_indices = @transform_3, window_bounds = array<i64: 8, 128>}, {pipeline_mode = #tpu.pipeline_mode<synchronous>, transform_indices = @transform_4, window_bounds = array<i64: 8, 1>}, {pipeline_mode = #tpu.pipeline_mode<synchronous>, transform_indices = @transform_5, window_bounds = array<i64: 8, 1>}, {pipeline_mode = #tpu.pipeline_mode<synchronous>, transform_indices = @transform_6, window_bounds = array<i64: 8, 1>}, {pipeline_mode = #tpu.pipeline_mode<synchronous>, transform_indices = @transform_7, window_bounds = array<i64: 8, 128>}]} {
    %cst = arith.constant 0.000000e+00 : f32
    %0 = vector.broadcast %cst : f32 to vector<8x128xf32>
    %c0 = arith.constant 0 : index
    %c0_0 = arith.constant 0 : index
    %1 = vector.load %arg1[%c0, %c0_0] : memref<4x146xf32, #tpu.memory_space<vmem>>, vector<4x128xf32>
    %c0_1 = arith.constant 0 : index
    %c0_2 = arith.constant 0 : index
    %2 = vector.load %arg3[%c0_1, %c0_2] : memref<9x128xf32, #tpu.memory_space<vmem>>, vector<1x128xf32>
    %3 = vector.broadcast %2 : vector<1x128xf32> to vector<4x128xf32>
    %4 = arith.mulf %1, %3 : vector<4x128xf32>
    %c0_3 = arith.constant 0 : index
    %c0_4 = arith.constant 0 : index
    %c0_5 = arith.constant 0 : index
    %5 = vector.load %arg2[%c0_3, %c0_4, %c0_5] : memref<9x8x4xf32, #tpu.memory_space<vmem>>, vector<1x8x4xf32>
    %6 = vector.shape_cast %5 : vector<1x8x4xf32> to vector<8x4xf32>
    %cst_6 = arith.constant dense<0.000000e+00> : vector<8x128xf32>
    %7 = tpu.matmul %6, %4, %cst_6 {dimension_numbers = #tpu.dot_dimension_numbers<[1], [0], [0], [1], [0, 0, 1, 1], [], []>} : vector<8x4xf32>, vector<4x128xf32>, vector<8x128xf32> -> vector<8x128xf32>
    %8 = arith.addf %0, %7 : vector<8x128xf32>
    %c0_7 = arith.constant 0 : index
    %c1 = arith.constant 1 : index
    %9 = vector.load %arg1[%c0_7, %c1] : memref<4x146xf32, #tpu.memory_space<vmem>>, vector<4x128xf32>
    %c1_8 = arith.constant 1 : index
    %c0_9 = arith.constant 0 : index
    %10 = vector.load %arg3[%c1_8, %c0_9] : memref<9x128xf32, #tpu.memory_space<vmem>>, vector<1x128xf32>
    %11 = vector.broadcast %10 : vector<1x128xf32> to vector<4x128xf32>
    %12 = arith.mulf %9, %11 : vector<4x128xf32>
    %c1_10 = arith.constant 1 : index
    %c0_11 = arith.constant 0 : index
    %c0_12 = arith.constant 0 : index
    %13 = vector.load %arg2[%c1_10, %c0_11, %c0_12] : memref<9x8x4xf32, #tpu.memory_space<vmem>>, vector<1x8x4xf32>
    %14 = vector.shape_cast %13 : vector<1x8x4xf32> to vector<8x4xf32>
    %cst_13 = arith.constant dense<0.000000e+00> : vector<8x128xf32>
    %15 = tpu.matmul %14, %12, %cst_13 {dimension_numbers = #tpu.dot_dimension_numbers<[1], [0], [0], [1], [0, 0, 1, 1], [], []>} : vector<8x4xf32>, vector<4x128xf32>, vector<8x128xf32> -> vector<8x128xf32>
    %16 = arith.addf %8, %15 : vector<8x128xf32>
    %c0_14 = arith.constant 0 : index
    %c2 = arith.constant 2 : index
    %17 = vector.load %arg1[%c0_14, %c2] : memref<4x146xf32, #tpu.memory_space<vmem>>, vector<4x128xf32>
    %c2_15 = arith.constant 2 : index
    %c0_16 = arith.constant 0 : index
    %18 = vector.load %arg3[%c2_15, %c0_16] : memref<9x128xf32, #tpu.memory_space<vmem>>, vector<1x128xf32>
    %19 = vector.broadcast %18 : vector<1x128xf32> to vector<4x128xf32>
    %20 = arith.mulf %17, %19 : vector<4x128xf32>
    %c2_17 = arith.constant 2 : index
    %c0_18 = arith.constant 0 : index
    %c0_19 = arith.constant 0 : index
    %21 = vector.load %arg2[%c2_17, %c0_18, %c0_19] : memref<9x8x4xf32, #tpu.memory_space<vmem>>, vector<1x8x4xf32>
    %22 = vector.shape_cast %21 : vector<1x8x4xf32> to vector<8x4xf32>
    %cst_20 = arith.constant dense<0.000000e+00> : vector<8x128xf32>
    %23 = tpu.matmul %22, %20, %cst_20 {dimension_numbers = #tpu.dot_dimension_numbers<[1], [0], [0], [1], [0, 0, 1, 1], [], []>} : vector<8x4xf32>, vector<4x128xf32>, vector<8x128xf32> -> vector<8x128xf32>
    %24 = arith.addf %16, %23 : vector<8x128xf32>
    %c0_21 = arith.constant 0 : index
    %c8 = arith.constant 8 : index
    %25 = vector.load %arg1[%c0_21, %c8] : memref<4x146xf32, #tpu.memory_space<vmem>>, vector<4x128xf32>
    %c3 = arith.constant 3 : index
    %c0_22 = arith.constant 0 : index
    %26 = vector.load %arg3[%c3, %c0_22] : memref<9x128xf32, #tpu.memory_space<vmem>>, vector<1x128xf32>
    %27 = vector.broadcast %26 : vector<1x128xf32> to vector<4x128xf32>
    %28 = arith.mulf %25, %27 : vector<4x128xf32>
    %c3_23 = arith.constant 3 : index
    %c0_24 = arith.constant 0 : index
    %c0_25 = arith.constant 0 : index
    %29 = vector.load %arg2[%c3_23, %c0_24, %c0_25] : memref<9x8x4xf32, #tpu.memory_space<vmem>>, vector<1x8x4xf32>
    %30 = vector.shape_cast %29 : vector<1x8x4xf32> to vector<8x4xf32>
    %cst_26 = arith.constant dense<0.000000e+00> : vector<8x128xf32>
    %31 = tpu.matmul %30, %28, %cst_26 {dimension_numbers = #tpu.dot_dimension_numbers<[1], [0], [0], [1], [0, 0, 1, 1], [], []>} : vector<8x4xf32>, vector<4x128xf32>, vector<8x128xf32> -> vector<8x128xf32>
    %32 = arith.addf %24, %31 : vector<8x128xf32>
    %c0_27 = arith.constant 0 : index
    %c9 = arith.constant 9 : index
    %33 = vector.load %arg1[%c0_27, %c9] : memref<4x146xf32, #tpu.memory_space<vmem>>, vector<4x128xf32>
    %c4 = arith.constant 4 : index
    %c0_28 = arith.constant 0 : index
    %c0_29 = arith.constant 0 : index
    %34 = vector.load %arg2[%c4, %c0_28, %c0_29] : memref<9x8x4xf32, #tpu.memory_space<vmem>>, vector<1x8x4xf32>
    %35 = vector.shape_cast %34 : vector<1x8x4xf32> to vector<8x4xf32>
    %cst_30 = arith.constant dense<0.000000e+00> : vector<8x128xf32>
    %36 = tpu.matmul %35, %33, %cst_30 {dimension_numbers = #tpu.dot_dimension_numbers<[1], [0], [0], [1], [0, 0, 1, 1], [], []>} : vector<8x4xf32>, vector<4x128xf32>, vector<8x128xf32> -> vector<8x128xf32>
    %37 = arith.addf %32, %36 : vector<8x128xf32>
    %c0_31 = arith.constant 0 : index
    %c10 = arith.constant 10 : index
    %38 = vector.load %arg1[%c0_31, %c10] : memref<4x146xf32, #tpu.memory_space<vmem>>, vector<4x128xf32>
    %c5 = arith.constant 5 : index
    %c0_32 = arith.constant 0 : index
    %39 = vector.load %arg3[%c5, %c0_32] : memref<9x128xf32, #tpu.memory_space<vmem>>, vector<1x128xf32>
    %40 = vector.broadcast %39 : vector<1x128xf32> to vector<4x128xf32>
    %41 = arith.mulf %38, %40 : vector<4x128xf32>
    %c5_33 = arith.constant 5 : index
    %c0_34 = arith.constant 0 : index
    %c0_35 = arith.constant 0 : index
    %42 = vector.load %arg2[%c5_33, %c0_34, %c0_35] : memref<9x8x4xf32, #tpu.memory_space<vmem>>, vector<1x8x4xf32>
    %43 = vector.shape_cast %42 : vector<1x8x4xf32> to vector<8x4xf32>
    %cst_36 = arith.constant dense<0.000000e+00> : vector<8x128xf32>
    %44 = tpu.matmul %43, %41, %cst_36 {dimension_numbers = #tpu.dot_dimension_numbers<[1], [0], [0], [1], [0, 0, 1, 1], [], []>} : vector<8x4xf32>, vector<4x128xf32>, vector<8x128xf32> -> vector<8x128xf32>
    %45 = arith.addf %37, %44 : vector<8x128xf32>
    %c0_37 = arith.constant 0 : index
    %c16 = arith.constant 16 : index
    %46 = vector.load %arg1[%c0_37, %c16] : memref<4x146xf32, #tpu.memory_space<vmem>>, vector<4x128xf32>
    %c6 = arith.constant 6 : index
    %c0_38 = arith.constant 0 : index
    %47 = vector.load %arg3[%c6, %c0_38] : memref<9x128xf32, #tpu.memory_space<vmem>>, vector<1x128xf32>
    %48 = vector.broadcast %47 : vector<1x128xf32> to vector<4x128xf32>
    %49 = arith.mulf %46, %48 : vector<4x128xf32>
    %c6_39 = arith.constant 6 : index
    %c0_40 = arith.constant 0 : index
    %c0_41 = arith.constant 0 : index
    %50 = vector.load %arg2[%c6_39, %c0_40, %c0_41] : memref<9x8x4xf32, #tpu.memory_space<vmem>>, vector<1x8x4xf32>
    %51 = vector.shape_cast %50 : vector<1x8x4xf32> to vector<8x4xf32>
    %cst_42 = arith.constant dense<0.000000e+00> : vector<8x128xf32>
    %52 = tpu.matmul %51, %49, %cst_42 {dimension_numbers = #tpu.dot_dimension_numbers<[1], [0], [0], [1], [0, 0, 1, 1], [], []>} : vector<8x4xf32>, vector<4x128xf32>, vector<8x128xf32> -> vector<8x128xf32>
    %53 = arith.addf %45, %52 : vector<8x128xf32>
    %c0_43 = arith.constant 0 : index
    %c17 = arith.constant 17 : index
    %54 = vector.load %arg1[%c0_43, %c17] : memref<4x146xf32, #tpu.memory_space<vmem>>, vector<4x128xf32>
    %c7 = arith.constant 7 : index
    %c0_44 = arith.constant 0 : index
    %55 = vector.load %arg3[%c7, %c0_44] : memref<9x128xf32, #tpu.memory_space<vmem>>, vector<1x128xf32>
    %56 = vector.broadcast %55 : vector<1x128xf32> to vector<4x128xf32>
    %57 = arith.mulf %54, %56 : vector<4x128xf32>
    %c7_45 = arith.constant 7 : index
    %c0_46 = arith.constant 0 : index
    %c0_47 = arith.constant 0 : index
    %58 = vector.load %arg2[%c7_45, %c0_46, %c0_47] : memref<9x8x4xf32, #tpu.memory_space<vmem>>, vector<1x8x4xf32>
    %59 = vector.shape_cast %58 : vector<1x8x4xf32> to vector<8x4xf32>
    %cst_48 = arith.constant dense<0.000000e+00> : vector<8x128xf32>
    %60 = tpu.matmul %59, %57, %cst_48 {dimension_numbers = #tpu.dot_dimension_numbers<[1], [0], [0], [1], [0, 0, 1, 1], [], []>} : vector<8x4xf32>, vector<4x128xf32>, vector<8x128xf32> -> vector<8x128xf32>
    %61 = arith.addf %53, %60 : vector<8x128xf32>
    %c0_49 = arith.constant 0 : index
    %c18 = arith.constant 18 : index
    %62 = vector.load %arg1[%c0_49, %c18] : memref<4x146xf32, #tpu.memory_space<vmem>>, vector<4x128xf32>
    %c8_50 = arith.constant 8 : index
    %c0_51 = arith.constant 0 : index
    %63 = vector.load %arg3[%c8_50, %c0_51] : memref<9x128xf32, #tpu.memory_space<vmem>>, vector<1x128xf32>
    %64 = vector.broadcast %63 : vector<1x128xf32> to vector<4x128xf32>
    %65 = arith.mulf %62, %64 : vector<4x128xf32>
    %c8_52 = arith.constant 8 : index
    %c0_53 = arith.constant 0 : index
    %c0_54 = arith.constant 0 : index
    %66 = vector.load %arg2[%c8_52, %c0_53, %c0_54] : memref<9x8x4xf32, #tpu.memory_space<vmem>>, vector<1x8x4xf32>
    %67 = vector.shape_cast %66 : vector<1x8x4xf32> to vector<8x4xf32>
    %cst_55 = arith.constant dense<0.000000e+00> : vector<8x128xf32>
    %68 = tpu.matmul %67, %65, %cst_55 {dimension_numbers = #tpu.dot_dimension_numbers<[1], [0], [0], [1], [0, 0, 1, 1], [], []>} : vector<8x4xf32>, vector<4x128xf32>, vector<8x128xf32> -> vector<8x128xf32>
    %69 = arith.addf %61, %68 : vector<8x128xf32>
    %c0_56 = arith.constant 0 : index
    %c0_57 = arith.constant 0 : index
    %70 = vector.load %arg4[%c0_56, %c0_57] : memref<8x128xf32, #tpu.memory_space<vmem>>, vector<8x128xf32>
    %71 = arith.addf %69, %70 : vector<8x128xf32>
    %cst_58 = arith.constant dense<0.000000e+00> : vector<8xf32>
    %72 = vector.multi_reduction <add>, %71, %cst_58 [1] : vector<8x128xf32> to vector<8xf32>
    %73 = vector.shape_cast %72 : vector<8xf32> to vector<8x1xf32>
    %cst_59 = arith.constant 7.812500e-03 : f32
    %74 = vector.broadcast %cst_59 : f32 to vector<8x1xf32>
    %75 = arith.mulf %73, %74 : vector<8x1xf32>
    %76 = vector.broadcast %75 : vector<8x1xf32> to vector<8x128xf32>
    %77 = arith.subf %71, %76 : vector<8x128xf32>
    %78 = arith.mulf %77, %77 : vector<8x128xf32>
    %cst_60 = arith.constant dense<0.000000e+00> : vector<8xf32>
    %79 = vector.multi_reduction <add>, %78, %cst_60 [1] : vector<8x128xf32> to vector<8xf32>
    %80 = vector.shape_cast %79 : vector<8xf32> to vector<8x1xf32>
    %cst_61 = arith.constant 7.812500e-03 : f32
    %81 = vector.broadcast %cst_61 : f32 to vector<8x1xf32>
    %82 = arith.mulf %80, %81 : vector<8x1xf32>
    %cst_62 = arith.constant 9.99999974E-6 : f32
    %83 = vector.broadcast %cst_62 : f32 to vector<8x1xf32>
    %84 = arith.addf %82, %83 : vector<8x1xf32>
    %85 = math.rsqrt %84 : vector<8x1xf32>
    %86 = vector.broadcast %85 : vector<8x1xf32> to vector<8x128xf32>
    %87 = arith.mulf %77, %86 : vector<8x128xf32>
    %c0_63 = arith.constant 0 : index
    %c0_64 = arith.constant 0 : index
    %88 = vector.load %arg5[%c0_63, %c0_64] : memref<8x1xf32, #tpu.memory_space<vmem>>, vector<8x1xf32>
    %89 = vector.broadcast %88 : vector<8x1xf32> to vector<8x128xf32>
    %90 = arith.mulf %87, %89 : vector<8x128xf32>
    %c0_65 = arith.constant 0 : index
    %c0_66 = arith.constant 0 : index
    %91 = vector.load %arg6[%c0_65, %c0_66] : memref<8x1xf32, #tpu.memory_space<vmem>>, vector<8x1xf32>
    %92 = vector.broadcast %91 : vector<8x1xf32> to vector<8x128xf32>
    %93 = arith.addf %90, %92 : vector<8x128xf32>
    %cst_67 = arith.constant 0.000000e+00 : f32
    %94 = vector.broadcast %cst_67 : f32 to vector<8x128xf32>
    %95 = arith.cmpf oge, %93, %94 : vector<8x128xf32>
    %c0_68 = arith.constant 0 : index
    %c0_69 = arith.constant 0 : index
    %96 = vector.load %arg7[%c0_68, %c0_69] : memref<8x1xf32, #tpu.memory_space<vmem>>, vector<8x1xf32>
    %97 = vector.broadcast %96 : vector<8x1xf32> to vector<8x128xf32>
    %98 = arith.mulf %97, %93 : vector<8x128xf32>
    %99 = arith.select %95, %93, %98 : vector<8x128xi1>, vector<8x128xf32>
    %c0_70 = arith.constant 0 : index
    %c0_71 = arith.constant 0 : index
    %100 = vector.load %arg8[%c0_70, %c0_71] : memref<8x128xf32, #tpu.memory_space<vmem>>, vector<8x128xf32>
    tpu.vector_store %arg8[%c0_70, %c0_71], %99 {strides = array<i32>} : memref<8x128xf32, #tpu.memory_space<vmem>>, vector<8x128xf32>,
    return
  }
  func.func @transform_0(%arg0: i32) -> (i32, i32) {
    %c0_i32 = arith.constant 0 : i32
    %c0_i32_0 = arith.constant 0 : i32
    %c0_i32_1 = arith.constant 0 : i32
    return %c0_i32, %c0_i32_0 : i32, i32
  }
  func.func @transform_1(%arg0: i32) -> (i32, i32, i32) {
    %c0_i32 = arith.constant 0 : i32
    %c0_i32_0 = arith.constant 0 : i32
    %c0_i32_1 = arith.constant 0 : i32
    %c0_i32_2 = arith.constant 0 : i32
    return %c0_i32, %c0_i32_0, %c0_i32_1 : i32, i32, i32
  }
  func.func @transform_2(%arg0: i32) -> (i32, i32) {
    %c0_i32 = arith.constant 0 : i32
    %c0_i32_0 = arith.constant 0 : i32
    %c0_i32_1 = arith.constant 0 : i32
    return %c0_i32, %c0_i32_0 : i32, i32
  }
  func.func @transform_3(%arg0: i32) -> (i32, i32) {
    %c0_i32 = arith.constant 0 : i32
    %c0_i32_0 = arith.constant 0 : i32
    %c0_i32_1 = arith.constant 0 : i32
    return %c0_i32, %c0_i32_0 : i32, i32
  }
  func.func @transform_4(%arg0: i32) -> (i32, i32) {
    %c0_i32 = arith.constant 0 : i32
    %c0_i32_0 = arith.constant 0 : i32
    %c0_i32_1 = arith.constant 0 : i32
    return %c0_i32, %c0_i32_0 : i32, i32
  }
  func.func @transform_5(%arg0: i32) -> (i32, i32) {
    %c0_i32 = arith.constant 0 : i32
    %c0_i32_0 = arith.constant 0 : i32
    %c0_i32_1 = arith.constant 0 : i32
    return %c0_i32, %c0_i32_0 : i32, i32
  }
  func.func @transform_6(%arg0: i32) -> (i32, i32) {
    %c0_i32 = arith.constant 0 : i32
    %c0_i32_0 = arith.constant 0 : i32
    %c0_i32_1 = arith.constant 0 : i32
    return %c0_i32, %c0_i32_0 : i32, i32
  }
  func.func @transform_7(%arg0: i32) -> (i32, i32) {
    %c0_i32 = arith.constant 0 : i32
    %c0_i32_0 = arith.constant 0 : i32
    %c0_i32_1 = arith.constant 0 : i32
    return %c0_i32, %c0_i32_0 : i32, i32
  }
}

module attributes {stable_mosaic.version = 11 : i64} {
  func.func @kernel(%arg0: i32, %arg1: memref<4x42xf32, #tpu.memory_space<vmem>>, %arg2: memref<9x8x4xf32, #tpu.memory_space<vmem>>, %arg3: memref<9x32xf32, #tpu.memory_space<vmem>>, %arg4: memref<8x32xf32, #tpu.memory_space<vmem>>, %arg5: memref<8x1xf32, #tpu.memory_space<vmem>>, %arg6: memref<8x1xf32, #tpu.memory_space<vmem>>, %arg7: memref<8x1xf32, #tpu.memory_space<vmem>>, %arg8: memref<8x32xf32, #tpu.memory_space<vmem>>) attributes {dimension_semantics = [#tpu.dimension_semantics<arbitrary>], iteration_bounds = array<i64: 1>, scalar_prefetch = 0 : i64, scratch_operands = 0 : i64, tpu.core_type = #tpu.core_type<tc>, window_params = [{pipeline_mode = #tpu.pipeline_mode<synchronous>, transform_indices = @transform_0, window_bounds = array<i64: 4, 42>}, {pipeline_mode = #tpu.pipeline_mode<synchronous>, transform_indices = @transform_1, window_bounds = array<i64: 9, 8, 4>}, {pipeline_mode = #tpu.pipeline_mode<synchronous>, transform_indices = @transform_2, window_bounds = array<i64: 9, 32>}, {pipeline_mode = #tpu.pipeline_mode<synchronous>, transform_indices = @transform_3, window_bounds = array<i64: 8, 32>}, {pipeline_mode = #tpu.pipeline_mode<synchronous>, transform_indices = @transform_4, window_bounds = array<i64: 8, 1>}, {pipeline_mode = #tpu.pipeline_mode<synchronous>, transform_indices = @transform_5, window_bounds = array<i64: 8, 1>}, {pipeline_mode = #tpu.pipeline_mode<synchronous>, transform_indices = @transform_6, window_bounds = array<i64: 8, 1>}, {pipeline_mode = #tpu.pipeline_mode<synchronous>, transform_indices = @transform_7, window_bounds = array<i64: 8, 32>}]} {
    %cst = arith.constant 0.000000e+00 : f32
    %0 = vector.broadcast %cst : f32 to vector<8x32xf32>
    %c0 = arith.constant 0 : index
    %c0_0 = arith.constant 0 : index
    %1 = vector.load %arg1[%c0, %c0_0] : memref<4x42xf32, #tpu.memory_space<vmem>>, vector<4x32xf32>
    %c0_1 = arith.constant 0 : index
    %c0_2 = arith.constant 0 : index
    %2 = vector.load %arg3[%c0_1, %c0_2] : memref<9x32xf32, #tpu.memory_space<vmem>>, vector<1x32xf32>
    %3 = vector.broadcast %2 : vector<1x32xf32> to vector<4x32xf32>
    %4 = arith.mulf %1, %3 : vector<4x32xf32>
    %c0_3 = arith.constant 0 : index
    %c0_4 = arith.constant 0 : index
    %c0_5 = arith.constant 0 : index
    %5 = vector.load %arg2[%c0_3, %c0_4, %c0_5] : memref<9x8x4xf32, #tpu.memory_space<vmem>>, vector<1x8x4xf32>
    %6 = vector.shape_cast %5 : vector<1x8x4xf32> to vector<8x4xf32>
    %cst_6 = arith.constant dense<0.000000e+00> : vector<8x32xf32>
    %7 = tpu.matmul %6, %4, %cst_6 {dimension_numbers = #tpu.dot_dimension_numbers<[1], [0], [0], [1], [0, 0, 1, 1], [], []>} : vector<8x4xf32>, vector<4x32xf32>, vector<8x32xf32> -> vector<8x32xf32>
    %8 = arith.addf %0, %7 : vector<8x32xf32>
    %c0_7 = arith.constant 0 : index
    %c1 = arith.constant 1 : index
    %9 = vector.load %arg1[%c0_7, %c1] : memref<4x42xf32, #tpu.memory_space<vmem>>, vector<4x32xf32>
    %c1_8 = arith.constant 1 : index
    %c0_9 = arith.constant 0 : index
    %10 = vector.load %arg3[%c1_8, %c0_9] : memref<9x32xf32, #tpu.memory_space<vmem>>, vector<1x32xf32>
    %11 = vector.broadcast %10 : vector<1x32xf32> to vector<4x32xf32>
    %12 = arith.mulf %9, %11 : vector<4x32xf32>
    %c1_10 = arith.constant 1 : index
    %c0_11 = arith.constant 0 : index
    %c0_12 = arith.constant 0 : index
    %13 = vector.load %arg2[%c1_10, %c0_11, %c0_12] : memref<9x8x4xf32, #tpu.memory_space<vmem>>, vector<1x8x4xf32>
    %14 = vector.shape_cast %13 : vector<1x8x4xf32> to vector<8x4xf32>
    %cst_13 = arith.constant dense<0.000000e+00> : vector<8x32xf32>
    %15 = tpu.matmul %14, %12, %cst_13 {dimension_numbers = #tpu.dot_dimension_numbers<[1], [0], [0], [1], [0, 0, 1, 1], [], []>} : vector<8x4xf32>, vector<4x32xf32>, vector<8x32xf32> -> vector<8x32xf32>
    %16 = arith.addf %8, %15 : vector<8x32xf32>
    %c0_14 = arith.constant 0 : index
    %c2 = arith.constant 2 : index
    %17 = vector.load %arg1[%c0_14, %c2] : memref<4x42xf32, #tpu.memory_space<vmem>>, vector<4x32xf32>
    %c2_15 = arith.constant 2 : index
    %c0_16 = arith.constant 0 : index
    %18 = vector.load %arg3[%c2_15, %c0_16] : memref<9x32xf32, #tpu.memory_space<vmem>>, vector<1x32xf32>
    %19 = vector.broadcast %18 : vector<1x32xf32> to vector<4x32xf32>
    %20 = arith.mulf %17, %19 : vector<4x32xf32>
    %c2_17 = arith.constant 2 : index
    %c0_18 = arith.constant 0 : index
    %c0_19 = arith.constant 0 : index
    %21 = vector.load %arg2[%c2_17, %c0_18, %c0_19] : memref<9x8x4xf32, #tpu.memory_space<vmem>>, vector<1x8x4xf32>
    %22 = vector.shape_cast %21 : vector<1x8x4xf32> to vector<8x4xf32>
    %cst_20 = arith.constant dense<0.000000e+00> : vector<8x32xf32>
    %23 = tpu.matmul %22, %20, %cst_20 {dimension_numbers = #tpu.dot_dimension_numbers<[1], [0], [0], [1], [0, 0, 1, 1], [], []>} : vector<8x4xf32>, vector<4x32xf32>, vector<8x32xf32> -> vector<8x32xf32>
    %24 = arith.addf %16, %23 : vector<8x32xf32>
    %c0_21 = arith.constant 0 : index
    %c4 = arith.constant 4 : index
    %25 = vector.load %arg1[%c0_21, %c4] : memref<4x42xf32, #tpu.memory_space<vmem>>, vector<4x32xf32>
    %c3 = arith.constant 3 : index
    %c0_22 = arith.constant 0 : index
    %26 = vector.load %arg3[%c3, %c0_22] : memref<9x32xf32, #tpu.memory_space<vmem>>, vector<1x32xf32>
    %27 = vector.broadcast %26 : vector<1x32xf32> to vector<4x32xf32>
    %28 = arith.mulf %25, %27 : vector<4x32xf32>
    %c3_23 = arith.constant 3 : index
    %c0_24 = arith.constant 0 : index
    %c0_25 = arith.constant 0 : index
    %29 = vector.load %arg2[%c3_23, %c0_24, %c0_25] : memref<9x8x4xf32, #tpu.memory_space<vmem>>, vector<1x8x4xf32>
    %30 = vector.shape_cast %29 : vector<1x8x4xf32> to vector<8x4xf32>
    %cst_26 = arith.constant dense<0.000000e+00> : vector<8x32xf32>
    %31 = tpu.matmul %30, %28, %cst_26 {dimension_numbers = #tpu.dot_dimension_numbers<[1], [0], [0], [1], [0, 0, 1, 1], [], []>} : vector<8x4xf32>, vector<4x32xf32>, vector<8x32xf32> -> vector<8x32xf32>
    %32 = arith.addf %24, %31 : vector<8x32xf32>
    %c0_27 = arith.constant 0 : index
    %c5 = arith.constant 5 : index
    %33 = vector.load %arg1[%c0_27, %c5] : memref<4x42xf32, #tpu.memory_space<vmem>>, vector<4x32xf32>
    %c4_28 = arith.constant 4 : index
    %c0_29 = arith.constant 0 : index
    %c0_30 = arith.constant 0 : index
    %34 = vector.load %arg2[%c4_28, %c0_29, %c0_30] : memref<9x8x4xf32, #tpu.memory_space<vmem>>, vector<1x8x4xf32>
    %35 = vector.shape_cast %34 : vector<1x8x4xf32> to vector<8x4xf32>
    %cst_31 = arith.constant dense<0.000000e+00> : vector<8x32xf32>
    %36 = tpu.matmul %35, %33, %cst_31 {dimension_numbers = #tpu.dot_dimension_numbers<[1], [0], [0], [1], [0, 0, 1, 1], [], []>} : vector<8x4xf32>, vector<4x32xf32>, vector<8x32xf32> -> vector<8x32xf32>
    %37 = arith.addf %32, %36 : vector<8x32xf32>
    %c0_32 = arith.constant 0 : index
    %c6 = arith.constant 6 : index
    %38 = vector.load %arg1[%c0_32, %c6] : memref<4x42xf32, #tpu.memory_space<vmem>>, vector<4x32xf32>
    %c5_33 = arith.constant 5 : index
    %c0_34 = arith.constant 0 : index
    %39 = vector.load %arg3[%c5_33, %c0_34] : memref<9x32xf32, #tpu.memory_space<vmem>>, vector<1x32xf32>
    %40 = vector.broadcast %39 : vector<1x32xf32> to vector<4x32xf32>
    %41 = arith.mulf %38, %40 : vector<4x32xf32>
    %c5_35 = arith.constant 5 : index
    %c0_36 = arith.constant 0 : index
    %c0_37 = arith.constant 0 : index
    %42 = vector.load %arg2[%c5_35, %c0_36, %c0_37] : memref<9x8x4xf32, #tpu.memory_space<vmem>>, vector<1x8x4xf32>
    %43 = vector.shape_cast %42 : vector<1x8x4xf32> to vector<8x4xf32>
    %cst_38 = arith.constant dense<0.000000e+00> : vector<8x32xf32>
    %44 = tpu.matmul %43, %41, %cst_38 {dimension_numbers = #tpu.dot_dimension_numbers<[1], [0], [0], [1], [0, 0, 1, 1], [], []>} : vector<8x4xf32>, vector<4x32xf32>, vector<8x32xf32> -> vector<8x32xf32>
    %45 = arith.addf %37, %44 : vector<8x32xf32>
    %c0_39 = arith.constant 0 : index
    %c8 = arith.constant 8 : index
    %46 = vector.load %arg1[%c0_39, %c8] : memref<4x42xf32, #tpu.memory_space<vmem>>, vector<4x32xf32>
    %c6_40 = arith.constant 6 : index
    %c0_41 = arith.constant 0 : index
    %47 = vector.load %arg3[%c6_40, %c0_41] : memref<9x32xf32, #tpu.memory_space<vmem>>, vector<1x32xf32>
    %48 = vector.broadcast %47 : vector<1x32xf32> to vector<4x32xf32>
    %49 = arith.mulf %46, %48 : vector<4x32xf32>
    %c6_42 = arith.constant 6 : index
    %c0_43 = arith.constant 0 : index
    %c0_44 = arith.constant 0 : index
    %50 = vector.load %arg2[%c6_42, %c0_43, %c0_44] : memref<9x8x4xf32, #tpu.memory_space<vmem>>, vector<1x8x4xf32>
    %51 = vector.shape_cast %50 : vector<1x8x4xf32> to vector<8x4xf32>
    %cst_45 = arith.constant dense<0.000000e+00> : vector<8x32xf32>
    %52 = tpu.matmul %51, %49, %cst_45 {dimension_numbers = #tpu.dot_dimension_numbers<[1], [0], [0], [1], [0, 0, 1, 1], [], []>} : vector<8x4xf32>, vector<4x32xf32>, vector<8x32xf32> -> vector<8x32xf32>
    %53 = arith.addf %45, %52 : vector<8x32xf32>
    %c0_46 = arith.constant 0 : index
    %c9 = arith.constant 9 : index
    %54 = vector.load %arg1[%c0_46, %c9] : memref<4x42xf32, #tpu.memory_space<vmem>>, vector<4x32xf32>
    %c7 = arith.constant 7 : index
    %c0_47 = arith.constant 0 : index
    %55 = vector.load %arg3[%c7, %c0_47] : memref<9x32xf32, #tpu.memory_space<vmem>>, vector<1x32xf32>
    %56 = vector.broadcast %55 : vector<1x32xf32> to vector<4x32xf32>
    %57 = arith.mulf %54, %56 : vector<4x32xf32>
    %c7_48 = arith.constant 7 : index
    %c0_49 = arith.constant 0 : index
    %c0_50 = arith.constant 0 : index
    %58 = vector.load %arg2[%c7_48, %c0_49, %c0_50] : memref<9x8x4xf32, #tpu.memory_space<vmem>>, vector<1x8x4xf32>
    %59 = vector.shape_cast %58 : vector<1x8x4xf32> to vector<8x4xf32>
    %cst_51 = arith.constant dense<0.000000e+00> : vector<8x32xf32>
    %60 = tpu.matmul %59, %57, %cst_51 {dimension_numbers = #tpu.dot_dimension_numbers<[1], [0], [0], [1], [0, 0, 1, 1], [], []>} : vector<8x4xf32>, vector<4x32xf32>, vector<8x32xf32> -> vector<8x32xf32>
    %61 = arith.addf %53, %60 : vector<8x32xf32>
    %c0_52 = arith.constant 0 : index
    %c10 = arith.constant 10 : index
    %62 = vector.load %arg1[%c0_52, %c10] : memref<4x42xf32, #tpu.memory_space<vmem>>, vector<4x32xf32>
    %c8_53 = arith.constant 8 : index
    %c0_54 = arith.constant 0 : index
    %63 = vector.load %arg3[%c8_53, %c0_54] : memref<9x32xf32, #tpu.memory_space<vmem>>, vector<1x32xf32>
    %64 = vector.broadcast %63 : vector<1x32xf32> to vector<4x32xf32>
    %65 = arith.mulf %62, %64 : vector<4x32xf32>
    %c8_55 = arith.constant 8 : index
    %c0_56 = arith.constant 0 : index
    %c0_57 = arith.constant 0 : index
    %66 = vector.load %arg2[%c8_55, %c0_56, %c0_57] : memref<9x8x4xf32, #tpu.memory_space<vmem>>, vector<1x8x4xf32>
    %67 = vector.shape_cast %66 : vector<1x8x4xf32> to vector<8x4xf32>
    %cst_58 = arith.constant dense<0.000000e+00> : vector<8x32xf32>
    %68 = tpu.matmul %67, %65, %cst_58 {dimension_numbers = #tpu.dot_dimension_numbers<[1], [0], [0], [1], [0, 0, 1, 1], [], []>} : vector<8x4xf32>, vector<4x32xf32>, vector<8x32xf32> -> vector<8x32xf32>
    %69 = arith.addf %61, %68 : vector<8x32xf32>
    %c0_59 = arith.constant 0 : index
    %c0_60 = arith.constant 0 : index
    %70 = vector.load %arg4[%c0_59, %c0_60] : memref<8x32xf32, #tpu.memory_space<vmem>>, vector<8x32xf32>
    %71 = arith.addf %69, %70 : vector<8x32xf32>
    %cst_61 = arith.constant dense<0.000000e+00> : vector<8xf32>
    %72 = vector.multi_reduction <add>, %71, %cst_61 [1] : vector<8x32xf32> to vector<8xf32>
    %73 = vector.shape_cast %72 : vector<8xf32> to vector<8x1xf32>
    %cst_62 = arith.constant 3.125000e-02 : f32
    %74 = vector.broadcast %cst_62 : f32 to vector<8x1xf32>
    %75 = arith.mulf %73, %74 : vector<8x1xf32>
    %76 = vector.broadcast %75 : vector<8x1xf32> to vector<8x32xf32>
    %77 = arith.subf %71, %76 : vector<8x32xf32>
    %78 = arith.mulf %77, %77 : vector<8x32xf32>
    %cst_63 = arith.constant dense<0.000000e+00> : vector<8xf32>
    %79 = vector.multi_reduction <add>, %78, %cst_63 [1] : vector<8x32xf32> to vector<8xf32>
    %80 = vector.shape_cast %79 : vector<8xf32> to vector<8x1xf32>
    %cst_64 = arith.constant 3.125000e-02 : f32
    %81 = vector.broadcast %cst_64 : f32 to vector<8x1xf32>
    %82 = arith.mulf %80, %81 : vector<8x1xf32>
    %cst_65 = arith.constant 9.99999974E-6 : f32
    %83 = vector.broadcast %cst_65 : f32 to vector<8x1xf32>
    %84 = arith.addf %82, %83 : vector<8x1xf32>
    %85 = math.rsqrt %84 : vector<8x1xf32>
    %86 = vector.broadcast %85 : vector<8x1xf32> to vector<8x32xf32>
    %87 = arith.mulf %77, %86 : vector<8x32xf32>
    %c0_66 = arith.constant 0 : index
    %c0_67 = arith.constant 0 : index
    %88 = vector.load %arg5[%c0_66, %c0_67] : memref<8x1xf32, #tpu.memory_space<vmem>>, vector<8x1xf32>
    %89 = vector.broadcast %88 : vector<8x1xf32> to vector<8x32xf32>
    %90 = arith.mulf %87, %89 : vector<8x32xf32>
    %c0_68 = arith.constant 0 : index
    %c0_69 = arith.constant 0 : index
    %91 = vector.load %arg6[%c0_68, %c0_69] : memref<8x1xf32, #tpu.memory_space<vmem>>, vector<8x1xf32>
    %92 = vector.broadcast %91 : vector<8x1xf32> to vector<8x32xf32>
    %93 = arith.addf %90, %92 : vector<8x32xf32>
    %cst_70 = arith.constant 0.000000e+00 : f32
    %94 = vector.broadcast %cst_70 : f32 to vector<8x32xf32>
    %95 = arith.cmpf oge, %93, %94 : vector<8x32xf32>
    %c0_71 = arith.constant 0 : index
    %c0_72 = arith.constant 0 : index
    %96 = vector.load %arg7[%c0_71, %c0_72] : memref<8x1xf32, #tpu.memory_space<vmem>>, vector<8x1xf32>
    %97 = vector.broadcast %96 : vector<8x1xf32> to vector<8x32xf32>
    %98 = arith.mulf %97, %93 : vector<8x32xf32>
    %99 = arith.select %95, %93, %98 : vector<8x32xi1>, vector<8x32xf32>
    %c0_73 = arith.constant 0 : index
    %c0_74 = arith.constant 0 : index
    %100 = vector.load %arg8[%c0_73, %c0_74] : memref<8x32xf32, #tpu.memory_space<vmem>>, vector<8x32xf32>
    tpu.vector_store %arg8[%c0_73, %c0_74], %99 {strides = array<i32>} : memref<8x32xf32, #tpu.memory_space<vmem>>, vector<8x32xf32>,
    return
  }
  func.func @transform_0(%arg0: i32) -> (i32, i32) {
    %c0_i32 = arith.constant 0 : i32
    %c0_i32_0 = arith.constant 0 : i32
    %c0_i32_1 = arith.constant 0 : i32
    return %c0_i32, %c0_i32_0 : i32, i32
  }
  func.func @transform_1(%arg0: i32) -> (i32, i32, i32) {
    %c0_i32 = arith.constant 0 : i32
    %c0_i32_0 = arith.constant 0 : i32
    %c0_i32_1 = arith.constant 0 : i32
    %c0_i32_2 = arith.constant 0 : i32
    return %c0_i32, %c0_i32_0, %c0_i32_1 : i32, i32, i32
  }
  func.func @transform_2(%arg0: i32) -> (i32, i32) {
    %c0_i32 = arith.constant 0 : i32
    %c0_i32_0 = arith.constant 0 : i32
    %c0_i32_1 = arith.constant 0 : i32
    return %c0_i32, %c0_i32_0 : i32, i32
  }
  func.func @transform_3(%arg0: i32) -> (i32, i32) {
    %c0_i32 = arith.constant 0 : i32
    %c0_i32_0 = arith.constant 0 : i32
    %c0_i32_1 = arith.constant 0 : i32
    return %c0_i32, %c0_i32_0 : i32, i32
  }
  func.func @transform_4(%arg0: i32) -> (i32, i32) {
    %c0_i32 = arith.constant 0 : i32
    %c0_i32_0 = arith.constant 0 : i32
    %c0_i32_1 = arith.constant 0 : i32
    return %c0_i32, %c0_i32_0 : i32, i32
  }
  func.func @transform_5(%arg0: i32) -> (i32, i32) {
    %c0_i32 = arith.constant 0 : i32
    %c0_i32_0 = arith.constant 0 : i32
    %c0_i32_1 = arith.constant 0 : i32
    return %c0_i32, %c0_i32_0 : i32, i32
  }
  func.func @transform_6(%arg0: i32) -> (i32, i32) {
    %c0_i32 = arith.constant 0 : i32
    %c0_i32_0 = arith.constant 0 : i32
    %c0_i32_1 = arith.constant 0 : i32
    return %c0_i32, %c0_i32_0 : i32, i32
  }
  func.func @transform_7(%arg0: i32) -> (i32, i32) {
    %c0_i32 = arith.constant 0 : i32
    %c0_i32_0 = arith.constant 0 : i32
    %c0_i32_1 = arith.constant 0 : i32
    return %c0_i32, %c0_i32_0 : i32, i32
  }
}

module attributes {stable_mosaic.version = 11 : i64} {
  func.func @kernel(%arg0: i32, %arg1: memref<8x42xf32, #tpu.memory_space<vmem>>, %arg2: memref<8x9xf32, #tpu.memory_space<vmem>>, %arg3: memref<9x32xf32, #tpu.memory_space<vmem>>, %arg4: memref<8x1xf32, #tpu.memory_space<vmem>>, %arg5: memref<8x1xf32, #tpu.memory_space<vmem>>, %arg6: memref<8x1xf32, #tpu.memory_space<vmem>>, %arg7: memref<8x32xf32, #tpu.memory_space<vmem>>) attributes {dimension_semantics = [#tpu.dimension_semantics<arbitrary>], iteration_bounds = array<i64: 1>, scalar_prefetch = 0 : i64, scratch_operands = 0 : i64, tpu.core_type = #tpu.core_type<tc>, window_params = [{pipeline_mode = #tpu.pipeline_mode<synchronous>, transform_indices = @transform_0, window_bounds = array<i64: 8, 42>}, {pipeline_mode = #tpu.pipeline_mode<synchronous>, transform_indices = @transform_1, window_bounds = array<i64: 8, 9>}, {pipeline_mode = #tpu.pipeline_mode<synchronous>, transform_indices = @transform_2, window_bounds = array<i64: 9, 32>}, {pipeline_mode = #tpu.pipeline_mode<synchronous>, transform_indices = @transform_3, window_bounds = array<i64: 8, 1>}, {pipeline_mode = #tpu.pipeline_mode<synchronous>, transform_indices = @transform_4, window_bounds = array<i64: 8, 1>}, {pipeline_mode = #tpu.pipeline_mode<synchronous>, transform_indices = @transform_5, window_bounds = array<i64: 8, 1>}, {pipeline_mode = #tpu.pipeline_mode<synchronous>, transform_indices = @transform_6, window_bounds = array<i64: 8, 32>}]} {
    %cst = arith.constant 0.000000e+00 : f32
    %0 = vector.broadcast %cst : f32 to vector<8x32xf32>
    %c0 = arith.constant 0 : index
    %c0_0 = arith.constant 0 : index
    %1 = vector.load %arg1[%c0, %c0_0] : memref<8x42xf32, #tpu.memory_space<vmem>>, vector<8x32xf32>
    %c0_1 = arith.constant 0 : index
    %c0_2 = arith.constant 0 : index
    %2 = vector.load %arg3[%c0_1, %c0_2] : memref<9x32xf32, #tpu.memory_space<vmem>>, vector<1x32xf32>
    %3 = vector.broadcast %2 : vector<1x32xf32> to vector<8x32xf32>
    %4 = arith.mulf %1, %3 : vector<8x32xf32>
    %c0_3 = arith.constant 0 : index
    %c0_4 = arith.constant 0 : index
    %5 = vector.load %arg2[%c0_3, %c0_4] : memref<8x9xf32, #tpu.memory_space<vmem>>, vector<8x1xf32>
    %6 = vector.broadcast %5 : vector<8x1xf32> to vector<8x32xf32>
    %7 = arith.mulf %4, %6 : vector<8x32xf32>
    %8 = arith.addf %0, %7 : vector<8x32xf32>
    %c0_5 = arith.constant 0 : index
    %c1 = arith.constant 1 : index
    %9 = vector.load %arg1[%c0_5, %c1] : memref<8x42xf32, #tpu.memory_space<vmem>>, vector<8x32xf32>
    %c1_6 = arith.constant 1 : index
    %c0_7 = arith.constant 0 : index
    %10 = vector.load %arg3[%c1_6, %c0_7] : memref<9x32xf32, #tpu.memory_space<vmem>>, vector<1x32xf32>
    %11 = vector.broadcast %10 : vector<1x32xf32> to vector<8x32xf32>
    %12 = arith.mulf %9, %11 : vector<8x32xf32>
    %c0_8 = arith.constant 0 : index
    %c1_9 = arith.constant 1 : index
    %13 = vector.load %arg2[%c0_8, %c1_9] : memref<8x9xf32, #tpu.memory_space<vmem>>, vector<8x1xf32>
    %14 = vector.broadcast %13 : vector<8x1xf32> to vector<8x32xf32>
    %15 = arith.mulf %12, %14 : vector<8x32xf32>
    %16 = arith.addf %8, %15 : vector<8x32xf32>
    %c0_10 = arith.constant 0 : index
    %c2 = arith.constant 2 : index
    %17 = vector.load %arg1[%c0_10, %c2] : memref<8x42xf32, #tpu.memory_space<vmem>>, vector<8x32xf32>
    %c2_11 = arith.constant 2 : index
    %c0_12 = arith.constant 0 : index
    %18 = vector.load %arg3[%c2_11, %c0_12] : memref<9x32xf32, #tpu.memory_space<vmem>>, vector<1x32xf32>
    %19 = vector.broadcast %18 : vector<1x32xf32> to vector<8x32xf32>
    %20 = arith.mulf %17, %19 : vector<8x32xf32>
    %c0_13 = arith.constant 0 : index
    %c2_14 = arith.constant 2 : index
    %21 = vector.load %arg2[%c0_13, %c2_14] : memref<8x9xf32, #tpu.memory_space<vmem>>, vector<8x1xf32>
    %22 = vector.broadcast %21 : vector<8x1xf32> to vector<8x32xf32>
    %23 = arith.mulf %20, %22 : vector<8x32xf32>
    %24 = arith.addf %16, %23 : vector<8x32xf32>
    %c0_15 = arith.constant 0 : index
    %c4 = arith.constant 4 : index
    %25 = vector.load %arg1[%c0_15, %c4] : memref<8x42xf32, #tpu.memory_space<vmem>>, vector<8x32xf32>
    %c3 = arith.constant 3 : index
    %c0_16 = arith.constant 0 : index
    %26 = vector.load %arg3[%c3, %c0_16] : memref<9x32xf32, #tpu.memory_space<vmem>>, vector<1x32xf32>
    %27 = vector.broadcast %26 : vector<1x32xf32> to vector<8x32xf32>
    %28 = arith.mulf %25, %27 : vector<8x32xf32>
    %c0_17 = arith.constant 0 : index
    %c3_18 = arith.constant 3 : index
    %29 = vector.load %arg2[%c0_17, %c3_18] : memref<8x9xf32, #tpu.memory_space<vmem>>, vector<8x1xf32>
    %30 = vector.broadcast %29 : vector<8x1xf32> to vector<8x32xf32>
    %31 = arith.mulf %28, %30 : vector<8x32xf32>
    %32 = arith.addf %24, %31 : vector<8x32xf32>
    %c0_19 = arith.constant 0 : index
    %c5 = arith.constant 5 : index
    %33 = vector.load %arg1[%c0_19, %c5] : memref<8x42xf32, #tpu.memory_space<vmem>>, vector<8x32xf32>
    %c0_20 = arith.constant 0 : index
    %c4_21 = arith.constant 4 : index
    %34 = vector.load %arg2[%c0_20, %c4_21] : memref<8x9xf32, #tpu.memory_space<vmem>>, vector<8x1xf32>
    %35 = vector.broadcast %34 : vector<8x1xf32> to vector<8x32xf32>
    %36 = arith.mulf %33, %35 : vector<8x32xf32>
    %37 = arith.addf %32, %36 : vector<8x32xf32>
    %c0_22 = arith.constant 0 : index
    %c6 = arith.constant 6 : index
    %38 = vector.load %arg1[%c0_22, %c6] : memref<8x42xf32, #tpu.memory_space<vmem>>, vector<8x32xf32>
    %c5_23 = arith.constant 5 : index
    %c0_24 = arith.constant 0 : index
    %39 = vector.load %arg3[%c5_23, %c0_24] : memref<9x32xf32, #tpu.memory_space<vmem>>, vector<1x32xf32>
    %40 = vector.broadcast %39 : vector<1x32xf32> to vector<8x32xf32>
    %41 = arith.mulf %38, %40 : vector<8x32xf32>
    %c0_25 = arith.constant 0 : index
    %c5_26 = arith.constant 5 : index
    %42 = vector.load %arg2[%c0_25, %c5_26] : memref<8x9xf32, #tpu.memory_space<vmem>>, vector<8x1xf32>
    %43 = vector.broadcast %42 : vector<8x1xf32> to vector<8x32xf32>
    %44 = arith.mulf %41, %43 : vector<8x32xf32>
    %45 = arith.addf %37, %44 : vector<8x32xf32>
    %c0_27 = arith.constant 0 : index
    %c8 = arith.constant 8 : index
    %46 = vector.load %arg1[%c0_27, %c8] : memref<8x42xf32, #tpu.memory_space<vmem>>, vector<8x32xf32>
    %c6_28 = arith.constant 6 : index
    %c0_29 = arith.constant 0 : index
    %47 = vector.load %arg3[%c6_28, %c0_29] : memref<9x32xf32, #tpu.memory_space<vmem>>, vector<1x32xf32>
    %48 = vector.broadcast %47 : vector<1x32xf32> to vector<8x32xf32>
    %49 = arith.mulf %46, %48 : vector<8x32xf32>
    %c0_30 = arith.constant 0 : index
    %c6_31 = arith.constant 6 : index
    %50 = vector.load %arg2[%c0_30, %c6_31] : memref<8x9xf32, #tpu.memory_space<vmem>>, vector<8x1xf32>
    %51 = vector.broadcast %50 : vector<8x1xf32> to vector<8x32xf32>
    %52 = arith.mulf %49, %51 : vector<8x32xf32>
    %53 = arith.addf %45, %52 : vector<8x32xf32>
    %c0_32 = arith.constant 0 : index
    %c9 = arith.constant 9 : index
    %54 = vector.load %arg1[%c0_32, %c9] : memref<8x42xf32, #tpu.memory_space<vmem>>, vector<8x32xf32>
    %c7 = arith.constant 7 : index
    %c0_33 = arith.constant 0 : index
    %55 = vector.load %arg3[%c7, %c0_33] : memref<9x32xf32, #tpu.memory_space<vmem>>, vector<1x32xf32>
    %56 = vector.broadcast %55 : vector<1x32xf32> to vector<8x32xf32>
    %57 = arith.mulf %54, %56 : vector<8x32xf32>
    %c0_34 = arith.constant 0 : index
    %c7_35 = arith.constant 7 : index
    %58 = vector.load %arg2[%c0_34, %c7_35] : memref<8x9xf32, #tpu.memory_space<vmem>>, vector<8x1xf32>
    %59 = vector.broadcast %58 : vector<8x1xf32> to vector<8x32xf32>
    %60 = arith.mulf %57, %59 : vector<8x32xf32>
    %61 = arith.addf %53, %60 : vector<8x32xf32>
    %c0_36 = arith.constant 0 : index
    %c10 = arith.constant 10 : index
    %62 = vector.load %arg1[%c0_36, %c10] : memref<8x42xf32, #tpu.memory_space<vmem>>, vector<8x32xf32>
    %c8_37 = arith.constant 8 : index
    %c0_38 = arith.constant 0 : index
    %63 = vector.load %arg3[%c8_37, %c0_38] : memref<9x32xf32, #tpu.memory_space<vmem>>, vector<1x32xf32>
    %64 = vector.broadcast %63 : vector<1x32xf32> to vector<8x32xf32>
    %65 = arith.mulf %62, %64 : vector<8x32xf32>
    %c0_39 = arith.constant 0 : index
    %c8_40 = arith.constant 8 : index
    %66 = vector.load %arg2[%c0_39, %c8_40] : memref<8x9xf32, #tpu.memory_space<vmem>>, vector<8x1xf32>
    %67 = vector.broadcast %66 : vector<8x1xf32> to vector<8x32xf32>
    %68 = arith.mulf %65, %67 : vector<8x32xf32>
    %69 = arith.addf %61, %68 : vector<8x32xf32>
    %cst_41 = arith.constant dense<0.000000e+00> : vector<8xf32>
    %70 = vector.multi_reduction <add>, %69, %cst_41 [1] : vector<8x32xf32> to vector<8xf32>
    %71 = vector.shape_cast %70 : vector<8xf32> to vector<8x1xf32>
    %cst_42 = arith.constant 3.125000e-02 : f32
    %72 = vector.broadcast %cst_42 : f32 to vector<8x1xf32>
    %73 = arith.mulf %71, %72 : vector<8x1xf32>
    %74 = vector.broadcast %73 : vector<8x1xf32> to vector<8x32xf32>
    %75 = arith.subf %69, %74 : vector<8x32xf32>
    %76 = arith.mulf %75, %75 : vector<8x32xf32>
    %cst_43 = arith.constant dense<0.000000e+00> : vector<8xf32>
    %77 = vector.multi_reduction <add>, %76, %cst_43 [1] : vector<8x32xf32> to vector<8xf32>
    %78 = vector.shape_cast %77 : vector<8xf32> to vector<8x1xf32>
    %cst_44 = arith.constant 3.125000e-02 : f32
    %79 = vector.broadcast %cst_44 : f32 to vector<8x1xf32>
    %80 = arith.mulf %78, %79 : vector<8x1xf32>
    %cst_45 = arith.constant 9.99999974E-6 : f32
    %81 = vector.broadcast %cst_45 : f32 to vector<8x1xf32>
    %82 = arith.addf %80, %81 : vector<8x1xf32>
    %83 = math.rsqrt %82 : vector<8x1xf32>
    %84 = vector.broadcast %83 : vector<8x1xf32> to vector<8x32xf32>
    %85 = arith.mulf %75, %84 : vector<8x32xf32>
    %c0_46 = arith.constant 0 : index
    %c0_47 = arith.constant 0 : index
    %86 = vector.load %arg4[%c0_46, %c0_47] : memref<8x1xf32, #tpu.memory_space<vmem>>, vector<8x1xf32>
    %87 = vector.broadcast %86 : vector<8x1xf32> to vector<8x32xf32>
    %88 = arith.mulf %85, %87 : vector<8x32xf32>
    %c0_48 = arith.constant 0 : index
    %c0_49 = arith.constant 0 : index
    %89 = vector.load %arg5[%c0_48, %c0_49] : memref<8x1xf32, #tpu.memory_space<vmem>>, vector<8x1xf32>
    %90 = vector.broadcast %89 : vector<8x1xf32> to vector<8x32xf32>
    %91 = arith.addf %88, %90 : vector<8x32xf32>
    %cst_50 = arith.constant 0.000000e+00 : f32
    %92 = vector.broadcast %cst_50 : f32 to vector<8x32xf32>
    %93 = arith.cmpf oge, %91, %92 : vector<8x32xf32>
    %c0_51 = arith.constant 0 : index
    %c0_52 = arith.constant 0 : index
    %94 = vector.load %arg6[%c0_51, %c0_52] : memref<8x1xf32, #tpu.memory_space<vmem>>, vector<8x1xf32>
    %95 = vector.broadcast %94 : vector<8x1xf32> to vector<8x32xf32>
    %96 = arith.mulf %95, %91 : vector<8x32xf32>
    %97 = arith.select %93, %91, %96 : vector<8x32xi1>, vector<8x32xf32>
    %c0_53 = arith.constant 0 : index
    %c0_54 = arith.constant 0 : index
    %98 = vector.load %arg7[%c0_53, %c0_54] : memref<8x32xf32, #tpu.memory_space<vmem>>, vector<8x32xf32>
    tpu.vector_store %arg7[%c0_53, %c0_54], %97 {strides = array<i32>} : memref<8x32xf32, #tpu.memory_space<vmem>>, vector<8x32xf32>,
    return
  }
  func.func @transform_0(%arg0: i32) -> (i32, i32) {
    %c0_i32 = arith.constant 0 : i32
    %c0_i32_0 = arith.constant 0 : i32
    %c0_i32_1 = arith.constant 0 : i32
    return %c0_i32, %c0_i32_0 : i32, i32
  }
  func.func @transform_1(%arg0: i32) -> (i32, i32) {
    %c0_i32 = arith.constant 0 : i32
    %c0_i32_0 = arith.constant 0 : i32
    %c0_i32_1 = arith.constant 0 : i32
    return %c0_i32, %c0_i32_0 : i32, i32
  }
  func.func @transform_2(%arg0: i32) -> (i32, i32) {
    %c0_i32 = arith.constant 0 : i32
    %c0_i32_0 = arith.constant 0 : i32
    %c0_i32_1 = arith.constant 0 : i32
    return %c0_i32, %c0_i32_0 : i32, i32
  }
  func.func @transform_3(%arg0: i32) -> (i32, i32) {
    %c0_i32 = arith.constant 0 : i32
    %c0_i32_0 = arith.constant 0 : i32
    %c0_i32_1 = arith.constant 0 : i32
    return %c0_i32, %c0_i32_0 : i32, i32
  }
  func.func @transform_4(%arg0: i32) -> (i32, i32) {
    %c0_i32 = arith.constant 0 : i32
    %c0_i32_0 = arith.constant 0 : i32
    %c0_i32_1 = arith.constant 0 : i32
    return %c0_i32, %c0_i32_0 : i32, i32
  }
  func.func @transform_5(%arg0: i32) -> (i32, i32) {
    %c0_i32 = arith.constant 0 : i32
    %c0_i32_0 = arith.constant 0 : i32
    %c0_i32_1 = arith.constant 0 : i32
    return %c0_i32, %c0_i32_0 : i32, i32
  }
  func.func @transform_6(%arg0: i32) -> (i32, i32) {
    %c0_i32 = arith.constant 0 : i32
    %c0_i32_0 = arith.constant 0 : i32
    %c0_i32_1 = arith.constant 0 : i32
    return %c0_i32, %c0_i32_0 : i32, i32
  }
}

module attributes {stable_mosaic.version = 11 : i64} {
  func.func @kernel(%arg0: i32, %arg1: memref<8x14xf32, #tpu.memory_space<vmem>>, %arg2: memref<9x8x8xf32, #tpu.memory_space<vmem>>, %arg3: memref<9x8xf32, #tpu.memory_space<vmem>>, %arg4: memref<8x8xf32, #tpu.memory_space<vmem>>, %arg5: memref<8x1xf32, #tpu.memory_space<vmem>>, %arg6: memref<8x1xf32, #tpu.memory_space<vmem>>, %arg7: memref<8x1xf32, #tpu.memory_space<vmem>>, %arg8: memref<8x8xf32, #tpu.memory_space<vmem>>) attributes {dimension_semantics = [#tpu.dimension_semantics<arbitrary>], iteration_bounds = array<i64: 1>, scalar_prefetch = 0 : i64, scratch_operands = 0 : i64, tpu.core_type = #tpu.core_type<tc>, window_params = [{pipeline_mode = #tpu.pipeline_mode<synchronous>, transform_indices = @transform_0, window_bounds = array<i64: 8, 14>}, {pipeline_mode = #tpu.pipeline_mode<synchronous>, transform_indices = @transform_1, window_bounds = array<i64: 9, 8, 8>}, {pipeline_mode = #tpu.pipeline_mode<synchronous>, transform_indices = @transform_2, window_bounds = array<i64: 9, 8>}, {pipeline_mode = #tpu.pipeline_mode<synchronous>, transform_indices = @transform_3, window_bounds = array<i64: 8, 8>}, {pipeline_mode = #tpu.pipeline_mode<synchronous>, transform_indices = @transform_4, window_bounds = array<i64: 8, 1>}, {pipeline_mode = #tpu.pipeline_mode<synchronous>, transform_indices = @transform_5, window_bounds = array<i64: 8, 1>}, {pipeline_mode = #tpu.pipeline_mode<synchronous>, transform_indices = @transform_6, window_bounds = array<i64: 8, 1>}, {pipeline_mode = #tpu.pipeline_mode<synchronous>, transform_indices = @transform_7, window_bounds = array<i64: 8, 8>}]} {
    %cst = arith.constant 0.000000e+00 : f32
    %0 = vector.broadcast %cst : f32 to vector<8x8xf32>
    %c0 = arith.constant 0 : index
    %c0_0 = arith.constant 0 : index
    %1 = vector.load %arg1[%c0, %c0_0] : memref<8x14xf32, #tpu.memory_space<vmem>>, vector<8x8xf32>
    %c0_1 = arith.constant 0 : index
    %c0_2 = arith.constant 0 : index
    %2 = vector.load %arg3[%c0_1, %c0_2] : memref<9x8xf32, #tpu.memory_space<vmem>>, vector<1x8xf32>
    %3 = vector.broadcast %2 : vector<1x8xf32> to vector<8x8xf32>
    %4 = arith.mulf %1, %3 : vector<8x8xf32>
    %c0_3 = arith.constant 0 : index
    %c0_4 = arith.constant 0 : index
    %c0_5 = arith.constant 0 : index
    %5 = vector.load %arg2[%c0_3, %c0_4, %c0_5] : memref<9x8x8xf32, #tpu.memory_space<vmem>>, vector<1x8x8xf32>
    %6 = vector.shape_cast %5 : vector<1x8x8xf32> to vector<8x8xf32>
    %cst_6 = arith.constant dense<0.000000e+00> : vector<8x8xf32>
    %7 = tpu.matmul %6, %4, %cst_6 {dimension_numbers = #tpu.dot_dimension_numbers<[1], [0], [0], [1], [0, 0, 1, 1], [], []>} : vector<8x8xf32>, vector<8x8xf32>, vector<8x8xf32> -> vector<8x8xf32>
    %8 = arith.addf %0, %7 : vector<8x8xf32>
    %c0_7 = arith.constant 0 : index
    %c1 = arith.constant 1 : index
    %9 = vector.load %arg1[%c0_7, %c1] : memref<8x14xf32, #tpu.memory_space<vmem>>, vector<8x8xf32>
    %c1_8 = arith.constant 1 : index
    %c0_9 = arith.constant 0 : index
    %10 = vector.load %arg3[%c1_8, %c0_9] : memref<9x8xf32, #tpu.memory_space<vmem>>, vector<1x8xf32>
    %11 = vector.broadcast %10 : vector<1x8xf32> to vector<8x8xf32>
    %12 = arith.mulf %9, %11 : vector<8x8xf32>
    %c1_10 = arith.constant 1 : index
    %c0_11 = arith.constant 0 : index
    %c0_12 = arith.constant 0 : index
    %13 = vector.load %arg2[%c1_10, %c0_11, %c0_12] : memref<9x8x8xf32, #tpu.memory_space<vmem>>, vector<1x8x8xf32>
    %14 = vector.shape_cast %13 : vector<1x8x8xf32> to vector<8x8xf32>
    %cst_13 = arith.constant dense<0.000000e+00> : vector<8x8xf32>
    %15 = tpu.matmul %14, %12, %cst_13 {dimension_numbers = #tpu.dot_dimension_numbers<[1], [0], [0], [1], [0, 0, 1, 1], [], []>} : vector<8x8xf32>, vector<8x8xf32>, vector<8x8xf32> -> vector<8x8xf32>
    %16 = arith.addf %8, %15 : vector<8x8xf32>
    %c0_14 = arith.constant 0 : index
    %c2 = arith.constant 2 : index
    %17 = vector.load %arg1[%c0_14, %c2] : memref<8x14xf32, #tpu.memory_space<vmem>>, vector<8x8xf32>
    %c2_15 = arith.constant 2 : index
    %c0_16 = arith.constant 0 : index
    %18 = vector.load %arg3[%c2_15, %c0_16] : memref<9x8xf32, #tpu.memory_space<vmem>>, vector<1x8xf32>
    %19 = vector.broadcast %18 : vector<1x8xf32> to vector<8x8xf32>
    %20 = arith.mulf %17, %19 : vector<8x8xf32>
    %c2_17 = arith.constant 2 : index
    %c0_18 = arith.constant 0 : index
    %c0_19 = arith.constant 0 : index
    %21 = vector.load %arg2[%c2_17, %c0_18, %c0_19] : memref<9x8x8xf32, #tpu.memory_space<vmem>>, vector<1x8x8xf32>
    %22 = vector.shape_cast %21 : vector<1x8x8xf32> to vector<8x8xf32>
    %cst_20 = arith.constant dense<0.000000e+00> : vector<8x8xf32>
    %23 = tpu.matmul %22, %20, %cst_20 {dimension_numbers = #tpu.dot_dimension_numbers<[1], [0], [0], [1], [0, 0, 1, 1], [], []>} : vector<8x8xf32>, vector<8x8xf32>, vector<8x8xf32> -> vector<8x8xf32>
    %24 = arith.addf %16, %23 : vector<8x8xf32>
    %c0_21 = arith.constant 0 : index
    %c2_22 = arith.constant 2 : index
    %25 = vector.load %arg1[%c0_21, %c2_22] : memref<8x14xf32, #tpu.memory_space<vmem>>, vector<8x8xf32>
    %c3 = arith.constant 3 : index
    %c0_23 = arith.constant 0 : index
    %26 = vector.load %arg3[%c3, %c0_23] : memref<9x8xf32, #tpu.memory_space<vmem>>, vector<1x8xf32>
    %27 = vector.broadcast %26 : vector<1x8xf32> to vector<8x8xf32>
    %28 = arith.mulf %25, %27 : vector<8x8xf32>
    %c3_24 = arith.constant 3 : index
    %c0_25 = arith.constant 0 : index
    %c0_26 = arith.constant 0 : index
    %29 = vector.load %arg2[%c3_24, %c0_25, %c0_26] : memref<9x8x8xf32, #tpu.memory_space<vmem>>, vector<1x8x8xf32>
    %30 = vector.shape_cast %29 : vector<1x8x8xf32> to vector<8x8xf32>
    %cst_27 = arith.constant dense<0.000000e+00> : vector<8x8xf32>
    %31 = tpu.matmul %30, %28, %cst_27 {dimension_numbers = #tpu.dot_dimension_numbers<[1], [0], [0], [1], [0, 0, 1, 1], [], []>} : vector<8x8xf32>, vector<8x8xf32>, vector<8x8xf32> -> vector<8x8xf32>
    %32 = arith.addf %24, %31 : vector<8x8xf32>
    %c0_28 = arith.constant 0 : index
    %c3_29 = arith.constant 3 : index
    %33 = vector.load %arg1[%c0_28, %c3_29] : memref<8x14xf32, #tpu.memory_space<vmem>>, vector<8x8xf32>
    %c4 = arith.constant 4 : index
    %c0_30 = arith.constant 0 : index
    %c0_31 = arith.constant 0 : index
    %34 = vector.load %arg2[%c4, %c0_30, %c0_31] : memref<9x8x8xf32, #tpu.memory_space<vmem>>, vector<1x8x8xf32>
    %35 = vector.shape_cast %34 : vector<1x8x8xf32> to vector<8x8xf32>
    %cst_32 = arith.constant dense<0.000000e+00> : vector<8x8xf32>
    %36 = tpu.matmul %35, %33, %cst_32 {dimension_numbers = #tpu.dot_dimension_numbers<[1], [0], [0], [1], [0, 0, 1, 1], [], []>} : vector<8x8xf32>, vector<8x8xf32>, vector<8x8xf32> -> vector<8x8xf32>
    %37 = arith.addf %32, %36 : vector<8x8xf32>
    %c0_33 = arith.constant 0 : index
    %c4_34 = arith.constant 4 : index
    %38 = vector.load %arg1[%c0_33, %c4_34] : memref<8x14xf32, #tpu.memory_space<vmem>>, vector<8x8xf32>
    %c5 = arith.constant 5 : index
    %c0_35 = arith.constant 0 : index
    %39 = vector.load %arg3[%c5, %c0_35] : memref<9x8xf32, #tpu.memory_space<vmem>>, vector<1x8xf32>
    %40 = vector.broadcast %39 : vector<1x8xf32> to vector<8x8xf32>
    %41 = arith.mulf %38, %40 : vector<8x8xf32>
    %c5_36 = arith.constant 5 : index
    %c0_37 = arith.constant 0 : index
    %c0_38 = arith.constant 0 : index
    %42 = vector.load %arg2[%c5_36, %c0_37, %c0_38] : memref<9x8x8xf32, #tpu.memory_space<vmem>>, vector<1x8x8xf32>
    %43 = vector.shape_cast %42 : vector<1x8x8xf32> to vector<8x8xf32>
    %cst_39 = arith.constant dense<0.000000e+00> : vector<8x8xf32>
    %44 = tpu.matmul %43, %41, %cst_39 {dimension_numbers = #tpu.dot_dimension_numbers<[1], [0], [0], [1], [0, 0, 1, 1], [], []>} : vector<8x8xf32>, vector<8x8xf32>, vector<8x8xf32> -> vector<8x8xf32>
    %45 = arith.addf %37, %44 : vector<8x8xf32>
    %c0_40 = arith.constant 0 : index
    %c4_41 = arith.constant 4 : index
    %46 = vector.load %arg1[%c0_40, %c4_41] : memref<8x14xf32, #tpu.memory_space<vmem>>, vector<8x8xf32>
    %c6 = arith.constant 6 : index
    %c0_42 = arith.constant 0 : index
    %47 = vector.load %arg3[%c6, %c0_42] : memref<9x8xf32, #tpu.memory_space<vmem>>, vector<1x8xf32>
    %48 = vector.broadcast %47 : vector<1x8xf32> to vector<8x8xf32>
    %49 = arith.mulf %46, %48 : vector<8x8xf32>
    %c6_43 = arith.constant 6 : index
    %c0_44 = arith.constant 0 : index
    %c0_45 = arith.constant 0 : index
    %50 = vector.load %arg2[%c6_43, %c0_44, %c0_45] : memref<9x8x8xf32, #tpu.memory_space<vmem>>, vector<1x8x8xf32>
    %51 = vector.shape_cast %50 : vector<1x8x8xf32> to vector<8x8xf32>
    %cst_46 = arith.constant dense<0.000000e+00> : vector<8x8xf32>
    %52 = tpu.matmul %51, %49, %cst_46 {dimension_numbers = #tpu.dot_dimension_numbers<[1], [0], [0], [1], [0, 0, 1, 1], [], []>} : vector<8x8xf32>, vector<8x8xf32>, vector<8x8xf32> -> vector<8x8xf32>
    %53 = arith.addf %45, %52 : vector<8x8xf32>
    %c0_47 = arith.constant 0 : index
    %c5_48 = arith.constant 5 : index
    %54 = vector.load %arg1[%c0_47, %c5_48] : memref<8x14xf32, #tpu.memory_space<vmem>>, vector<8x8xf32>
    %c7 = arith.constant 7 : index
    %c0_49 = arith.constant 0 : index
    %55 = vector.load %arg3[%c7, %c0_49] : memref<9x8xf32, #tpu.memory_space<vmem>>, vector<1x8xf32>
    %56 = vector.broadcast %55 : vector<1x8xf32> to vector<8x8xf32>
    %57 = arith.mulf %54, %56 : vector<8x8xf32>
    %c7_50 = arith.constant 7 : index
    %c0_51 = arith.constant 0 : index
    %c0_52 = arith.constant 0 : index
    %58 = vector.load %arg2[%c7_50, %c0_51, %c0_52] : memref<9x8x8xf32, #tpu.memory_space<vmem>>, vector<1x8x8xf32>
    %59 = vector.shape_cast %58 : vector<1x8x8xf32> to vector<8x8xf32>
    %cst_53 = arith.constant dense<0.000000e+00> : vector<8x8xf32>
    %60 = tpu.matmul %59, %57, %cst_53 {dimension_numbers = #tpu.dot_dimension_numbers<[1], [0], [0], [1], [0, 0, 1, 1], [], []>} : vector<8x8xf32>, vector<8x8xf32>, vector<8x8xf32> -> vector<8x8xf32>
    %61 = arith.addf %53, %60 : vector<8x8xf32>
    %c0_54 = arith.constant 0 : index
    %c6_55 = arith.constant 6 : index
    %62 = vector.load %arg1[%c0_54, %c6_55] : memref<8x14xf32, #tpu.memory_space<vmem>>, vector<8x8xf32>
    %c8 = arith.constant 8 : index
    %c0_56 = arith.constant 0 : index
    %63 = vector.load %arg3[%c8, %c0_56] : memref<9x8xf32, #tpu.memory_space<vmem>>, vector<1x8xf32>
    %64 = vector.broadcast %63 : vector<1x8xf32> to vector<8x8xf32>
    %65 = arith.mulf %62, %64 : vector<8x8xf32>
    %c8_57 = arith.constant 8 : index
    %c0_58 = arith.constant 0 : index
    %c0_59 = arith.constant 0 : index
    %66 = vector.load %arg2[%c8_57, %c0_58, %c0_59] : memref<9x8x8xf32, #tpu.memory_space<vmem>>, vector<1x8x8xf32>
    %67 = vector.shape_cast %66 : vector<1x8x8xf32> to vector<8x8xf32>
    %cst_60 = arith.constant dense<0.000000e+00> : vector<8x8xf32>
    %68 = tpu.matmul %67, %65, %cst_60 {dimension_numbers = #tpu.dot_dimension_numbers<[1], [0], [0], [1], [0, 0, 1, 1], [], []>} : vector<8x8xf32>, vector<8x8xf32>, vector<8x8xf32> -> vector<8x8xf32>
    %69 = arith.addf %61, %68 : vector<8x8xf32>
    %c0_61 = arith.constant 0 : index
    %c0_62 = arith.constant 0 : index
    %70 = vector.load %arg4[%c0_61, %c0_62] : memref<8x8xf32, #tpu.memory_space<vmem>>, vector<8x8xf32>
    %71 = arith.addf %69, %70 : vector<8x8xf32>
    %cst_63 = arith.constant dense<0.000000e+00> : vector<8xf32>
    %72 = vector.multi_reduction <add>, %71, %cst_63 [1] : vector<8x8xf32> to vector<8xf32>
    %73 = vector.shape_cast %72 : vector<8xf32> to vector<8x1xf32>
    %cst_64 = arith.constant 1.250000e-01 : f32
    %74 = vector.broadcast %cst_64 : f32 to vector<8x1xf32>
    %75 = arith.mulf %73, %74 : vector<8x1xf32>
    %76 = vector.broadcast %75 : vector<8x1xf32> to vector<8x8xf32>
    %77 = arith.subf %71, %76 : vector<8x8xf32>
    %78 = arith.mulf %77, %77 : vector<8x8xf32>
    %cst_65 = arith.constant dense<0.000000e+00> : vector<8xf32>
    %79 = vector.multi_reduction <add>, %78, %cst_65 [1] : vector<8x8xf32> to vector<8xf32>
    %80 = vector.shape_cast %79 : vector<8xf32> to vector<8x1xf32>
    %cst_66 = arith.constant 1.250000e-01 : f32
    %81 = vector.broadcast %cst_66 : f32 to vector<8x1xf32>
    %82 = arith.mulf %80, %81 : vector<8x1xf32>
    %cst_67 = arith.constant 9.99999974E-6 : f32
    %83 = vector.broadcast %cst_67 : f32 to vector<8x1xf32>
    %84 = arith.addf %82, %83 : vector<8x1xf32>
    %85 = math.rsqrt %84 : vector<8x1xf32>
    %86 = vector.broadcast %85 : vector<8x1xf32> to vector<8x8xf32>
    %87 = arith.mulf %77, %86 : vector<8x8xf32>
    %c0_68 = arith.constant 0 : index
    %c0_69 = arith.constant 0 : index
    %88 = vector.load %arg5[%c0_68, %c0_69] : memref<8x1xf32, #tpu.memory_space<vmem>>, vector<8x1xf32>
    %89 = vector.broadcast %88 : vector<8x1xf32> to vector<8x8xf32>
    %90 = arith.mulf %87, %89 : vector<8x8xf32>
    %c0_70 = arith.constant 0 : index
    %c0_71 = arith.constant 0 : index
    %91 = vector.load %arg6[%c0_70, %c0_71] : memref<8x1xf32, #tpu.memory_space<vmem>>, vector<8x1xf32>
    %92 = vector.broadcast %91 : vector<8x1xf32> to vector<8x8xf32>
    %93 = arith.addf %90, %92 : vector<8x8xf32>
    %cst_72 = arith.constant 0.000000e+00 : f32
    %94 = vector.broadcast %cst_72 : f32 to vector<8x8xf32>
    %95 = arith.cmpf oge, %93, %94 : vector<8x8xf32>
    %c0_73 = arith.constant 0 : index
    %c0_74 = arith.constant 0 : index
    %96 = vector.load %arg7[%c0_73, %c0_74] : memref<8x1xf32, #tpu.memory_space<vmem>>, vector<8x1xf32>
    %97 = vector.broadcast %96 : vector<8x1xf32> to vector<8x8xf32>
    %98 = arith.mulf %97, %93 : vector<8x8xf32>
    %99 = arith.select %95, %93, %98 : vector<8x8xi1>, vector<8x8xf32>
    %c0_75 = arith.constant 0 : index
    %c0_76 = arith.constant 0 : index
    %100 = vector.load %arg8[%c0_75, %c0_76] : memref<8x8xf32, #tpu.memory_space<vmem>>, vector<8x8xf32>
    tpu.vector_store %arg8[%c0_75, %c0_76], %99 {strides = array<i32>} : memref<8x8xf32, #tpu.memory_space<vmem>>, vector<8x8xf32>,
    return
  }
  func.func @transform_0(%arg0: i32) -> (i32, i32) {
    %c0_i32 = arith.constant 0 : i32
    %c0_i32_0 = arith.constant 0 : i32
    %c0_i32_1 = arith.constant 0 : i32
    return %c0_i32, %c0_i32_0 : i32, i32
  }
  func.func @transform_1(%arg0: i32) -> (i32, i32, i32) {
    %c0_i32 = arith.constant 0 : i32
    %c0_i32_0 = arith.constant 0 : i32
    %c0_i32_1 = arith.constant 0 : i32
    %c0_i32_2 = arith.constant 0 : i32
    return %c0_i32, %c0_i32_0, %c0_i32_1 : i32, i32, i32
  }
  func.func @transform_2(%arg0: i32) -> (i32, i32) {
    %c0_i32 = arith.constant 0 : i32
    %c0_i32_0 = arith.constant 0 : i32
    %c0_i32_1 = arith.constant 0 : i32
    return %c0_i32, %c0_i32_0 : i32, i32
  }
  func.func @transform_3(%arg0: i32) -> (i32, i32) {
    %c0_i32 = arith.constant 0 : i32
    %c0_i32_0 = arith.constant 0 : i32
    %c0_i32_1 = arith.constant 0 : i32
    return %c0_i32, %c0_i32_0 : i32, i32
  }
  func.func @transform_4(%arg0: i32) -> (i32, i32) {
    %c0_i32 = arith.constant 0 : i32
    %c0_i32_0 = arith.constant 0 : i32
    %c0_i32_1 = arith.constant 0 : i32
    return %c0_i32, %c0_i32_0 : i32, i32
  }
  func.func @transform_5(%arg0: i32) -> (i32, i32) {
    %c0_i32 = arith.constant 0 : i32
    %c0_i32_0 = arith.constant 0 : i32
    %c0_i32_1 = arith.constant 0 : i32
    return %c0_i32, %c0_i32_0 : i32, i32
  }
  func.func @transform_6(%arg0: i32) -> (i32, i32) {
    %c0_i32 = arith.constant 0 : i32
    %c0_i32_0 = arith.constant 0 : i32
    %c0_i32_1 = arith.constant 0 : i32
    return %c0_i32, %c0_i32_0 : i32, i32
  }
  func.func @transform_7(%arg0: i32) -> (i32, i32) {
    %c0_i32 = arith.constant 0 : i32
    %c0_i32_0 = arith.constant 0 : i32
    %c0_i32_1 = arith.constant 0 : i32
    return %c0_i32, %c0_i32_0 : i32, i32
  }
}

module attributes {stable_mosaic.version = 11 : i64} {
  func.func @kernel(%arg0: i32, %arg1: memref<8x14xf32, #tpu.memory_space<vmem>>, %arg2: memref<9x16x8xf32, #tpu.memory_space<vmem>>, %arg3: memref<9x8xf32, #tpu.memory_space<vmem>>, %arg4: memref<16x8xf32, #tpu.memory_space<vmem>>) attributes {dimension_semantics = [#tpu.dimension_semantics<arbitrary>], iteration_bounds = array<i64: 1>, scalar_prefetch = 0 : i64, scratch_operands = 0 : i64, tpu.core_type = #tpu.core_type<tc>, window_params = [{pipeline_mode = #tpu.pipeline_mode<synchronous>, transform_indices = @transform_0, window_bounds = array<i64: 8, 14>}, {pipeline_mode = #tpu.pipeline_mode<synchronous>, transform_indices = @transform_1, window_bounds = array<i64: 9, 16, 8>}, {pipeline_mode = #tpu.pipeline_mode<synchronous>, transform_indices = @transform_2, window_bounds = array<i64: 9, 8>}, {pipeline_mode = #tpu.pipeline_mode<synchronous>, transform_indices = @transform_3, window_bounds = array<i64: 16, 8>}]} {
    %cst = arith.constant 0.000000e+00 : f32
    %0 = vector.broadcast %cst : f32 to vector<16x8xf32>
    %c0 = arith.constant 0 : index
    %c0_0 = arith.constant 0 : index
    %1 = vector.load %arg1[%c0, %c0_0] : memref<8x14xf32, #tpu.memory_space<vmem>>, vector<8x8xf32>
    %c0_1 = arith.constant 0 : index
    %c0_2 = arith.constant 0 : index
    %2 = vector.load %arg3[%c0_1, %c0_2] : memref<9x8xf32, #tpu.memory_space<vmem>>, vector<1x8xf32>
    %3 = vector.broadcast %2 : vector<1x8xf32> to vector<8x8xf32>
    %4 = arith.mulf %1, %3 : vector<8x8xf32>
    %c0_3 = arith.constant 0 : index
    %c0_4 = arith.constant 0 : index
    %c0_5 = arith.constant 0 : index
    %5 = vector.load %arg2[%c0_3, %c0_4, %c0_5] : memref<9x16x8xf32, #tpu.memory_space<vmem>>, vector<1x16x8xf32>
    %6 = vector.shape_cast %5 : vector<1x16x8xf32> to vector<16x8xf32>
    %cst_6 = arith.constant dense<0.000000e+00> : vector<16x8xf32>
    %7 = tpu.matmul %6, %4, %cst_6 {dimension_numbers = #tpu.dot_dimension_numbers<[1], [0], [0], [1], [0, 0, 1, 1], [], []>} : vector<16x8xf32>, vector<8x8xf32>, vector<16x8xf32> -> vector<16x8xf32>
    %8 = arith.addf %0, %7 : vector<16x8xf32>
    %c0_7 = arith.constant 0 : index
    %c1 = arith.constant 1 : index
    %9 = vector.load %arg1[%c0_7, %c1] : memref<8x14xf32, #tpu.memory_space<vmem>>, vector<8x8xf32>
    %c1_8 = arith.constant 1 : index
    %c0_9 = arith.constant 0 : index
    %10 = vector.load %arg3[%c1_8, %c0_9] : memref<9x8xf32, #tpu.memory_space<vmem>>, vector<1x8xf32>
    %11 = vector.broadcast %10 : vector<1x8xf32> to vector<8x8xf32>
    %12 = arith.mulf %9, %11 : vector<8x8xf32>
    %c1_10 = arith.constant 1 : index
    %c0_11 = arith.constant 0 : index
    %c0_12 = arith.constant 0 : index
    %13 = vector.load %arg2[%c1_10, %c0_11, %c0_12] : memref<9x16x8xf32, #tpu.memory_space<vmem>>, vector<1x16x8xf32>
    %14 = vector.shape_cast %13 : vector<1x16x8xf32> to vector<16x8xf32>
    %cst_13 = arith.constant dense<0.000000e+00> : vector<16x8xf32>
    %15 = tpu.matmul %14, %12, %cst_13 {dimension_numbers = #tpu.dot_dimension_numbers<[1], [0], [0], [1], [0, 0, 1, 1], [], []>} : vector<16x8xf32>, vector<8x8xf32>, vector<16x8xf32> -> vector<16x8xf32>
    %16 = arith.addf %8, %15 : vector<16x8xf32>
    %c0_14 = arith.constant 0 : index
    %c2 = arith.constant 2 : index
    %17 = vector.load %arg1[%c0_14, %c2] : memref<8x14xf32, #tpu.memory_space<vmem>>, vector<8x8xf32>
    %c2_15 = arith.constant 2 : index
    %c0_16 = arith.constant 0 : index
    %18 = vector.load %arg3[%c2_15, %c0_16] : memref<9x8xf32, #tpu.memory_space<vmem>>, vector<1x8xf32>
    %19 = vector.broadcast %18 : vector<1x8xf32> to vector<8x8xf32>
    %20 = arith.mulf %17, %19 : vector<8x8xf32>
    %c2_17 = arith.constant 2 : index
    %c0_18 = arith.constant 0 : index
    %c0_19 = arith.constant 0 : index
    %21 = vector.load %arg2[%c2_17, %c0_18, %c0_19] : memref<9x16x8xf32, #tpu.memory_space<vmem>>, vector<1x16x8xf32>
    %22 = vector.shape_cast %21 : vector<1x16x8xf32> to vector<16x8xf32>
    %cst_20 = arith.constant dense<0.000000e+00> : vector<16x8xf32>
    %23 = tpu.matmul %22, %20, %cst_20 {dimension_numbers = #tpu.dot_dimension_numbers<[1], [0], [0], [1], [0, 0, 1, 1], [], []>} : vector<16x8xf32>, vector<8x8xf32>, vector<16x8xf32> -> vector<16x8xf32>
    %24 = arith.addf %16, %23 : vector<16x8xf32>
    %c0_21 = arith.constant 0 : index
    %c2_22 = arith.constant 2 : index
    %25 = vector.load %arg1[%c0_21, %c2_22] : memref<8x14xf32, #tpu.memory_space<vmem>>, vector<8x8xf32>
    %c3 = arith.constant 3 : index
    %c0_23 = arith.constant 0 : index
    %26 = vector.load %arg3[%c3, %c0_23] : memref<9x8xf32, #tpu.memory_space<vmem>>, vector<1x8xf32>
    %27 = vector.broadcast %26 : vector<1x8xf32> to vector<8x8xf32>
    %28 = arith.mulf %25, %27 : vector<8x8xf32>
    %c3_24 = arith.constant 3 : index
    %c0_25 = arith.constant 0 : index
    %c0_26 = arith.constant 0 : index
    %29 = vector.load %arg2[%c3_24, %c0_25, %c0_26] : memref<9x16x8xf32, #tpu.memory_space<vmem>>, vector<1x16x8xf32>
    %30 = vector.shape_cast %29 : vector<1x16x8xf32> to vector<16x8xf32>
    %cst_27 = arith.constant dense<0.000000e+00> : vector<16x8xf32>
    %31 = tpu.matmul %30, %28, %cst_27 {dimension_numbers = #tpu.dot_dimension_numbers<[1], [0], [0], [1], [0, 0, 1, 1], [], []>} : vector<16x8xf32>, vector<8x8xf32>, vector<16x8xf32> -> vector<16x8xf32>
    %32 = arith.addf %24, %31 : vector<16x8xf32>
    %c0_28 = arith.constant 0 : index
    %c3_29 = arith.constant 3 : index
    %33 = vector.load %arg1[%c0_28, %c3_29] : memref<8x14xf32, #tpu.memory_space<vmem>>, vector<8x8xf32>
    %c4 = arith.constant 4 : index
    %c0_30 = arith.constant 0 : index
    %c0_31 = arith.constant 0 : index
    %34 = vector.load %arg2[%c4, %c0_30, %c0_31] : memref<9x16x8xf32, #tpu.memory_space<vmem>>, vector<1x16x8xf32>
    %35 = vector.shape_cast %34 : vector<1x16x8xf32> to vector<16x8xf32>
    %cst_32 = arith.constant dense<0.000000e+00> : vector<16x8xf32>
    %36 = tpu.matmul %35, %33, %cst_32 {dimension_numbers = #tpu.dot_dimension_numbers<[1], [0], [0], [1], [0, 0, 1, 1], [], []>} : vector<16x8xf32>, vector<8x8xf32>, vector<16x8xf32> -> vector<16x8xf32>
    %37 = arith.addf %32, %36 : vector<16x8xf32>
    %c0_33 = arith.constant 0 : index
    %c4_34 = arith.constant 4 : index
    %38 = vector.load %arg1[%c0_33, %c4_34] : memref<8x14xf32, #tpu.memory_space<vmem>>, vector<8x8xf32>
    %c5 = arith.constant 5 : index
    %c0_35 = arith.constant 0 : index
    %39 = vector.load %arg3[%c5, %c0_35] : memref<9x8xf32, #tpu.memory_space<vmem>>, vector<1x8xf32>
    %40 = vector.broadcast %39 : vector<1x8xf32> to vector<8x8xf32>
    %41 = arith.mulf %38, %40 : vector<8x8xf32>
    %c5_36 = arith.constant 5 : index
    %c0_37 = arith.constant 0 : index
    %c0_38 = arith.constant 0 : index
    %42 = vector.load %arg2[%c5_36, %c0_37, %c0_38] : memref<9x16x8xf32, #tpu.memory_space<vmem>>, vector<1x16x8xf32>
    %43 = vector.shape_cast %42 : vector<1x16x8xf32> to vector<16x8xf32>
    %cst_39 = arith.constant dense<0.000000e+00> : vector<16x8xf32>
    %44 = tpu.matmul %43, %41, %cst_39 {dimension_numbers = #tpu.dot_dimension_numbers<[1], [0], [0], [1], [0, 0, 1, 1], [], []>} : vector<16x8xf32>, vector<8x8xf32>, vector<16x8xf32> -> vector<16x8xf32>
    %45 = arith.addf %37, %44 : vector<16x8xf32>
    %c0_40 = arith.constant 0 : index
    %c4_41 = arith.constant 4 : index
    %46 = vector.load %arg1[%c0_40, %c4_41] : memref<8x14xf32, #tpu.memory_space<vmem>>, vector<8x8xf32>
    %c6 = arith.constant 6 : index
    %c0_42 = arith.constant 0 : index
    %47 = vector.load %arg3[%c6, %c0_42] : memref<9x8xf32, #tpu.memory_space<vmem>>, vector<1x8xf32>
    %48 = vector.broadcast %47 : vector<1x8xf32> to vector<8x8xf32>
    %49 = arith.mulf %46, %48 : vector<8x8xf32>
    %c6_43 = arith.constant 6 : index
    %c0_44 = arith.constant 0 : index
    %c0_45 = arith.constant 0 : index
    %50 = vector.load %arg2[%c6_43, %c0_44, %c0_45] : memref<9x16x8xf32, #tpu.memory_space<vmem>>, vector<1x16x8xf32>
    %51 = vector.shape_cast %50 : vector<1x16x8xf32> to vector<16x8xf32>
    %cst_46 = arith.constant dense<0.000000e+00> : vector<16x8xf32>
    %52 = tpu.matmul %51, %49, %cst_46 {dimension_numbers = #tpu.dot_dimension_numbers<[1], [0], [0], [1], [0, 0, 1, 1], [], []>} : vector<16x8xf32>, vector<8x8xf32>, vector<16x8xf32> -> vector<16x8xf32>
    %53 = arith.addf %45, %52 : vector<16x8xf32>
    %c0_47 = arith.constant 0 : index
    %c5_48 = arith.constant 5 : index
    %54 = vector.load %arg1[%c0_47, %c5_48] : memref<8x14xf32, #tpu.memory_space<vmem>>, vector<8x8xf32>
    %c7 = arith.constant 7 : index
    %c0_49 = arith.constant 0 : index
    %55 = vector.load %arg3[%c7, %c0_49] : memref<9x8xf32, #tpu.memory_space<vmem>>, vector<1x8xf32>
    %56 = vector.broadcast %55 : vector<1x8xf32> to vector<8x8xf32>
    %57 = arith.mulf %54, %56 : vector<8x8xf32>
    %c7_50 = arith.constant 7 : index
    %c0_51 = arith.constant 0 : index
    %c0_52 = arith.constant 0 : index
    %58 = vector.load %arg2[%c7_50, %c0_51, %c0_52] : memref<9x16x8xf32, #tpu.memory_space<vmem>>, vector<1x16x8xf32>
    %59 = vector.shape_cast %58 : vector<1x16x8xf32> to vector<16x8xf32>
    %cst_53 = arith.constant dense<0.000000e+00> : vector<16x8xf32>
    %60 = tpu.matmul %59, %57, %cst_53 {dimension_numbers = #tpu.dot_dimension_numbers<[1], [0], [0], [1], [0, 0, 1, 1], [], []>} : vector<16x8xf32>, vector<8x8xf32>, vector<16x8xf32> -> vector<16x8xf32>
    %61 = arith.addf %53, %60 : vector<16x8xf32>
    %c0_54 = arith.constant 0 : index
    %c6_55 = arith.constant 6 : index
    %62 = vector.load %arg1[%c0_54, %c6_55] : memref<8x14xf32, #tpu.memory_space<vmem>>, vector<8x8xf32>
    %c8 = arith.constant 8 : index
    %c0_56 = arith.constant 0 : index
    %63 = vector.load %arg3[%c8, %c0_56] : memref<9x8xf32, #tpu.memory_space<vmem>>, vector<1x8xf32>
    %64 = vector.broadcast %63 : vector<1x8xf32> to vector<8x8xf32>
    %65 = arith.mulf %62, %64 : vector<8x8xf32>
    %c8_57 = arith.constant 8 : index
    %c0_58 = arith.constant 0 : index
    %c0_59 = arith.constant 0 : index
    %66 = vector.load %arg2[%c8_57, %c0_58, %c0_59] : memref<9x16x8xf32, #tpu.memory_space<vmem>>, vector<1x16x8xf32>
    %67 = vector.shape_cast %66 : vector<1x16x8xf32> to vector<16x8xf32>
    %cst_60 = arith.constant dense<0.000000e+00> : vector<16x8xf32>
    %68 = tpu.matmul %67, %65, %cst_60 {dimension_numbers = #tpu.dot_dimension_numbers<[1], [0], [0], [1], [0, 0, 1, 1], [], []>} : vector<16x8xf32>, vector<8x8xf32>, vector<16x8xf32> -> vector<16x8xf32>
    %69 = arith.addf %61, %68 : vector<16x8xf32>
    %c0_61 = arith.constant 0 : index
    %c0_62 = arith.constant 0 : index
    %70 = vector.load %arg4[%c0_61, %c0_62] : memref<16x8xf32, #tpu.memory_space<vmem>>, vector<16x8xf32>
    tpu.vector_store %arg4[%c0_61, %c0_62], %69 {strides = array<i32>} : memref<16x8xf32, #tpu.memory_space<vmem>>, vector<16x8xf32>,
    return
  }
  func.func @transform_0(%arg0: i32) -> (i32, i32) {
    %c0_i32 = arith.constant 0 : i32
    %c0_i32_0 = arith.constant 0 : i32
    %c0_i32_1 = arith.constant 0 : i32
    return %c0_i32, %c0_i32_0 : i32, i32
  }
  func.func @transform_1(%arg0: i32) -> (i32, i32, i32) {
    %c0_i32 = arith.constant 0 : i32
    %c0_i32_0 = arith.constant 0 : i32
    %c0_i32_1 = arith.constant 0 : i32
    %c0_i32_2 = arith.constant 0 : i32
    return %c0_i32, %c0_i32_0, %c0_i32_1 : i32, i32, i32
  }
  func.func @transform_2(%arg0: i32) -> (i32, i32) {
    %c0_i32 = arith.constant 0 : i32
    %c0_i32_0 = arith.constant 0 : i32
    %c0_i32_1 = arith.constant 0 : i32
    return %c0_i32, %c0_i32_0 : i32, i32
  }
  func.func @transform_3(%arg0: i32) -> (i32, i32) {
    %c0_i32 = arith.constant 0 : i32
    %c0_i32_0 = arith.constant 0 : i32
    %c0_i32_1 = arith.constant 0 : i32
    return %c0_i32, %c0_i32_0 : i32, i32
  }
}

module attributes {stable_mosaic.version = 11 : i64} {
  func.func @kernel(%arg0: i32, %arg1: memref<8x14xf32, #tpu.memory_space<vmem>>, %arg2: memref<8x9xf32, #tpu.memory_space<vmem>>, %arg3: memref<9x8xf32, #tpu.memory_space<vmem>>, %arg4: memref<8x1xf32, #tpu.memory_space<vmem>>, %arg5: memref<8x1xf32, #tpu.memory_space<vmem>>, %arg6: memref<8x1xf32, #tpu.memory_space<vmem>>, %arg7: memref<8x8xf32, #tpu.memory_space<vmem>>) attributes {dimension_semantics = [#tpu.dimension_semantics<arbitrary>], iteration_bounds = array<i64: 1>, scalar_prefetch = 0 : i64, scratch_operands = 0 : i64, tpu.core_type = #tpu.core_type<tc>, window_params = [{pipeline_mode = #tpu.pipeline_mode<synchronous>, transform_indices = @transform_0, window_bounds = array<i64: 8, 14>}, {pipeline_mode = #tpu.pipeline_mode<synchronous>, transform_indices = @transform_1, window_bounds = array<i64: 8, 9>}, {pipeline_mode = #tpu.pipeline_mode<synchronous>, transform_indices = @transform_2, window_bounds = array<i64: 9, 8>}, {pipeline_mode = #tpu.pipeline_mode<synchronous>, transform_indices = @transform_3, window_bounds = array<i64: 8, 1>}, {pipeline_mode = #tpu.pipeline_mode<synchronous>, transform_indices = @transform_4, window_bounds = array<i64: 8, 1>}, {pipeline_mode = #tpu.pipeline_mode<synchronous>, transform_indices = @transform_5, window_bounds = array<i64: 8, 1>}, {pipeline_mode = #tpu.pipeline_mode<synchronous>, transform_indices = @transform_6, window_bounds = array<i64: 8, 8>}]} {
    %cst = arith.constant 0.000000e+00 : f32
    %0 = vector.broadcast %cst : f32 to vector<8x8xf32>
    %c0 = arith.constant 0 : index
    %c0_0 = arith.constant 0 : index
    %1 = vector.load %arg1[%c0, %c0_0] : memref<8x14xf32, #tpu.memory_space<vmem>>, vector<8x8xf32>
    %c0_1 = arith.constant 0 : index
    %c0_2 = arith.constant 0 : index
    %2 = vector.load %arg3[%c0_1, %c0_2] : memref<9x8xf32, #tpu.memory_space<vmem>>, vector<1x8xf32>
    %3 = vector.broadcast %2 : vector<1x8xf32> to vector<8x8xf32>
    %4 = arith.mulf %1, %3 : vector<8x8xf32>
    %c0_3 = arith.constant 0 : index
    %c0_4 = arith.constant 0 : index
    %5 = vector.load %arg2[%c0_3, %c0_4] : memref<8x9xf32, #tpu.memory_space<vmem>>, vector<8x1xf32>
    %6 = vector.broadcast %5 : vector<8x1xf32> to vector<8x8xf32>
    %7 = arith.mulf %4, %6 : vector<8x8xf32>
    %8 = arith.addf %0, %7 : vector<8x8xf32>
    %c0_5 = arith.constant 0 : index
    %c1 = arith.constant 1 : index
    %9 = vector.load %arg1[%c0_5, %c1] : memref<8x14xf32, #tpu.memory_space<vmem>>, vector<8x8xf32>
    %c1_6 = arith.constant 1 : index
    %c0_7 = arith.constant 0 : index
    %10 = vector.load %arg3[%c1_6, %c0_7] : memref<9x8xf32, #tpu.memory_space<vmem>>, vector<1x8xf32>
    %11 = vector.broadcast %10 : vector<1x8xf32> to vector<8x8xf32>
    %12 = arith.mulf %9, %11 : vector<8x8xf32>
    %c0_8 = arith.constant 0 : index
    %c1_9 = arith.constant 1 : index
    %13 = vector.load %arg2[%c0_8, %c1_9] : memref<8x9xf32, #tpu.memory_space<vmem>>, vector<8x1xf32>
    %14 = vector.broadcast %13 : vector<8x1xf32> to vector<8x8xf32>
    %15 = arith.mulf %12, %14 : vector<8x8xf32>
    %16 = arith.addf %8, %15 : vector<8x8xf32>
    %c0_10 = arith.constant 0 : index
    %c2 = arith.constant 2 : index
    %17 = vector.load %arg1[%c0_10, %c2] : memref<8x14xf32, #tpu.memory_space<vmem>>, vector<8x8xf32>
    %c2_11 = arith.constant 2 : index
    %c0_12 = arith.constant 0 : index
    %18 = vector.load %arg3[%c2_11, %c0_12] : memref<9x8xf32, #tpu.memory_space<vmem>>, vector<1x8xf32>
    %19 = vector.broadcast %18 : vector<1x8xf32> to vector<8x8xf32>
    %20 = arith.mulf %17, %19 : vector<8x8xf32>
    %c0_13 = arith.constant 0 : index
    %c2_14 = arith.constant 2 : index
    %21 = vector.load %arg2[%c0_13, %c2_14] : memref<8x9xf32, #tpu.memory_space<vmem>>, vector<8x1xf32>
    %22 = vector.broadcast %21 : vector<8x1xf32> to vector<8x8xf32>
    %23 = arith.mulf %20, %22 : vector<8x8xf32>
    %24 = arith.addf %16, %23 : vector<8x8xf32>
    %c0_15 = arith.constant 0 : index
    %c2_16 = arith.constant 2 : index
    %25 = vector.load %arg1[%c0_15, %c2_16] : memref<8x14xf32, #tpu.memory_space<vmem>>, vector<8x8xf32>
    %c3 = arith.constant 3 : index
    %c0_17 = arith.constant 0 : index
    %26 = vector.load %arg3[%c3, %c0_17] : memref<9x8xf32, #tpu.memory_space<vmem>>, vector<1x8xf32>
    %27 = vector.broadcast %26 : vector<1x8xf32> to vector<8x8xf32>
    %28 = arith.mulf %25, %27 : vector<8x8xf32>
    %c0_18 = arith.constant 0 : index
    %c3_19 = arith.constant 3 : index
    %29 = vector.load %arg2[%c0_18, %c3_19] : memref<8x9xf32, #tpu.memory_space<vmem>>, vector<8x1xf32>
    %30 = vector.broadcast %29 : vector<8x1xf32> to vector<8x8xf32>
    %31 = arith.mulf %28, %30 : vector<8x8xf32>
    %32 = arith.addf %24, %31 : vector<8x8xf32>
    %c0_20 = arith.constant 0 : index
    %c3_21 = arith.constant 3 : index
    %33 = vector.load %arg1[%c0_20, %c3_21] : memref<8x14xf32, #tpu.memory_space<vmem>>, vector<8x8xf32>
    %c0_22 = arith.constant 0 : index
    %c4 = arith.constant 4 : index
    %34 = vector.load %arg2[%c0_22, %c4] : memref<8x9xf32, #tpu.memory_space<vmem>>, vector<8x1xf32>
    %35 = vector.broadcast %34 : vector<8x1xf32> to vector<8x8xf32>
    %36 = arith.mulf %33, %35 : vector<8x8xf32>
    %37 = arith.addf %32, %36 : vector<8x8xf32>
    %c0_23 = arith.constant 0 : index
    %c4_24 = arith.constant 4 : index
    %38 = vector.load %arg1[%c0_23, %c4_24] : memref<8x14xf32, #tpu.memory_space<vmem>>, vector<8x8xf32>
    %c5 = arith.constant 5 : index
    %c0_25 = arith.constant 0 : index
    %39 = vector.load %arg3[%c5, %c0_25] : memref<9x8xf32, #tpu.memory_space<vmem>>, vector<1x8xf32>
    %40 = vector.broadcast %39 : vector<1x8xf32> to vector<8x8xf32>
    %41 = arith.mulf %38, %40 : vector<8x8xf32>
    %c0_26 = arith.constant 0 : index
    %c5_27 = arith.constant 5 : index
    %42 = vector.load %arg2[%c0_26, %c5_27] : memref<8x9xf32, #tpu.memory_space<vmem>>, vector<8x1xf32>
    %43 = vector.broadcast %42 : vector<8x1xf32> to vector<8x8xf32>
    %44 = arith.mulf %41, %43 : vector<8x8xf32>
    %45 = arith.addf %37, %44 : vector<8x8xf32>
    %c0_28 = arith.constant 0 : index
    %c4_29 = arith.constant 4 : index
    %46 = vector.load %arg1[%c0_28, %c4_29] : memref<8x14xf32, #tpu.memory_space<vmem>>, vector<8x8xf32>
    %c6 = arith.constant 6 : index
    %c0_30 = arith.constant 0 : index
    %47 = vector.load %arg3[%c6, %c0_30] : memref<9x8xf32, #tpu.memory_space<vmem>>, vector<1x8xf32>
    %48 = vector.broadcast %47 : vector<1x8xf32> to vector<8x8xf32>
    %49 = arith.mulf %46, %48 : vector<8x8xf32>
    %c0_31 = arith.constant 0 : index
    %c6_32 = arith.constant 6 : index
    %50 = vector.load %arg2[%c0_31, %c6_32] : memref<8x9xf32, #tpu.memory_space<vmem>>, vector<8x1xf32>
    %51 = vector.broadcast %50 : vector<8x1xf32> to vector<8x8xf32>
    %52 = arith.mulf %49, %51 : vector<8x8xf32>
    %53 = arith.addf %45, %52 : vector<8x8xf32>
    %c0_33 = arith.constant 0 : index
    %c5_34 = arith.constant 5 : index
    %54 = vector.load %arg1[%c0_33, %c5_34] : memref<8x14xf32, #tpu.memory_space<vmem>>, vector<8x8xf32>
    %c7 = arith.constant 7 : index
    %c0_35 = arith.constant 0 : index
    %55 = vector.load %arg3[%c7, %c0_35] : memref<9x8xf32, #tpu.memory_space<vmem>>, vector<1x8xf32>
    %56 = vector.broadcast %55 : vector<1x8xf32> to vector<8x8xf32>
    %57 = arith.mulf %54, %56 : vector<8x8xf32>
    %c0_36 = arith.constant 0 : index
    %c7_37 = arith.constant 7 : index
    %58 = vector.load %arg2[%c0_36, %c7_37] : memref<8x9xf32, #tpu.memory_space<vmem>>, vector<8x1xf32>
    %59 = vector.broadcast %58 : vector<8x1xf32> to vector<8x8xf32>
    %60 = arith.mulf %57, %59 : vector<8x8xf32>
    %61 = arith.addf %53, %60 : vector<8x8xf32>
    %c0_38 = arith.constant 0 : index
    %c6_39 = arith.constant 6 : index
    %62 = vector.load %arg1[%c0_38, %c6_39] : memref<8x14xf32, #tpu.memory_space<vmem>>, vector<8x8xf32>
    %c8 = arith.constant 8 : index
    %c0_40 = arith.constant 0 : index
    %63 = vector.load %arg3[%c8, %c0_40] : memref<9x8xf32, #tpu.memory_space<vmem>>, vector<1x8xf32>
    %64 = vector.broadcast %63 : vector<1x8xf32> to vector<8x8xf32>
    %65 = arith.mulf %62, %64 : vector<8x8xf32>
    %c0_41 = arith.constant 0 : index
    %c8_42 = arith.constant 8 : index
    %66 = vector.load %arg2[%c0_41, %c8_42] : memref<8x9xf32, #tpu.memory_space<vmem>>, vector<8x1xf32>
    %67 = vector.broadcast %66 : vector<8x1xf32> to vector<8x8xf32>
    %68 = arith.mulf %65, %67 : vector<8x8xf32>
    %69 = arith.addf %61, %68 : vector<8x8xf32>
    %cst_43 = arith.constant dense<0.000000e+00> : vector<8xf32>
    %70 = vector.multi_reduction <add>, %69, %cst_43 [1] : vector<8x8xf32> to vector<8xf32>
    %71 = vector.shape_cast %70 : vector<8xf32> to vector<8x1xf32>
    %cst_44 = arith.constant 1.250000e-01 : f32
    %72 = vector.broadcast %cst_44 : f32 to vector<8x1xf32>
    %73 = arith.mulf %71, %72 : vector<8x1xf32>
    %74 = vector.broadcast %73 : vector<8x1xf32> to vector<8x8xf32>
    %75 = arith.subf %69, %74 : vector<8x8xf32>
    %76 = arith.mulf %75, %75 : vector<8x8xf32>
    %cst_45 = arith.constant dense<0.000000e+00> : vector<8xf32>
    %77 = vector.multi_reduction <add>, %76, %cst_45 [1] : vector<8x8xf32> to vector<8xf32>
    %78 = vector.shape_cast %77 : vector<8xf32> to vector<8x1xf32>
    %cst_46 = arith.constant 1.250000e-01 : f32
    %79 = vector.broadcast %cst_46 : f32 to vector<8x1xf32>
    %80 = arith.mulf %78, %79 : vector<8x1xf32>
    %cst_47 = arith.constant 9.99999974E-6 : f32
    %81 = vector.broadcast %cst_47 : f32 to vector<8x1xf32>
    %82 = arith.addf %80, %81 : vector<8x1xf32>
    %83 = math.rsqrt %82 : vector<8x1xf32>
    %84 = vector.broadcast %83 : vector<8x1xf32> to vector<8x8xf32>
    %85 = arith.mulf %75, %84 : vector<8x8xf32>
    %c0_48 = arith.constant 0 : index
    %c0_49 = arith.constant 0 : index
    %86 = vector.load %arg4[%c0_48, %c0_49] : memref<8x1xf32, #tpu.memory_space<vmem>>, vector<8x1xf32>
    %87 = vector.broadcast %86 : vector<8x1xf32> to vector<8x8xf32>
    %88 = arith.mulf %85, %87 : vector<8x8xf32>
    %c0_50 = arith.constant 0 : index
    %c0_51 = arith.constant 0 : index
    %89 = vector.load %arg5[%c0_50, %c0_51] : memref<8x1xf32, #tpu.memory_space<vmem>>, vector<8x1xf32>
    %90 = vector.broadcast %89 : vector<8x1xf32> to vector<8x8xf32>
    %91 = arith.addf %88, %90 : vector<8x8xf32>
    %cst_52 = arith.constant 0.000000e+00 : f32
    %92 = vector.broadcast %cst_52 : f32 to vector<8x8xf32>
    %93 = arith.cmpf oge, %91, %92 : vector<8x8xf32>
    %c0_53 = arith.constant 0 : index
    %c0_54 = arith.constant 0 : index
    %94 = vector.load %arg6[%c0_53, %c0_54] : memref<8x1xf32, #tpu.memory_space<vmem>>, vector<8x1xf32>
    %95 = vector.broadcast %94 : vector<8x1xf32> to vector<8x8xf32>
    %96 = arith.mulf %95, %91 : vector<8x8xf32>
    %97 = arith.select %93, %91, %96 : vector<8x8xi1>, vector<8x8xf32>
    %c0_55 = arith.constant 0 : index
    %c0_56 = arith.constant 0 : index
    %98 = vector.load %arg7[%c0_55, %c0_56] : memref<8x8xf32, #tpu.memory_space<vmem>>, vector<8x8xf32>
    tpu.vector_store %arg7[%c0_55, %c0_56], %97 {strides = array<i32>} : memref<8x8xf32, #tpu.memory_space<vmem>>, vector<8x8xf32>,
    return
  }
  func.func @transform_0(%arg0: i32) -> (i32, i32) {
    %c0_i32 = arith.constant 0 : i32
    %c0_i32_0 = arith.constant 0 : i32
    %c0_i32_1 = arith.constant 0 : i32
    return %c0_i32, %c0_i32_0 : i32, i32
  }
  func.func @transform_1(%arg0: i32) -> (i32, i32) {
    %c0_i32 = arith.constant 0 : i32
    %c0_i32_0 = arith.constant 0 : i32
    %c0_i32_1 = arith.constant 0 : i32
    return %c0_i32, %c0_i32_0 : i32, i32
  }
  func.func @transform_2(%arg0: i32) -> (i32, i32) {
    %c0_i32 = arith.constant 0 : i32
    %c0_i32_0 = arith.constant 0 : i32
    %c0_i32_1 = arith.constant 0 : i32
    return %c0_i32, %c0_i32_0 : i32, i32
  }
  func.func @transform_3(%arg0: i32) -> (i32, i32) {
    %c0_i32 = arith.constant 0 : i32
    %c0_i32_0 = arith.constant 0 : i32
    %c0_i32_1 = arith.constant 0 : i32
    return %c0_i32, %c0_i32_0 : i32, i32
  }
  func.func @transform_4(%arg0: i32) -> (i32, i32) {
    %c0_i32 = arith.constant 0 : i32
    %c0_i32_0 = arith.constant 0 : i32
    %c0_i32_1 = arith.constant 0 : i32
    return %c0_i32, %c0_i32_0 : i32, i32
  }
  func.func @transform_5(%arg0: i32) -> (i32, i32) {
    %c0_i32 = arith.constant 0 : i32
    %c0_i32_0 = arith.constant 0 : i32
    %c0_i32_1 = arith.constant 0 : i32
    return %c0_i32, %c0_i32_0 : i32, i32
  }
  func.func @transform_6(%arg0: i32) -> (i32, i32) {
    %c0_i32 = arith.constant 0 : i32
    %c0_i32_0 = arith.constant 0 : i32
    %c0_i32_1 = arith.constant 0 : i32
    return %c0_i32, %c0_i32_0 : i32, i32
  }
}

module attributes {stable_mosaic.version = 11 : i64} {
  func.func @kernel(%arg0: i32, %arg1: memref<8x6xf32, #tpu.memory_space<vmem>>, %arg2: memref<1x16x8xf32, #tpu.memory_space<vmem>>, %arg3: memref<16x2xf32, #tpu.memory_space<vmem>>) attributes {dimension_semantics = [#tpu.dimension_semantics<arbitrary>], iteration_bounds = array<i64: 1>, scalar_prefetch = 0 : i64, scratch_operands = 0 : i64, tpu.core_type = #tpu.core_type<tc>, window_params = [{pipeline_mode = #tpu.pipeline_mode<synchronous>, transform_indices = @transform_0, window_bounds = array<i64: 8, 6>}, {pipeline_mode = #tpu.pipeline_mode<synchronous>, transform_indices = @transform_1, window_bounds = array<i64: 1, 16, 8>}, {pipeline_mode = #tpu.pipeline_mode<synchronous>, transform_indices = @transform_2, window_bounds = array<i64: 16, 2>}]} {
    %cst = arith.constant 0.000000e+00 : f32
    %0 = vector.broadcast %cst : f32 to vector<16x2xf32>
    %c0 = arith.constant 0 : index
    %c2 = arith.constant 2 : index
    %1 = vector.load %arg1[%c0, %c2] : memref<8x6xf32, #tpu.memory_space<vmem>>, vector<8x2xf32>
    %c0_0 = arith.constant 0 : index
    %c0_1 = arith.constant 0 : index
    %c0_2 = arith.constant 0 : index
    %2 = vector.load %arg2[%c0_0, %c0_1, %c0_2] : memref<1x16x8xf32, #tpu.memory_space<vmem>>, vector<1x16x8xf32>
    %3 = vector.shape_cast %2 : vector<1x16x8xf32> to vector<16x8xf32>
    %cst_3 = arith.constant dense<0.000000e+00> : vector<16x2xf32>
    %4 = tpu.matmul %3, %1, %cst_3 {dimension_numbers = #tpu.dot_dimension_numbers<[1], [0], [0], [1], [0, 0, 1, 1], [], []>} : vector<16x8xf32>, vector<8x2xf32>, vector<16x2xf32> -> vector<16x2xf32>
    %5 = arith.addf %0, %4 : vector<16x2xf32>
    %c0_4 = arith.constant 0 : index
    %c0_5 = arith.constant 0 : index
    %6 = vector.load %arg3[%c0_4, %c0_5] : memref<16x2xf32, #tpu.memory_space<vmem>>, vector<16x2xf32>
    tpu.vector_store %arg3[%c0_4, %c0_5], %5 {strides = array<i32>} : memref<16x2xf32, #tpu.memory_space<vmem>>, vector<16x2xf32>,
    return
  }
  func.func @transform_0(%arg0: i32) -> (i32, i32) {
    %c0_i32 = arith.constant 0 : i32
    %c0_i32_0 = arith.constant 0 : i32
    %c0_i32_1 = arith.constant 0 : i32
    return %c0_i32, %c0_i32_0 : i32, i32
  }
  func.func @transform_1(%arg0: i32) -> (i32, i32, i32) {
    %c0_i32 = arith.constant 0 : i32
    %c0_i32_0 = arith.constant 0 : i32
    %c0_i32_1 = arith.constant 0 : i32
    %c0_i32_2 = arith.constant 0 : i32
    return %c0_i32, %c0_i32_0, %c0_i32_1 : i32, i32, i32
  }
  func.func @transform_2(%arg0: i32) -> (i32, i32) {
    %c0_i32 = arith.constant 0 : i32
    %c0_i32_0 = arith.constant 0 : i32
    %c0_i32_1 = arith.constant 0 : i32
    return %c0_i32, %c0_i32_0 : i32, i32
  }
}

module attributes {stable_mosaic.version = 11 : i64} {
  func.func @kernel(%arg0: i32, %arg1: memref<8x42xf32, #tpu.memory_space<vmem>>, %arg2: memref<9x8x8xf32, #tpu.memory_space<vmem>>, %arg3: memref<9x32xf32, #tpu.memory_space<vmem>>, %arg4: memref<8x32xf32, #tpu.memory_space<vmem>>, %arg5: memref<8x1xf32, #tpu.memory_space<vmem>>, %arg6: memref<8x1xf32, #tpu.memory_space<vmem>>, %arg7: memref<8x1xf32, #tpu.memory_space<vmem>>, %arg8: memref<8x32xf32, #tpu.memory_space<vmem>>) attributes {dimension_semantics = [#tpu.dimension_semantics<arbitrary>], iteration_bounds = array<i64: 1>, scalar_prefetch = 0 : i64, scratch_operands = 0 : i64, tpu.core_type = #tpu.core_type<tc>, window_params = [{pipeline_mode = #tpu.pipeline_mode<synchronous>, transform_indices = @transform_0, window_bounds = array<i64: 8, 42>}, {pipeline_mode = #tpu.pipeline_mode<synchronous>, transform_indices = @transform_1, window_bounds = array<i64: 9, 8, 8>}, {pipeline_mode = #tpu.pipeline_mode<synchronous>, transform_indices = @transform_2, window_bounds = array<i64: 9, 32>}, {pipeline_mode = #tpu.pipeline_mode<synchronous>, transform_indices = @transform_3, window_bounds = array<i64: 8, 32>}, {pipeline_mode = #tpu.pipeline_mode<synchronous>, transform_indices = @transform_4, window_bounds = array<i64: 8, 1>}, {pipeline_mode = #tpu.pipeline_mode<synchronous>, transform_indices = @transform_5, window_bounds = array<i64: 8, 1>}, {pipeline_mode = #tpu.pipeline_mode<synchronous>, transform_indices = @transform_6, window_bounds = array<i64: 8, 1>}, {pipeline_mode = #tpu.pipeline_mode<synchronous>, transform_indices = @transform_7, window_bounds = array<i64: 8, 32>}]} {
    %cst = arith.constant 0.000000e+00 : f32
    %0 = vector.broadcast %cst : f32 to vector<8x32xf32>
    %c0 = arith.constant 0 : index
    %c0_0 = arith.constant 0 : index
    %1 = vector.load %arg1[%c0, %c0_0] : memref<8x42xf32, #tpu.memory_space<vmem>>, vector<8x32xf32>
    %c0_1 = arith.constant 0 : index
    %c0_2 = arith.constant 0 : index
    %2 = vector.load %arg3[%c0_1, %c0_2] : memref<9x32xf32, #tpu.memory_space<vmem>>, vector<1x32xf32>
    %3 = vector.broadcast %2 : vector<1x32xf32> to vector<8x32xf32>
    %4 = arith.mulf %1, %3 : vector<8x32xf32>
    %c0_3 = arith.constant 0 : index
    %c0_4 = arith.constant 0 : index
    %c0_5 = arith.constant 0 : index
    %5 = vector.load %arg2[%c0_3, %c0_4, %c0_5] : memref<9x8x8xf32, #tpu.memory_space<vmem>>, vector<1x8x8xf32>
    %6 = vector.shape_cast %5 : vector<1x8x8xf32> to vector<8x8xf32>
    %cst_6 = arith.constant dense<0.000000e+00> : vector<8x32xf32>
    %7 = tpu.matmul %6, %4, %cst_6 {dimension_numbers = #tpu.dot_dimension_numbers<[1], [0], [0], [1], [0, 0, 1, 1], [], []>} : vector<8x8xf32>, vector<8x32xf32>, vector<8x32xf32> -> vector<8x32xf32>
    %8 = arith.addf %0, %7 : vector<8x32xf32>
    %c0_7 = arith.constant 0 : index
    %c1 = arith.constant 1 : index
    %9 = vector.load %arg1[%c0_7, %c1] : memref<8x42xf32, #tpu.memory_space<vmem>>, vector<8x32xf32>
    %c1_8 = arith.constant 1 : index
    %c0_9 = arith.constant 0 : index
    %10 = vector.load %arg3[%c1_8, %c0_9] : memref<9x32xf32, #tpu.memory_space<vmem>>, vector<1x32xf32>
    %11 = vector.broadcast %10 : vector<1x32xf32> to vector<8x32xf32>
    %12 = arith.mulf %9, %11 : vector<8x32xf32>
    %c1_10 = arith.constant 1 : index
    %c0_11 = arith.constant 0 : index
    %c0_12 = arith.constant 0 : index
    %13 = vector.load %arg2[%c1_10, %c0_11, %c0_12] : memref<9x8x8xf32, #tpu.memory_space<vmem>>, vector<1x8x8xf32>
    %14 = vector.shape_cast %13 : vector<1x8x8xf32> to vector<8x8xf32>
    %cst_13 = arith.constant dense<0.000000e+00> : vector<8x32xf32>
    %15 = tpu.matmul %14, %12, %cst_13 {dimension_numbers = #tpu.dot_dimension_numbers<[1], [0], [0], [1], [0, 0, 1, 1], [], []>} : vector<8x8xf32>, vector<8x32xf32>, vector<8x32xf32> -> vector<8x32xf32>
    %16 = arith.addf %8, %15 : vector<8x32xf32>
    %c0_14 = arith.constant 0 : index
    %c2 = arith.constant 2 : index
    %17 = vector.load %arg1[%c0_14, %c2] : memref<8x42xf32, #tpu.memory_space<vmem>>, vector<8x32xf32>
    %c2_15 = arith.constant 2 : index
    %c0_16 = arith.constant 0 : index
    %18 = vector.load %arg3[%c2_15, %c0_16] : memref<9x32xf32, #tpu.memory_space<vmem>>, vector<1x32xf32>
    %19 = vector.broadcast %18 : vector<1x32xf32> to vector<8x32xf32>
    %20 = arith.mulf %17, %19 : vector<8x32xf32>
    %c2_17 = arith.constant 2 : index
    %c0_18 = arith.constant 0 : index
    %c0_19 = arith.constant 0 : index
    %21 = vector.load %arg2[%c2_17, %c0_18, %c0_19] : memref<9x8x8xf32, #tpu.memory_space<vmem>>, vector<1x8x8xf32>
    %22 = vector.shape_cast %21 : vector<1x8x8xf32> to vector<8x8xf32>
    %cst_20 = arith.constant dense<0.000000e+00> : vector<8x32xf32>
    %23 = tpu.matmul %22, %20, %cst_20 {dimension_numbers = #tpu.dot_dimension_numbers<[1], [0], [0], [1], [0, 0, 1, 1], [], []>} : vector<8x8xf32>, vector<8x32xf32>, vector<8x32xf32> -> vector<8x32xf32>
    %24 = arith.addf %16, %23 : vector<8x32xf32>
    %c0_21 = arith.constant 0 : index
    %c4 = arith.constant 4 : index
    %25 = vector.load %arg1[%c0_21, %c4] : memref<8x42xf32, #tpu.memory_space<vmem>>, vector<8x32xf32>
    %c3 = arith.constant 3 : index
    %c0_22 = arith.constant 0 : index
    %26 = vector.load %arg3[%c3, %c0_22] : memref<9x32xf32, #tpu.memory_space<vmem>>, vector<1x32xf32>
    %27 = vector.broadcast %26 : vector<1x32xf32> to vector<8x32xf32>
    %28 = arith.mulf %25, %27 : vector<8x32xf32>
    %c3_23 = arith.constant 3 : index
    %c0_24 = arith.constant 0 : index
    %c0_25 = arith.constant 0 : index
    %29 = vector.load %arg2[%c3_23, %c0_24, %c0_25] : memref<9x8x8xf32, #tpu.memory_space<vmem>>, vector<1x8x8xf32>
    %30 = vector.shape_cast %29 : vector<1x8x8xf32> to vector<8x8xf32>
    %cst_26 = arith.constant dense<0.000000e+00> : vector<8x32xf32>
    %31 = tpu.matmul %30, %28, %cst_26 {dimension_numbers = #tpu.dot_dimension_numbers<[1], [0], [0], [1], [0, 0, 1, 1], [], []>} : vector<8x8xf32>, vector<8x32xf32>, vector<8x32xf32> -> vector<8x32xf32>
    %32 = arith.addf %24, %31 : vector<8x32xf32>
    %c0_27 = arith.constant 0 : index
    %c5 = arith.constant 5 : index
    %33 = vector.load %arg1[%c0_27, %c5] : memref<8x42xf32, #tpu.memory_space<vmem>>, vector<8x32xf32>
    %c4_28 = arith.constant 4 : index
    %c0_29 = arith.constant 0 : index
    %c0_30 = arith.constant 0 : index
    %34 = vector.load %arg2[%c4_28, %c0_29, %c0_30] : memref<9x8x8xf32, #tpu.memory_space<vmem>>, vector<1x8x8xf32>
    %35 = vector.shape_cast %34 : vector<1x8x8xf32> to vector<8x8xf32>
    %cst_31 = arith.constant dense<0.000000e+00> : vector<8x32xf32>
    %36 = tpu.matmul %35, %33, %cst_31 {dimension_numbers = #tpu.dot_dimension_numbers<[1], [0], [0], [1], [0, 0, 1, 1], [], []>} : vector<8x8xf32>, vector<8x32xf32>, vector<8x32xf32> -> vector<8x32xf32>
    %37 = arith.addf %32, %36 : vector<8x32xf32>
    %c0_32 = arith.constant 0 : index
    %c6 = arith.constant 6 : index
    %38 = vector.load %arg1[%c0_32, %c6] : memref<8x42xf32, #tpu.memory_space<vmem>>, vector<8x32xf32>
    %c5_33 = arith.constant 5 : index
    %c0_34 = arith.constant 0 : index
    %39 = vector.load %arg3[%c5_33, %c0_34] : memref<9x32xf32, #tpu.memory_space<vmem>>, vector<1x32xf32>
    %40 = vector.broadcast %39 : vector<1x32xf32> to vector<8x32xf32>
    %41 = arith.mulf %38, %40 : vector<8x32xf32>
    %c5_35 = arith.constant 5 : index
    %c0_36 = arith.constant 0 : index
    %c0_37 = arith.constant 0 : index
    %42 = vector.load %arg2[%c5_35, %c0_36, %c0_37] : memref<9x8x8xf32, #tpu.memory_space<vmem>>, vector<1x8x8xf32>
    %43 = vector.shape_cast %42 : vector<1x8x8xf32> to vector<8x8xf32>
    %cst_38 = arith.constant dense<0.000000e+00> : vector<8x32xf32>
    %44 = tpu.matmul %43, %41, %cst_38 {dimension_numbers = #tpu.dot_dimension_numbers<[1], [0], [0], [1], [0, 0, 1, 1], [], []>} : vector<8x8xf32>, vector<8x32xf32>, vector<8x32xf32> -> vector<8x32xf32>
    %45 = arith.addf %37, %44 : vector<8x32xf32>
    %c0_39 = arith.constant 0 : index
    %c8 = arith.constant 8 : index
    %46 = vector.load %arg1[%c0_39, %c8] : memref<8x42xf32, #tpu.memory_space<vmem>>, vector<8x32xf32>
    %c6_40 = arith.constant 6 : index
    %c0_41 = arith.constant 0 : index
    %47 = vector.load %arg3[%c6_40, %c0_41] : memref<9x32xf32, #tpu.memory_space<vmem>>, vector<1x32xf32>
    %48 = vector.broadcast %47 : vector<1x32xf32> to vector<8x32xf32>
    %49 = arith.mulf %46, %48 : vector<8x32xf32>
    %c6_42 = arith.constant 6 : index
    %c0_43 = arith.constant 0 : index
    %c0_44 = arith.constant 0 : index
    %50 = vector.load %arg2[%c6_42, %c0_43, %c0_44] : memref<9x8x8xf32, #tpu.memory_space<vmem>>, vector<1x8x8xf32>
    %51 = vector.shape_cast %50 : vector<1x8x8xf32> to vector<8x8xf32>
    %cst_45 = arith.constant dense<0.000000e+00> : vector<8x32xf32>
    %52 = tpu.matmul %51, %49, %cst_45 {dimension_numbers = #tpu.dot_dimension_numbers<[1], [0], [0], [1], [0, 0, 1, 1], [], []>} : vector<8x8xf32>, vector<8x32xf32>, vector<8x32xf32> -> vector<8x32xf32>
    %53 = arith.addf %45, %52 : vector<8x32xf32>
    %c0_46 = arith.constant 0 : index
    %c9 = arith.constant 9 : index
    %54 = vector.load %arg1[%c0_46, %c9] : memref<8x42xf32, #tpu.memory_space<vmem>>, vector<8x32xf32>
    %c7 = arith.constant 7 : index
    %c0_47 = arith.constant 0 : index
    %55 = vector.load %arg3[%c7, %c0_47] : memref<9x32xf32, #tpu.memory_space<vmem>>, vector<1x32xf32>
    %56 = vector.broadcast %55 : vector<1x32xf32> to vector<8x32xf32>
    %57 = arith.mulf %54, %56 : vector<8x32xf32>
    %c7_48 = arith.constant 7 : index
    %c0_49 = arith.constant 0 : index
    %c0_50 = arith.constant 0 : index
    %58 = vector.load %arg2[%c7_48, %c0_49, %c0_50] : memref<9x8x8xf32, #tpu.memory_space<vmem>>, vector<1x8x8xf32>
    %59 = vector.shape_cast %58 : vector<1x8x8xf32> to vector<8x8xf32>
    %cst_51 = arith.constant dense<0.000000e+00> : vector<8x32xf32>
    %60 = tpu.matmul %59, %57, %cst_51 {dimension_numbers = #tpu.dot_dimension_numbers<[1], [0], [0], [1], [0, 0, 1, 1], [], []>} : vector<8x8xf32>, vector<8x32xf32>, vector<8x32xf32> -> vector<8x32xf32>
    %61 = arith.addf %53, %60 : vector<8x32xf32>
    %c0_52 = arith.constant 0 : index
    %c10 = arith.constant 10 : index
    %62 = vector.load %arg1[%c0_52, %c10] : memref<8x42xf32, #tpu.memory_space<vmem>>, vector<8x32xf32>
    %c8_53 = arith.constant 8 : index
    %c0_54 = arith.constant 0 : index
    %63 = vector.load %arg3[%c8_53, %c0_54] : memref<9x32xf32, #tpu.memory_space<vmem>>, vector<1x32xf32>
    %64 = vector.broadcast %63 : vector<1x32xf32> to vector<8x32xf32>
    %65 = arith.mulf %62, %64 : vector<8x32xf32>
    %c8_55 = arith.constant 8 : index
    %c0_56 = arith.constant 0 : index
    %c0_57 = arith.constant 0 : index
    %66 = vector.load %arg2[%c8_55, %c0_56, %c0_57] : memref<9x8x8xf32, #tpu.memory_space<vmem>>, vector<1x8x8xf32>
    %67 = vector.shape_cast %66 : vector<1x8x8xf32> to vector<8x8xf32>
    %cst_58 = arith.constant dense<0.000000e+00> : vector<8x32xf32>
    %68 = tpu.matmul %67, %65, %cst_58 {dimension_numbers = #tpu.dot_dimension_numbers<[1], [0], [0], [1], [0, 0, 1, 1], [], []>} : vector<8x8xf32>, vector<8x32xf32>, vector<8x32xf32> -> vector<8x32xf32>
    %69 = arith.addf %61, %68 : vector<8x32xf32>
    %c0_59 = arith.constant 0 : index
    %c0_60 = arith.constant 0 : index
    %70 = vector.load %arg4[%c0_59, %c0_60] : memref<8x32xf32, #tpu.memory_space<vmem>>, vector<8x32xf32>
    %71 = arith.addf %69, %70 : vector<8x32xf32>
    %cst_61 = arith.constant dense<0.000000e+00> : vector<8xf32>
    %72 = vector.multi_reduction <add>, %71, %cst_61 [1] : vector<8x32xf32> to vector<8xf32>
    %73 = vector.shape_cast %72 : vector<8xf32> to vector<8x1xf32>
    %cst_62 = arith.constant 3.125000e-02 : f32
    %74 = vector.broadcast %cst_62 : f32 to vector<8x1xf32>
    %75 = arith.mulf %73, %74 : vector<8x1xf32>
    %76 = vector.broadcast %75 : vector<8x1xf32> to vector<8x32xf32>
    %77 = arith.subf %71, %76 : vector<8x32xf32>
    %78 = arith.mulf %77, %77 : vector<8x32xf32>
    %cst_63 = arith.constant dense<0.000000e+00> : vector<8xf32>
    %79 = vector.multi_reduction <add>, %78, %cst_63 [1] : vector<8x32xf32> to vector<8xf32>
    %80 = vector.shape_cast %79 : vector<8xf32> to vector<8x1xf32>
    %cst_64 = arith.constant 3.125000e-02 : f32
    %81 = vector.broadcast %cst_64 : f32 to vector<8x1xf32>
    %82 = arith.mulf %80, %81 : vector<8x1xf32>
    %cst_65 = arith.constant 9.99999974E-6 : f32
    %83 = vector.broadcast %cst_65 : f32 to vector<8x1xf32>
    %84 = arith.addf %82, %83 : vector<8x1xf32>
    %85 = math.rsqrt %84 : vector<8x1xf32>
    %86 = vector.broadcast %85 : vector<8x1xf32> to vector<8x32xf32>
    %87 = arith.mulf %77, %86 : vector<8x32xf32>
    %c0_66 = arith.constant 0 : index
    %c0_67 = arith.constant 0 : index
    %88 = vector.load %arg5[%c0_66, %c0_67] : memref<8x1xf32, #tpu.memory_space<vmem>>, vector<8x1xf32>
    %89 = vector.broadcast %88 : vector<8x1xf32> to vector<8x32xf32>
    %90 = arith.mulf %87, %89 : vector<8x32xf32>
    %c0_68 = arith.constant 0 : index
    %c0_69 = arith.constant 0 : index
    %91 = vector.load %arg6[%c0_68, %c0_69] : memref<8x1xf32, #tpu.memory_space<vmem>>, vector<8x1xf32>
    %92 = vector.broadcast %91 : vector<8x1xf32> to vector<8x32xf32>
    %93 = arith.addf %90, %92 : vector<8x32xf32>
    %cst_70 = arith.constant 0.000000e+00 : f32
    %94 = vector.broadcast %cst_70 : f32 to vector<8x32xf32>
    %95 = arith.cmpf oge, %93, %94 : vector<8x32xf32>
    %c0_71 = arith.constant 0 : index
    %c0_72 = arith.constant 0 : index
    %96 = vector.load %arg7[%c0_71, %c0_72] : memref<8x1xf32, #tpu.memory_space<vmem>>, vector<8x1xf32>
    %97 = vector.broadcast %96 : vector<8x1xf32> to vector<8x32xf32>
    %98 = arith.mulf %97, %93 : vector<8x32xf32>
    %99 = arith.select %95, %93, %98 : vector<8x32xi1>, vector<8x32xf32>
    %c0_73 = arith.constant 0 : index
    %c0_74 = arith.constant 0 : index
    %100 = vector.load %arg8[%c0_73, %c0_74] : memref<8x32xf32, #tpu.memory_space<vmem>>, vector<8x32xf32>
    tpu.vector_store %arg8[%c0_73, %c0_74], %99 {strides = array<i32>} : memref<8x32xf32, #tpu.memory_space<vmem>>, vector<8x32xf32>,
    return
  }
  func.func @transform_0(%arg0: i32) -> (i32, i32) {
    %c0_i32 = arith.constant 0 : i32
    %c0_i32_0 = arith.constant 0 : i32
    %c0_i32_1 = arith.constant 0 : i32
    return %c0_i32, %c0_i32_0 : i32, i32
  }
  func.func @transform_1(%arg0: i32) -> (i32, i32, i32) {
    %c0_i32 = arith.constant 0 : i32
    %c0_i32_0 = arith.constant 0 : i32
    %c0_i32_1 = arith.constant 0 : i32
    %c0_i32_2 = arith.constant 0 : i32
    return %c0_i32, %c0_i32_0, %c0_i32_1 : i32, i32, i32
  }
  func.func @transform_2(%arg0: i32) -> (i32, i32) {
    %c0_i32 = arith.constant 0 : i32
    %c0_i32_0 = arith.constant 0 : i32
    %c0_i32_1 = arith.constant 0 : i32
    return %c0_i32, %c0_i32_0 : i32, i32
  }
  func.func @transform_3(%arg0: i32) -> (i32, i32) {
    %c0_i32 = arith.constant 0 : i32
    %c0_i32_0 = arith.constant 0 : i32
    %c0_i32_1 = arith.constant 0 : i32
    return %c0_i32, %c0_i32_0 : i32, i32
  }
  func.func @transform_4(%arg0: i32) -> (i32, i32) {
    %c0_i32 = arith.constant 0 : i32
    %c0_i32_0 = arith.constant 0 : i32
    %c0_i32_1 = arith.constant 0 : i32
    return %c0_i32, %c0_i32_0 : i32, i32
  }
  func.func @transform_5(%arg0: i32) -> (i32, i32) {
    %c0_i32 = arith.constant 0 : i32
    %c0_i32_0 = arith.constant 0 : i32
    %c0_i32_1 = arith.constant 0 : i32
    return %c0_i32, %c0_i32_0 : i32, i32
  }
  func.func @transform_6(%arg0: i32) -> (i32, i32) {
    %c0_i32 = arith.constant 0 : i32
    %c0_i32_0 = arith.constant 0 : i32
    %c0_i32_1 = arith.constant 0 : i32
    return %c0_i32, %c0_i32_0 : i32, i32
  }
  func.func @transform_7(%arg0: i32) -> (i32, i32) {
    %c0_i32 = arith.constant 0 : i32
    %c0_i32_0 = arith.constant 0 : i32
    %c0_i32_1 = arith.constant 0 : i32
    return %c0_i32, %c0_i32_0 : i32, i32
  }
}

module attributes {stable_mosaic.version = 11 : i64} {
  func.func @kernel(%arg0: i32, %arg1: memref<8x6xf32, #tpu.memory_space<vmem>>, %arg2: memref<1x8x8xf32, #tpu.memory_space<vmem>>, %arg3: memref<8x2xf32, #tpu.memory_space<vmem>>, %arg4: memref<8x1xf32, #tpu.memory_space<vmem>>, %arg5: memref<8x1xf32, #tpu.memory_space<vmem>>, %arg6: memref<8x1xf32, #tpu.memory_space<vmem>>, %arg7: memref<8x2xf32, #tpu.memory_space<vmem>>) attributes {dimension_semantics = [#tpu.dimension_semantics<arbitrary>], iteration_bounds = array<i64: 1>, scalar_prefetch = 0 : i64, scratch_operands = 0 : i64, tpu.core_type = #tpu.core_type<tc>, window_params = [{pipeline_mode = #tpu.pipeline_mode<synchronous>, transform_indices = @transform_0, window_bounds = array<i64: 8, 6>}, {pipeline_mode = #tpu.pipeline_mode<synchronous>, transform_indices = @transform_1, window_bounds = array<i64: 1, 8, 8>}, {pipeline_mode = #tpu.pipeline_mode<synchronous>, transform_indices = @transform_2, window_bounds = array<i64: 8, 2>}, {pipeline_mode = #tpu.pipeline_mode<synchronous>, transform_indices = @transform_3, window_bounds = array<i64: 8, 1>}, {pipeline_mode = #tpu.pipeline_mode<synchronous>, transform_indices = @transform_4, window_bounds = array<i64: 8, 1>}, {pipeline_mode = #tpu.pipeline_mode<synchronous>, transform_indices = @transform_5, window_bounds = array<i64: 8, 1>}, {pipeline_mode = #tpu.pipeline_mode<synchronous>, transform_indices = @transform_6, window_bounds = array<i64: 8, 2>}]} {
    %cst = arith.constant 0.000000e+00 : f32
    %0 = vector.broadcast %cst : f32 to vector<8x2xf32>
    %c0 = arith.constant 0 : index
    %c2 = arith.constant 2 : index
    %1 = vector.load %arg1[%c0, %c2] : memref<8x6xf32, #tpu.memory_space<vmem>>, vector<8x2xf32>
    %c0_0 = arith.constant 0 : index
    %c0_1 = arith.constant 0 : index
    %c0_2 = arith.constant 0 : index
    %2 = vector.load %arg2[%c0_0, %c0_1, %c0_2] : memref<1x8x8xf32, #tpu.memory_space<vmem>>, vector<1x8x8xf32>
    %3 = vector.shape_cast %2 : vector<1x8x8xf32> to vector<8x8xf32>
    %cst_3 = arith.constant dense<0.000000e+00> : vector<8x2xf32>
    %4 = tpu.matmul %3, %1, %cst_3 {dimension_numbers = #tpu.dot_dimension_numbers<[1], [0], [0], [1], [0, 0, 1, 1], [], []>} : vector<8x8xf32>, vector<8x2xf32>, vector<8x2xf32> -> vector<8x2xf32>
    %5 = arith.addf %0, %4 : vector<8x2xf32>
    %c0_4 = arith.constant 0 : index
    %c0_5 = arith.constant 0 : index
    %6 = vector.load %arg3[%c0_4, %c0_5] : memref<8x2xf32, #tpu.memory_space<vmem>>, vector<8x2xf32>
    %7 = arith.addf %5, %6 : vector<8x2xf32>
    %cst_6 = arith.constant dense<0.000000e+00> : vector<8xf32>
    %8 = vector.multi_reduction <add>, %7, %cst_6 [1] : vector<8x2xf32> to vector<8xf32>
    %9 = vector.shape_cast %8 : vector<8xf32> to vector<8x1xf32>
    %cst_7 = arith.constant 5.000000e-01 : f32
    %10 = vector.broadcast %cst_7 : f32 to vector<8x1xf32>
    %11 = arith.mulf %9, %10 : vector<8x1xf32>
    %12 = vector.broadcast %11 : vector<8x1xf32> to vector<8x2xf32>
    %13 = arith.subf %7, %12 : vector<8x2xf32>
    %14 = arith.mulf %13, %13 : vector<8x2xf32>
    %cst_8 = arith.constant dense<0.000000e+00> : vector<8xf32>
    %15 = vector.multi_reduction <add>, %14, %cst_8 [1] : vector<8x2xf32> to vector<8xf32>
    %16 = vector.shape_cast %15 : vector<8xf32> to vector<8x1xf32>
    %cst_9 = arith.constant 5.000000e-01 : f32
    %17 = vector.broadcast %cst_9 : f32 to vector<8x1xf32>
    %18 = arith.mulf %16, %17 : vector<8x1xf32>
    %cst_10 = arith.constant 9.99999974E-6 : f32
    %19 = vector.broadcast %cst_10 : f32 to vector<8x1xf32>
    %20 = arith.addf %18, %19 : vector<8x1xf32>
    %21 = math.rsqrt %20 : vector<8x1xf32>
    %22 = vector.broadcast %21 : vector<8x1xf32> to vector<8x2xf32>
    %23 = arith.mulf %13, %22 : vector<8x2xf32>
    %c0_11 = arith.constant 0 : index
    %c0_12 = arith.constant 0 : index
    %24 = vector.load %arg4[%c0_11, %c0_12] : memref<8x1xf32, #tpu.memory_space<vmem>>, vector<8x1xf32>
    %25 = vector.broadcast %24 : vector<8x1xf32> to vector<8x2xf32>
    %26 = arith.mulf %23, %25 : vector<8x2xf32>
    %c0_13 = arith.constant 0 : index
    %c0_14 = arith.constant 0 : index
    %27 = vector.load %arg5[%c0_13, %c0_14] : memref<8x1xf32, #tpu.memory_space<vmem>>, vector<8x1xf32>
    %28 = vector.broadcast %27 : vector<8x1xf32> to vector<8x2xf32>
    %29 = arith.addf %26, %28 : vector<8x2xf32>
    %cst_15 = arith.constant 0.000000e+00 : f32
    %30 = vector.broadcast %cst_15 : f32 to vector<8x2xf32>
    %31 = arith.cmpf oge, %29, %30 : vector<8x2xf32>
    %c0_16 = arith.constant 0 : index
    %c0_17 = arith.constant 0 : index
    %32 = vector.load %arg6[%c0_16, %c0_17] : memref<8x1xf32, #tpu.memory_space<vmem>>, vector<8x1xf32>
    %33 = vector.broadcast %32 : vector<8x1xf32> to vector<8x2xf32>
    %34 = arith.mulf %33, %29 : vector<8x2xf32>
    %35 = arith.select %31, %29, %34 : vector<8x2xi1>, vector<8x2xf32>
    %c0_18 = arith.constant 0 : index
    %c0_19 = arith.constant 0 : index
    %36 = vector.load %arg7[%c0_18, %c0_19] : memref<8x2xf32, #tpu.memory_space<vmem>>, vector<8x2xf32>
    tpu.vector_store %arg7[%c0_18, %c0_19], %35 {strides = array<i32>} : memref<8x2xf32, #tpu.memory_space<vmem>>, vector<8x2xf32>,
    return
  }
  func.func @transform_0(%arg0: i32) -> (i32, i32) {
    %c0_i32 = arith.constant 0 : i32
    %c0_i32_0 = arith.constant 0 : i32
    %c0_i32_1 = arith.constant 0 : i32
    return %c0_i32, %c0_i32_0 : i32, i32
  }
  func.func @transform_1(%arg0: i32) -> (i32, i32, i32) {
    %c0_i32 = arith.constant 0 : i32
    %c0_i32_0 = arith.constant 0 : i32
    %c0_i32_1 = arith.constant 0 : i32
    %c0_i32_2 = arith.constant 0 : i32
    return %c0_i32, %c0_i32_0, %c0_i32_1 : i32, i32, i32
  }
  func.func @transform_2(%arg0: i32) -> (i32, i32) {
    %c0_i32 = arith.constant 0 : i32
    %c0_i32_0 = arith.constant 0 : i32
    %c0_i32_1 = arith.constant 0 : i32
    return %c0_i32, %c0_i32_0 : i32, i32
  }
  func.func @transform_3(%arg0: i32) -> (i32, i32) {
    %c0_i32 = arith.constant 0 : i32
    %c0_i32_0 = arith.constant 0 : i32
    %c0_i32_1 = arith.constant 0 : i32
    return %c0_i32, %c0_i32_0 : i32, i32
  }
  func.func @transform_4(%arg0: i32) -> (i32, i32) {
    %c0_i32 = arith.constant 0 : i32
    %c0_i32_0 = arith.constant 0 : i32
    %c0_i32_1 = arith.constant 0 : i32
    return %c0_i32, %c0_i32_0 : i32, i32
  }
  func.func @transform_5(%arg0: i32) -> (i32, i32) {
    %c0_i32 = arith.constant 0 : i32
    %c0_i32_0 = arith.constant 0 : i32
    %c0_i32_1 = arith.constant 0 : i32
    return %c0_i32, %c0_i32_0 : i32, i32
  }
  func.func @transform_6(%arg0: i32) -> (i32, i32) {
    %c0_i32 = arith.constant 0 : i32
    %c0_i32_0 = arith.constant 0 : i32
    %c0_i32_1 = arith.constant 0 : i32
    return %c0_i32, %c0_i32_0 : i32, i32
  }
}

module attributes {stable_mosaic.version = 11 : i64} {
  func.func @kernel(%arg0: i32, %arg1: memref<8x6xf32, #tpu.memory_space<vmem>>, %arg2: memref<8x1xf32, #tpu.memory_space<vmem>>, %arg3: memref<8x1xf32, #tpu.memory_space<vmem>>, %arg4: memref<8x1xf32, #tpu.memory_space<vmem>>, %arg5: memref<8x1xf32, #tpu.memory_space<vmem>>, %arg6: memref<8x2xf32, #tpu.memory_space<vmem>>) attributes {dimension_semantics = [#tpu.dimension_semantics<arbitrary>], iteration_bounds = array<i64: 1>, scalar_prefetch = 0 : i64, scratch_operands = 0 : i64, tpu.core_type = #tpu.core_type<tc>, window_params = [{pipeline_mode = #tpu.pipeline_mode<synchronous>, transform_indices = @transform_0, window_bounds = array<i64: 8, 6>}, {pipeline_mode = #tpu.pipeline_mode<synchronous>, transform_indices = @transform_1, window_bounds = array<i64: 8, 1>}, {pipeline_mode = #tpu.pipeline_mode<synchronous>, transform_indices = @transform_2, window_bounds = array<i64: 8, 1>}, {pipeline_mode = #tpu.pipeline_mode<synchronous>, transform_indices = @transform_3, window_bounds = array<i64: 8, 1>}, {pipeline_mode = #tpu.pipeline_mode<synchronous>, transform_indices = @transform_4, window_bounds = array<i64: 8, 1>}, {pipeline_mode = #tpu.pipeline_mode<synchronous>, transform_indices = @transform_5, window_bounds = array<i64: 8, 2>}]} {
    %cst = arith.constant 0.000000e+00 : f32
    %0 = vector.broadcast %cst : f32 to vector<8x2xf32>
    %c0 = arith.constant 0 : index
    %c2 = arith.constant 2 : index
    %1 = vector.load %arg1[%c0, %c2] : memref<8x6xf32, #tpu.memory_space<vmem>>, vector<8x2xf32>
    %c0_0 = arith.constant 0 : index
    %c0_1 = arith.constant 0 : index
    %2 = vector.load %arg2[%c0_0, %c0_1] : memref<8x1xf32, #tpu.memory_space<vmem>>, vector<8x1xf32>
    %3 = vector.broadcast %2 : vector<8x1xf32> to vector<8x2xf32>
    %4 = arith.mulf %1, %3 : vector<8x2xf32>
    %5 = arith.addf %0, %4 : vector<8x2xf32>
    %cst_2 = arith.constant dense<0.000000e+00> : vector<8xf32>
    %6 = vector.multi_reduction <add>, %5, %cst_2 [1] : vector<8x2xf32> to vector<8xf32>
    %7 = vector.shape_cast %6 : vector<8xf32> to vector<8x1xf32>
    %cst_3 = arith.constant 5.000000e-01 : f32
    %8 = vector.broadcast %cst_3 : f32 to vector<8x1xf32>
    %9 = arith.mulf %7, %8 : vector<8x1xf32>
    %10 = vector.broadcast %9 : vector<8x1xf32> to vector<8x2xf32>
    %11 = arith.subf %5, %10 : vector<8x2xf32>
    %12 = arith.mulf %11, %11 : vector<8x2xf32>
    %cst_4 = arith.constant dense<0.000000e+00> : vector<8xf32>
    %13 = vector.multi_reduction <add>, %12, %cst_4 [1] : vector<8x2xf32> to vector<8xf32>
    %14 = vector.shape_cast %13 : vector<8xf32> to vector<8x1xf32>
    %cst_5 = arith.constant 5.000000e-01 : f32
    %15 = vector.broadcast %cst_5 : f32 to vector<8x1xf32>
    %16 = arith.mulf %14, %15 : vector<8x1xf32>
    %cst_6 = arith.constant 9.99999974E-6 : f32
    %17 = vector.broadcast %cst_6 : f32 to vector<8x1xf32>
    %18 = arith.addf %16, %17 : vector<8x1xf32>
    %19 = math.rsqrt %18 : vector<8x1xf32>
    %20 = vector.broadcast %19 : vector<8x1xf32> to vector<8x2xf32>
    %21 = arith.mulf %11, %20 : vector<8x2xf32>
    %c0_7 = arith.constant 0 : index
    %c0_8 = arith.constant 0 : index
    %22 = vector.load %arg3[%c0_7, %c0_8] : memref<8x1xf32, #tpu.memory_space<vmem>>, vector<8x1xf32>
    %23 = vector.broadcast %22 : vector<8x1xf32> to vector<8x2xf32>
    %24 = arith.mulf %21, %23 : vector<8x2xf32>
    %c0_9 = arith.constant 0 : index
    %c0_10 = arith.constant 0 : index
    %25 = vector.load %arg4[%c0_9, %c0_10] : memref<8x1xf32, #tpu.memory_space<vmem>>, vector<8x1xf32>
    %26 = vector.broadcast %25 : vector<8x1xf32> to vector<8x2xf32>
    %27 = arith.addf %24, %26 : vector<8x2xf32>
    %cst_11 = arith.constant 0.000000e+00 : f32
    %28 = vector.broadcast %cst_11 : f32 to vector<8x2xf32>
    %29 = arith.cmpf oge, %27, %28 : vector<8x2xf32>
    %c0_12 = arith.constant 0 : index
    %c0_13 = arith.constant 0 : index
    %30 = vector.load %arg5[%c0_12, %c0_13] : memref<8x1xf32, #tpu.memory_space<vmem>>, vector<8x1xf32>
    %31 = vector.broadcast %30 : vector<8x1xf32> to vector<8x2xf32>
    %32 = arith.mulf %31, %27 : vector<8x2xf32>
    %33 = arith.select %29, %27, %32 : vector<8x2xi1>, vector<8x2xf32>
    %c0_14 = arith.constant 0 : index
    %c0_15 = arith.constant 0 : index
    %34 = vector.load %arg6[%c0_14, %c0_15] : memref<8x2xf32, #tpu.memory_space<vmem>>, vector<8x2xf32>
    tpu.vector_store %arg6[%c0_14, %c0_15], %33 {strides = array<i32>} : memref<8x2xf32, #tpu.memory_space<vmem>>, vector<8x2xf32>,
    return
  }
  func.func @transform_0(%arg0: i32) -> (i32, i32) {
    %c0_i32 = arith.constant 0 : i32
    %c0_i32_0 = arith.constant 0 : i32
    %c0_i32_1 = arith.constant 0 : i32
    return %c0_i32, %c0_i32_0 : i32, i32
  }
  func.func @transform_1(%arg0: i32) -> (i32, i32) {
    %c0_i32 = arith.constant 0 : i32
    %c0_i32_0 = arith.constant 0 : i32
    %c0_i32_1 = arith.constant 0 : i32
    return %c0_i32, %c0_i32_0 : i32, i32
  }
  func.func @transform_2(%arg0: i32) -> (i32, i32) {
    %c0_i32 = arith.constant 0 : i32
    %c0_i32_0 = arith.constant 0 : i32
    %c0_i32_1 = arith.constant 0 : i32
    return %c0_i32, %c0_i32_0 : i32, i32
  }
  func.func @transform_3(%arg0: i32) -> (i32, i32) {
    %c0_i32 = arith.constant 0 : i32
    %c0_i32_0 = arith.constant 0 : i32
    %c0_i32_1 = arith.constant 0 : i32
    return %c0_i32, %c0_i32_0 : i32, i32
  }
  func.func @transform_4(%arg0: i32) -> (i32, i32) {
    %c0_i32 = arith.constant 0 : i32
    %c0_i32_0 = arith.constant 0 : i32
    %c0_i32_1 = arith.constant 0 : i32
    return %c0_i32, %c0_i32_0 : i32, i32
  }
  func.func @transform_5(%arg0: i32) -> (i32, i32) {
    %c0_i32 = arith.constant 0 : i32
    %c0_i32_0 = arith.constant 0 : i32
    %c0_i32_1 = arith.constant 0 : i32
    return %c0_i32, %c0_i32_0 : i32, i32
  }
}

</mosaic_0001>

<llo_original>
// kernel: _lambda_.40
$region0: #{_lambda_.40}
  #allocation0 [shape = 'u32[]', space=smem, size = 0x4, offset = 0x4, fixed_abs, tag = 'smem constant byte address 0x4 - core index']
  #allocation1 [shape = 'u32[72,128]{1,0:T(1,128)}', space=vmem, size = 0x9000, scoped, tag = 'internal scratch']
  %s0 = inlined_call_operand.vmem [shape: f32[4,128], index: 0, kind: input, shape index: {}]
  %s1 = inlined_call_operand.vmem [shape: f32[1,8,4], index: 1, kind: input, shape index: {}]
  %s2 = inlined_call_operand.vmem [shape: f32[8,128], index: 2, kind: output, shape index: {}]
  %s3 = sld [smem:[#allocation0]]
  $region18: #{_lambda_.40} parent=0
    _
  %s5 = ssub.s32 1, %s3
  %s6 = scalar_select 0, %s5, %s3
  // Predicated region
  $region2: #{_lambda_.40} parent=0 // pred_check
    _
  $region3: #{_lambda_.40} parent=0 // pred_check_branch
    %8 = sbr.rel (0) target = $region5
  $region4: #{_lambda_.40} parent=0 // pred_region
    _
  $region5: #{_lambda_.40} parent=0 // pred_fallthru
    _
  // Predicated region
  $region6: #{_lambda_.40} parent=0 // pred_check
    _
  $region7: #{_lambda_.40} parent=0 // pred_check_branch
    %10 = sbr.rel (0) target = $region9
  $region8: #{_lambda_.40} parent=0 // pred_region
    _
  $region9: #{_lambda_.40} parent=0 // pred_fallthru
    _
  %v11 = vld [vmem:[%s0] sm:$0xf]
  %v12 = vld [vmem:[%s1] sm:$0xff]
  %vm13 = vcmask 31744
  %v15 = vsel %vm13, %v12, 0
  %vm17 = vcmask 1043456
  %v19 = vsel %vm17, %v11, 0
  %21 = vmatpush.msra.mxu0 0.0
  %22 = vmatpush.msra.mxu0 0.0
  %23 = vmatpush.msra.mxu0 0.0
  %24 = vmatpush.msra.mxu0 0.0
  %25 = vmatpush.msra.mxu0 0.0
  %26 = vmatpush.msra.mxu0 0.0
  %27 = vmatpush.msra.mxu0 0.0
  %28 = vmatpush.msra.mxu0 0.0
  %29 = vmatpush.msra.mxu0 0.0
  %30 = vmatpush.msra.mxu0 0.0
  %31 = vmatpush.msra.mxu0 0.0
  %32 = vmatpush.msra.mxu0 0.0
  %33 = vmatpush.msra.mxu0 0.0
  %34 = vmatpush.msra.mxu0 0.0
  %35 = vmatpush.msra.mxu0 0.0
  %36 = vmatpush.msra.mxu0 %v19
  %37 = vmatmul.f32.gmra.mxu0 %v15
  %v38 = vpop.f32.mrf.mxu0
  %v39 = vadd.f32 0.0, %v38
  %40 = vdwg.mxu0
  %41 = vst [vmem:[%s2] sm:$0xff] %v39
  // Predicated region
  $region10: #{_lambda_.40} parent=0 // pred_check
    _
  $region11: #{_lambda_.40} parent=0 // pred_check_branch
    %43 = sbr.rel (0) target = $region13
  $region12: #{_lambda_.40} parent=0 // pred_region
    _
  $region13: #{_lambda_.40} parent=0 // pred_fallthru
    _
  // Predicated region
  $region14: #{_lambda_.40} parent=0 // pred_check
    _
  $region15: #{_lambda_.40} parent=0 // pred_check_branch
    %45 = sbr.rel (0) target = $region17
  $region16: #{_lambda_.40} parent=0 // pred_region
    _
  $region17: #{_lambda_.40} parent=0 // pred_fallthru
    _

// kernel: _lambda_.37
$region0: #{_lambda_.37}
  #allocation0 [shape = 'u32[]', space=smem, size = 0x4, offset = 0x4, fixed_abs, tag = 'smem constant byte address 0x4 - core index']
  #allocation1 [shape = 'u32[72,128]{1,0:T(1,128)}', space=vmem, size = 0x9000, scoped, tag = 'internal scratch']
  %s0 = inlined_call_operand.vmem [shape: f32[4,146], index: 0, kind: input, shape index: {}]
  %s1 = inlined_call_operand.vmem [shape: f32[4,9], index: 1, kind: input, shape index: {}]
  %s2 = inlined_call_operand.vmem [shape: f32[9,128], index: 2, kind: input, shape index: {}]
  %s3 = inlined_call_operand.vmem [shape: f32[4,1], index: 3, kind: input, shape index: {}]
  %s4 = inlined_call_operand.vmem [shape: f32[4,1], index: 4, kind: input, shape index: {}]
  %s5 = inlined_call_operand.vmem [shape: f32[4,1], index: 5, kind: input, shape index: {}]
  %s6 = inlined_call_operand.vmem [shape: f32[4,128], index: 6, kind: output, shape index: {}]
  %s7 = sld [smem:[#allocation0]]
  $region34: #{_lambda_.37} parent=0
    _
  %s9 = ssub.s32 1, %s7
  %s10 = scalar_select 0, %s9, %s7
  // Predicated region
  $region2: #{_lambda_.37} parent=0 // pred_check
    _
  $region3: #{_lambda_.37} parent=0 // pred_check_branch
    %12 = sbr.rel (0) target = $region5
  $region4: #{_lambda_.37} parent=0 // pred_region
    _
  $region5: #{_lambda_.37} parent=0 // pred_fallthru
    _
  // Predicated region
  $region6: #{_lambda_.37} parent=0 // pred_check
    _
  $region7: #{_lambda_.37} parent=0 // pred_check_branch
    %14 = sbr.rel (0) target = $region9
  $region8: #{_lambda_.37} parent=0 // pred_region
    _
  $region9: #{_lambda_.37} parent=0 // pred_fallthru
    _
  // Predicated region
  $region10: #{_lambda_.37} parent=0 // pred_check
    _
  $region11: #{_lambda_.37} parent=0 // pred_check_branch
    %16 = sbr.rel (0) target = $region13
  $region12: #{_lambda_.37} parent=0 // pred_region
    _
  $region13: #{_lambda_.37} parent=0 // pred_fallthru
    _
  // Predicated region
  $region14: #{_lambda_.37} parent=0 // pred_check
    _
  $region15: #{_lambda_.37} parent=0 // pred_check_branch
    %18 = sbr.rel (0) target = $region17
  $region16: #{_lambda_.37} parent=0 // pred_region
    _
  $region17: #{_lambda_.37} parent=0 // pred_fallthru
    _
  // Predicated region
  $region18: #{_lambda_.37} parent=0 // pred_check
    _
  $region19: #{_lambda_.37} parent=0 // pred_check_branch
    %20 = sbr.rel (0) target = $region21
  $region20: #{_lambda_.37} parent=0 // pred_region
    _
  $region21: #{_lambda_.37} parent=0 // pred_fallthru
    _
  // Predicated region
  $region22: #{_lambda_.37} parent=0 // pred_check
    _
  $region23: #{_lambda_.37} parent=0 // pred_check_branch
    %22 = sbr.rel (0) target = $region25
  $region24: #{_lambda_.37} parent=0 // pred_region
    _
  $region25: #{_lambda_.37} parent=0 // pred_fallthru
    _
  %v23 = vld [vmem:[%s0] sm:$0xf]
  %v24 = vld [vmem:[%s2] sm:$0x1]
  %v25 = vperm.slane %v24, 0
  %v26 = vmul.f32 %v23, %v25
  %v27 = vld [vmem:[%s1] sm:$0xf]
  %29 = vset.pattern.permute.xlu0 0
  %30 = vperm.xlu0 %29, %v27
  %v31 = vpop.permute.xlu0 %30
  %v33 = vmul.f32 %v26, %v31
  %v34 = vadd.f32 %v33, 0.0
  %v35 = vld [vmem:[%s0] sm:$0xff]
  %v36 = vld [vmem:[%s2 + $0x1] sm:$0x1]
  %v37 = vperm.slane %v36, 0
  %39 = vrot.lane.b32.xlu0 %v37, 1
  %v40 = vpop.permute.xlu0 %39
  %v41 = vrot.slane %v40, 4
  %vm42 = vcmask 7168
  %v43 = vsel %vm42, %v41, %v40
  %v45 = vmul.f32 %v35, %v43
  %46 = vset.pattern.permute.xlu0 1
  %47 = vperm.xlu0 %46, %v27
  %v48 = vpop.permute.xlu0 %47
  %v50 = vmul.f32 %v45, %v48
  %52 = vrot.lane.b32.xlu0 %v50, 127
  %v53 = vpop.permute.xlu0 %52
  %v54 = vrot.slane %v53, 4
  %vm55 = vcmask 1039360
  %v56 = vsel %vm55, %v53, %v54
  %v58 = vadd.f32 %v34, %v56
  %v59 = vld [vmem:[%s2 + $0x2] sm:$0x1]
  %v60 = vperm.slane %v59, 0
  %62 = vrot.lane.b32.xlu0 %v60, 2
  %v63 = vpop.permute.xlu0 %62
  %v64 = vrot.slane %v63, 4
  %vm65 = vcmask 15360
  %v66 = vsel %vm65, %v64, %v63
  %v68 = vmul.f32 %v35, %v66
  %69 = vset.pattern.permute.xlu0 2
  %70 = vperm.xlu0 %69, %v27
  %v71 = vpop.permute.xlu0 %70
  %v73 = vmul.f32 %v68, %v71
  %75 = vrot.lane.b32.xlu0 %v73, 126
  %v76 = vpop.permute.xlu0 %75
  %v77 = vrot.slane %v76, 4
  %vm78 = vcmask 1031168
  %v79 = vsel %vm78, %v76, %v77
  %v81 = vadd.f32 %v58, %v79
  %v82 = vld [vmem:[%s2 + $0x3] sm:$0x1]
  %v83 = vperm.slane %v82, 0
  %85 = vrot.lane.b32.xlu0 %v83, 8
  %v86 = vpop.permute.xlu0 %85
  %v87 = vrot.slane %v86, 4
  %vm88 = vcmask 64512
  %v89 = vsel %vm88, %v87, %v86
  %v91 = vmul.f32 %v35, %v89
  %92 = vset.pattern.permute.xlu0 3
  %93 = vperm.xlu0 %92, %v27
  %v94 = vpop.permute.xlu0 %93
  %v96 = vmul.f32 %v91, %v94
  %98 = vrot.lane.b32.xlu0 %v96, 120
  %v99 = vpop.permute.xlu0 %98
  %v100 = vrot.slane %v99, 4
  %vm101 = vcmask 982016
  %v102 = vsel %vm101, %v99, %v100
  %v104 = vadd.f32 %v81, %v102
  %105 = vset.pattern.permute.xlu0 4
  %106 = vperm.xlu0 %105, %v27
  %v107 = vpop.permute.xlu0 %106
  %v109 = vmul.f32 %v35, %v107
  %111 = vrot.lane.b32.xlu0 %v109, 119
  %v112 = vpop.permute.xlu0 %111
  %v113 = vrot.slane %v112, 4
  %vm114 = vcmask 973824
  %v115 = vsel %vm114, %v112, %v113
  %v117 = vadd.f32 %v104, %v115
  %v118 = vld [vmem:[%s2 + $0x5] sm:$0x1]
  %v119 = vperm.slane %v118, 0
  %121 = vrot.lane.b32.xlu0 %v119, 10
  %v122 = vpop.permute.xlu0 %121
  %v123 = vrot.slane %v122, 4
  %vm124 = vcmask 80896
  %v125 = vsel %vm124, %v123, %v122
  %v127 = vmul.f32 %v35, %v125
  %128 = vset.pattern.permute.xlu0 5
  %129 = vperm.xlu0 %128, %v27
  %v130 = vpop.permute.xlu0 %129
  %v132 = vmul.f32 %v127, %v130
  %134 = vrot.lane.b32.xlu0 %v132, 118
  %v135 = vpop.permute.xlu0 %134
  %v136 = vrot.slane %v135, 4
  %vm137 = vcmask 965632
  %v138 = vsel %vm137, %v135, %v136
  %v140 = vadd.f32 %v117, %v138
  %v141 = vld [vmem:[%s2 + $0x6] sm:$0x1]
  %v142 = vperm.slane %v141, 0
  %144 = vrot.lane.b32.xlu0 %v142, 16
  %v145 = vpop.permute.xlu0 %144
  %v146 = vrot.slane %v145, 4
  %vm147 = vcmask 130048
  %v148 = vsel %vm147, %v146, %v145
  %v150 = vmul.f32 %v35, %v148
  %151 = vset.pattern.permute.xlu0 6
  %152 = vperm.xlu0 %151, %v27
  %v153 = vpop.permute.xlu0 %152
  %v155 = vmul.f32 %v150, %v153
  %157 = vrot.lane.b32.xlu0 %v155, 112
  %v158 = vpop.permute.xlu0 %157
  %v159 = vrot.slane %v158, 4
  %vm160 = vcmask 916480
  %v161 = vsel %vm160, %v158, %v159
  %v163 = vadd.f32 %v140, %v161
  %v164 = vld [vmem:[%s2 + $0x7] sm:$0x1]
  %v165 = vperm.slane %v164, 0
  %167 = vrot.lane.b32.xlu0 %v165, 17
  %v168 = vpop.permute.xlu0 %167
  %v169 = vrot.slane %v168, 4
  %vm170 = vcmask 138240
  %v171 = vsel %vm170, %v169, %v168
  %v173 = vmul.f32 %v35, %v171
  %174 = vset.pattern.permute.xlu0 7
  %175 = vperm.xlu0 %174, %v27
  %v176 = vpop.permute.xlu0 %175
  %v178 = vmul.f32 %v173, %v176
  %180 = vrot.lane.b32.xlu0 %v178, 111
  %v181 = vpop.permute.xlu0 %180
  %v182 = vrot.slane %v181, 4
  %vm183 = vcmask 908288
  %v184 = vsel %vm183, %v181, %v182
  %v186 = vadd.f32 %v163, %v184
  %v187 = vld [vmem:[%s2 + $0x8] sm:$0x1]
  %v188 = vperm.slane %v187, 0
  %190 = vrot.lane.b32.xlu0 %v188, 18
  %v191 = vpop.permute.xlu0 %190
  %v192 = vrot.slane %v191, 4
  %vm193 = vcmask 146432
  %v194 = vsel %vm193, %v192, %v191
  %v196 = vmul.f32 %v35, %v194
  %197 = vset.pattern.permute.xlu0 8
  %198 = vperm.xlu0 %197, %v27
  %v199 = vpop.permute.xlu0 %198
  %v201 = vmul.f32 %v196, %v199
  %203 = vrot.lane.b32.xlu0 %v201, 110
  %v204 = vpop.permute.xlu0 %203
  %v205 = vrot.slane %v204, 4
  %vm206 = vcmask 900096
  %v207 = vsel %vm206, %v204, %v205
  %v209 = vadd.f32 %v186, %v207
  %vm210 = vcmask 1043456
  %v211 = vsel %vm210, %v209, 0.0
  %212 = vadd.xlane.f32.xlu0 %v211
  %v213 = vpop.xlane.xlu0 %212
  %v214 = vmul.f32 %v213, 0.0078125
  %v215 = vsub.f32 %v209, %v214
  %v216 = vmul.f32 %v215, %v215
  %v217 = vsel %vm210, %v216, 0.0
  %218 = vadd.xlane.f32.xlu0 %v217
  %v219 = vpop.xlane.xlu0 %218
  %v220 = vmul.f32 %v219, 0.0078125
  %v221 = vadd.f32 %v220, 1e-05
  %v222 = vrsqrt.pop %v221
  %v223 = vmul.f32 %v222, %v221
  %v224 = vmul.f32 %v223, %v222
  %v225 = vmul.f32 0.5, %v224
  %v226 = vsub.f32 1.5, %v225
  %v227 = vmul.f32 %v222, %v226
  %vm228 = vweird.f32 %v221
  %vm229 = vweird.f32 %v222
  %vm230 = vmor %vm228, %vm229
  %v231 = vsel %vm230, %v222, %v227
  %v232 = vmul.f32 %v215, %v231
  %v233 = vld [vmem:[%s3] sm:$0xf]
  %235 = vset.pattern.permute.xlu0 0
  %236 = vperm.xlu0 %235, %v233
  %v237 = vpop.permute.xlu0 %236
  %v239 = vmul.f32 %v232, %v237
  %v240 = vld [vmem:[%s4] sm:$0xf]
  %242 = vset.pattern.permute.xlu0 0
  %243 = vperm.xlu0 %242, %v240
  %v244 = vpop.permute.xlu0 %243
  %v246 = vadd.f32 %v239, %v244
  %vm247 = vcmp.ge.f32.partialorder %v246, 0.0
  %v248 = vld [vmem:[%s5] sm:$0xf]
  %250 = vset.pattern.permute.xlu0 0
  %251 = vperm.xlu0 %250, %v248
  %v252 = vpop.permute.xlu0 %251
  %v254 = vmul.f32 %v252, %v246
  %v255 = vsel %vm247, %v246, %v254
  %256 = vst [vmem:[%s6] sm:$0xf] %v255
  // Predicated region
  $region26: #{_lambda_.37} parent=0 // pred_check
    _
  $region27: #{_lambda_.37} parent=0 // pred_check_branch
    %258 = sbr.rel (0) target = $region29
  $region28: #{_lambda_.37} parent=0 // pred_region
    _
  $region29: #{_lambda_.37} parent=0 // pred_fallthru
    _
  // Predicated region
  $region30: #{_lambda_.37} parent=0 // pred_check
    _
  $region31: #{_lambda_.37} parent=0 // pred_check_branch
    %260 = sbr.rel (0) target = $region33
  $region32: #{_lambda_.37} parent=0 // pred_region
    _
  $region33: #{_lambda_.37} parent=0 // pred_fallthru
    _

// kernel: _lambda_.35
$region0: #{_lambda_.35}
  #allocation0 [shape = 'u32[]', space=smem, size = 0x4, offset = 0x4, fixed_abs, tag = 'smem constant byte address 0x4 - core index']
  #allocation1 [shape = 'u32[72,128]{1,0:T(1,128)}', space=vmem, size = 0x9000, scoped, tag = 'internal scratch']
  %s0 = inlined_call_operand.vmem [shape: f32[3,146], index: 0, kind: input, shape index: {}]
  %s1 = inlined_call_operand.vmem [shape: f32[9,4,3], index: 1, kind: input, shape index: {}]
  %s2 = inlined_call_operand.vmem [shape: f32[9,128], index: 2, kind: input, shape index: {}]
  %s3 = inlined_call_operand.vmem [shape: f32[4,1], index: 3, kind: input, shape index: {}]
  %s4 = inlined_call_operand.vmem [shape: f32[4,1], index: 4, kind: input, shape index: {}]
  %s5 = inlined_call_operand.vmem [shape: f32[4,1], index: 5, kind: input, shape index: {}]
  %s6 = inlined_call_operand.vmem [shape: f32[4,128], index: 6, kind: output, shape index: {}]
  %s7 = sld [smem:[#allocation0]]
  $region34: #{_lambda_.35} parent=0
    _
  %s9 = ssub.s32 1, %s7
  %s10 = scalar_select 0, %s9, %s7
  // Predicated region
  $region2: #{_lambda_.35} parent=0 // pred_check
    _
  $region3: #{_lambda_.35} parent=0 // pred_check_branch
    %12 = sbr.rel (0) target = $region5
  $region4: #{_lambda_.35} parent=0 // pred_region
    _
  $region5: #{_lambda_.35} parent=0 // pred_fallthru
    _
  // Predicated region
  $region6: #{_lambda_.35} parent=0 // pred_check
    _
  $region7: #{_lambda_.35} parent=0 // pred_check_branch
    %14 = sbr.rel (0) target = $region9
  $region8: #{_lambda_.35} parent=0 // pred_region
    _
  $region9: #{_lambda_.35} parent=0 // pred_fallthru
    _
  // Predicated region
  $region10: #{_lambda_.35} parent=0 // pred_check
    _
  $region11: #{_lambda_.35} parent=0 // pred_check_branch
    %16 = sbr.rel (0) target = $region13
  $region12: #{_lambda_.35} parent=0 // pred_region
    _
  $region13: #{_lambda_.35} parent=0 // pred_fallthru
    _
  // Predicated region
  $region14: #{_lambda_.35} parent=0 // pred_check
    _
  $region15: #{_lambda_.35} parent=0 // pred_check_branch
    %18 = sbr.rel (0) target = $region17
  $region16: #{_lambda_.35} parent=0 // pred_region
    _
  $region17: #{_lambda_.35} parent=0 // pred_fallthru
    _
  // Predicated region
  $region18: #{_lambda_.35} parent=0 // pred_check
    _
  $region19: #{_lambda_.35} parent=0 // pred_check_branch
    %20 = sbr.rel (0) target = $region21
  $region20: #{_lambda_.35} parent=0 // pred_region
    _
  $region21: #{_lambda_.35} parent=0 // pred_fallthru
    _
  // Predicated region
  $region22: #{_lambda_.35} parent=0 // pred_check
    _
  $region23: #{_lambda_.35} parent=0 // pred_check_branch
    %22 = sbr.rel (0) target = $region25
  $region24: #{_lambda_.35} parent=0 // pred_region
    _
  $region25: #{_lambda_.35} parent=0 // pred_fallthru
    _
  %v23 = vld [vmem:[%s0] sm:$0x7]
  %v24 = vld [vmem:[%s2] sm:$0x1]
  %v25 = vperm.slane %v24, 0
  %v26 = vmul.f32 %v23, %v25
  %v27 = vld [vmem:[%s1] sm:$0xf]
  %v28 = vld [vmem:[%s0] sm:$0x77]
  %v29 = vld [vmem:[%s2 + $0x1] sm:$0x1]
  %v30 = vperm.slane %v29, 0
  %32 = vrot.lane.b32.xlu0 %v30, 1
  %v33 = vpop.permute.xlu0 %32
  %v34 = vrot.slane %v33, 4
  %vm35 = vcmask 7168
  %v36 = vsel %vm35, %v34, %v33
  %v38 = vmul.f32 %v28, %v36
  %s39 = scalar_lea.vmem %s1, 4
  %v40 = vld [vmem:[%s39] sm:$0xf]
  %42 = vst [vmem:[#allocation1] ss:$2 sm:$0xff] %v38
  %v43 = vld.sshfl [vmem:[#allocation1] sm:$0xff pattern:$0x75316420]
  %v44 = vld.sshfl [vmem:[#allocation1 + $0x8] sm:$0xff pattern:$0x75316420]
  %45 = vrot.lane.b32.xlu0 %v43, 127
  %v46 = vpop.permute.xlu0 %45
  %47 = vrot.lane.b32.xlu0 %v44, 127
  %v48 = vpop.permute.xlu0 %47
  %vm49 = vcmask 1039360
  %v50 = vsel %vm49, %v46, %v48
  %vm51 = vcmask 23552
  %v53 = vsel %vm51, %v40, 0
  %vm55 = vcmask 1042432
  %v56 = vsel %vm55, %v50, 0
  %58 = vmatpush.msra.mxu0 0.0
  %59 = vmatpush.msra.mxu0 0.0
  %60 = vmatpush.msra.mxu0 0.0
  %61 = vmatpush.msra.mxu0 0.0
  %62 = vmatpush.msra.mxu0 0.0
  %63 = vmatpush.msra.mxu0 0.0
  %64 = vmatpush.msra.mxu0 0.0
  %65 = vmatpush.msra.mxu0 0.0
  %66 = vmatpush.msra.mxu0 0.0
  %67 = vmatpush.msra.mxu0 0.0
  %68 = vmatpush.msra.mxu0 0.0
  %69 = vmatpush.msra.mxu0 0.0
  %70 = vmatpush.msra.mxu0 0.0
  %71 = vmatpush.msra.mxu0 0.0
  %72 = vmatpush.msra.mxu0 0.0
  %73 = vmatpush.msra.mxu0 %v56
  %74 = vmatmul.f32.gmra.mxu0 %v53
  %v75 = vpop.f32.mrf.mxu0
  %v76 = vadd.f32 0.0, %v75
  %77 = vdwg.mxu0
  %v79 = vsel %vm51, %v27, 0
  %v82 = vsel %vm55, %v26, 0
  %84 = vmatpush.msra.mxu0 0.0
  %85 = vmatpush.msra.mxu0 0.0
  %86 = vmatpush.msra.mxu0 0.0
  %87 = vmatpush.msra.mxu0 0.0
  %88 = vmatpush.msra.mxu0 0.0
  %89 = vmatpush.msra.mxu0 0.0
  %90 = vmatpush.msra.mxu0 0.0
  %91 = vmatpush.msra.mxu0 0.0
  %92 = vmatpush.msra.mxu0 0.0
  %93 = vmatpush.msra.mxu0 0.0
  %94 = vmatpush.msra.mxu0 0.0
  %95 = vmatpush.msra.mxu0 0.0
  %96 = vmatpush.msra.mxu0 0.0
  %97 = vmatpush.msra.mxu0 0.0
  %98 = vmatpush.msra.mxu0 0.0
  %99 = vmatpush.msra.mxu0 %v82
  %100 = vmatmul.f32.gmra.mxu0 %v79
  %v101 = vpop.f32.mrf.mxu0
  %v102 = vadd.f32 %v76, %v101
  %103 = vdwg.mxu0
  %v104 = vld [vmem:[%s0] sm:$0x77]
  %v105 = vld [vmem:[%s2 + $0x2] sm:$0x1]
  %v106 = vperm.slane %v105, 0
  %108 = vrot.lane.b32.xlu0 %v106, 2
  %v109 = vpop.permute.xlu0 %108
  %v110 = vrot.slane %v109, 4
  %vm111 = vcmask 15360
  %v112 = vsel %vm111, %v110, %v109
  %v114 = vmul.f32 %v104, %v112
  %s115 = scalar_lea.vmem %s1, 8
  %v116 = vld [vmem:[%s115] sm:$0xf]
  %118 = vst [vmem:[#allocation1] ss:$2 sm:$0xff] %v114
  %v119 = vld.sshfl [vmem:[#allocation1] sm:$0xff pattern:$0x75316420]
  %v120 = vld.sshfl [vmem:[#allocation1 + $0x8] sm:$0xff pattern:$0x75316420]
  %121 = vrot.lane.b32.xlu0 %v119, 126
  %v122 = vpop.permute.xlu0 %121
  %123 = vrot.lane.b32.xlu0 %v120, 126
  %v124 = vpop.permute.xlu0 %123
  %vm125 = vcmask 1031168
  %v126 = vsel %vm125, %v122, %v124
  %v128 = vsel %vm51, %v116, 0
  %v130 = vsel %vm55, %v126, 0
  %132 = vmatpush.msra.mxu0 0.0
  %133 = vmatpush.msra.mxu0 0.0
  %134 = vmatpush.msra.mxu0 0.0
  %135 = vmatpush.msra.mxu0 0.0
  %136 = vmatpush.msra.mxu0 0.0
  %137 = vmatpush.msra.mxu0 0.0
  %138 = vmatpush.msra.mxu0 0.0
  %139 = vmatpush.msra.mxu0 0.0
  %140 = vmatpush.msra.mxu0 0.0
  %141 = vmatpush.msra.mxu0 0.0
  %142 = vmatpush.msra.mxu0 0.0
  %143 = vmatpush.msra.mxu0 0.0
  %144 = vmatpush.msra.mxu0 0.0
  %145 = vmatpush.msra.mxu0 0.0
  %146 = vmatpush.msra.mxu0 0.0
  %147 = vmatpush.msra.mxu0 %v130
  %148 = vmatmul.f32.gmra.mxu0 %v128
  %v149 = vpop.f32.mrf.mxu0
  %v150 = vadd.f32 0.0, %v149
  %151 = vdwg.mxu0
  %v152 = vadd.f32 %v102, %v150
  %v153 = vld [vmem:[%s0] sm:$0x77]
  %v154 = vld [vmem:[%s2 + $0x3] sm:$0x1]
  %v155 = vperm.slane %v154, 0
  %157 = vrot.lane.b32.xlu0 %v155, 8
  %v158 = vpop.permute.xlu0 %157
  %v159 = vrot.slane %v158, 4
  %vm160 = vcmask 64512
  %v161 = vsel %vm160, %v159, %v158
  %v163 = vmul.f32 %v153, %v161
  %s164 = scalar_lea.vmem %s1, 12
  %v165 = vld [vmem:[%s164] sm:$0xf]
  %167 = vst [vmem:[#allocation1] ss:$2 sm:$0xff] %v163
  %v168 = vld.sshfl [vmem:[#allocation1] sm:$0xff pattern:$0x75316420]
  %v169 = vld.sshfl [vmem:[#allocation1 + $0x8] sm:$0xff pattern:$0x75316420]
  %170 = vrot.lane.b32.xlu0 %v168, 120
  %v171 = vpop.permute.xlu0 %170
  %172 = vrot.lane.b32.xlu0 %v169, 120
  %v173 = vpop.permute.xlu0 %172
  %vm174 = vcmask 982016
  %v175 = vsel %vm174, %v171, %v173
  %v177 = vsel %vm51, %v165, 0
  %v179 = vsel %vm55, %v175, 0
  %181 = vmatpush.msra.mxu0 0.0
  %182 = vmatpush.msra.mxu0 0.0
  %183 = vmatpush.msra.mxu0 0.0
  %184 = vmatpush.msra.mxu0 0.0
  %185 = vmatpush.msra.mxu0 0.0
  %186 = vmatpush.msra.mxu0 0.0
  %187 = vmatpush.msra.mxu0 0.0
  %188 = vmatpush.msra.mxu0 0.0
  %189 = vmatpush.msra.mxu0 0.0
  %190 = vmatpush.msra.mxu0 0.0
  %191 = vmatpush.msra.mxu0 0.0
  %192 = vmatpush.msra.mxu0 0.0
  %193 = vmatpush.msra.mxu0 0.0
  %194 = vmatpush.msra.mxu0 0.0
  %195 = vmatpush.msra.mxu0 0.0
  %196 = vmatpush.msra.mxu0 %v179
  %197 = vmatmul.f32.gmra.mxu0 %v177
  %v198 = vpop.f32.mrf.mxu0
  %v199 = vadd.f32 0.0, %v198
  %200 = vdwg.mxu0
  %v201 = vadd.f32 %v152, %v199
  %v202 = vld [vmem:[%s0] sm:$0x77]
  %s203 = scalar_lea.vmem %s1, 16
  %v204 = vld [vmem:[%s203] sm:$0xf]
  %206 = vst [vmem:[#allocation1] ss:$2 sm:$0xff] %v202
  %v207 = vld.sshfl [vmem:[#allocation1] sm:$0xff pattern:$0x75316420]
  %v208 = vld.sshfl [vmem:[#allocation1 + $0x8] sm:$0xff pattern:$0x75316420]
  %209 = vrot.lane.b32.xlu0 %v207, 119
  %v210 = vpop.permute.xlu0 %209
  %211 = vrot.lane.b32.xlu0 %v208, 119
  %v212 = vpop.permute.xlu0 %211
  %vm213 = vcmask 973824
  %v214 = vsel %vm213, %v210, %v212
  %v216 = vsel %vm51, %v204, 0
  %v218 = vsel %vm55, %v214, 0
  %220 = vmatpush.msra.mxu0 0.0
  %221 = vmatpush.msra.mxu0 0.0
  %222 = vmatpush.msra.mxu0 0.0
  %223 = vmatpush.msra.mxu0 0.0
  %224 = vmatpush.msra.mxu0 0.0
  %225 = vmatpush.msra.mxu0 0.0
  %226 = vmatpush.msra.mxu0 0.0
  %227 = vmatpush.msra.mxu0 0.0
  %228 = vmatpush.msra.mxu0 0.0
  %229 = vmatpush.msra.mxu0 0.0
  %230 = vmatpush.msra.mxu0 0.0
  %231 = vmatpush.msra.mxu0 0.0
  %232 = vmatpush.msra.mxu0 0.0
  %233 = vmatpush.msra.mxu0 0.0
  %234 = vmatpush.msra.mxu0 0.0
  %235 = vmatpush.msra.mxu0 %v218
  %236 = vmatmul.f32.gmra.mxu0 %v216
  %v237 = vpop.f32.mrf.mxu0
  %v238 = vadd.f32 0.0, %v237
  %239 = vdwg.mxu0
  %v240 = vadd.f32 %v201, %v238
  %v241 = vld [vmem:[%s0] sm:$0x77]
  %v242 = vld [vmem:[%s2 + $0x5] sm:$0x1]
  %v243 = vperm.slane %v242, 0
  %245 = vrot.lane.b32.xlu0 %v243, 10
  %v246 = vpop.permute.xlu0 %245
  %v247 = vrot.slane %v246, 4
  %vm248 = vcmask 80896
  %v249 = vsel %vm248, %v247, %v246
  %v251 = vmul.f32 %v241, %v249
  %s252 = scalar_lea.vmem %s1, 20
  %v253 = vld [vmem:[%s252] sm:$0xf]
  %255 = vst [vmem:[#allocation1] ss:$2 sm:$0xff] %v251
  %v256 = vld.sshfl [vmem:[#allocation1] sm:$0xff pattern:$0x75316420]
  %v257 = vld.sshfl [vmem:[#allocation1 + $0x8] sm:$0xff pattern:$0x75316420]
  %258 = vrot.lane.b32.xlu0 %v256, 118
  %v259 = vpop.permute.xlu0 %258
  %260 = vrot.lane.b32.xlu0 %v257, 118
  %v261 = vpop.permute.xlu0 %260
  %vm262 = vcmask 965632
  %v263 = vsel %vm262, %v259, %v261
  %v265 = vsel %vm51, %v253, 0
  %v267 = vsel %vm55, %v263, 0
  %269 = vmatpush.msra.mxu0 0.0
  %270 = vmatpush.msra.mxu0 0.0
  %271 = vmatpush.msra.mxu0 0.0
  %272 = vmatpush.msra.mxu0 0.0
  %273 = vmatpush.msra.mxu0 0.0
  %274 = vmatpush.msra.mxu0 0.0
  %275 = vmatpush.msra.mxu0 0.0
  %276 = vmatpush.msra.mxu0 0.0
  %277 = vmatpush.msra.mxu0 0.0
  %278 = vmatpush.msra.mxu0 0.0
  %279 = vmatpush.msra.mxu0 0.0
  %280 = vmatpush.msra.mxu0 0.0
  %281 = vmatpush.msra.mxu0 0.0
  %282 = vmatpush.msra.mxu0 0.0
  %283 = vmatpush.msra.mxu0 0.0
  %284 = vmatpush.msra.mxu0 %v267
  %285 = vmatmul.f32.gmra.mxu0 %v265
  %v286 = vpop.f32.mrf.mxu0
  %v287 = vadd.f32 0.0, %v286
  %288 = vdwg.mxu0
  %v289 = vadd.f32 %v240, %v287
  %v290 = vld [vmem:[%s0] sm:$0x77]
  %v291 = vld [vmem:[%s2 + $0x6] sm:$0x1]
  %v292 = vperm.slane %v291, 0
  %294 = vrot.lane.b32.xlu0 %v292, 16
  %v295 = vpop.permute.xlu0 %294
  %v296 = vrot.slane %v295, 4
  %vm297 = vcmask 130048
  %v298 = vsel %vm297, %v296, %v295
  %v300 = vmul.f32 %v290, %v298
  %s301 = scalar_lea.vmem %s1, 24
  %v302 = vld [vmem:[%s301] sm:$0xf]
  %304 = vst [vmem:[#allocation1] ss:$2 sm:$0xff] %v300
  %v305 = vld.sshfl [vmem:[#allocation1] sm:$0xff pattern:$0x75316420]
  %v306 = vld.sshfl [vmem:[#allocation1 + $0x8] sm:$0xff pattern:$0x75316420]
  %307 = vrot.lane.b32.xlu0 %v305, 112
  %v308 = vpop.permute.xlu0 %307
  %309 = vrot.lane.b32.xlu0 %v306, 112
  %v310 = vpop.permute.xlu0 %309
  %vm311 = vcmask 916480
  %v312 = vsel %vm311, %v308, %v310
  %v314 = vsel %vm51, %v302, 0
  %v316 = vsel %vm55, %v312, 0
  %318 = vmatpush.msra.mxu0 0.0
  %319 = vmatpush.msra.mxu0 0.0
  %320 = vmatpush.msra.mxu0 0.0
  %321 = vmatpush.msra.mxu0 0.0
  %322 = vmatpush.msra.mxu0 0.0
  %323 = vmatpush.msra.mxu0 0.0
  %324 = vmatpush.msra.mxu0 0.0
  %325 = vmatpush.msra.mxu0 0.0
  %326 = vmatpush.msra.mxu0 0.0
  %327 = vmatpush.msra.mxu0 0.0
  %328 = vmatpush.msra.mxu0 0.0
  %329 = vmatpush.msra.mxu0 0.0
  %330 = vmatpush.msra.mxu0 0.0
  %331 = vmatpush.msra.mxu0 0.0
  %332 = vmatpush.msra.mxu0 0.0
  %333 = vmatpush.msra.mxu0 %v316
  %334 = vmatmul.f32.gmra.mxu0 %v314
  %v335 = vpop.f32.mrf.mxu0
  %v336 = vadd.f32 0.0, %v335
  %337 = vdwg.mxu0
  %v338 = vadd.f32 %v289, %v336
  %v339 = vld [vmem:[%s0] sm:$0x77]
  %v340 = vld [vmem:[%s2 + $0x7] sm:$0x1]
  %v341 = vperm.slane %v340, 0
  %343 = vrot.lane.b32.xlu0 %v341, 17
  %v344 = vpop.permute.xlu0 %343
  %v345 = vrot.slane %v344, 4
  %vm346 = vcmask 138240
  %v347 = vsel %vm346, %v345, %v344
  %v349 = vmul.f32 %v339, %v347
  %s350 = scalar_lea.vmem %s1, 28
  %v351 = vld [vmem:[%s350] sm:$0xf]
  %353 = vst [vmem:[#allocation1] ss:$2 sm:$0xff] %v349
  %v354 = vld.sshfl [vmem:[#allocation1] sm:$0xff pattern:$0x75316420]
  %v355 = vld.sshfl [vmem:[#allocation1 + $0x8] sm:$0xff pattern:$0x75316420]
  %356 = vrot.lane.b32.xlu0 %v354, 111
  %v357 = vpop.permute.xlu0 %356
  %358 = vrot.lane.b32.xlu0 %v355, 111
  %v359 = vpop.permute.xlu0 %358
  %vm360 = vcmask 908288
  %v361 = vsel %vm360, %v357, %v359
  %v363 = vsel %vm51, %v351, 0
  %v365 = vsel %vm55, %v361, 0
  %367 = vmatpush.msra.mxu0 0.0
  %368 = vmatpush.msra.mxu0 0.0
  %369 = vmatpush.msra.mxu0 0.0
  %370 = vmatpush.msra.mxu0 0.0
  %371 = vmatpush.msra.mxu0 0.0
  %372 = vmatpush.msra.mxu0 0.0
  %373 = vmatpush.msra.mxu0 0.0
  %374 = vmatpush.msra.mxu0 0.0
  %375 = vmatpush.msra.mxu0 0.0
  %376 = vmatpush.msra.mxu0 0.0
  %377 = vmatpush.msra.mxu0 0.0
  %378 = vmatpush.msra.mxu0 0.0
  %379 = vmatpush.msra.mxu0 0.0
  %380 = vmatpush.msra.mxu0 0.0
  %381 = vmatpush.msra.mxu0 0.0
  %382 = vmatpush.msra.mxu0 %v365
  %383 = vmatmul.f32.gmra.mxu0 %v363
  %v384 = vpop.f32.mrf.mxu0
  %v385 = vadd.f32 0.0, %v384
  %386 = vdwg.mxu0
  %v387 = vadd.f32 %v338, %v385
  %v388 = vld [vmem:[%s0] sm:$0x77]
  %v389 = vld [vmem:[%s2 + $0x8] sm:$0x1]
  %v390 = vperm.slane %v389, 0
  %392 = vrot.lane.b32.xlu0 %v390, 18
  %v393 = vpop.permute.xlu0 %392
  %v394 = vrot.slane %v393, 4
  %vm395 = vcmask 146432
  %v396 = vsel %vm395, %v394, %v393
  %v398 = vmul.f32 %v388, %v396
  %s399 = scalar_lea.vmem %s1, 32
  %v400 = vld [vmem:[%s399] sm:$0xf]
  %402 = vst [vmem:[#allocation1] ss:$2 sm:$0xff] %v398
  %v403 = vld.sshfl [vmem:[#allocation1] sm:$0xff pattern:$0x75316420]
  %v404 = vld.sshfl [vmem:[#allocation1 + $0x8] sm:$0xff pattern:$0x75316420]
  %405 = vrot.lane.b32.xlu0 %v403, 110
  %v406 = vpop.permute.xlu0 %405
  %407 = vrot.lane.b32.xlu0 %v404, 110
  %v408 = vpop.permute.xlu0 %407
  %vm409 = vcmask 900096
  %v410 = vsel %vm409, %v406, %v408
  %v412 = vsel %vm51, %v400, 0
  %v414 = vsel %vm55, %v410, 0
  %416 = vmatpush.msra.mxu0 0.0
  %417 = vmatpush.msra.mxu0 0.0
  %418 = vmatpush.msra.mxu0 0.0
  %419 = vmatpush.msra.mxu0 0.0
  %420 = vmatpush.msra.mxu0 0.0
  %421 = vmatpush.msra.mxu0 0.0
  %422 = vmatpush.msra.mxu0 0.0
  %423 = vmatpush.msra.mxu0 0.0
  %424 = vmatpush.msra.mxu0 0.0
  %425 = vmatpush.msra.mxu0 0.0
  %426 = vmatpush.msra.mxu0 0.0
  %427 = vmatpush.msra.mxu0 0.0
  %428 = vmatpush.msra.mxu0 0.0
  %429 = vmatpush.msra.mxu0 0.0
  %430 = vmatpush.msra.mxu0 0.0
  %431 = vmatpush.msra.mxu0 %v414
  %432 = vmatmul.f32.gmra.mxu0 %v412
  %v433 = vpop.f32.mrf.mxu0
  %v434 = vadd.f32 0.0, %v433
  %435 = vdwg.mxu0
  %v436 = vadd.f32 %v387, %v434
  %vm437 = vcmask 1043456
  %v438 = vsel %vm437, %v436, 0.0
  %439 = vadd.xlane.f32.xlu0 %v438
  %v440 = vpop.xlane.xlu0 %439
  %v441 = vmul.f32 %v440, 0.0078125
  %v442 = vsub.f32 %v436, %v441
  %v443 = vmul.f32 %v442, %v442
  %v444 = vsel %vm437, %v443, 0.0
  %445 = vadd.xlane.f32.xlu0 %v444
  %v446 = vpop.xlane.xlu0 %445
  %v447 = vmul.f32 %v446, 0.0078125
  %v448 = vadd.f32 %v447, 1e-05
  %v449 = vrsqrt.pop %v448
  %v450 = vmul.f32 %v449, %v448
  %v451 = vmul.f32 %v450, %v449
  %v452 = vmul.f32 0.5, %v451
  %v453 = vsub.f32 1.5, %v452
  %v454 = vmul.f32 %v449, %v453
  %vm455 = vweird.f32 %v448
  %vm456 = vweird.f32 %v449
  %vm457 = vmor %vm455, %vm456
  %v458 = vsel %vm457, %v449, %v454
  %v459 = vmul.f32 %v442, %v458
  %v460 = vld [vmem:[%s3] sm:$0xf]
  %462 = vset.pattern.permute.xlu0 0
  %463 = vperm.xlu0 %462, %v460
  %v464 = vpop.permute.xlu0 %463
  %v466 = vmul.f32 %v459, %v464
  %v467 = vld [vmem:[%s4] sm:$0xf]
  %469 = vset.pattern.permute.xlu0 0
  %470 = vperm.xlu0 %469, %v467
  %v471 = vpop.permute.xlu0 %470
  %v473 = vadd.f32 %v466, %v471
  %vm474 = vcmp.ge.f32.partialorder %v473, 0.0
  %v475 = vld [vmem:[%s5] sm:$0xf]
  %477 = vset.pattern.permute.xlu0 0
  %478 = vperm.xlu0 %477, %v475
  %v479 = vpop.permute.xlu0 %478
  %v481 = vmul.f32 %v479, %v473
  %v482 = vsel %vm474, %v473, %v481
  %483 = vst [vmem:[%s6] sm:$0xf] %v482
  // Predicated region
  $region26: #{_lambda_.35} parent=0 // pred_check
    _
  $region27: #{_lambda_.35} parent=0 // pred_check_branch
    %485 = sbr.rel (0) target = $region29
  $region28: #{_lambda_.35} parent=0 // pred_region
    _
  $region29: #{_lambda_.35} parent=0 // pred_fallthru
    _
  // Predicated region
  $region30: #{_lambda_.35} parent=0 // pred_check
    _
  $region31: #{_lambda_.35} parent=0 // pred_check_branch
    %487 = sbr.rel (0) target = $region33
  $region32: #{_lambda_.35} parent=0 // pred_region
    _
  $region33: #{_lambda_.35} parent=0 // pred_fallthru
    _

// kernel: _lambda_.36
$region0: #{_lambda_.36}
  #allocation0 [shape = 'u32[]', space=smem, size = 0x4, offset = 0x4, fixed_abs, tag = 'smem constant byte address 0x4 - core index']
  #allocation1 [shape = 'u32[72,128]{1,0:T(1,128)}', space=vmem, size = 0x9000, scoped, tag = 'internal scratch']
  %s0 = inlined_call_operand.vmem [shape: f32[4,546], index: 0, kind: input, shape index: {}]
  %s1 = inlined_call_operand.vmem [shape: f32[4,9], index: 1, kind: input, shape index: {}]
  %s2 = inlined_call_operand.vmem [shape: f32[9,512], index: 2, kind: input, shape index: {}]
  %s3 = inlined_call_operand.vmem [shape: f32[4,1], index: 3, kind: input, shape index: {}]
  %s4 = inlined_call_operand.vmem [shape: f32[4,1], index: 4, kind: input, shape index: {}]
  %s5 = inlined_call_operand.vmem [shape: f32[4,1], index: 5, kind: input, shape index: {}]
  %s6 = inlined_call_operand.vmem [shape: f32[4,512], index: 6, kind: output, shape index: {}]
  %s7 = sld [smem:[#allocation0]]
  $region34: #{_lambda_.36} parent=0
    _
  %s9 = ssub.s32 1, %s7
  %s10 = scalar_select 0, %s9, %s7
  // Predicated region
  $region2: #{_lambda_.36} parent=0 // pred_check
    _
  $region3: #{_lambda_.36} parent=0 // pred_check_branch
    %12 = sbr.rel (0) target = $region5
  $region4: #{_lambda_.36} parent=0 // pred_region
    _
  $region5: #{_lambda_.36} parent=0 // pred_fallthru
    _
  // Predicated region
  $region6: #{_lambda_.36} parent=0 // pred_check
    _
  $region7: #{_lambda_.36} parent=0 // pred_check_branch
    %14 = sbr.rel (0) target = $region9
  $region8: #{_lambda_.36} parent=0 // pred_region
    _
  $region9: #{_lambda_.36} parent=0 // pred_fallthru
    _
  // Predicated region
  $region10: #{_lambda_.36} parent=0 // pred_check
    _
  $region11: #{_lambda_.36} parent=0 // pred_check_branch
    %16 = sbr.rel (0) target = $region13
  $region12: #{_lambda_.36} parent=0 // pred_region
    _
  $region13: #{_lambda_.36} parent=0 // pred_fallthru
    _
  // Predicated region
  $region14: #{_lambda_.36} parent=0 // pred_check
    _
  $region15: #{_lambda_.36} parent=0 // pred_check_branch
    %18 = sbr.rel (0) target = $region17
  $region16: #{_lambda_.36} parent=0 // pred_region
    _
  $region17: #{_lambda_.36} parent=0 // pred_fallthru
    _
  // Predicated region
  $region18: #{_lambda_.36} parent=0 // pred_check
    _
  $region19: #{_lambda_.36} parent=0 // pred_check_branch
    %20 = sbr.rel (0) target = $region21
  $region20: #{_lambda_.36} parent=0 // pred_region
    _
  $region21: #{_lambda_.36} parent=0 // pred_fallthru
    _
  // Predicated region
  $region22: #{_lambda_.36} parent=0 // pred_check
    _
  $region23: #{_lambda_.36} parent=0 // pred_check_branch
    %22 = sbr.rel (0) target = $region25
  $region24: #{_lambda_.36} parent=0 // pred_region
    _
  $region25: #{_lambda_.36} parent=0 // pred_fallthru
    _
  %v23 = vld [vmem:[%s0] sm:$0xff]
  %v24 = vld [vmem:[%s0 + $0x8] sm:$0xff]
  %v25 = vld [vmem:[%s2] ss:$8 sm:$0xf]
  %v27 = vperm.slane %v25, 0
  %v28 = vperm.slane %v25, 1
  %v29 = vperm.slane %v25, 2
  %v30 = vperm.slane %v25, 3
  %v31 = vrot.slane %v28, 4
  %v32 = vrot.slane %v30, 4
  %vm33 = vcmask 1043456
  %v34 = vsel %vm33, %v27, %v31
  %v35 = vsel %vm33, %v29, %v32
  %v38 = vmul.f32 %v23, %v34
  %v39 = vmul.f32 %v24, %v35
  %v40 = vld [vmem:[%s1] sm:$0xf]
  %42 = vset.pattern.permute.xlu0 0
  %43 = vperm.xlu0 %42, %v40
  %v44 = vpop.permute.xlu0 %43
  %v46 = vunpack.c.l.s4 839922192
  %v47 = vunpack.c.0.s8 %v46
  %v48 = vperm.slane %v44, %v47
  %v50 = vmul.f32 %v38, %v48
  %v51 = vmul.f32 %v39, %v48
  %v52 = vadd.f32 %v50, 0.0
  %v53 = vadd.f32 %v51, 0.0
  %v54 = vld [vmem:[%s0] sm:$0xff]
  %v55 = vld [vmem:[%s0 + $0x8] sm:$0xff]
  %v56 = vld [vmem:[%s0 + $0x10] sm:$0xf]
  %s57 = scalar_lea.vmem %s2, 1
  %v58 = vld [vmem:[%s57] ss:$8 sm:$0xf]
  %v60 = vperm.slane %v58, 0
  %v61 = vperm.slane %v58, 1
  %v62 = vperm.slane %v58, 2
  %v63 = vperm.slane %v58, 3
  %v64 = vrot.slane %v61, 4
  %v65 = vrot.slane %v63, 4
  %v66 = vsel %vm33, %v60, %v64
  %v67 = vsel %vm33, %v62, %v65
  %68 = vrot.lane.b32.xlu0 %v66, 1
  %v69 = vpop.permute.xlu0 %68
  %70 = vrot.lane.b32.xlu0 %v67, 1
  %v71 = vpop.permute.xlu0 %70
  %v72 = vrot.slane %v69, 4
  %v73 = vrot.slane %v71, 4
  %vm74 = vcmask 7168
  %v75 = vsel %vm74, %v72, %v69
  %v76 = vsel %vm33, %v72, %v73
  %v77 = vsel %vm74, %v76, %v71
  %v81 = vmul.f32 %v54, %v75
  %v82 = vmul.f32 %v55, %v77
  %v83 = vmul.f32 %v56, %v73
  %84 = vset.pattern.permute.xlu0 1
  %85 = vperm.xlu0 %84, %v40
  %v86 = vpop.permute.xlu0 %85
  %v88 = vunpack.c.l.s4 839922192
  %v89 = vunpack.c.0.s8 %v88
  %v90 = vperm.slane %v86, %v89
  %v92 = vmul.f32 %v81, %v90
  %v93 = vmul.f32 %v82, %v90
  %v94 = vmul.f32 %v83, %v90
  %98 = vrot.lane.b32.xlu0 %v92, 127
  %v99 = vpop.permute.xlu0 %98
  %100 = vrot.lane.b32.xlu0 %v93, 127
  %v101 = vpop.permute.xlu0 %100
  %102 = vrot.lane.b32.xlu0 %v94, 127
  %v103 = vpop.permute.xlu0 %102
  %v104 = vrot.slane %v99, 4
  %v105 = vrot.slane %v101, 4
  %v106 = vrot.slane %v103, 4
  %v107 = vsel %vm33, %v104, %v105
  %vm108 = vcmask 1039360
  %v109 = vsel %vm108, %v99, %v107
  %v110 = vsel %vm33, %v105, %v106
  %v111 = vsel %vm108, %v101, %v110
  %v114 = vadd.f32 %v52, %v109
  %v115 = vadd.f32 %v53, %v111
  %s116 = scalar_lea.vmem %s2, 2
  %v117 = vld [vmem:[%s116] ss:$8 sm:$0xf]
  %v119 = vperm.slane %v117, 0
  %v120 = vperm.slane %v117, 1
  %v121 = vperm.slane %v117, 2
  %v122 = vperm.slane %v117, 3
  %v123 = vrot.slane %v120, 4
  %v124 = vrot.slane %v122, 4
  %v125 = vsel %vm33, %v119, %v123
  %v126 = vsel %vm33, %v121, %v124
  %127 = vrot.lane.b32.xlu0 %v125, 2
  %v128 = vpop.permute.xlu0 %127
  %129 = vrot.lane.b32.xlu0 %v126, 2
  %v130 = vpop.permute.xlu0 %129
  %v131 = vrot.slane %v128, 4
  %v132 = vrot.slane %v130, 4
  %vm133 = vcmask 15360
  %v134 = vsel %vm133, %v131, %v128
  %v135 = vsel %vm33, %v131, %v132
  %v136 = vsel %vm133, %v135, %v130
  %v140 = vmul.f32 %v54, %v134
  %v141 = vmul.f32 %v55, %v136
  %v142 = vmul.f32 %v56, %v132
  %143 = vset.pattern.permute.xlu0 2
  %144 = vperm.xlu0 %143, %v40
  %v145 = vpop.permute.xlu0 %144
  %v147 = vunpack.c.l.s4 839922192
  %v148 = vunpack.c.0.s8 %v147
  %v149 = vperm.slane %v145, %v148
  %v151 = vmul.f32 %v140, %v149
  %v152 = vmul.f32 %v141, %v149
  %v153 = vmul.f32 %v142, %v149
  %157 = vrot.lane.b32.xlu0 %v151, 126
  %v158 = vpop.permute.xlu0 %157
  %159 = vrot.lane.b32.xlu0 %v152, 126
  %v160 = vpop.permute.xlu0 %159
  %161 = vrot.lane.b32.xlu0 %v153, 126
  %v162 = vpop.permute.xlu0 %161
  %v163 = vrot.slane %v158, 4
  %v164 = vrot.slane %v160, 4
  %v165 = vrot.slane %v162, 4
  %v166 = vsel %vm33, %v163, %v164
  %vm167 = vcmask 1031168
  %v168 = vsel %vm167, %v158, %v166
  %v169 = vsel %vm33, %v164, %v165
  %v170 = vsel %vm167, %v160, %v169
  %v173 = vadd.f32 %v114, %v168
  %v174 = vadd.f32 %v115, %v170
  %s175 = scalar_lea.vmem %s2, 3
  %v176 = vld [vmem:[%s175] ss:$8 sm:$0xf]
  %v178 = vperm.slane %v176, 0
  %v179 = vperm.slane %v176, 1
  %v180 = vperm.slane %v176, 2
  %v181 = vperm.slane %v176, 3
  %v182 = vrot.slane %v179, 4
  %v183 = vrot.slane %v181, 4
  %v184 = vsel %vm33, %v178, %v182
  %v185 = vsel %vm33, %v180, %v183
  %186 = vrot.lane.b32.xlu0 %v184, 16
  %v187 = vpop.permute.xlu0 %186
  %188 = vrot.lane.b32.xlu0 %v185, 16
  %v189 = vpop.permute.xlu0 %188
  %v190 = vrot.slane %v187, 4
  %v191 = vrot.slane %v189, 4
  %vm192 = vcmask 130048
  %v193 = vsel %vm192, %v190, %v187
  %v194 = vsel %vm33, %v190, %v191
  %v195 = vsel %vm192, %v194, %v189
  %v199 = vmul.f32 %v54, %v193
  %v200 = vmul.f32 %v55, %v195
  %v201 = vmul.f32 %v56, %v191
  %202 = vset.pattern.permute.xlu0 3
  %203 = vperm.xlu0 %202, %v40
  %v204 = vpop.permute.xlu0 %203
  %v206 = vunpack.c.l.s4 839922192
  %v207 = vunpack.c.0.s8 %v206
  %v208 = vperm.slane %v204, %v207
  %v210 = vmul.f32 %v199, %v208
  %v211 = vmul.f32 %v200, %v208
  %v212 = vmul.f32 %v201, %v208
  %216 = vrot.lane.b32.xlu0 %v210, 112
  %v217 = vpop.permute.xlu0 %216
  %218 = vrot.lane.b32.xlu0 %v211, 112
  %v219 = vpop.permute.xlu0 %218
  %220 = vrot.lane.b32.xlu0 %v212, 112
  %v221 = vpop.permute.xlu0 %220
  %v222 = vrot.slane %v217, 4
  %v223 = vrot.slane %v219, 4
  %v224 = vrot.slane %v221, 4
  %v225 = vsel %vm33, %v222, %v223
  %vm226 = vcmask 916480
  %v227 = vsel %vm226, %v217, %v225
  %v228 = vsel %vm33, %v223, %v224
  %v229 = vsel %vm226, %v219, %v228
  %v232 = vadd.f32 %v173, %v227
  %v233 = vadd.f32 %v174, %v229
  %234 = vset.pattern.permute.xlu0 4
  %235 = vperm.xlu0 %234, %v40
  %v236 = vpop.permute.xlu0 %235
  %v238 = vunpack.c.l.s4 839922192
  %v239 = vunpack.c.0.s8 %v238
  %v240 = vperm.slane %v236, %v239
  %v242 = vmul.f32 %v54, %v240
  %v243 = vmul.f32 %v55, %v240
  %v244 = vmul.f32 %v56, %v240
  %248 = vrot.lane.b32.xlu0 %v242, 111
  %v249 = vpop.permute.xlu0 %248
  %250 = vrot.lane.b32.xlu0 %v243, 111
  %v251 = vpop.permute.xlu0 %250
  %252 = vrot.lane.b32.xlu0 %v244, 111
  %v253 = vpop.permute.xlu0 %252
  %v254 = vrot.slane %v249, 4
  %v255 = vrot.slane %v251, 4
  %v256 = vrot.slane %v253, 4
  %v257 = vsel %vm33, %v254, %v255
  %vm258 = vcmask 908288
  %v259 = vsel %vm258, %v249, %v257
  %v260 = vsel %vm33, %v255, %v256
  %v261 = vsel %vm258, %v251, %v260
  %v264 = vadd.f32 %v232, %v259
  %v265 = vadd.f32 %v233, %v261
  %s266 = scalar_lea.vmem %s2, 5
  %v267 = vld [vmem:[%s266] ss:$8 sm:$0xf]
  %v269 = vperm.slane %v267, 0
  %v270 = vperm.slane %v267, 1
  %v271 = vperm.slane %v267, 2
  %v272 = vperm.slane %v267, 3
  %v273 = vrot.slane %v270, 4
  %v274 = vrot.slane %v272, 4
  %v275 = vsel %vm33, %v269, %v273
  %v276 = vsel %vm33, %v271, %v274
  %277 = vrot.lane.b32.xlu0 %v275, 18
  %v278 = vpop.permute.xlu0 %277
  %279 = vrot.lane.b32.xlu0 %v276, 18
  %v280 = vpop.permute.xlu0 %279
  %v281 = vrot.slane %v278, 4
  %v282 = vrot.slane %v280, 4
  %vm283 = vcmask 146432
  %v284 = vsel %vm283, %v281, %v278
  %v285 = vsel %vm33, %v281, %v282
  %v286 = vsel %vm283, %v285, %v280
  %v290 = vmul.f32 %v54, %v284
  %v291 = vmul.f32 %v55, %v286
  %v292 = vmul.f32 %v56, %v282
  %293 = vset.pattern.permute.xlu0 5
  %294 = vperm.xlu0 %293, %v40
  %v295 = vpop.permute.xlu0 %294
  %v297 = vunpack.c.l.s4 839922192
  %v298 = vunpack.c.0.s8 %v297
  %v299 = vperm.slane %v295, %v298
  %v301 = vmul.f32 %v290, %v299
  %v302 = vmul.f32 %v291, %v299
  %v303 = vmul.f32 %v292, %v299
  %307 = vrot.lane.b32.xlu0 %v301, 110
  %v308 = vpop.permute.xlu0 %307
  %309 = vrot.lane.b32.xlu0 %v302, 110
  %v310 = vpop.permute.xlu0 %309
  %311 = vrot.lane.b32.xlu0 %v303, 110
  %v312 = vpop.permute.xlu0 %311
  %v313 = vrot.slane %v308, 4
  %v314 = vrot.slane %v310, 4
  %v315 = vrot.slane %v312, 4
  %v316 = vsel %vm33, %v313, %v314
  %vm317 = vcmask 900096
  %v318 = vsel %vm317, %v308, %v316
  %v319 = vsel %vm33, %v314, %v315
  %v320 = vsel %vm317, %v310, %v319
  %v323 = vadd.f32 %v264, %v318
  %v324 = vadd.f32 %v265, %v320
  %s325 = scalar_lea.vmem %s2, 6
  %v326 = vld [vmem:[%s325] ss:$8 sm:$0xf]
  %v328 = vperm.slane %v326, 0
  %v329 = vperm.slane %v326, 1
  %v330 = vperm.slane %v326, 2
  %v331 = vperm.slane %v326, 3
  %v332 = vrot.slane %v329, 4
  %v333 = vrot.slane %v331, 4
  %v334 = vsel %vm33, %v328, %v332
  %v335 = vsel %vm33, %v330, %v333
  %336 = vrot.lane.b32.xlu0 %v334, 32
  %v337 = vpop.permute.xlu0 %336
  %338 = vrot.lane.b32.xlu0 %v335, 32
  %v339 = vpop.permute.xlu0 %338
  %v340 = vrot.slane %v337, 4
  %v341 = vrot.slane %v339, 4
  %vm342 = vcmask 261120
  %v343 = vsel %vm342, %v340, %v337
  %v344 = vsel %vm33, %v340, %v341
  %v345 = vsel %vm342, %v344, %v339
  %v349 = vmul.f32 %v54, %v343
  %v350 = vmul.f32 %v55, %v345
  %v351 = vmul.f32 %v56, %v341
  %352 = vset.pattern.permute.xlu0 6
  %353 = vperm.xlu0 %352, %v40
  %v354 = vpop.permute.xlu0 %353
  %v356 = vunpack.c.l.s4 839922192
  %v357 = vunpack.c.0.s8 %v356
  %v358 = vperm.slane %v354, %v357
  %v360 = vmul.f32 %v349, %v358
  %v361 = vmul.f32 %v350, %v358
  %v362 = vmul.f32 %v351, %v358
  %366 = vrot.lane.b32.xlu0 %v360, 96
  %v367 = vpop.permute.xlu0 %366
  %368 = vrot.lane.b32.xlu0 %v361, 96
  %v369 = vpop.permute.xlu0 %368
  %370 = vrot.lane.b32.xlu0 %v362, 96
  %v371 = vpop.permute.xlu0 %370
  %v372 = vrot.slane %v367, 4
  %v373 = vrot.slane %v369, 4
  %v374 = vrot.slane %v371, 4
  %v375 = vsel %vm33, %v372, %v373
  %vm376 = vcmask 785408
  %v377 = vsel %vm376, %v367, %v375
  %v378 = vsel %vm33, %v373, %v374
  %v379 = vsel %vm376, %v369, %v378
  %v382 = vadd.f32 %v323, %v377
  %v383 = vadd.f32 %v324, %v379
  %s384 = scalar_lea.vmem %s2, 7
  %v385 = vld [vmem:[%s384] ss:$8 sm:$0xf]
  %v387 = vperm.slane %v385, 0
  %v388 = vperm.slane %v385, 1
  %v389 = vperm.slane %v385, 2
  %v390 = vperm.slane %v385, 3
  %v391 = vrot.slane %v388, 4
  %v392 = vrot.slane %v390, 4
  %v393 = vsel %vm33, %v387, %v391
  %v394 = vsel %vm33, %v389, %v392
  %395 = vrot.lane.b32.xlu0 %v393, 33
  %v396 = vpop.permute.xlu0 %395
  %397 = vrot.lane.b32.xlu0 %v394, 33
  %v398 = vpop.permute.xlu0 %397
  %v399 = vrot.slane %v396, 4
  %v400 = vrot.slane %v398, 4
  %vm401 = vcmask 269312
  %v402 = vsel %vm401, %v399, %v396
  %v403 = vsel %vm33, %v399, %v400
  %v404 = vsel %vm401, %v403, %v398
  %v408 = vmul.f32 %v54, %v402
  %v409 = vmul.f32 %v55, %v404
  %v410 = vmul.f32 %v56, %v400
  %411 = vset.pattern.permute.xlu0 7
  %412 = vperm.xlu0 %411, %v40
  %v413 = vpop.permute.xlu0 %412
  %v415 = vunpack.c.l.s4 839922192
  %v416 = vunpack.c.0.s8 %v415
  %v417 = vperm.slane %v413, %v416
  %v419 = vmul.f32 %v408, %v417
  %v420 = vmul.f32 %v409, %v417
  %v421 = vmul.f32 %v410, %v417
  %425 = vrot.lane.b32.xlu0 %v419, 95
  %v426 = vpop.permute.xlu0 %425
  %427 = vrot.lane.b32.xlu0 %v420, 95
  %v428 = vpop.permute.xlu0 %427
  %429 = vrot.lane.b32.xlu0 %v421, 95
  %v430 = vpop.permute.xlu0 %429
  %v431 = vrot.slane %v426, 4
  %v432 = vrot.slane %v428, 4
  %v433 = vrot.slane %v430, 4
  %v434 = vsel %vm33, %v431, %v432
  %vm435 = vcmask 777216
  %v436 = vsel %vm435, %v426, %v434
  %v437 = vsel %vm33, %v432, %v433
  %v438 = vsel %vm435, %v428, %v437
  %v441 = vadd.f32 %v382, %v436
  %v442 = vadd.f32 %v383, %v438
  %s443 = scalar_lea.vmem %s2, 32
  %v444 = vld [vmem:[%s443] ss:$8 sm:$0xf]
  %v446 = vperm.slane %v444, 0
  %v447 = vperm.slane %v444, 1
  %v448 = vperm.slane %v444, 2
  %v449 = vperm.slane %v444, 3
  %v450 = vrot.slane %v447, 4
  %v451 = vrot.slane %v449, 4
  %v452 = vsel %vm33, %v446, %v450
  %v453 = vsel %vm33, %v448, %v451
  %454 = vrot.lane.b32.xlu0 %v452, 34
  %v455 = vpop.permute.xlu0 %454
  %456 = vrot.lane.b32.xlu0 %v453, 34
  %v457 = vpop.permute.xlu0 %456
  %v458 = vrot.slane %v455, 4
  %v459 = vrot.slane %v457, 4
  %vm460 = vcmask 277504
  %v461 = vsel %vm460, %v458, %v455
  %v462 = vsel %vm33, %v458, %v459
  %v463 = vsel %vm460, %v462, %v457
  %v467 = vmul.f32 %v54, %v461
  %v468 = vmul.f32 %v55, %v463
  %v469 = vmul.f32 %v56, %v459
  %470 = vset.pattern.permute.xlu0 8
  %471 = vperm.xlu0 %470, %v40
  %v472 = vpop.permute.xlu0 %471
  %v474 = vunpack.c.l.s4 839922192
  %v475 = vunpack.c.0.s8 %v474
  %v476 = vperm.slane %v472, %v475
  %v478 = vmul.f32 %v467, %v476
  %v479 = vmul.f32 %v468, %v476
  %v480 = vmul.f32 %v469, %v476
  %484 = vrot.lane.b32.xlu0 %v478, 94
  %v485 = vpop.permute.xlu0 %484
  %486 = vrot.lane.b32.xlu0 %v479, 94
  %v487 = vpop.permute.xlu0 %486
  %488 = vrot.lane.b32.xlu0 %v480, 94
  %v489 = vpop.permute.xlu0 %488
  %v490 = vrot.slane %v485, 4
  %v491 = vrot.slane %v487, 4
  %v492 = vrot.slane %v489, 4
  %v493 = vsel %vm33, %v490, %v491
  %vm494 = vcmask 769024
  %v495 = vsel %vm494, %v485, %v493
  %v496 = vsel %vm33, %v491, %v492
  %v497 = vsel %vm494, %v487, %v496
  %v500 = vadd.f32 %v441, %v495
  %v501 = vadd.f32 %v442, %v497
  %504 = vst [vmem:[#allocation1] ss:$2 sm:$0xff] %v500
  %s505 = scalar_lea.vmem [#allocation1], 16
  %506 = vst [vmem:[%s505] ss:$2 sm:$0xff] %v501
  %v507 = vld.sshfl [vmem:[#allocation1] sm:$0xff pattern:$0x75316420]
  %v508 = vld.sshfl [vmem:[#allocation1 + $0x8] sm:$0xff pattern:$0x75316420]
  %v509 = vld.sshfl [vmem:[#allocation1 + $0x10] sm:$0xff pattern:$0x75316420]
  %v510 = vld.sshfl [vmem:[#allocation1 + $0x18] sm:$0xff pattern:$0x75316420]
  %v515 = vsel %vm33, %v507, 0.0
  %v516 = vsel %vm33, %v508, 0.0
  %v517 = vadd.f32 %v515, %v516
  %v518 = vsel %vm33, %v509, 0.0
  %v519 = vadd.f32 %v517, %v518
  %v520 = vsel %vm33, %v510, 0.0
  %v521 = vadd.f32 %v519, %v520
  %522 = vadd.xlane.f32.xlu0 %v521
  %v523 = vpop.xlane.xlu0 %522
  %v524 = vmul.f32 %v523, 0.001953125
  %v527 = vunpack.c.l.s4 839922192
  %v528 = vunpack.c.0.s8 %v527
  %v529 = vperm.slane %v524, %v528
  %v531 = vsub.f32 %v500, %v529
  %v532 = vsub.f32 %v501, %v529
  %v533 = vmul.f32 %v531, %v531
  %v534 = vmul.f32 %v532, %v532
  %537 = vst [vmem:[#allocation1] ss:$2 sm:$0xff] %v533
  %s538 = scalar_lea.vmem [#allocation1], 16
  %539 = vst [vmem:[%s538] ss:$2 sm:$0xff] %v534
  %v540 = vld.sshfl [vmem:[#allocation1] sm:$0xff pattern:$0x75316420]
  %v541 = vld.sshfl [vmem:[#allocation1 + $0x8] sm:$0xff pattern:$0x75316420]
  %v542 = vld.sshfl [vmem:[#allocation1 + $0x10] sm:$0xff pattern:$0x75316420]
  %v543 = vld.sshfl [vmem:[#allocation1 + $0x18] sm:$0xff pattern:$0x75316420]
  %v548 = vsel %vm33, %v540, 0.0
  %v549 = vsel %vm33, %v541, 0.0
  %v550 = vadd.f32 %v548, %v549
  %v551 = vsel %vm33, %v542, 0.0
  %v552 = vadd.f32 %v550, %v551
  %v553 = vsel %vm33, %v543, 0.0
  %v554 = vadd.f32 %v552, %v553
  %555 = vadd.xlane.f32.xlu0 %v554
  %v556 = vpop.xlane.xlu0 %555
  %v557 = vmul.f32 %v556, 0.001953125
  %v558 = vadd.f32 %v557, 1e-05
  %v559 = vrsqrt.pop %v558
  %v560 = vmul.f32 %v559, %v558
  %v561 = vmul.f32 %v560, %v559
  %v562 = vmul.f32 0.5, %v561
  %v563 = vsub.f32 1.5, %v562
  %v564 = vmul.f32 %v559, %v563
  %vm565 = vweird.f32 %v558
  %vm566 = vweird.f32 %v559
  %vm567 = vmor %vm565, %vm566
  %v568 = vsel %vm567, %v559, %v564
  %v571 = vunpack.c.l.s4 839922192
  %v572 = vunpack.c.0.s8 %v571
  %v573 = vperm.slane %v568, %v572
  %v575 = vmul.f32 %v531, %v573
  %v576 = vmul.f32 %v532, %v573
  %v577 = vld [vmem:[%s3] sm:$0xf]
  %579 = vset.pattern.permute.xlu0 0
  %580 = vperm.xlu0 %579, %v577
  %v581 = vpop.permute.xlu0 %580
  %v583 = vunpack.c.l.s4 839922192
  %v584 = vunpack.c.0.s8 %v583
  %v585 = vperm.slane %v581, %v584
  %v587 = vmul.f32 %v575, %v585
  %v588 = vmul.f32 %v576, %v585
  %v589 = vld [vmem:[%s4] sm:$0xf]
  %591 = vset.pattern.permute.xlu0 0
  %592 = vperm.xlu0 %591, %v589
  %v593 = vpop.permute.xlu0 %592
  %v595 = vunpack.c.l.s4 839922192
  %v596 = vunpack.c.0.s8 %v595
  %v597 = vperm.slane %v593, %v596
  %v599 = vadd.f32 %v587, %v597
  %v600 = vadd.f32 %v588, %v597
  %vm601 = vcmp.ge.f32.partialorder %v599, 0.0
  %vm602 = vcmp.ge.f32.partialorder %v600, 0.0
  %v603 = vld [vmem:[%s5] sm:$0xf]
  %605 = vset.pattern.permute.xlu0 0
  %606 = vperm.xlu0 %605, %v603
  %v607 = vpop.permute.xlu0 %606
  %611 = vst [vmem:[#allocation1] ss:$2 sm:$0xff] %v599
  %s612 = scalar_lea.vmem [#allocation1], 16
  %613 = vst [vmem:[%s612] ss:$2 sm:$0xff] %v600
  %v614 = vld.sshfl [vmem:[#allocation1] sm:$0xff pattern:$0x75316420]
  %v615 = vld.sshfl [vmem:[#allocation1 + $0x8] sm:$0xff pattern:$0x75316420]
  %v616 = vld.sshfl [vmem:[#allocation1 + $0x10] sm:$0xff pattern:$0x75316420]
  %v617 = vld.sshfl [vmem:[#allocation1 + $0x18] sm:$0xff pattern:$0x75316420]
  %v622 = vmul.f32 %v607, %v614
  %v623 = vmul.f32 %v607, %v615
  %v624 = vmul.f32 %v607, %v616
  %v625 = vmul.f32 %v607, %v617
  %v630 = vrot.slane %v623, 4
  %v631 = vrot.slane %v625, 4
  %v632 = vsel %vm33, %v622, %v630
  %v633 = vsel %vm33, %v624, %v631
  %v636 = vsel %vm601, %v599, %v632
  %v637 = vsel %vm602, %v600, %v633
  %638 = vst [vmem:[%s6] sm:$0xff] %v636
  %639 = vst [vmem:[%s6 + $0x8] sm:$0xff] %v637
  // Predicated region
  $region26: #{_lambda_.36} parent=0 // pred_check
    _
  $region27: #{_lambda_.36} parent=0 // pred_check_branch
    %641 = sbr.rel (0) target = $region29
  $region28: #{_lambda_.36} parent=0 // pred_region
    _
  $region29: #{_lambda_.36} parent=0 // pred_fallthru
    _
  // Predicated region
  $region30: #{_lambda_.36} parent=0 // pred_check
    _
  $region31: #{_lambda_.36} parent=0 // pred_check_branch
    %643 = sbr.rel (0) target = $region33
  $region32: #{_lambda_.36} parent=0 // pred_region
    _
  $region33: #{_lambda_.36} parent=0 // pred_fallthru
    _

// kernel: _lambda_.42
$region0: #{_lambda_.42}
  #allocation0 [shape = 'u32[]', space=smem, size = 0x4, offset = 0x4, fixed_abs, tag = 'smem constant byte address 0x4 - core index']
  #allocation1 [shape = 'u32[72,128]{1,0:T(1,128)}', space=vmem, size = 0x9000, scoped, tag = 'internal scratch']
  %s0 = inlined_call_operand.vmem [shape: f32[4,128], index: 0, kind: input, shape index: {}]
  %s1 = inlined_call_operand.vmem [shape: f32[1,4,4], index: 1, kind: input, shape index: {}]
  %s2 = inlined_call_operand.vmem [shape: f32[4,128], index: 2, kind: input, shape index: {}]
  %s3 = inlined_call_operand.vmem [shape: f32[4,1], index: 3, kind: input, shape index: {}]
  %s4 = inlined_call_operand.vmem [shape: f32[4,1], index: 4, kind: input, shape index: {}]
  %s5 = inlined_call_operand.vmem [shape: f32[4,1], index: 5, kind: input, shape index: {}]
  %s6 = inlined_call_operand.vmem [shape: f32[4,128], index: 6, kind: output, shape index: {}]
  %s7 = sld [smem:[#allocation0]]
  $region34: #{_lambda_.42} parent=0
    _
  %s9 = ssub.s32 1, %s7
  %s10 = scalar_select 0, %s9, %s7
  // Predicated region
  $region2: #{_lambda_.42} parent=0 // pred_check
    _
  $region3: #{_lambda_.42} parent=0 // pred_check_branch
    %12 = sbr.rel (0) target = $region5
  $region4: #{_lambda_.42} parent=0 // pred_region
    _
  $region5: #{_lambda_.42} parent=0 // pred_fallthru
    _
  // Predicated region
  $region6: #{_lambda_.42} parent=0 // pred_check
    _
  $region7: #{_lambda_.42} parent=0 // pred_check_branch
    %14 = sbr.rel (0) target = $region9
  $region8: #{_lambda_.42} parent=0 // pred_region
    _
  $region9: #{_lambda_.42} parent=0 // pred_fallthru
    _
  // Predicated region
  $region10: #{_lambda_.42} parent=0 // pred_check
    _
  $region11: #{_lambda_.42} parent=0 // pred_check_branch
    %16 = sbr.rel (0) target = $region13
  $region12: #{_lambda_.42} parent=0 // pred_region
    _
  $region13: #{_lambda_.42} parent=0 // pred_fallthru
    _
  // Predicated region
  $region14: #{_lambda_.42} parent=0 // pred_check
    _
  $region15: #{_lambda_.42} parent=0 // pred_check_branch
    %18 = sbr.rel (0) target = $region17
  $region16: #{_lambda_.42} parent=0 // pred_region
    _
  $region17: #{_lambda_.42} parent=0 // pred_fallthru
    _
  // Predicated region
  $region18: #{_lambda_.42} parent=0 // pred_check
    _
  $region19: #{_lambda_.42} parent=0 // pred_check_branch
    %20 = sbr.rel (0) target = $region21
  $region20: #{_lambda_.42} parent=0 // pred_region
    _
  $region21: #{_lambda_.42} parent=0 // pred_fallthru
    _
  // Predicated region
  $region22: #{_lambda_.42} parent=0 // pred_check
    _
  $region23: #{_lambda_.42} parent=0 // pred_check_branch
    %22 = sbr.rel (0) target = $region25
  $region24: #{_lambda_.42} parent=0 // pred_region
    _
  $region25: #{_lambda_.42} parent=0 // pred_fallthru
    _
  %v23 = vld [vmem:[%s0] sm:$0xf]
  %v24 = vld [vmem:[%s1] sm:$0xf]
  %v25 = vld [vmem:[%s2] sm:$0xf]
  %vm26 = vcmask 31744
  %v28 = vsel %vm26, %v24, 0
  %vm30 = vcmask 1043456
  %v32 = vsel %vm30, %v23, 0
  %34 = vmatpush.msra.mxu0 0.0
  %35 = vmatpush.msra.mxu0 0.0
  %36 = vmatpush.msra.mxu0 0.0
  %37 = vmatpush.msra.mxu0 0.0
  %38 = vmatpush.msra.mxu0 0.0
  %39 = vmatpush.msra.mxu0 0.0
  %40 = vmatpush.msra.mxu0 0.0
  %41 = vmatpush.msra.mxu0 0.0
  %42 = vmatpush.msra.mxu0 0.0
  %43 = vmatpush.msra.mxu0 0.0
  %44 = vmatpush.msra.mxu0 0.0
  %45 = vmatpush.msra.mxu0 0.0
  %46 = vmatpush.msra.mxu0 0.0
  %47 = vmatpush.msra.mxu0 0.0
  %48 = vmatpush.msra.mxu0 0.0
  %49 = vmatpush.msra.mxu0 %v32
  %50 = vmatmul.f32.gmra.mxu0 %v28
  %v51 = vpop.f32.mrf.mxu0
  %v52 = vadd.f32 %v25, %v51
  %53 = vdwg.mxu0
  %v54 = vsel %vm30, %v52, 0.0
  %55 = vadd.xlane.f32.xlu0 %v54
  %v56 = vpop.xlane.xlu0 %55
  %v57 = vmul.f32 %v56, 0.0078125
  %v58 = vsub.f32 %v52, %v57
  %v59 = vmul.f32 %v58, %v58
  %v60 = vsel %vm30, %v59, 0.0
  %61 = vadd.xlane.f32.xlu0 %v60
  %v62 = vpop.xlane.xlu0 %61
  %v63 = vmul.f32 %v62, 0.0078125
  %v64 = vadd.f32 %v63, 1e-05
  %v65 = vrsqrt.pop %v64
  %v66 = vmul.f32 %v65, %v64
  %v67 = vmul.f32 %v66, %v65
  %v68 = vmul.f32 0.5, %v67
  %v69 = vsub.f32 1.5, %v68
  %v70 = vmul.f32 %v65, %v69
  %vm71 = vweird.f32 %v64
  %vm72 = vweird.f32 %v65
  %vm73 = vmor %vm71, %vm72
  %v74 = vsel %vm73, %v65, %v70
  %v75 = vmul.f32 %v58, %v74
  %v76 = vld [vmem:[%s3] sm:$0xf]
  %78 = vset.pattern.permute.xlu0 0
  %79 = vperm.xlu0 %78, %v76
  %v80 = vpop.permute.xlu0 %79
  %v82 = vmul.f32 %v75, %v80
  %v83 = vld [vmem:[%s4] sm:$0xf]
  %85 = vset.pattern.permute.xlu0 0
  %86 = vperm.xlu0 %85, %v83
  %v87 = vpop.permute.xlu0 %86
  %v89 = vadd.f32 %v82, %v87
  %vm90 = vcmp.ge.f32.partialorder %v89, 0.0
  %v91 = vld [vmem:[%s5] sm:$0xf]
  %93 = vset.pattern.permute.xlu0 0
  %94 = vperm.xlu0 %93, %v91
  %v95 = vpop.permute.xlu0 %94
  %v97 = vmul.f32 %v95, %v89
  %v98 = vsel %vm90, %v89, %v97
  %99 = vst [vmem:[%s6] sm:$0xf] %v98
  // Predicated region
  $region26: #{_lambda_.42} parent=0 // pred_check
    _
  $region27: #{_lambda_.42} parent=0 // pred_check_branch
    %101 = sbr.rel (0) target = $region29
  $region28: #{_lambda_.42} parent=0 // pred_region
    _
  $region29: #{_lambda_.42} parent=0 // pred_fallthru
    _
  // Predicated region
  $region30: #{_lambda_.42} parent=0 // pred_check
    _
  $region31: #{_lambda_.42} parent=0 // pred_check_branch
    %103 = sbr.rel (0) target = $region33
  $region32: #{_lambda_.42} parent=0 // pred_region
    _
  $region33: #{_lambda_.42} parent=0 // pred_fallthru
    _

// kernel: _lambda_.34
$region0: #{_lambda_.34}
  #allocation0 [shape = 'u32[]', space=smem, size = 0x4, offset = 0x4, fixed_abs, tag = 'smem constant byte address 0x4 - core index']
  #allocation1 [shape = 'u32[72,128]{1,0:T(1,128)}', space=vmem, size = 0x9000, scoped, tag = 'internal scratch']
  %s0 = inlined_call_operand.vmem [shape: f32[3,546], index: 0, kind: input, shape index: {}]
  %s1 = inlined_call_operand.vmem [shape: f32[9,4,3], index: 1, kind: input, shape index: {}]
  %s2 = inlined_call_operand.vmem [shape: f32[9,512], index: 2, kind: input, shape index: {}]
  %s3 = inlined_call_operand.vmem [shape: f32[4,1], index: 3, kind: input, shape index: {}]
  %s4 = inlined_call_operand.vmem [shape: f32[4,1], index: 4, kind: input, shape index: {}]
  %s5 = inlined_call_operand.vmem [shape: f32[4,1], index: 5, kind: input, shape index: {}]
  %s6 = inlined_call_operand.vmem [shape: f32[4,512], index: 6, kind: output, shape index: {}]
  %s7 = sld [smem:[#allocation0]]
  $region34: #{_lambda_.34} parent=0
    _
  %s9 = ssub.s32 1, %s7
  %s10 = scalar_select 0, %s9, %s7
  // Predicated region
  $region2: #{_lambda_.34} parent=0 // pred_check
    _
  $region3: #{_lambda_.34} parent=0 // pred_check_branch
    %12 = sbr.rel (0) target = $region5
  $region4: #{_lambda_.34} parent=0 // pred_region
    _
  $region5: #{_lambda_.34} parent=0 // pred_fallthru
    _
  // Predicated region
  $region6: #{_lambda_.34} parent=0 // pred_check
    _
  $region7: #{_lambda_.34} parent=0 // pred_check_branch
    %14 = sbr.rel (0) target = $region9
  $region8: #{_lambda_.34} parent=0 // pred_region
    _
  $region9: #{_lambda_.34} parent=0 // pred_fallthru
    _
  // Predicated region
  $region10: #{_lambda_.34} parent=0 // pred_check
    _
  $region11: #{_lambda_.34} parent=0 // pred_check_branch
    %16 = sbr.rel (0) target = $region13
  $region12: #{_lambda_.34} parent=0 // pred_region
    _
  $region13: #{_lambda_.34} parent=0 // pred_fallthru
    _
  // Predicated region
  $region14: #{_lambda_.34} parent=0 // pred_check
    _
  $region15: #{_lambda_.34} parent=0 // pred_check_branch
    %18 = sbr.rel (0) target = $region17
  $region16: #{_lambda_.34} parent=0 // pred_region
    _
  $region17: #{_lambda_.34} parent=0 // pred_fallthru
    _
  // Predicated region
  $region18: #{_lambda_.34} parent=0 // pred_check
    _
  $region19: #{_lambda_.34} parent=0 // pred_check_branch
    %20 = sbr.rel (0) target = $region21
  $region20: #{_lambda_.34} parent=0 // pred_region
    _
  $region21: #{_lambda_.34} parent=0 // pred_fallthru
    _
  // Predicated region
  $region22: #{_lambda_.34} parent=0 // pred_check
    _
  $region23: #{_lambda_.34} parent=0 // pred_check_branch
    %22 = sbr.rel (0) target = $region25
  $region24: #{_lambda_.34} parent=0 // pred_region
    _
  $region25: #{_lambda_.34} parent=0 // pred_fallthru
    _
  %v23 = vld [vmem:[%s0] sm:$0x77]
  %v24 = vld [vmem:[%s0 + $0x8] sm:$0x77]
  %v25 = vld [vmem:[%s2] ss:$8 sm:$0xf]
  %v27 = vperm.slane %v25, 0
  %v28 = vperm.slane %v25, 1
  %v29 = vperm.slane %v25, 2
  %v30 = vperm.slane %v25, 3
  %v31 = vrot.slane %v28, 4
  %v32 = vrot.slane %v30, 4
  %vm33 = vcmask 1043456
  %v34 = vsel %vm33, %v27, %v31
  %v35 = vsel %vm33, %v29, %v32
  %v38 = vmul.f32 %v23, %v34
  %v39 = vmul.f32 %v24, %v35
  %v40 = vld [vmem:[%s1] sm:$0xf]
  %v41 = vld [vmem:[%s0 + $0x10] sm:$0x7]
  %s42 = scalar_lea.vmem %s2, 1
  %v43 = vld [vmem:[%s42] ss:$8 sm:$0xf]
  %v45 = vperm.slane %v43, 0
  %v46 = vperm.slane %v43, 1
  %v47 = vperm.slane %v43, 2
  %v48 = vperm.slane %v43, 3
  %v49 = vrot.slane %v46, 4
  %v50 = vrot.slane %v48, 4
  %v51 = vsel %vm33, %v45, %v49
  %v52 = vsel %vm33, %v47, %v50
  %53 = vrot.lane.b32.xlu0 %v51, 1
  %v54 = vpop.permute.xlu0 %53
  %55 = vrot.lane.b32.xlu0 %v52, 1
  %v56 = vpop.permute.xlu0 %55
  %v57 = vrot.slane %v54, 4
  %v58 = vrot.slane %v56, 4
  %vm59 = vcmask 7168
  %v60 = vsel %vm59, %v57, %v54
  %v61 = vsel %vm33, %v57, %v58
  %v62 = vsel %vm59, %v61, %v56
  %v66 = vmul.f32 %v23, %v60
  %v67 = vmul.f32 %v24, %v62
  %v68 = vmul.f32 %v41, %v58
  %s69 = scalar_lea.vmem %s1, 4
  %v70 = vld [vmem:[%s69] sm:$0xf]
  %74 = vst [vmem:[#allocation1] ss:$2 sm:$0xff] %v66
  %s75 = scalar_lea.vmem [#allocation1], 16
  %76 = vst [vmem:[%s75] ss:$2 sm:$0xff] %v67
  %s77 = scalar_lea.vmem [#allocation1], 32
  %78 = vst [vmem:[%s77] ss:$2 sm:$0xff] %v68
  %v79 = vld.sshfl [vmem:[#allocation1] sm:$0xff pattern:$0x75316420]
  %v80 = vld.sshfl [vmem:[#allocation1 + $0x8] sm:$0xff pattern:$0x75316420]
  %v81 = vld.sshfl [vmem:[#allocation1 + $0x10] sm:$0xff pattern:$0x75316420]
  %v82 = vld.sshfl [vmem:[#allocation1 + $0x18] sm:$0xff pattern:$0x75316420]
  %v83 = vld.sshfl [vmem:[#allocation1 + $0x20] sm:$0xff pattern:$0x75316420]
  %84 = vrot.lane.b32.xlu0 %v79, 127
  %v85 = vpop.permute.xlu0 %84
  %86 = vrot.lane.b32.xlu0 %v80, 127
  %v87 = vpop.permute.xlu0 %86
  %88 = vrot.lane.b32.xlu0 %v81, 127
  %v89 = vpop.permute.xlu0 %88
  %90 = vrot.lane.b32.xlu0 %v82, 127
  %v91 = vpop.permute.xlu0 %90
  %92 = vrot.lane.b32.xlu0 %v83, 127
  %v93 = vpop.permute.xlu0 %92
  %vm94 = vcmask 1039360
  %v95 = vsel %vm94, %v85, %v87
  %v96 = vsel %vm94, %v87, %v89
  %v97 = vsel %vm94, %v89, %v91
  %v98 = vsel %vm94, %v91, %v93
  %vm99 = vcmask 23552
  %v101 = vsel %vm99, %v70, 0
  %vm103 = vcmask 1042432
  %v104 = vsel %vm103, %v95, 0
  %v106 = vsel %vm103, %v96, 0
  %v108 = vsel %vm103, %v97, 0
  %v110 = vsel %vm103, %v98, 0
  %112 = vmatpush.msra.mxu0 0.0
  %113 = vmatpush.msra.mxu0 0.0
  %114 = vmatpush.msra.mxu0 0.0
  %115 = vmatpush.msra.mxu0 0.0
  %116 = vmatpush.msra.mxu0 0.0
  %117 = vmatpush.msra.mxu0 0.0
  %118 = vmatpush.msra.mxu0 0.0
  %119 = vmatpush.msra.mxu0 0.0
  %120 = vmatpush.msra.mxu0 0.0
  %121 = vmatpush.msra.mxu0 0.0
  %122 = vmatpush.msra.mxu0 0.0
  %123 = vmatpush.msra.mxu0 0.0
  %124 = vmatpush.msra.mxu0 0.0
  %125 = vmatpush.msra.mxu0 0.0
  %126 = vmatpush.msra.mxu0 0.0
  %127 = vmatpush.msra.mxu0 %v104
  %128 = vmatmul.f32.gmra.mxu0 %v101
  %v129 = vpop.f32.mrf.mxu0
  %v130 = vadd.f32 0.0, %v129
  %131 = vdwg.mxu0
  %132 = vmatpush.msra.mxu0 0.0
  %133 = vmatpush.msra.mxu0 0.0
  %134 = vmatpush.msra.mxu0 0.0
  %135 = vmatpush.msra.mxu0 0.0
  %136 = vmatpush.msra.mxu0 0.0
  %137 = vmatpush.msra.mxu0 0.0
  %138 = vmatpush.msra.mxu0 0.0
  %139 = vmatpush.msra.mxu0 0.0
  %140 = vmatpush.msra.mxu0 0.0
  %141 = vmatpush.msra.mxu0 0.0
  %142 = vmatpush.msra.mxu0 0.0
  %143 = vmatpush.msra.mxu0 0.0
  %144 = vmatpush.msra.mxu0 0.0
  %145 = vmatpush.msra.mxu0 0.0
  %146 = vmatpush.msra.mxu0 0.0
  %147 = vmatpush.msra.mxu0 %v106
  %148 = vmatmul.f32.gmra.mxu0 %v101
  %v149 = vpop.f32.mrf.mxu0
  %v150 = vadd.f32 0.0, %v149
  %151 = vdwg.mxu0
  %152 = vmatpush.msra.mxu0 0.0
  %153 = vmatpush.msra.mxu0 0.0
  %154 = vmatpush.msra.mxu0 0.0
  %155 = vmatpush.msra.mxu0 0.0
  %156 = vmatpush.msra.mxu0 0.0
  %157 = vmatpush.msra.mxu0 0.0
  %158 = vmatpush.msra.mxu0 0.0
  %159 = vmatpush.msra.mxu0 0.0
  %160 = vmatpush.msra.mxu0 0.0
  %161 = vmatpush.msra.mxu0 0.0
  %162 = vmatpush.msra.mxu0 0.0
  %163 = vmatpush.msra.mxu0 0.0
  %164 = vmatpush.msra.mxu0 0.0
  %165 = vmatpush.msra.mxu0 0.0
  %166 = vmatpush.msra.mxu0 0.0
  %167 = vmatpush.msra.mxu0 %v108
  %168 = vmatmul.f32.gmra.mxu0 %v101
  %v169 = vpop.f32.mrf.mxu0
  %v170 = vadd.f32 0.0, %v169
  %171 = vdwg.mxu0
  %172 = vmatpush.msra.mxu0 0.0
  %173 = vmatpush.msra.mxu0 0.0
  %174 = vmatpush.msra.mxu0 0.0
  %175 = vmatpush.msra.mxu0 0.0
  %176 = vmatpush.msra.mxu0 0.0
  %177 = vmatpush.msra.mxu0 0.0
  %178 = vmatpush.msra.mxu0 0.0
  %179 = vmatpush.msra.mxu0 0.0
  %180 = vmatpush.msra.mxu0 0.0
  %181 = vmatpush.msra.mxu0 0.0
  %182 = vmatpush.msra.mxu0 0.0
  %183 = vmatpush.msra.mxu0 0.0
  %184 = vmatpush.msra.mxu0 0.0
  %185 = vmatpush.msra.mxu0 0.0
  %186 = vmatpush.msra.mxu0 0.0
  %187 = vmatpush.msra.mxu0 %v110
  %188 = vmatmul.f32.gmra.mxu0 %v101
  %v189 = vpop.f32.mrf.mxu0
  %v190 = vadd.f32 0.0, %v189
  %191 = vdwg.mxu0
  %194 = vst [vmem:[#allocation1] ss:$2 sm:$0xff] %v38
  %s195 = scalar_lea.vmem [#allocation1], 16
  %196 = vst [vmem:[%s195] ss:$2 sm:$0xff] %v39
  %v197 = vld.sshfl [vmem:[#allocation1] sm:$0xff pattern:$0x75316420]
  %v198 = vld.sshfl [vmem:[#allocation1 + $0x8] sm:$0xff pattern:$0x75316420]
  %v199 = vld.sshfl [vmem:[#allocation1 + $0x10] sm:$0xff pattern:$0x75316420]
  %v200 = vld.sshfl [vmem:[#allocation1 + $0x18] sm:$0xff pattern:$0x75316420]
  %v202 = vsel %vm99, %v40, 0
  %v204 = vsel %vm103, %v197, 0
  %v206 = vsel %vm103, %v198, 0
  %v208 = vsel %vm103, %v199, 0
  %v210 = vsel %vm103, %v200, 0
  %212 = vmatpush.msra.mxu0 0.0
  %213 = vmatpush.msra.mxu0 0.0
  %214 = vmatpush.msra.mxu0 0.0
  %215 = vmatpush.msra.mxu0 0.0
  %216 = vmatpush.msra.mxu0 0.0
  %217 = vmatpush.msra.mxu0 0.0
  %218 = vmatpush.msra.mxu0 0.0
  %219 = vmatpush.msra.mxu0 0.0
  %220 = vmatpush.msra.mxu0 0.0
  %221 = vmatpush.msra.mxu0 0.0
  %222 = vmatpush.msra.mxu0 0.0
  %223 = vmatpush.msra.mxu0 0.0
  %224 = vmatpush.msra.mxu0 0.0
  %225 = vmatpush.msra.mxu0 0.0
  %226 = vmatpush.msra.mxu0 0.0
  %227 = vmatpush.msra.mxu0 %v204
  %228 = vmatmul.f32.gmra.mxu0 %v202
  %v229 = vpop.f32.mrf.mxu0
  %v230 = vadd.f32 %v130, %v229
  %231 = vdwg.mxu0
  %232 = vmatpush.msra.mxu0 0.0
  %233 = vmatpush.msra.mxu0 0.0
  %234 = vmatpush.msra.mxu0 0.0
  %235 = vmatpush.msra.mxu0 0.0
  %236 = vmatpush.msra.mxu0 0.0
  %237 = vmatpush.msra.mxu0 0.0
  %238 = vmatpush.msra.mxu0 0.0
  %239 = vmatpush.msra.mxu0 0.0
  %240 = vmatpush.msra.mxu0 0.0
  %241 = vmatpush.msra.mxu0 0.0
  %242 = vmatpush.msra.mxu0 0.0
  %243 = vmatpush.msra.mxu0 0.0
  %244 = vmatpush.msra.mxu0 0.0
  %245 = vmatpush.msra.mxu0 0.0
  %246 = vmatpush.msra.mxu0 0.0
  %247 = vmatpush.msra.mxu0 %v206
  %248 = vmatmul.f32.gmra.mxu0 %v202
  %v249 = vpop.f32.mrf.mxu0
  %v250 = vadd.f32 %v150, %v249
  %251 = vdwg.mxu0
  %252 = vmatpush.msra.mxu0 0.0
  %253 = vmatpush.msra.mxu0 0.0
  %254 = vmatpush.msra.mxu0 0.0
  %255 = vmatpush.msra.mxu0 0.0
  %256 = vmatpush.msra.mxu0 0.0
  %257 = vmatpush.msra.mxu0 0.0
  %258 = vmatpush.msra.mxu0 0.0
  %259 = vmatpush.msra.mxu0 0.0
  %260 = vmatpush.msra.mxu0 0.0
  %261 = vmatpush.msra.mxu0 0.0
  %262 = vmatpush.msra.mxu0 0.0
  %263 = vmatpush.msra.mxu0 0.0
  %264 = vmatpush.msra.mxu0 0.0
  %265 = vmatpush.msra.mxu0 0.0
  %266 = vmatpush.msra.mxu0 0.0
  %267 = vmatpush.msra.mxu0 %v208
  %268 = vmatmul.f32.gmra.mxu0 %v202
  %v269 = vpop.f32.mrf.mxu0
  %v270 = vadd.f32 %v170, %v269
  %271 = vdwg.mxu0
  %272 = vmatpush.msra.mxu0 0.0
  %273 = vmatpush.msra.mxu0 0.0
  %274 = vmatpush.msra.mxu0 0.0
  %275 = vmatpush.msra.mxu0 0.0
  %276 = vmatpush.msra.mxu0 0.0
  %277 = vmatpush.msra.mxu0 0.0
  %278 = vmatpush.msra.mxu0 0.0
  %279 = vmatpush.msra.mxu0 0.0
  %280 = vmatpush.msra.mxu0 0.0
  %281 = vmatpush.msra.mxu0 0.0
  %282 = vmatpush.msra.mxu0 0.0
  %283 = vmatpush.msra.mxu0 0.0
  %284 = vmatpush.msra.mxu0 0.0
  %285 = vmatpush.msra.mxu0 0.0
  %286 = vmatpush.msra.mxu0 0.0
  %287 = vmatpush.msra.mxu0 %v210
  %288 = vmatmul.f32.gmra.mxu0 %v202
  %v289 = vpop.f32.mrf.mxu0
  %v290 = vadd.f32 %v190, %v289
  %291 = vdwg.mxu0
  %v292 = vld [vmem:[%s0] sm:$0x77]
  %v293 = vld [vmem:[%s0 + $0x8] sm:$0x77]
  %v294 = vld [vmem:[%s0 + $0x10] sm:$0x7]
  %s295 = scalar_lea.vmem %s2, 2
  %v296 = vld [vmem:[%s295] ss:$8 sm:$0xf]
  %v298 = vperm.slane %v296, 0
  %v299 = vperm.slane %v296, 1
  %v300 = vperm.slane %v296, 2
  %v301 = vperm.slane %v296, 3
  %v302 = vrot.slane %v299, 4
  %v303 = vrot.slane %v301, 4
  %v304 = vsel %vm33, %v298, %v302
  %v305 = vsel %vm33, %v300, %v303
  %306 = vrot.lane.b32.xlu0 %v304, 2
  %v307 = vpop.permute.xlu0 %306
  %308 = vrot.lane.b32.xlu0 %v305, 2
  %v309 = vpop.permute.xlu0 %308
  %v310 = vrot.slane %v307, 4
  %v311 = vrot.slane %v309, 4
  %vm312 = vcmask 15360
  %v313 = vsel %vm312, %v310, %v307
  %v314 = vsel %vm33, %v310, %v311
  %v315 = vsel %vm312, %v314, %v309
  %v319 = vmul.f32 %v292, %v313
  %v320 = vmul.f32 %v293, %v315
  %v321 = vmul.f32 %v294, %v311
  %s322 = scalar_lea.vmem %s1, 8
  %v323 = vld [vmem:[%s322] sm:$0xf]
  %327 = vst [vmem:[#allocation1] ss:$2 sm:$0xff] %v319
  %s328 = scalar_lea.vmem [#allocation1], 16
  %329 = vst [vmem:[%s328] ss:$2 sm:$0xff] %v320
  %s330 = scalar_lea.vmem [#allocation1], 32
  %331 = vst [vmem:[%s330] ss:$2 sm:$0xff] %v321
  %v332 = vld.sshfl [vmem:[#allocation1] sm:$0xff pattern:$0x75316420]
  %v333 = vld.sshfl [vmem:[#allocation1 + $0x8] sm:$0xff pattern:$0x75316420]
  %v334 = vld.sshfl [vmem:[#allocation1 + $0x10] sm:$0xff pattern:$0x75316420]
  %v335 = vld.sshfl [vmem:[#allocation1 + $0x18] sm:$0xff pattern:$0x75316420]
  %v336 = vld.sshfl [vmem:[#allocation1 + $0x20] sm:$0xff pattern:$0x75316420]
  %337 = vrot.lane.b32.xlu0 %v332, 126
  %v338 = vpop.permute.xlu0 %337
  %339 = vrot.lane.b32.xlu0 %v333, 126
  %v340 = vpop.permute.xlu0 %339
  %341 = vrot.lane.b32.xlu0 %v334, 126
  %v342 = vpop.permute.xlu0 %341
  %343 = vrot.lane.b32.xlu0 %v335, 126
  %v344 = vpop.permute.xlu0 %343
  %345 = vrot.lane.b32.xlu0 %v336, 126
  %v346 = vpop.permute.xlu0 %345
  %vm347 = vcmask 1031168
  %v348 = vsel %vm347, %v338, %v340
  %v349 = vsel %vm347, %v340, %v342
  %v350 = vsel %vm347, %v342, %v344
  %v351 = vsel %vm347, %v344, %v346
  %v353 = vsel %vm99, %v323, 0
  %v355 = vsel %vm103, %v348, 0
  %v357 = vsel %vm103, %v349, 0
  %v359 = vsel %vm103, %v350, 0
  %v361 = vsel %vm103, %v351, 0
  %363 = vmatpush.msra.mxu0 0.0
  %364 = vmatpush.msra.mxu0 0.0
  %365 = vmatpush.msra.mxu0 0.0
  %366 = vmatpush.msra.mxu0 0.0
  %367 = vmatpush.msra.mxu0 0.0
  %368 = vmatpush.msra.mxu0 0.0
  %369 = vmatpush.msra.mxu0 0.0
  %370 = vmatpush.msra.mxu0 0.0
  %371 = vmatpush.msra.mxu0 0.0
  %372 = vmatpush.msra.mxu0 0.0
  %373 = vmatpush.msra.mxu0 0.0
  %374 = vmatpush.msra.mxu0 0.0
  %375 = vmatpush.msra.mxu0 0.0
  %376 = vmatpush.msra.mxu0 0.0
  %377 = vmatpush.msra.mxu0 0.0
  %378 = vmatpush.msra.mxu0 %v355
  %379 = vmatmul.f32.gmra.mxu0 %v353
  %v380 = vpop.f32.mrf.mxu0
  %v381 = vadd.f32 0.0, %v380
  %382 = vdwg.mxu0
  %383 = vmatpush.msra.mxu0 0.0
  %384 = vmatpush.msra.mxu0 0.0
  %385 = vmatpush.msra.mxu0 0.0
  %386 = vmatpush.msra.mxu0 0.0
  %387 = vmatpush.msra.mxu0 0.0
  %388 = vmatpush.msra.mxu0 0.0
  %389 = vmatpush.msra.mxu0 0.0
  %390 = vmatpush.msra.mxu0 0.0
  %391 = vmatpush.msra.mxu0 0.0
  %392 = vmatpush.msra.mxu0 0.0
  %393 = vmatpush.msra.mxu0 0.0
  %394 = vmatpush.msra.mxu0 0.0
  %395 = vmatpush.msra.mxu0 0.0
  %396 = vmatpush.msra.mxu0 0.0
  %397 = vmatpush.msra.mxu0 0.0
  %398 = vmatpush.msra.mxu0 %v357
  %399 = vmatmul.f32.gmra.mxu0 %v353
  %v400 = vpop.f32.mrf.mxu0
  %v401 = vadd.f32 0.0, %v400
  %402 = vdwg.mxu0
  %403 = vmatpush.msra.mxu0 0.0
  %404 = vmatpush.msra.mxu0 0.0
  %405 = vmatpush.msra.mxu0 0.0
  %406 = vmatpush.msra.mxu0 0.0
  %407 = vmatpush.msra.mxu0 0.0
  %408 = vmatpush.msra.mxu0 0.0
  %409 = vmatpush.msra.mxu0 0.0
  %410 = vmatpush.msra.mxu0 0.0
  %411 = vmatpush.msra.mxu0 0.0
  %412 = vmatpush.msra.mxu0 0.0
  %413 = vmatpush.msra.mxu0 0.0
  %414 = vmatpush.msra.mxu0 0.0
  %415 = vmatpush.msra.mxu0 0.0
  %416 = vmatpush.msra.mxu0 0.0
  %417 = vmatpush.msra.mxu0 0.0
  %418 = vmatpush.msra.mxu0 %v359
  %419 = vmatmul.f32.gmra.mxu0 %v353
  %v420 = vpop.f32.mrf.mxu0
  %v421 = vadd.f32 0.0, %v420
  %422 = vdwg.mxu0
  %423 = vmatpush.msra.mxu0 0.0
  %424 = vmatpush.msra.mxu0 0.0
  %425 = vmatpush.msra.mxu0 0.0
  %426 = vmatpush.msra.mxu0 0.0
  %427 = vmatpush.msra.mxu0 0.0
  %428 = vmatpush.msra.mxu0 0.0
  %429 = vmatpush.msra.mxu0 0.0
  %430 = vmatpush.msra.mxu0 0.0
  %431 = vmatpush.msra.mxu0 0.0
  %432 = vmatpush.msra.mxu0 0.0
  %433 = vmatpush.msra.mxu0 0.0
  %434 = vmatpush.msra.mxu0 0.0
  %435 = vmatpush.msra.mxu0 0.0
  %436 = vmatpush.msra.mxu0 0.0
  %437 = vmatpush.msra.mxu0 0.0
  %438 = vmatpush.msra.mxu0 %v361
  %439 = vmatmul.f32.gmra.mxu0 %v353
  %v440 = vpop.f32.mrf.mxu0
  %v441 = vadd.f32 0.0, %v440
  %442 = vdwg.mxu0
  %v443 = vadd.f32 %v230, %v381
  %v444 = vadd.f32 %v250, %v401
  %v445 = vadd.f32 %v270, %v421
  %v446 = vadd.f32 %v290, %v441
  %v447 = vld [vmem:[%s0] sm:$0x77]
  %v448 = vld [vmem:[%s0 + $0x8] sm:$0x77]
  %v449 = vld [vmem:[%s0 + $0x10] sm:$0x7]
  %s450 = scalar_lea.vmem %s2, 3
  %v451 = vld [vmem:[%s450] ss:$8 sm:$0xf]
  %v453 = vperm.slane %v451, 0
  %v454 = vperm.slane %v451, 1
  %v455 = vperm.slane %v451, 2
  %v456 = vperm.slane %v451, 3
  %v457 = vrot.slane %v454, 4
  %v458 = vrot.slane %v456, 4
  %v459 = vsel %vm33, %v453, %v457
  %v460 = vsel %vm33, %v455, %v458
  %461 = vrot.lane.b32.xlu0 %v459, 16
  %v462 = vpop.permute.xlu0 %461
  %463 = vrot.lane.b32.xlu0 %v460, 16
  %v464 = vpop.permute.xlu0 %463
  %v465 = vrot.slane %v462, 4
  %v466 = vrot.slane %v464, 4
  %vm467 = vcmask 130048
  %v468 = vsel %vm467, %v465, %v462
  %v469 = vsel %vm33, %v465, %v466
  %v470 = vsel %vm467, %v469, %v464
  %v474 = vmul.f32 %v447, %v468
  %v475 = vmul.f32 %v448, %v470
  %v476 = vmul.f32 %v449, %v466
  %s477 = scalar_lea.vmem %s1, 12
  %v478 = vld [vmem:[%s477] sm:$0xf]
  %482 = vst [vmem:[#allocation1] ss:$2 sm:$0xff] %v474
  %s483 = scalar_lea.vmem [#allocation1], 16
  %484 = vst [vmem:[%s483] ss:$2 sm:$0xff] %v475
  %s485 = scalar_lea.vmem [#allocation1], 32
  %486 = vst [vmem:[%s485] ss:$2 sm:$0xff] %v476
  %v487 = vld.sshfl [vmem:[#allocation1] sm:$0xff pattern:$0x75316420]
  %v488 = vld.sshfl [vmem:[#allocation1 + $0x8] sm:$0xff pattern:$0x75316420]
  %v489 = vld.sshfl [vmem:[#allocation1 + $0x10] sm:$0xff pattern:$0x75316420]
  %v490 = vld.sshfl [vmem:[#allocation1 + $0x18] sm:$0xff pattern:$0x75316420]
  %v491 = vld.sshfl [vmem:[#allocation1 + $0x20] sm:$0xff pattern:$0x75316420]
  %492 = vrot.lane.b32.xlu0 %v487, 112
  %v493 = vpop.permute.xlu0 %492
  %494 = vrot.lane.b32.xlu0 %v488, 112
  %v495 = vpop.permute.xlu0 %494
  %496 = vrot.lane.b32.xlu0 %v489, 112
  %v497 = vpop.permute.xlu0 %496
  %498 = vrot.lane.b32.xlu0 %v490, 112
  %v499 = vpop.permute.xlu0 %498
  %500 = vrot.lane.b32.xlu0 %v491, 112
  %v501 = vpop.permute.xlu0 %500
  %vm502 = vcmask 916480
  %v503 = vsel %vm502, %v493, %v495
  %v504 = vsel %vm502, %v495, %v497
  %v505 = vsel %vm502, %v497, %v499
  %v506 = vsel %vm502, %v499, %v501
  %v508 = vsel %vm99, %v478, 0
  %v510 = vsel %vm103, %v503, 0
  %v512 = vsel %vm103, %v504, 0
  %v514 = vsel %vm103, %v505, 0
  %v516 = vsel %vm103, %v506, 0
  %518 = vmatpush.msra.mxu0 0.0
  %519 = vmatpush.msra.mxu0 0.0
  %520 = vmatpush.msra.mxu0 0.0
  %521 = vmatpush.msra.mxu0 0.0
  %522 = vmatpush.msra.mxu0 0.0
  %523 = vmatpush.msra.mxu0 0.0
  %524 = vmatpush.msra.mxu0 0.0
  %525 = vmatpush.msra.mxu0 0.0
  %526 = vmatpush.msra.mxu0 0.0
  %527 = vmatpush.msra.mxu0 0.0
  %528 = vmatpush.msra.mxu0 0.0
  %529 = vmatpush.msra.mxu0 0.0
  %530 = vmatpush.msra.mxu0 0.0
  %531 = vmatpush.msra.mxu0 0.0
  %532 = vmatpush.msra.mxu0 0.0
  %533 = vmatpush.msra.mxu0 %v510
  %534 = vmatmul.f32.gmra.mxu0 %v508
  %v535 = vpop.f32.mrf.mxu0
  %v536 = vadd.f32 0.0, %v535
  %537 = vdwg.mxu0
  %538 = vmatpush.msra.mxu0 0.0
  %539 = vmatpush.msra.mxu0 0.0
  %540 = vmatpush.msra.mxu0 0.0
  %541 = vmatpush.msra.mxu0 0.0
  %542 = vmatpush.msra.mxu0 0.0
  %543 = vmatpush.msra.mxu0 0.0
  %544 = vmatpush.msra.mxu0 0.0
  %545 = vmatpush.msra.mxu0 0.0
  %546 = vmatpush.msra.mxu0 0.0
  %547 = vmatpush.msra.mxu0 0.0
  %548 = vmatpush.msra.mxu0 0.0
  %549 = vmatpush.msra.mxu0 0.0
  %550 = vmatpush.msra.mxu0 0.0
  %551 = vmatpush.msra.mxu0 0.0
  %552 = vmatpush.msra.mxu0 0.0
  %553 = vmatpush.msra.mxu0 %v512
  %554 = vmatmul.f32.gmra.mxu0 %v508
  %v555 = vpop.f32.mrf.mxu0
  %v556 = vadd.f32 0.0, %v555
  %557 = vdwg.mxu0
  %558 = vmatpush.msra.mxu0 0.0
  %559 = vmatpush.msra.mxu0 0.0
  %560 = vmatpush.msra.mxu0 0.0
  %561 = vmatpush.msra.mxu0 0.0
  %562 = vmatpush.msra.mxu0 0.0
  %563 = vmatpush.msra.mxu0 0.0
  %564 = vmatpush.msra.mxu0 0.0
  %565 = vmatpush.msra.mxu0 0.0
  %566 = vmatpush.msra.mxu0 0.0
  %567 = vmatpush.msra.mxu0 0.0
  %568 = vmatpush.msra.mxu0 0.0
  %569 = vmatpush.msra.mxu0 0.0
  %570 = vmatpush.msra.mxu0 0.0
  %571 = vmatpush.msra.mxu0 0.0
  %572 = vmatpush.msra.mxu0 0.0
  %573 = vmatpush.msra.mxu0 %v514
  %574 = vmatmul.f32.gmra.mxu0 %v508
  %v575 = vpop.f32.mrf.mxu0
  %v576 = vadd.f32 0.0, %v575
  %577 = vdwg.mxu0
  %578 = vmatpush.msra.mxu0 0.0
  %579 = vmatpush.msra.mxu0 0.0
  %580 = vmatpush.msra.mxu0 0.0
  %581 = vmatpush.msra.mxu0 0.0
  %582 = vmatpush.msra.mxu0 0.0
  %583 = vmatpush.msra.mxu0 0.0
  %584 = vmatpush.msra.mxu0 0.0
  %585 = vmatpush.msra.mxu0 0.0
  %586 = vmatpush.msra.mxu0 0.0
  %587 = vmatpush.msra.mxu0 0.0
  %588 = vmatpush.msra.mxu0 0.0
  %589 = vmatpush.msra.mxu0 0.0
  %590 = vmatpush.msra.mxu0 0.0
  %591 = vmatpush.msra.mxu0 0.0
  %592 = vmatpush.msra.mxu0 0.0
  %593 = vmatpush.msra.mxu0 %v516
  %594 = vmatmul.f32.gmra.mxu0 %v508
  %v595 = vpop.f32.mrf.mxu0
  %v596 = vadd.f32 0.0, %v595
  %597 = vdwg.mxu0
  %v598 = vadd.f32 %v443, %v536
  %v599 = vadd.f32 %v444, %v556
  %v600 = vadd.f32 %v445, %v576
  %v601 = vadd.f32 %v446, %v596
  %v602 = vld [vmem:[%s0] sm:$0x77]
  %v603 = vld [vmem:[%s0 + $0x8] sm:$0x77]
  %v604 = vld [vmem:[%s0 + $0x10] sm:$0x7]
  %s605 = scalar_lea.vmem %s1, 16
  %v606 = vld [vmem:[%s605] sm:$0xf]
  %610 = vst [vmem:[#allocation1] ss:$2 sm:$0xff] %v602
  %s611 = scalar_lea.vmem [#allocation1], 16
  %612 = vst [vmem:[%s611] ss:$2 sm:$0xff] %v603
  %s613 = scalar_lea.vmem [#allocation1], 32
  %614 = vst [vmem:[%s613] ss:$2 sm:$0xff] %v604
  %v615 = vld.sshfl [vmem:[#allocation1] sm:$0xff pattern:$0x75316420]
  %v616 = vld.sshfl [vmem:[#allocation1 + $0x8] sm:$0xff pattern:$0x75316420]
  %v617 = vld.sshfl [vmem:[#allocation1 + $0x10] sm:$0xff pattern:$0x75316420]
  %v618 = vld.sshfl [vmem:[#allocation1 + $0x18] sm:$0xff pattern:$0x75316420]
  %v619 = vld.sshfl [vmem:[#allocation1 + $0x20] sm:$0xff pattern:$0x75316420]
  %620 = vrot.lane.b32.xlu0 %v615, 111
  %v621 = vpop.permute.xlu0 %620
  %622 = vrot.lane.b32.xlu0 %v616, 111
  %v623 = vpop.permute.xlu0 %622
  %624 = vrot.lane.b32.xlu0 %v617, 111
  %v625 = vpop.permute.xlu0 %624
  %626 = vrot.lane.b32.xlu0 %v618, 111
  %v627 = vpop.permute.xlu0 %626
  %628 = vrot.lane.b32.xlu0 %v619, 111
  %v629 = vpop.permute.xlu0 %628
  %vm630 = vcmask 908288
  %v631 = vsel %vm630, %v621, %v623
  %v632 = vsel %vm630, %v623, %v625
  %v633 = vsel %vm630, %v625, %v627
  %v634 = vsel %vm630, %v627, %v629
  %v636 = vsel %vm99, %v606, 0
  %v638 = vsel %vm103, %v631, 0
  %v640 = vsel %vm103, %v632, 0
  %v642 = vsel %vm103, %v633, 0
  %v644 = vsel %vm103, %v634, 0
  %646 = vmatpush.msra.mxu0 0.0
  %647 = vmatpush.msra.mxu0 0.0
  %648 = vmatpush.msra.mxu0 0.0
  %649 = vmatpush.msra.mxu0 0.0
  %650 = vmatpush.msra.mxu0 0.0
  %651 = vmatpush.msra.mxu0 0.0
  %652 = vmatpush.msra.mxu0 0.0
  %653 = vmatpush.msra.mxu0 0.0
  %654 = vmatpush.msra.mxu0 0.0
  %655 = vmatpush.msra.mxu0 0.0
  %656 = vmatpush.msra.mxu0 0.0
  %657 = vmatpush.msra.mxu0 0.0
  %658 = vmatpush.msra.mxu0 0.0
  %659 = vmatpush.msra.mxu0 0.0
  %660 = vmatpush.msra.mxu0 0.0
  %661 = vmatpush.msra.mxu0 %v638
  %662 = vmatmul.f32.gmra.mxu0 %v636
  %v663 = vpop.f32.mrf.mxu0
  %v664 = vadd.f32 0.0, %v663
  %665 = vdwg.mxu0
  %666 = vmatpush.msra.mxu0 0.0
  %667 = vmatpush.msra.mxu0 0.0
  %668 = vmatpush.msra.mxu0 0.0
  %669 = vmatpush.msra.mxu0 0.0
  %670 = vmatpush.msra.mxu0 0.0
  %671 = vmatpush.msra.mxu0 0.0
  %672 = vmatpush.msra.mxu0 0.0
  %673 = vmatpush.msra.mxu0 0.0
  %674 = vmatpush.msra.mxu0 0.0
  %675 = vmatpush.msra.mxu0 0.0
  %676 = vmatpush.msra.mxu0 0.0
  %677 = vmatpush.msra.mxu0 0.0
  %678 = vmatpush.msra.mxu0 0.0
  %679 = vmatpush.msra.mxu0 0.0
  %680 = vmatpush.msra.mxu0 0.0
  %681 = vmatpush.msra.mxu0 %v640
  %682 = vmatmul.f32.gmra.mxu0 %v636
  %v683 = vpop.f32.mrf.mxu0
  %v684 = vadd.f32 0.0, %v683
  %685 = vdwg.mxu0
  %686 = vmatpush.msra.mxu0 0.0
  %687 = vmatpush.msra.mxu0 0.0
  %688 = vmatpush.msra.mxu0 0.0
  %689 = vmatpush.msra.mxu0 0.0
  %690 = vmatpush.msra.mxu0 0.0
  %691 = vmatpush.msra.mxu0 0.0
  %692 = vmatpush.msra.mxu0 0.0
  %693 = vmatpush.msra.mxu0 0.0
  %694 = vmatpush.msra.mxu0 0.0
  %695 = vmatpush.msra.mxu0 0.0
  %696 = vmatpush.msra.mxu0 0.0
  %697 = vmatpush.msra.mxu0 0.0
  %698 = vmatpush.msra.mxu0 0.0
  %699 = vmatpush.msra.mxu0 0.0
  %700 = vmatpush.msra.mxu0 0.0
  %701 = vmatpush.msra.mxu0 %v642
  %702 = vmatmul.f32.gmra.mxu0 %v636
  %v703 = vpop.f32.mrf.mxu0
  %v704 = vadd.f32 0.0, %v703
  %705 = vdwg.mxu0
  %706 = vmatpush.msra.mxu0 0.0
  %707 = vmatpush.msra.mxu0 0.0
  %708 = vmatpush.msra.mxu0 0.0
  %709 = vmatpush.msra.mxu0 0.0
  %710 = vmatpush.msra.mxu0 0.0
  %711 = vmatpush.msra.mxu0 0.0
  %712 = vmatpush.msra.mxu0 0.0
  %713 = vmatpush.msra.mxu0 0.0
  %714 = vmatpush.msra.mxu0 0.0
  %715 = vmatpush.msra.mxu0 0.0
  %716 = vmatpush.msra.mxu0 0.0
  %717 = vmatpush.msra.mxu0 0.0
  %718 = vmatpush.msra.mxu0 0.0
  %719 = vmatpush.msra.mxu0 0.0
  %720 = vmatpush.msra.mxu0 0.0
  %721 = vmatpush.msra.mxu0 %v644
  %722 = vmatmul.f32.gmra.mxu0 %v636
  %v723 = vpop.f32.mrf.mxu0
  %v724 = vadd.f32 0.0, %v723
  %725 = vdwg.mxu0
  %v726 = vadd.f32 %v598, %v664
  %v727 = vadd.f32 %v599, %v684
  %v728 = vadd.f32 %v600, %v704
  %v729 = vadd.f32 %v601, %v724
  %v730 = vld [vmem:[%s0] sm:$0x77]
  %v731 = vld [vmem:[%s0 + $0x8] sm:$0x77]
  %v732 = vld [vmem:[%s0 + $0x10] sm:$0x7]
  %s733 = scalar_lea.vmem %s2, 5
  %v734 = vld [vmem:[%s733] ss:$8 sm:$0xf]
  %v736 = vperm.slane %v734, 0
  %v737 = vperm.slane %v734, 1
  %v738 = vperm.slane %v734, 2
  %v739 = vperm.slane %v734, 3
  %v740 = vrot.slane %v737, 4
  %v741 = vrot.slane %v739, 4
  %v742 = vsel %vm33, %v736, %v740
  %v743 = vsel %vm33, %v738, %v741
  %744 = vrot.lane.b32.xlu0 %v742, 18
  %v745 = vpop.permute.xlu0 %744
  %746 = vrot.lane.b32.xlu0 %v743, 18
  %v747 = vpop.permute.xlu0 %746
  %v748 = vrot.slane %v745, 4
  %v749 = vrot.slane %v747, 4
  %vm750 = vcmask 146432
  %v751 = vsel %vm750, %v748, %v745
  %v752 = vsel %vm33, %v748, %v749
  %v753 = vsel %vm750, %v752, %v747
  %v757 = vmul.f32 %v730, %v751
  %v758 = vmul.f32 %v731, %v753
  %v759 = vmul.f32 %v732, %v749
  %s760 = scalar_lea.vmem %s1, 20
  %v761 = vld [vmem:[%s760] sm:$0xf]
  %765 = vst [vmem:[#allocation1] ss:$2 sm:$0xff] %v757
  %s766 = scalar_lea.vmem [#allocation1], 16
  %767 = vst [vmem:[%s766] ss:$2 sm:$0xff] %v758
  %s768 = scalar_lea.vmem [#allocation1], 32
  %769 = vst [vmem:[%s768] ss:$2 sm:$0xff] %v759
  %v770 = vld.sshfl [vmem:[#allocation1] sm:$0xff pattern:$0x75316420]
  %v771 = vld.sshfl [vmem:[#allocation1 + $0x8] sm:$0xff pattern:$0x75316420]
  %v772 = vld.sshfl [vmem:[#allocation1 + $0x10] sm:$0xff pattern:$0x75316420]
  %v773 = vld.sshfl [vmem:[#allocation1 + $0x18] sm:$0xff pattern:$0x75316420]
  %v774 = vld.sshfl [vmem:[#allocation1 + $0x20] sm:$0xff pattern:$0x75316420]
  %775 = vrot.lane.b32.xlu0 %v770, 110
  %v776 = vpop.permute.xlu0 %775
  %777 = vrot.lane.b32.xlu0 %v771, 110
  %v778 = vpop.permute.xlu0 %777
  %779 = vrot.lane.b32.xlu0 %v772, 110
  %v780 = vpop.permute.xlu0 %779
  %781 = vrot.lane.b32.xlu0 %v773, 110
  %v782 = vpop.permute.xlu0 %781
  %783 = vrot.lane.b32.xlu0 %v774, 110
  %v784 = vpop.permute.xlu0 %783
  %vm785 = vcmask 900096
  %v786 = vsel %vm785, %v776, %v778
  %v787 = vsel %vm785, %v778, %v780
  %v788 = vsel %vm785, %v780, %v782
  %v789 = vsel %vm785, %v782, %v784
  %v791 = vsel %vm99, %v761, 0
  %v793 = vsel %vm103, %v786, 0
  %v795 = vsel %vm103, %v787, 0
  %v797 = vsel %vm103, %v788, 0
  %v799 = vsel %vm103, %v789, 0
  %801 = vmatpush.msra.mxu0 0.0
  %802 = vmatpush.msra.mxu0 0.0
  %803 = vmatpush.msra.mxu0 0.0
  %804 = vmatpush.msra.mxu0 0.0
  %805 = vmatpush.msra.mxu0 0.0
  %806 = vmatpush.msra.mxu0 0.0
  %807 = vmatpush.msra.mxu0 0.0
  %808 = vmatpush.msra.mxu0 0.0
  %809 = vmatpush.msra.mxu0 0.0
  %810 = vmatpush.msra.mxu0 0.0
  %811 = vmatpush.msra.mxu0 0.0
  %812 = vmatpush.msra.mxu0 0.0
  %813 = vmatpush.msra.mxu0 0.0
  %814 = vmatpush.msra.mxu0 0.0
  %815 = vmatpush.msra.mxu0 0.0
  %816 = vmatpush.msra.mxu0 %v793
  %817 = vmatmul.f32.gmra.mxu0 %v791
  %v818 = vpop.f32.mrf.mxu0
  %v819 = vadd.f32 0.0, %v818
  %820 = vdwg.mxu0
  %821 = vmatpush.msra.mxu0 0.0
  %822 = vmatpush.msra.mxu0 0.0
  %823 = vmatpush.msra.mxu0 0.0
  %824 = vmatpush.msra.mxu0 0.0
  %825 = vmatpush.msra.mxu0 0.0
  %826 = vmatpush.msra.mxu0 0.0
  %827 = vmatpush.msra.mxu0 0.0
  %828 = vmatpush.msra.mxu0 0.0
  %829 = vmatpush.msra.mxu0 0.0
  %830 = vmatpush.msra.mxu0 0.0
  %831 = vmatpush.msra.mxu0 0.0
  %832 = vmatpush.msra.mxu0 0.0
  %833 = vmatpush.msra.mxu0 0.0
  %834 = vmatpush.msra.mxu0 0.0
  %835 = vmatpush.msra.mxu0 0.0
  %836 = vmatpush.msra.mxu0 %v795
  %837 = vmatmul.f32.gmra.mxu0 %v791
  %v838 = vpop.f32.mrf.mxu0
  %v839 = vadd.f32 0.0, %v838
  %840 = vdwg.mxu0
  %841 = vmatpush.msra.mxu0 0.0
  %842 = vmatpush.msra.mxu0 0.0
  %843 = vmatpush.msra.mxu0 0.0
  %844 = vmatpush.msra.mxu0 0.0
  %845 = vmatpush.msra.mxu0 0.0
  %846 = vmatpush.msra.mxu0 0.0
  %847 = vmatpush.msra.mxu0 0.0
  %848 = vmatpush.msra.mxu0 0.0
  %849 = vmatpush.msra.mxu0 0.0
  %850 = vmatpush.msra.mxu0 0.0
  %851 = vmatpush.msra.mxu0 0.0
  %852 = vmatpush.msra.mxu0 0.0
  %853 = vmatpush.msra.mxu0 0.0
  %854 = vmatpush.msra.mxu0 0.0
  %855 = vmatpush.msra.mxu0 0.0
  %856 = vmatpush.msra.mxu0 %v797
  %857 = vmatmul.f32.gmra.mxu0 %v791
  %v858 = vpop.f32.mrf.mxu0
  %v859 = vadd.f32 0.0, %v858
  %860 = vdwg.mxu0
  %861 = vmatpush.msra.mxu0 0.0
  %862 = vmatpush.msra.mxu0 0.0
  %863 = vmatpush.msra.mxu0 0.0
  %864 = vmatpush.msra.mxu0 0.0
  %865 = vmatpush.msra.mxu0 0.0
  %866 = vmatpush.msra.mxu0 0.0
  %867 = vmatpush.msra.mxu0 0.0
  %868 = vmatpush.msra.mxu0 0.0
  %869 = vmatpush.msra.mxu0 0.0
  %870 = vmatpush.msra.mxu0 0.0
  %871 = vmatpush.msra.mxu0 0.0
  %872 = vmatpush.msra.mxu0 0.0
  %873 = vmatpush.msra.mxu0 0.0
  %874 = vmatpush.msra.mxu0 0.0
  %875 = vmatpush.msra.mxu0 0.0
  %876 = vmatpush.msra.mxu0 %v799
  %877 = vmatmul.f32.gmra.mxu0 %v791
  %v878 = vpop.f32.mrf.mxu0
  %v879 = vadd.f32 0.0, %v878
  %880 = vdwg.mxu0
  %v881 = vadd.f32 %v726, %v819
  %v882 = vadd.f32 %v727, %v839
  %v883 = vadd.f32 %v728, %v859
  %v884 = vadd.f32 %v729, %v879
  %v885 = vld [vmem:[%s0] sm:$0x77]
  %v886 = vld [vmem:[%s0 + $0x8] sm:$0x77]
  %v887 = vld [vmem:[%s0 + $0x10] sm:$0x7]
  %s888 = scalar_lea.vmem %s2, 6
  %v889 = vld [vmem:[%s888] ss:$8 sm:$0xf]
  %v891 = vperm.slane %v889, 0
  %v892 = vperm.slane %v889, 1
  %v893 = vperm.slane %v889, 2
  %v894 = vperm.slane %v889, 3
  %v895 = vrot.slane %v892, 4
  %v896 = vrot.slane %v894, 4
  %v897 = vsel %vm33, %v891, %v895
  %v898 = vsel %vm33, %v893, %v896
  %899 = vrot.lane.b32.xlu0 %v897, 32
  %v900 = vpop.permute.xlu0 %899
  %901 = vrot.lane.b32.xlu0 %v898, 32
  %v902 = vpop.permute.xlu0 %901
  %v903 = vrot.slane %v900, 4
  %v904 = vrot.slane %v902, 4
  %vm905 = vcmask 261120
  %v906 = vsel %vm905, %v903, %v900
  %v907 = vsel %vm33, %v903, %v904
  %v908 = vsel %vm905, %v907, %v902
  %v912 = vmul.f32 %v885, %v906
  %v913 = vmul.f32 %v886, %v908
  %v914 = vmul.f32 %v887, %v904
  %s915 = scalar_lea.vmem %s1, 24
  %v916 = vld [vmem:[%s915] sm:$0xf]
  %920 = vst [vmem:[#allocation1] ss:$2 sm:$0xff] %v912
  %s921 = scalar_lea.vmem [#allocation1], 16
  %922 = vst [vmem:[%s921] ss:$2 sm:$0xff] %v913
  %s923 = scalar_lea.vmem [#allocation1], 32
  %924 = vst [vmem:[%s923] ss:$2 sm:$0xff] %v914
  %v925 = vld.sshfl [vmem:[#allocation1] sm:$0xff pattern:$0x75316420]
  %v926 = vld.sshfl [vmem:[#allocation1 + $0x8] sm:$0xff pattern:$0x75316420]
  %v927 = vld.sshfl [vmem:[#allocation1 + $0x10] sm:$0xff pattern:$0x75316420]
  %v928 = vld.sshfl [vmem:[#allocation1 + $0x18] sm:$0xff pattern:$0x75316420]
  %v929 = vld.sshfl [vmem:[#allocation1 + $0x20] sm:$0xff pattern:$0x75316420]
  %930 = vrot.lane.b32.xlu0 %v925, 96
  %v931 = vpop.permute.xlu0 %930
  %932 = vrot.lane.b32.xlu0 %v926, 96
  %v933 = vpop.permute.xlu0 %932
  %934 = vrot.lane.b32.xlu0 %v927, 96
  %v935 = vpop.permute.xlu0 %934
  %936 = vrot.lane.b32.xlu0 %v928, 96
  %v937 = vpop.permute.xlu0 %936
  %938 = vrot.lane.b32.xlu0 %v929, 96
  %v939 = vpop.permute.xlu0 %938
  %vm940 = vcmask 785408
  %v941 = vsel %vm940, %v931, %v933
  %v942 = vsel %vm940, %v933, %v935
  %v943 = vsel %vm940, %v935, %v937
  %v944 = vsel %vm940, %v937, %v939
  %v946 = vsel %vm99, %v916, 0
  %v948 = vsel %vm103, %v941, 0
  %v950 = vsel %vm103, %v942, 0
  %v952 = vsel %vm103, %v943, 0
  %v954 = vsel %vm103, %v944, 0
  %956 = vmatpush.msra.mxu0 0.0
  %957 = vmatpush.msra.mxu0 0.0
  %958 = vmatpush.msra.mxu0 0.0
  %959 = vmatpush.msra.mxu0 0.0
  %960 = vmatpush.msra.mxu0 0.0
  %961 = vmatpush.msra.mxu0 0.0
  %962 = vmatpush.msra.mxu0 0.0
  %963 = vmatpush.msra.mxu0 0.0
  %964 = vmatpush.msra.mxu0 0.0
  %965 = vmatpush.msra.mxu0 0.0
  %966 = vmatpush.msra.mxu0 0.0
  %967 = vmatpush.msra.mxu0 0.0
  %968 = vmatpush.msra.mxu0 0.0
  %969 = vmatpush.msra.mxu0 0.0
  %970 = vmatpush.msra.mxu0 0.0
  %971 = vmatpush.msra.mxu0 %v948
  %972 = vmatmul.f32.gmra.mxu0 %v946
  %v973 = vpop.f32.mrf.mxu0
  %v974 = vadd.f32 0.0, %v973
  %975 = vdwg.mxu0
  %976 = vmatpush.msra.mxu0 0.0
  %977 = vmatpush.msra.mxu0 0.0
  %978 = vmatpush.msra.mxu0 0.0
  %979 = vmatpush.msra.mxu0 0.0
  %980 = vmatpush.msra.mxu0 0.0
  %981 = vmatpush.msra.mxu0 0.0
  %982 = vmatpush.msra.mxu0 0.0
  %983 = vmatpush.msra.mxu0 0.0
  %984 = vmatpush.msra.mxu0 0.0
  %985 = vmatpush.msra.mxu0 0.0
  %986 = vmatpush.msra.mxu0 0.0
  %987 = vmatpush.msra.mxu0 0.0
  %988 = vmatpush.msra.mxu0 0.0
  %989 = vmatpush.msra.mxu0 0.0
  %990 = vmatpush.msra.mxu0 0.0
  %991 = vmatpush.msra.mxu0 %v950
  %992 = vmatmul.f32.gmra.mxu0 %v946
  %v993 = vpop.f32.mrf.mxu0
  %v994 = vadd.f32 0.0, %v993
  %995 = vdwg.mxu0
  %996 = vmatpush.msra.mxu0 0.0
  %997 = vmatpush.msra.mxu0 0.0
  %998 = vmatpush.msra.mxu0 0.0
  %999 = vmatpush.msra.mxu0 0.0
  %1000 = vmatpush.msra.mxu0 0.0
  %1001 = vmatpush.msra.mxu0 0.0
  %1002 = vmatpush.msra.mxu0 0.0
  %1003 = vmatpush.msra.mxu0 0.0
  %1004 = vmatpush.msra.mxu0 0.0
  %1005 = vmatpush.msra.mxu0 0.0
  %1006 = vmatpush.msra.mxu0 0.0
  %1007 = vmatpush.msra.mxu0 0.0
  %1008 = vmatpush.msra.mxu0 0.0
  %1009 = vmatpush.msra.mxu0 0.0
  %1010 = vmatpush.msra.mxu0 0.0
  %1011 = vmatpush.msra.mxu0 %v952
  %1012 = vmatmul.f32.gmra.mxu0 %v946
  %v1013 = vpop.f32.mrf.mxu0
  %v1014 = vadd.f32 0.0, %v1013
  %1015 = vdwg.mxu0
  %1016 = vmatpush.msra.mxu0 0.0
  %1017 = vmatpush.msra.mxu0 0.0
  %1018 = vmatpush.msra.mxu0 0.0
  %1019 = vmatpush.msra.mxu0 0.0
  %1020 = vmatpush.msra.mxu0 0.0
  %1021 = vmatpush.msra.mxu0 0.0
  %1022 = vmatpush.msra.mxu0 0.0
  %1023 = vmatpush.msra.mxu0 0.0
  %1024 = vmatpush.msra.mxu0 0.0
  %1025 = vmatpush.msra.mxu0 0.0
  %1026 = vmatpush.msra.mxu0 0.0
  %1027 = vmatpush.msra.mxu0 0.0
  %1028 = vmatpush.msra.mxu0 0.0
  %1029 = vmatpush.msra.mxu0 0.0
  %1030 = vmatpush.msra.mxu0 0.0
  %1031 = vmatpush.msra.mxu0 %v954
  %1032 = vmatmul.f32.gmra.mxu0 %v946
  %v1033 = vpop.f32.mrf.mxu0
  %v1034 = vadd.f32 0.0, %v1033
  %1035 = vdwg.mxu0
  %v1036 = vadd.f32 %v881, %v974
  %v1037 = vadd.f32 %v882, %v994
  %v1038 = vadd.f32 %v883, %v1014
  %v1039 = vadd.f32 %v884, %v1034
  %v1040 = vld [vmem:[%s0] sm:$0x77]
  %v1041 = vld [vmem:[%s0 + $0x8] sm:$0x77]
  %v1042 = vld [vmem:[%s0 + $0x10] sm:$0x7]
  %s1043 = scalar_lea.vmem %s2, 7
  %v1044 = vld [vmem:[%s1043] ss:$8 sm:$0xf]
  %v1046 = vperm.slane %v1044, 0
  %v1047 = vperm.slane %v1044, 1
  %v1048 = vperm.slane %v1044, 2
  %v1049 = vperm.slane %v1044, 3
  %v1050 = vrot.slane %v1047, 4
  %v1051 = vrot.slane %v1049, 4
  %v1052 = vsel %vm33, %v1046, %v1050
  %v1053 = vsel %vm33, %v1048, %v1051
  %1054 = vrot.lane.b32.xlu0 %v1052, 33
  %v1055 = vpop.permute.xlu0 %1054
  %1056 = vrot.lane.b32.xlu0 %v1053, 33
  %v1057 = vpop.permute.xlu0 %1056
  %v1058 = vrot.slane %v1055, 4
  %v1059 = vrot.slane %v1057, 4
  %vm1060 = vcmask 269312
  %v1061 = vsel %vm1060, %v1058, %v1055
  %v1062 = vsel %vm33, %v1058, %v1059
  %v1063 = vsel %vm1060, %v1062, %v1057
  %v1067 = vmul.f32 %v1040, %v1061
  %v1068 = vmul.f32 %v1041, %v1063
  %v1069 = vmul.f32 %v1042, %v1059
  %s1070 = scalar_lea.vmem %s1, 28
  %v1071 = vld [vmem:[%s1070] sm:$0xf]
  %1075 = vst [vmem:[#allocation1] ss:$2 sm:$0xff] %v1067
  %s1076 = scalar_lea.vmem [#allocation1], 16
  %1077 = vst [vmem:[%s1076] ss:$2 sm:$0xff] %v1068
  %s1078 = scalar_lea.vmem [#allocation1], 32
  %1079 = vst [vmem:[%s1078] ss:$2 sm:$0xff] %v1069
  %v1080 = vld.sshfl [vmem:[#allocation1] sm:$0xff pattern:$0x75316420]
  %v1081 = vld.sshfl [vmem:[#allocation1 + $0x8] sm:$0xff pattern:$0x75316420]
  %v1082 = vld.sshfl [vmem:[#allocation1 + $0x10] sm:$0xff pattern:$0x75316420]
  %v1083 = vld.sshfl [vmem:[#allocation1 + $0x18] sm:$0xff pattern:$0x75316420]
  %v1084 = vld.sshfl [vmem:[#allocation1 + $0x20] sm:$0xff pattern:$0x75316420]
  %1085 = vrot.lane.b32.xlu0 %v1080, 95
  %v1086 = vpop.permute.xlu0 %1085
  %1087 = vrot.lane.b32.xlu0 %v1081, 95
  %v1088 = vpop.permute.xlu0 %1087
  %1089 = vrot.lane.b32.xlu0 %v1082, 95
  %v1090 = vpop.permute.xlu0 %1089
  %1091 = vrot.lane.b32.xlu0 %v1083, 95
  %v1092 = vpop.permute.xlu0 %1091
  %1093 = vrot.lane.b32.xlu0 %v1084, 95
  %v1094 = vpop.permute.xlu0 %1093
  %vm1095 = vcmask 777216
  %v1096 = vsel %vm1095, %v1086, %v1088
  %v1097 = vsel %vm1095, %v1088, %v1090
  %v1098 = vsel %vm1095, %v1090, %v1092
  %v1099 = vsel %vm1095, %v1092, %v1094
  %v1101 = vsel %vm99, %v1071, 0
  %v1103 = vsel %vm103, %v1096, 0
  %v1105 = vsel %vm103, %v1097, 0
  %v1107 = vsel %vm103, %v1098, 0
  %v1109 = vsel %vm103, %v1099, 0
  %1111 = vmatpush.msra.mxu0 0.0
  %1112 = vmatpush.msra.mxu0 0.0
  %1113 = vmatpush.msra.mxu0 0.0
  %1114 = vmatpush.msra.mxu0 0.0
  %1115 = vmatpush.msra.mxu0 0.0
  %1116 = vmatpush.msra.mxu0 0.0
  %1117 = vmatpush.msra.mxu0 0.0
  %1118 = vmatpush.msra.mxu0 0.0
  %1119 = vmatpush.msra.mxu0 0.0
  %1120 = vmatpush.msra.mxu0 0.0
  %1121 = vmatpush.msra.mxu0 0.0
  %1122 = vmatpush.msra.mxu0 0.0
  %1123 = vmatpush.msra.mxu0 0.0
  %1124 = vmatpush.msra.mxu0 0.0
  %1125 = vmatpush.msra.mxu0 0.0
  %1126 = vmatpush.msra.mxu0 %v1103
  %1127 = vmatmul.f32.gmra.mxu0 %v1101
  %v1128 = vpop.f32.mrf.mxu0
  %v1129 = vadd.f32 0.0, %v1128
  %1130 = vdwg.mxu0
  %1131 = vmatpush.msra.mxu0 0.0
  %1132 = vmatpush.msra.mxu0 0.0
  %1133 = vmatpush.msra.mxu0 0.0
  %1134 = vmatpush.msra.mxu0 0.0
  %1135 = vmatpush.msra.mxu0 0.0
  %1136 = vmatpush.msra.mxu0 0.0
  %1137 = vmatpush.msra.mxu0 0.0
  %1138 = vmatpush.msra.mxu0 0.0
  %1139 = vmatpush.msra.mxu0 0.0
  %1140 = vmatpush.msra.mxu0 0.0
  %1141 = vmatpush.msra.mxu0 0.0
  %1142 = vmatpush.msra.mxu0 0.0
  %1143 = vmatpush.msra.mxu0 0.0
  %1144 = vmatpush.msra.mxu0 0.0
  %1145 = vmatpush.msra.mxu0 0.0
  %1146 = vmatpush.msra.mxu0 %v1105
  %1147 = vmatmul.f32.gmra.mxu0 %v1101
  %v1148 = vpop.f32.mrf.mxu0
  %v1149 = vadd.f32 0.0, %v1148
  %1150 = vdwg.mxu0
  %1151 = vmatpush.msra.mxu0 0.0
  %1152 = vmatpush.msra.mxu0 0.0
  %1153 = vmatpush.msra.mxu0 0.0
  %1154 = vmatpush.msra.mxu0 0.0
  %1155 = vmatpush.msra.mxu0 0.0
  %1156 = vmatpush.msra.mxu0 0.0
  %1157 = vmatpush.msra.mxu0 0.0
  %1158 = vmatpush.msra.mxu0 0.0
  %1159 = vmatpush.msra.mxu0 0.0
  %1160 = vmatpush.msra.mxu0 0.0
  %1161 = vmatpush.msra.mxu0 0.0
  %1162 = vmatpush.msra.mxu0 0.0
  %1163 = vmatpush.msra.mxu0 0.0
  %1164 = vmatpush.msra.mxu0 0.0
  %1165 = vmatpush.msra.mxu0 0.0
  %1166 = vmatpush.msra.mxu0 %v1107
  %1167 = vmatmul.f32.gmra.mxu0 %v1101
  %v1168 = vpop.f32.mrf.mxu0
  %v1169 = vadd.f32 0.0, %v1168
  %1170 = vdwg.mxu0
  %1171 = vmatpush.msra.mxu0 0.0
  %1172 = vmatpush.msra.mxu0 0.0
  %1173 = vmatpush.msra.mxu0 0.0
  %1174 = vmatpush.msra.mxu0 0.0
  %1175 = vmatpush.msra.mxu0 0.0
  %1176 = vmatpush.msra.mxu0 0.0
  %1177 = vmatpush.msra.mxu0 0.0
  %1178 = vmatpush.msra.mxu0 0.0
  %1179 = vmatpush.msra.mxu0 0.0
  %1180 = vmatpush.msra.mxu0 0.0
  %1181 = vmatpush.msra.mxu0 0.0
  %1182 = vmatpush.msra.mxu0 0.0
  %1183 = vmatpush.msra.mxu0 0.0
  %1184 = vmatpush.msra.mxu0 0.0
  %1185 = vmatpush.msra.mxu0 0.0
  %1186 = vmatpush.msra.mxu0 %v1109
  %1187 = vmatmul.f32.gmra.mxu0 %v1101
  %v1188 = vpop.f32.mrf.mxu0
  %v1189 = vadd.f32 0.0, %v1188
  %1190 = vdwg.mxu0
  %v1191 = vadd.f32 %v1036, %v1129
  %v1192 = vadd.f32 %v1037, %v1149
  %v1193 = vadd.f32 %v1038, %v1169
  %v1194 = vadd.f32 %v1039, %v1189
  %v1195 = vld [vmem:[%s0] sm:$0x77]
  %v1196 = vld [vmem:[%s0 + $0x8] sm:$0x77]
  %v1197 = vld [vmem:[%s0 + $0x10] sm:$0x7]
  %s1198 = scalar_lea.vmem %s2, 32
  %v1199 = vld [vmem:[%s1198] ss:$8 sm:$0xf]
  %v1201 = vperm.slane %v1199, 0
  %v1202 = vperm.slane %v1199, 1
  %v1203 = vperm.slane %v1199, 2
  %v1204 = vperm.slane %v1199, 3
  %v1205 = vrot.slane %v1202, 4
  %v1206 = vrot.slane %v1204, 4
  %v1207 = vsel %vm33, %v1201, %v1205
  %v1208 = vsel %vm33, %v1203, %v1206
  %1209 = vrot.lane.b32.xlu0 %v1207, 34
  %v1210 = vpop.permute.xlu0 %1209
  %1211 = vrot.lane.b32.xlu0 %v1208, 34
  %v1212 = vpop.permute.xlu0 %1211
  %v1213 = vrot.slane %v1210, 4
  %v1214 = vrot.slane %v1212, 4
  %vm1215 = vcmask 277504
  %v1216 = vsel %vm1215, %v1213, %v1210
  %v1217 = vsel %vm33, %v1213, %v1214
  %v1218 = vsel %vm1215, %v1217, %v1212
  %v1222 = vmul.f32 %v1195, %v1216
  %v1223 = vmul.f32 %v1196, %v1218
  %v1224 = vmul.f32 %v1197, %v1214
  %s1225 = scalar_lea.vmem %s1, 32
  %v1226 = vld [vmem:[%s1225] sm:$0xf]
  %1230 = vst [vmem:[#allocation1] ss:$2 sm:$0xff] %v1222
  %s1231 = scalar_lea.vmem [#allocation1], 16
  %1232 = vst [vmem:[%s1231] ss:$2 sm:$0xff] %v1223
  %s1233 = scalar_lea.vmem [#allocation1], 32
  %1234 = vst [vmem:[%s1233] ss:$2 sm:$0xff] %v1224
  %v1235 = vld.sshfl [vmem:[#allocation1] sm:$0xff pattern:$0x75316420]
  %v1236 = vld.sshfl [vmem:[#allocation1 + $0x8] sm:$0xff pattern:$0x75316420]
  %v1237 = vld.sshfl [vmem:[#allocation1 + $0x10] sm:$0xff pattern:$0x75316420]
  %v1238 = vld.sshfl [vmem:[#allocation1 + $0x18] sm:$0xff pattern:$0x75316420]
  %v1239 = vld.sshfl [vmem:[#allocation1 + $0x20] sm:$0xff pattern:$0x75316420]
  %1240 = vrot.lane.b32.xlu0 %v1235, 94
  %v1241 = vpop.permute.xlu0 %1240
  %1242 = vrot.lane.b32.xlu0 %v1236, 94
  %v1243 = vpop.permute.xlu0 %1242
  %1244 = vrot.lane.b32.xlu0 %v1237, 94
  %v1245 = vpop.permute.xlu0 %1244
  %1246 = vrot.lane.b32.xlu0 %v1238, 94
  %v1247 = vpop.permute.xlu0 %1246
  %1248 = vrot.lane.b32.xlu0 %v1239, 94
  %v1249 = vpop.permute.xlu0 %1248
  %vm1250 = vcmask 769024
  %v1251 = vsel %vm1250, %v1241, %v1243
  %v1252 = vsel %vm1250, %v1243, %v1245
  %v1253 = vsel %vm1250, %v1245, %v1247
  %v1254 = vsel %vm1250, %v1247, %v1249
  %v1256 = vsel %vm99, %v1226, 0
  %v1258 = vsel %vm103, %v1251, 0
  %v1260 = vsel %vm103, %v1252, 0
  %v1262 = vsel %vm103, %v1253, 0
  %v1264 = vsel %vm103, %v1254, 0
  %1266 = vmatpush.msra.mxu0 0.0
  %1267 = vmatpush.msra.mxu0 0.0
  %1268 = vmatpush.msra.mxu0 0.0
  %1269 = vmatpush.msra.mxu0 0.0
  %1270 = vmatpush.msra.mxu0 0.0
  %1271 = vmatpush.msra.mxu0 0.0
  %1272 = vmatpush.msra.mxu0 0.0
  %1273 = vmatpush.msra.mxu0 0.0
  %1274 = vmatpush.msra.mxu0 0.0
  %1275 = vmatpush.msra.mxu0 0.0
  %1276 = vmatpush.msra.mxu0 0.0
  %1277 = vmatpush.msra.mxu0 0.0
  %1278 = vmatpush.msra.mxu0 0.0
  %1279 = vmatpush.msra.mxu0 0.0
  %1280 = vmatpush.msra.mxu0 0.0
  %1281 = vmatpush.msra.mxu0 %v1258
  %1282 = vmatmul.f32.gmra.mxu0 %v1256
  %v1283 = vpop.f32.mrf.mxu0
  %v1284 = vadd.f32 0.0, %v1283
  %1285 = vdwg.mxu0
  %1286 = vmatpush.msra.mxu0 0.0
  %1287 = vmatpush.msra.mxu0 0.0
  %1288 = vmatpush.msra.mxu0 0.0
  %1289 = vmatpush.msra.mxu0 0.0
  %1290 = vmatpush.msra.mxu0 0.0
  %1291 = vmatpush.msra.mxu0 0.0
  %1292 = vmatpush.msra.mxu0 0.0
  %1293 = vmatpush.msra.mxu0 0.0
  %1294 = vmatpush.msra.mxu0 0.0
  %1295 = vmatpush.msra.mxu0 0.0
  %1296 = vmatpush.msra.mxu0 0.0
  %1297 = vmatpush.msra.mxu0 0.0
  %1298 = vmatpush.msra.mxu0 0.0
  %1299 = vmatpush.msra.mxu0 0.0
  %1300 = vmatpush.msra.mxu0 0.0
  %1301 = vmatpush.msra.mxu0 %v1260
  %1302 = vmatmul.f32.gmra.mxu0 %v1256
  %v1303 = vpop.f32.mrf.mxu0
  %v1304 = vadd.f32 0.0, %v1303
  %1305 = vdwg.mxu0
  %1306 = vmatpush.msra.mxu0 0.0
  %1307 = vmatpush.msra.mxu0 0.0
  %1308 = vmatpush.msra.mxu0 0.0
  %1309 = vmatpush.msra.mxu0 0.0
  %1310 = vmatpush.msra.mxu0 0.0
  %1311 = vmatpush.msra.mxu0 0.0
  %1312 = vmatpush.msra.mxu0 0.0
  %1313 = vmatpush.msra.mxu0 0.0
  %1314 = vmatpush.msra.mxu0 0.0
  %1315 = vmatpush.msra.mxu0 0.0
  %1316 = vmatpush.msra.mxu0 0.0
  %1317 = vmatpush.msra.mxu0 0.0
  %1318 = vmatpush.msra.mxu0 0.0
  %1319 = vmatpush.msra.mxu0 0.0
  %1320 = vmatpush.msra.mxu0 0.0
  %1321 = vmatpush.msra.mxu0 %v1262
  %1322 = vmatmul.f32.gmra.mxu0 %v1256
  %v1323 = vpop.f32.mrf.mxu0
  %v1324 = vadd.f32 0.0, %v1323
  %1325 = vdwg.mxu0
  %1326 = vmatpush.msra.mxu0 0.0
  %1327 = vmatpush.msra.mxu0 0.0
  %1328 = vmatpush.msra.mxu0 0.0
  %1329 = vmatpush.msra.mxu0 0.0
  %1330 = vmatpush.msra.mxu0 0.0
  %1331 = vmatpush.msra.mxu0 0.0
  %1332 = vmatpush.msra.mxu0 0.0
  %1333 = vmatpush.msra.mxu0 0.0
  %1334 = vmatpush.msra.mxu0 0.0
  %1335 = vmatpush.msra.mxu0 0.0
  %1336 = vmatpush.msra.mxu0 0.0
  %1337 = vmatpush.msra.mxu0 0.0
  %1338 = vmatpush.msra.mxu0 0.0
  %1339 = vmatpush.msra.mxu0 0.0
  %1340 = vmatpush.msra.mxu0 0.0
  %1341 = vmatpush.msra.mxu0 %v1264
  %1342 = vmatmul.f32.gmra.mxu0 %v1256
  %v1343 = vpop.f32.mrf.mxu0
  %v1344 = vadd.f32 0.0, %v1343
  %1345 = vdwg.mxu0
  %v1346 = vadd.f32 %v1191, %v1284
  %v1347 = vadd.f32 %v1192, %v1304
  %v1348 = vadd.f32 %v1193, %v1324
  %v1349 = vadd.f32 %v1194, %v1344
  %v1350 = vsel %vm33, %v1346, 0.0
  %v1351 = vsel %vm33, %v1347, 0.0
  %v1352 = vadd.f32 %v1350, %v1351
  %v1353 = vsel %vm33, %v1348, 0.0
  %v1354 = vadd.f32 %v1352, %v1353
  %v1355 = vsel %vm33, %v1349, 0.0
  %v1356 = vadd.f32 %v1354, %v1355
  %1357 = vadd.xlane.f32.xlu0 %v1356
  %v1358 = vpop.xlane.xlu0 %1357
  %v1359 = vmul.f32 %v1358, 0.001953125
  %v1360 = vsub.f32 %v1346, %v1359
  %v1361 = vsub.f32 %v1347, %v1359
  %v1362 = vsub.f32 %v1348, %v1359
  %v1363 = vsub.f32 %v1349, %v1359
  %v1364 = vmul.f32 %v1360, %v1360
  %v1365 = vmul.f32 %v1361, %v1361
  %v1366 = vmul.f32 %v1362, %v1362
  %v1367 = vmul.f32 %v1363, %v1363
  %v1368 = vsel %vm33, %v1364, 0.0
  %v1369 = vsel %vm33, %v1365, 0.0
  %v1370 = vadd.f32 %v1368, %v1369
  %v1371 = vsel %vm33, %v1366, 0.0
  %v1372 = vadd.f32 %v1370, %v1371
  %v1373 = vsel %vm33, %v1367, 0.0
  %v1374 = vadd.f32 %v1372, %v1373
  %1375 = vadd.xlane.f32.xlu0 %v1374
  %v1376 = vpop.xlane.xlu0 %1375
  %v1377 = vmul.f32 %v1376, 0.001953125
  %v1378 = vadd.f32 %v1377, 1e-05
  %v1379 = vrsqrt.pop %v1378
  %v1380 = vmul.f32 %v1379, %v1378
  %v1381 = vmul.f32 %v1380, %v1379
  %v1382 = vmul.f32 0.5, %v1381
  %v1383 = vsub.f32 1.5, %v1382
  %v1384 = vmul.f32 %v1379, %v1383
  %vm1385 = vweird.f32 %v1378
  %vm1386 = vweird.f32 %v1379
  %vm1387 = vmor %vm1385, %vm1386
  %v1388 = vsel %vm1387, %v1379, %v1384
  %v1389 = vmul.f32 %v1360, %v1388
  %v1390 = vmul.f32 %v1361, %v1388
  %v1391 = vmul.f32 %v1362, %v1388
  %v1392 = vmul.f32 %v1363, %v1388
  %v1393 = vld [vmem:[%s3] sm:$0xf]
  %1395 = vset.pattern.permute.xlu0 0
  %1396 = vperm.xlu0 %1395, %v1393
  %v1397 = vpop.permute.xlu0 %1396
  %v1399 = vmul.f32 %v1389, %v1397
  %v1400 = vmul.f32 %v1390, %v1397
  %v1401 = vmul.f32 %v1391, %v1397
  %v1402 = vmul.f32 %v1392, %v1397
  %v1403 = vld [vmem:[%s4] sm:$0xf]
  %1405 = vset.pattern.permute.xlu0 0
  %1406 = vperm.xlu0 %1405, %v1403
  %v1407 = vpop.permute.xlu0 %1406
  %v1409 = vadd.f32 %v1399, %v1407
  %v1410 = vadd.f32 %v1400, %v1407
  %v1411 = vadd.f32 %v1401, %v1407
  %v1412 = vadd.f32 %v1402, %v1407
  %vm1413 = vcmp.ge.f32.partialorder %v1409, 0.0
  %vm1414 = vcmp.ge.f32.partialorder %v1410, 0.0
  %vm1415 = vcmp.ge.f32.partialorder %v1411, 0.0
  %vm1416 = vcmp.ge.f32.partialorder %v1412, 0.0
  %v1417 = vld [vmem:[%s5] sm:$0xf]
  %1419 = vset.pattern.permute.xlu0 0
  %1420 = vperm.xlu0 %1419, %v1417
  %v1421 = vpop.permute.xlu0 %1420
  %v1423 = vmul.f32 %v1421, %v1409
  %v1424 = vmul.f32 %v1421, %v1410
  %v1425 = vmul.f32 %v1421, %v1411
  %v1426 = vmul.f32 %v1421, %v1412
  %v1427 = vsel %vm1413, %v1409, %v1423
  %v1428 = vsel %vm1414, %v1410, %v1424
  %v1429 = vsel %vm1415, %v1411, %v1425
  %v1430 = vsel %vm1416, %v1412, %v1426
  %v1435 = vrot.slane %v1428, 4
  %v1436 = vrot.slane %v1430, 4
  %v1437 = vsel %vm33, %v1427, %v1435
  %v1438 = vsel %vm33, %v1429, %v1436
  %1441 = vst [vmem:[%s6] sm:$0xff] %v1437
  %1442 = vst [vmem:[%s6 + $0x8] sm:$0xff] %v1438
  // Predicated region
  $region26: #{_lambda_.34} parent=0 // pred_check
    _
  $region27: #{_lambda_.34} parent=0 // pred_check_branch
    %1444 = sbr.rel (0) target = $region29
  $region28: #{_lambda_.34} parent=0 // pred_region
    _
  $region29: #{_lambda_.34} parent=0 // pred_fallthru
    _
  // Predicated region
  $region30: #{_lambda_.34} parent=0 // pred_check
    _
  $region31: #{_lambda_.34} parent=0 // pred_check_branch
    %1446 = sbr.rel (0) target = $region33
  $region32: #{_lambda_.34} parent=0 // pred_region
    _
  $region33: #{_lambda_.34} parent=0 // pred_fallthru
    _

// kernel: _lambda_.47
$region0: #{_lambda_.47}
  #allocation0 [shape = 'u32[]', space=smem, size = 0x4, offset = 0x4, fixed_abs, tag = 'smem constant byte address 0x4 - core index']
  #allocation1 [shape = 'u32[72,128]{1,0:T(1,128)}', space=vmem, size = 0x9000, scoped, tag = 'internal scratch']
  %s0 = inlined_call_operand.vmem [shape: f32[4,42], index: 0, kind: input, shape index: {}]
  %s1 = inlined_call_operand.vmem [shape: f32[9,16,4], index: 1, kind: input, shape index: {}]
  %s2 = inlined_call_operand.vmem [shape: f32[9,32], index: 2, kind: input, shape index: {}]
  %s3 = inlined_call_operand.vmem [shape: f32[16,32], index: 3, kind: output, shape index: {}]
  %s4 = sld [smem:[#allocation0]]
  $region22: #{_lambda_.47} parent=0
    _
  %s6 = ssub.s32 1, %s4
  %s7 = scalar_select 0, %s6, %s4
  // Predicated region
  $region2: #{_lambda_.47} parent=0 // pred_check
    _
  $region3: #{_lambda_.47} parent=0 // pred_check_branch
    %9 = sbr.rel (0) target = $region5
  $region4: #{_lambda_.47} parent=0 // pred_region
    _
  $region5: #{_lambda_.47} parent=0 // pred_fallthru
    _
  // Predicated region
  $region6: #{_lambda_.47} parent=0 // pred_check
    _
  $region7: #{_lambda_.47} parent=0 // pred_check_branch
    %11 = sbr.rel (0) target = $region9
  $region8: #{_lambda_.47} parent=0 // pred_region
    _
  $region9: #{_lambda_.47} parent=0 // pred_fallthru
    _
  // Predicated region
  $region10: #{_lambda_.47} parent=0 // pred_check
    _
  $region11: #{_lambda_.47} parent=0 // pred_check_branch
    %13 = sbr.rel (0) target = $region13
  $region12: #{_lambda_.47} parent=0 // pred_region
    _
  $region13: #{_lambda_.47} parent=0 // pred_fallthru
    _
  %v14 = vld [vmem:[%s0] sm:$0xf]
  %v15 = vld [vmem:[%s2] sm:$0x1]
  %v16 = vperm.slane %v15, 0
  %v17 = vmul.f32 %v14, %v16
  %v18 = vld [vmem:[%s1] sm:$0xff]
  %v19 = vld [vmem:[%s1 + $0x8] sm:$0xff]
  %v20 = vld [vmem:[%s2 + $0x1] sm:$0x1]
  %v21 = vperm.slane %v20, 0
  %23 = vrot.lane.b32.xlu0 %v21, 1
  %v24 = vpop.permute.xlu0 %23
  %v26 = vmul.f32 %v14, %v24
  %s27 = scalar_lea.vmem %s1, 16
  %v28 = vld [vmem:[%s27] sm:$0xff]
  %v29 = vld [vmem:[%s27 + $0x8] sm:$0xff]
  %31 = vrot.lane.b32.xlu0 %v26, 127
  %v32 = vpop.permute.xlu0 %31
  %vm33 = vcmask 31744
  %v35 = vsel %vm33, %v28, 0
  %v38 = vsel %vm33, %v29, 0
  %vm40 = vcmask 1043456
  %v41 = vsel %vm40, %v32, 0
  %43 = vmatpush.msra.mxu0 0.0
  %44 = vmatpush.msra.mxu0 0.0
  %45 = vmatpush.msra.mxu0 0.0
  %46 = vmatpush.msra.mxu0 0.0
  %47 = vmatpush.msra.mxu0 0.0
  %48 = vmatpush.msra.mxu0 0.0
  %49 = vmatpush.msra.mxu0 0.0
  %50 = vmatpush.msra.mxu0 0.0
  %51 = vmatpush.msra.mxu0 0.0
  %52 = vmatpush.msra.mxu0 0.0
  %53 = vmatpush.msra.mxu0 0.0
  %54 = vmatpush.msra.mxu0 0.0
  %55 = vmatpush.msra.mxu0 0.0
  %56 = vmatpush.msra.mxu0 0.0
  %57 = vmatpush.msra.mxu0 0.0
  %58 = vmatpush.msra.mxu0 %v41
  %59 = vmatmul.f32.gmra.mxu0 %v35
  %v60 = vpop.f32.mrf.mxu0
  %v61 = vadd.f32 0.0, %v60
  %62 = vmatmul.f32.gmra.mxu0 %v38
  %v63 = vpop.f32.mrf.mxu0
  %v64 = vadd.f32 0.0, %v63
  %65 = vdwg.mxu0
  %v67 = vsel %vm33, %v18, 0
  %v70 = vsel %vm33, %v19, 0
  %v73 = vsel %vm40, %v17, 0
  %75 = vmatpush.msra.mxu0 0.0
  %76 = vmatpush.msra.mxu0 0.0
  %77 = vmatpush.msra.mxu0 0.0
  %78 = vmatpush.msra.mxu0 0.0
  %79 = vmatpush.msra.mxu0 0.0
  %80 = vmatpush.msra.mxu0 0.0
  %81 = vmatpush.msra.mxu0 0.0
  %82 = vmatpush.msra.mxu0 0.0
  %83 = vmatpush.msra.mxu0 0.0
  %84 = vmatpush.msra.mxu0 0.0
  %85 = vmatpush.msra.mxu0 0.0
  %86 = vmatpush.msra.mxu0 0.0
  %87 = vmatpush.msra.mxu0 0.0
  %88 = vmatpush.msra.mxu0 0.0
  %89 = vmatpush.msra.mxu0 0.0
  %90 = vmatpush.msra.mxu0 %v73
  %91 = vmatmul.f32.gmra.mxu0 %v67
  %v92 = vpop.f32.mrf.mxu0
  %v93 = vadd.f32 %v61, %v92
  %94 = vmatmul.f32.gmra.mxu0 %v70
  %v95 = vpop.f32.mrf.mxu0
  %v96 = vadd.f32 %v64, %v95
  %97 = vdwg.mxu0
  %v98 = vld [vmem:[%s2 + $0x2] sm:$0x1]
  %v99 = vperm.slane %v98, 0
  %101 = vrot.lane.b32.xlu0 %v99, 2
  %v102 = vpop.permute.xlu0 %101
  %v104 = vmul.f32 %v14, %v102
  %s105 = scalar_lea.vmem %s1, 32
  %v106 = vld [vmem:[%s105] sm:$0xff]
  %v107 = vld [vmem:[%s105 + $0x8] sm:$0xff]
  %109 = vrot.lane.b32.xlu0 %v104, 126
  %v110 = vpop.permute.xlu0 %109
  %v112 = vsel %vm33, %v106, 0
  %v115 = vsel %vm33, %v107, 0
  %v117 = vsel %vm40, %v110, 0
  %119 = vmatpush.msra.mxu0 0.0
  %120 = vmatpush.msra.mxu0 0.0
  %121 = vmatpush.msra.mxu0 0.0
  %122 = vmatpush.msra.mxu0 0.0
  %123 = vmatpush.msra.mxu0 0.0
  %124 = vmatpush.msra.mxu0 0.0
  %125 = vmatpush.msra.mxu0 0.0
  %126 = vmatpush.msra.mxu0 0.0
  %127 = vmatpush.msra.mxu0 0.0
  %128 = vmatpush.msra.mxu0 0.0
  %129 = vmatpush.msra.mxu0 0.0
  %130 = vmatpush.msra.mxu0 0.0
  %131 = vmatpush.msra.mxu0 0.0
  %132 = vmatpush.msra.mxu0 0.0
  %133 = vmatpush.msra.mxu0 0.0
  %134 = vmatpush.msra.mxu0 %v117
  %135 = vmatmul.f32.gmra.mxu0 %v112
  %v136 = vpop.f32.mrf.mxu0
  %v137 = vadd.f32 0.0, %v136
  %138 = vmatmul.f32.gmra.mxu0 %v115
  %v139 = vpop.f32.mrf.mxu0
  %v140 = vadd.f32 0.0, %v139
  %141 = vdwg.mxu0
  %v142 = vadd.f32 %v93, %v137
  %v143 = vadd.f32 %v96, %v140
  %v144 = vld [vmem:[%s2 + $0x3] sm:$0x1]
  %v145 = vperm.slane %v144, 0
  %147 = vrot.lane.b32.xlu0 %v145, 4
  %v148 = vpop.permute.xlu0 %147
  %v150 = vmul.f32 %v14, %v148
  %s151 = scalar_lea.vmem %s1, 48
  %v152 = vld [vmem:[%s151] sm:$0xff]
  %v153 = vld [vmem:[%s151 + $0x8] sm:$0xff]
  %155 = vrot.lane.b32.xlu0 %v150, 124
  %v156 = vpop.permute.xlu0 %155
  %v158 = vsel %vm33, %v152, 0
  %v161 = vsel %vm33, %v153, 0
  %v163 = vsel %vm40, %v156, 0
  %165 = vmatpush.msra.mxu0 0.0
  %166 = vmatpush.msra.mxu0 0.0
  %167 = vmatpush.msra.mxu0 0.0
  %168 = vmatpush.msra.mxu0 0.0
  %169 = vmatpush.msra.mxu0 0.0
  %170 = vmatpush.msra.mxu0 0.0
  %171 = vmatpush.msra.mxu0 0.0
  %172 = vmatpush.msra.mxu0 0.0
  %173 = vmatpush.msra.mxu0 0.0
  %174 = vmatpush.msra.mxu0 0.0
  %175 = vmatpush.msra.mxu0 0.0
  %176 = vmatpush.msra.mxu0 0.0
  %177 = vmatpush.msra.mxu0 0.0
  %178 = vmatpush.msra.mxu0 0.0
  %179 = vmatpush.msra.mxu0 0.0
  %180 = vmatpush.msra.mxu0 %v163
  %181 = vmatmul.f32.gmra.mxu0 %v158
  %v182 = vpop.f32.mrf.mxu0
  %v183 = vadd.f32 0.0, %v182
  %184 = vmatmul.f32.gmra.mxu0 %v161
  %v185 = vpop.f32.mrf.mxu0
  %v186 = vadd.f32 0.0, %v185
  %187 = vdwg.mxu0
  %v188 = vadd.f32 %v142, %v183
  %v189 = vadd.f32 %v143, %v186
  %s190 = scalar_lea.vmem %s1, 64
  %v191 = vld [vmem:[%s190] sm:$0xff]
  %v192 = vld [vmem:[%s190 + $0x8] sm:$0xff]
  %194 = vrot.lane.b32.xlu0 %v14, 123
  %v195 = vpop.permute.xlu0 %194
  %v197 = vsel %vm33, %v191, 0
  %v200 = vsel %vm33, %v192, 0
  %v202 = vsel %vm40, %v195, 0
  %204 = vmatpush.msra.mxu0 0.0
  %205 = vmatpush.msra.mxu0 0.0
  %206 = vmatpush.msra.mxu0 0.0
  %207 = vmatpush.msra.mxu0 0.0
  %208 = vmatpush.msra.mxu0 0.0
  %209 = vmatpush.msra.mxu0 0.0
  %210 = vmatpush.msra.mxu0 0.0
  %211 = vmatpush.msra.mxu0 0.0
  %212 = vmatpush.msra.mxu0 0.0
  %213 = vmatpush.msra.mxu0 0.0
  %214 = vmatpush.msra.mxu0 0.0
  %215 = vmatpush.msra.mxu0 0.0
  %216 = vmatpush.msra.mxu0 0.0
  %217 = vmatpush.msra.mxu0 0.0
  %218 = vmatpush.msra.mxu0 0.0
  %219 = vmatpush.msra.mxu0 %v202
  %220 = vmatmul.f32.gmra.mxu0 %v197
  %v221 = vpop.f32.mrf.mxu0
  %v222 = vadd.f32 0.0, %v221
  %223 = vmatmul.f32.gmra.mxu0 %v200
  %v224 = vpop.f32.mrf.mxu0
  %v225 = vadd.f32 0.0, %v224
  %226 = vdwg.mxu0
  %v227 = vadd.f32 %v188, %v222
  %v228 = vadd.f32 %v189, %v225
  %v229 = vld [vmem:[%s2 + $0x5] sm:$0x1]
  %v230 = vperm.slane %v229, 0
  %232 = vrot.lane.b32.xlu0 %v230, 6
  %v233 = vpop.permute.xlu0 %232
  %v235 = vmul.f32 %v14, %v233
  %s236 = scalar_lea.vmem %s1, 80
  %v237 = vld [vmem:[%s236] sm:$0xff]
  %v238 = vld [vmem:[%s236 + $0x8] sm:$0xff]
  %240 = vrot.lane.b32.xlu0 %v235, 122
  %v241 = vpop.permute.xlu0 %240
  %v243 = vsel %vm33, %v237, 0
  %v246 = vsel %vm33, %v238, 0
  %v248 = vsel %vm40, %v241, 0
  %250 = vmatpush.msra.mxu0 0.0
  %251 = vmatpush.msra.mxu0 0.0
  %252 = vmatpush.msra.mxu0 0.0
  %253 = vmatpush.msra.mxu0 0.0
  %254 = vmatpush.msra.mxu0 0.0
  %255 = vmatpush.msra.mxu0 0.0
  %256 = vmatpush.msra.mxu0 0.0
  %257 = vmatpush.msra.mxu0 0.0
  %258 = vmatpush.msra.mxu0 0.0
  %259 = vmatpush.msra.mxu0 0.0
  %260 = vmatpush.msra.mxu0 0.0
  %261 = vmatpush.msra.mxu0 0.0
  %262 = vmatpush.msra.mxu0 0.0
  %263 = vmatpush.msra.mxu0 0.0
  %264 = vmatpush.msra.mxu0 0.0
  %265 = vmatpush.msra.mxu0 %v248
  %266 = vmatmul.f32.gmra.mxu0 %v243
  %v267 = vpop.f32.mrf.mxu0
  %v268 = vadd.f32 0.0, %v267
  %269 = vmatmul.f32.gmra.mxu0 %v246
  %v270 = vpop.f32.mrf.mxu0
  %v271 = vadd.f32 0.0, %v270
  %272 = vdwg.mxu0
  %v273 = vadd.f32 %v227, %v268
  %v274 = vadd.f32 %v228, %v271
  %v275 = vld [vmem:[%s2 + $0x6] sm:$0x1]
  %v276 = vperm.slane %v275, 0
  %278 = vrot.lane.b32.xlu0 %v276, 8
  %v279 = vpop.permute.xlu0 %278
  %v281 = vmul.f32 %v14, %v279
  %s282 = scalar_lea.vmem %s1, 96
  %v283 = vld [vmem:[%s282] sm:$0xff]
  %v284 = vld [vmem:[%s282 + $0x8] sm:$0xff]
  %286 = vrot.lane.b32.xlu0 %v281, 120
  %v287 = vpop.permute.xlu0 %286
  %v289 = vsel %vm33, %v283, 0
  %v292 = vsel %vm33, %v284, 0
  %v294 = vsel %vm40, %v287, 0
  %296 = vmatpush.msra.mxu0 0.0
  %297 = vmatpush.msra.mxu0 0.0
  %298 = vmatpush.msra.mxu0 0.0
  %299 = vmatpush.msra.mxu0 0.0
  %300 = vmatpush.msra.mxu0 0.0
  %301 = vmatpush.msra.mxu0 0.0
  %302 = vmatpush.msra.mxu0 0.0
  %303 = vmatpush.msra.mxu0 0.0
  %304 = vmatpush.msra.mxu0 0.0
  %305 = vmatpush.msra.mxu0 0.0
  %306 = vmatpush.msra.mxu0 0.0
  %307 = vmatpush.msra.mxu0 0.0
  %308 = vmatpush.msra.mxu0 0.0
  %309 = vmatpush.msra.mxu0 0.0
  %310 = vmatpush.msra.mxu0 0.0
  %311 = vmatpush.msra.mxu0 %v294
  %312 = vmatmul.f32.gmra.mxu0 %v289
  %v313 = vpop.f32.mrf.mxu0
  %v314 = vadd.f32 0.0, %v313
  %315 = vmatmul.f32.gmra.mxu0 %v292
  %v316 = vpop.f32.mrf.mxu0
  %v317 = vadd.f32 0.0, %v316
  %318 = vdwg.mxu0
  %v319 = vadd.f32 %v273, %v314
  %v320 = vadd.f32 %v274, %v317
  %v321 = vld [vmem:[%s2 + $0x7] sm:$0x1]
  %v322 = vperm.slane %v321, 0
  %324 = vrot.lane.b32.xlu0 %v322, 9
  %v325 = vpop.permute.xlu0 %324
  %v327 = vmul.f32 %v14, %v325
  %s328 = scalar_lea.vmem %s1, 112
  %v329 = vld [vmem:[%s328] sm:$0xff]
  %v330 = vld [vmem:[%s328 + $0x8] sm:$0xff]
  %332 = vrot.lane.b32.xlu0 %v327, 119
  %v333 = vpop.permute.xlu0 %332
  %v335 = vsel %vm33, %v329, 0
  %v338 = vsel %vm33, %v330, 0
  %v340 = vsel %vm40, %v333, 0
  %342 = vmatpush.msra.mxu0 0.0
  %343 = vmatpush.msra.mxu0 0.0
  %344 = vmatpush.msra.mxu0 0.0
  %345 = vmatpush.msra.mxu0 0.0
  %346 = vmatpush.msra.mxu0 0.0
  %347 = vmatpush.msra.mxu0 0.0
  %348 = vmatpush.msra.mxu0 0.0
  %349 = vmatpush.msra.mxu0 0.0
  %350 = vmatpush.msra.mxu0 0.0
  %351 = vmatpush.msra.mxu0 0.0
  %352 = vmatpush.msra.mxu0 0.0
  %353 = vmatpush.msra.mxu0 0.0
  %354 = vmatpush.msra.mxu0 0.0
  %355 = vmatpush.msra.mxu0 0.0
  %356 = vmatpush.msra.mxu0 0.0
  %357 = vmatpush.msra.mxu0 %v340
  %358 = vmatmul.f32.gmra.mxu0 %v335
  %v359 = vpop.f32.mrf.mxu0
  %v360 = vadd.f32 0.0, %v359
  %361 = vmatmul.f32.gmra.mxu0 %v338
  %v362 = vpop.f32.mrf.mxu0
  %v363 = vadd.f32 0.0, %v362
  %364 = vdwg.mxu0
  %v365 = vadd.f32 %v319, %v360
  %v366 = vadd.f32 %v320, %v363
  %v367 = vld [vmem:[%s2 + $0x8] sm:$0x1]
  %v368 = vperm.slane %v367, 0
  %370 = vrot.lane.b32.xlu0 %v368, 10
  %v371 = vpop.permute.xlu0 %370
  %v373 = vmul.f32 %v14, %v371
  %s374 = scalar_lea.vmem %s1, 128
  %v375 = vld [vmem:[%s374] sm:$0xff]
  %v376 = vld [vmem:[%s374 + $0x8] sm:$0xff]
  %378 = vrot.lane.b32.xlu0 %v373, 118
  %v379 = vpop.permute.xlu0 %378
  %v381 = vsel %vm33, %v375, 0
  %v384 = vsel %vm33, %v376, 0
  %v386 = vsel %vm40, %v379, 0
  %388 = vmatpush.msra.mxu0 0.0
  %389 = vmatpush.msra.mxu0 0.0
  %390 = vmatpush.msra.mxu0 0.0
  %391 = vmatpush.msra.mxu0 0.0
  %392 = vmatpush.msra.mxu0 0.0
  %393 = vmatpush.msra.mxu0 0.0
  %394 = vmatpush.msra.mxu0 0.0
  %395 = vmatpush.msra.mxu0 0.0
  %396 = vmatpush.msra.mxu0 0.0
  %397 = vmatpush.msra.mxu0 0.0
  %398 = vmatpush.msra.mxu0 0.0
  %399 = vmatpush.msra.mxu0 0.0
  %400 = vmatpush.msra.mxu0 0.0
  %401 = vmatpush.msra.mxu0 0.0
  %402 = vmatpush.msra.mxu0 0.0
  %403 = vmatpush.msra.mxu0 %v386
  %404 = vmatmul.f32.gmra.mxu0 %v381
  %v405 = vpop.f32.mrf.mxu0
  %v406 = vadd.f32 0.0, %v405
  %407 = vmatmul.f32.gmra.mxu0 %v384
  %v408 = vpop.f32.mrf.mxu0
  %v409 = vadd.f32 0.0, %v408
  %410 = vdwg.mxu0
  %v411 = vadd.f32 %v365, %v406
  %v412 = vadd.f32 %v366, %v409
  %vm413 = vcmask 261120
  %414 = vst.msk [vmem:[%s3] sm:$0xff] %vm413, %v411
  %415 = vst.msk [vmem:[%s3 + $0x8] sm:$0xff] %vm413, %v412
  // Predicated region
  $region14: #{_lambda_.47} parent=0 // pred_check
    _
  $region15: #{_lambda_.47} parent=0 // pred_check_branch
    %417 = sbr.rel (0) target = $region17
  $region16: #{_lambda_.47} parent=0 // pred_region
    _
  $region17: #{_lambda_.47} parent=0 // pred_fallthru
    _
  // Predicated region
  $region18: #{_lambda_.47} parent=0 // pred_check
    _
  $region19: #{_lambda_.47} parent=0 // pred_check_branch
    %419 = sbr.rel (0) target = $region21
  $region20: #{_lambda_.47} parent=0 // pred_region
    _
  $region21: #{_lambda_.47} parent=0 // pred_fallthru
    _

// kernel: _lambda_.41
$region0: #{_lambda_.41}
  #allocation0 [shape = 'u32[]', space=smem, size = 0x4, offset = 0x4, fixed_abs, tag = 'smem constant byte address 0x4 - core index']
  #allocation1 [shape = 'u32[72,128]{1,0:T(1,128)}', space=vmem, size = 0x9000, scoped, tag = 'internal scratch']
  %s0 = inlined_call_operand.vmem [shape: f32[4,512], index: 0, kind: input, shape index: {}]
  %s1 = inlined_call_operand.vmem [shape: f32[1,4,4], index: 1, kind: input, shape index: {}]
  %s2 = inlined_call_operand.vmem [shape: f32[4,512], index: 2, kind: input, shape index: {}]
  %s3 = inlined_call_operand.vmem [shape: f32[4,1], index: 3, kind: input, shape index: {}]
  %s4 = inlined_call_operand.vmem [shape: f32[4,1], index: 4, kind: input, shape index: {}]
  %s5 = inlined_call_operand.vmem [shape: f32[4,1], index: 5, kind: input, shape index: {}]
  %s6 = inlined_call_operand.vmem [shape: f32[4,512], index: 6, kind: output, shape index: {}]
  %s7 = sld [smem:[#allocation0]]
  $region34: #{_lambda_.41} parent=0
    _
  %s9 = ssub.s32 1, %s7
  %s10 = scalar_select 0, %s9, %s7
  // Predicated region
  $region2: #{_lambda_.41} parent=0 // pred_check
    _
  $region3: #{_lambda_.41} parent=0 // pred_check_branch
    %12 = sbr.rel (0) target = $region5
  $region4: #{_lambda_.41} parent=0 // pred_region
    _
  $region5: #{_lambda_.41} parent=0 // pred_fallthru
    _
  // Predicated region
  $region6: #{_lambda_.41} parent=0 // pred_check
    _
  $region7: #{_lambda_.41} parent=0 // pred_check_branch
    %14 = sbr.rel (0) target = $region9
  $region8: #{_lambda_.41} parent=0 // pred_region
    _
  $region9: #{_lambda_.41} parent=0 // pred_fallthru
    _
  // Predicated region
  $region10: #{_lambda_.41} parent=0 // pred_check
    _
  $region11: #{_lambda_.41} parent=0 // pred_check_branch
    %16 = sbr.rel (0) target = $region13
  $region12: #{_lambda_.41} parent=0 // pred_region
    _
  $region13: #{_lambda_.41} parent=0 // pred_fallthru
    _
  // Predicated region
  $region14: #{_lambda_.41} parent=0 // pred_check
    _
  $region15: #{_lambda_.41} parent=0 // pred_check_branch
    %18 = sbr.rel (0) target = $region17
  $region16: #{_lambda_.41} parent=0 // pred_region
    _
  $region17: #{_lambda_.41} parent=0 // pred_fallthru
    _
  // Predicated region
  $region18: #{_lambda_.41} parent=0 // pred_check
    _
  $region19: #{_lambda_.41} parent=0 // pred_check_branch
    %20 = sbr.rel (0) target = $region21
  $region20: #{_lambda_.41} parent=0 // pred_region
    _
  $region21: #{_lambda_.41} parent=0 // pred_fallthru
    _
  // Predicated region
  $region22: #{_lambda_.41} parent=0 // pred_check
    _
  $region23: #{_lambda_.41} parent=0 // pred_check_branch
    %22 = sbr.rel (0) target = $region25
  $region24: #{_lambda_.41} parent=0 // pred_region
    _
  $region25: #{_lambda_.41} parent=0 // pred_fallthru
    _
  %v23 = vld [vmem:[%s0] sm:$0xff]
  %v24 = vld [vmem:[%s0 + $0x8] sm:$0xff]
  %v25 = vld [vmem:[%s1] sm:$0xf]
  %v26 = vld [vmem:[%s2] sm:$0xff]
  %v27 = vld [vmem:[%s2 + $0x8] sm:$0xff]
  %30 = vst [vmem:[#allocation1] ss:$2 sm:$0xff] %v23
  %s31 = scalar_lea.vmem [#allocation1], 16
  %32 = vst [vmem:[%s31] ss:$2 sm:$0xff] %v24
  %v33 = vld.sshfl [vmem:[#allocation1] sm:$0xff pattern:$0x75316420]
  %v34 = vld.sshfl [vmem:[#allocation1 + $0x8] sm:$0xff pattern:$0x75316420]
  %v35 = vld.sshfl [vmem:[#allocation1 + $0x10] sm:$0xff pattern:$0x75316420]
  %v36 = vld.sshfl [vmem:[#allocation1 + $0x18] sm:$0xff pattern:$0x75316420]
  %39 = vst [vmem:[#allocation1] ss:$2 sm:$0xff] %v26
  %s40 = scalar_lea.vmem [#allocation1], 16
  %41 = vst [vmem:[%s40] ss:$2 sm:$0xff] %v27
  %v42 = vld.sshfl [vmem:[#allocation1] sm:$0xff pattern:$0x75316420]
  %v43 = vld.sshfl [vmem:[#allocation1 + $0x8] sm:$0xff pattern:$0x75316420]
  %v44 = vld.sshfl [vmem:[#allocation1 + $0x10] sm:$0xff pattern:$0x75316420]
  %v45 = vld.sshfl [vmem:[#allocation1 + $0x18] sm:$0xff pattern:$0x75316420]
  %vm50 = vcmask 31744
  %v52 = vsel %vm50, %v25, 0
  %vm54 = vcmask 1043456
  %v55 = vsel %vm54, %v33, 0
  %v57 = vsel %vm54, %v34, 0
  %v59 = vsel %vm54, %v35, 0
  %v61 = vsel %vm54, %v36, 0
  %63 = vmatpush.msra.mxu0 0.0
  %64 = vmatpush.msra.mxu0 0.0
  %65 = vmatpush.msra.mxu0 0.0
  %66 = vmatpush.msra.mxu0 0.0
  %67 = vmatpush.msra.mxu0 0.0
  %68 = vmatpush.msra.mxu0 0.0
  %69 = vmatpush.msra.mxu0 0.0
  %70 = vmatpush.msra.mxu0 0.0
  %71 = vmatpush.msra.mxu0 0.0
  %72 = vmatpush.msra.mxu0 0.0
  %73 = vmatpush.msra.mxu0 0.0
  %74 = vmatpush.msra.mxu0 0.0
  %75 = vmatpush.msra.mxu0 0.0
  %76 = vmatpush.msra.mxu0 0.0
  %77 = vmatpush.msra.mxu0 0.0
  %78 = vmatpush.msra.mxu0 %v55
  %79 = vmatmul.f32.gmra.mxu0 %v52
  %v80 = vpop.f32.mrf.mxu0
  %v81 = vadd.f32 %v42, %v80
  %82 = vdwg.mxu0
  %83 = vmatpush.msra.mxu0 0.0
  %84 = vmatpush.msra.mxu0 0.0
  %85 = vmatpush.msra.mxu0 0.0
  %86 = vmatpush.msra.mxu0 0.0
  %87 = vmatpush.msra.mxu0 0.0
  %88 = vmatpush.msra.mxu0 0.0
  %89 = vmatpush.msra.mxu0 0.0
  %90 = vmatpush.msra.mxu0 0.0
  %91 = vmatpush.msra.mxu0 0.0
  %92 = vmatpush.msra.mxu0 0.0
  %93 = vmatpush.msra.mxu0 0.0
  %94 = vmatpush.msra.mxu0 0.0
  %95 = vmatpush.msra.mxu0 0.0
  %96 = vmatpush.msra.mxu0 0.0
  %97 = vmatpush.msra.mxu0 0.0
  %98 = vmatpush.msra.mxu0 %v57
  %99 = vmatmul.f32.gmra.mxu0 %v52
  %v100 = vpop.f32.mrf.mxu0
  %v101 = vadd.f32 %v43, %v100
  %102 = vdwg.mxu0
  %103 = vmatpush.msra.mxu0 0.0
  %104 = vmatpush.msra.mxu0 0.0
  %105 = vmatpush.msra.mxu0 0.0
  %106 = vmatpush.msra.mxu0 0.0
  %107 = vmatpush.msra.mxu0 0.0
  %108 = vmatpush.msra.mxu0 0.0
  %109 = vmatpush.msra.mxu0 0.0
  %110 = vmatpush.msra.mxu0 0.0
  %111 = vmatpush.msra.mxu0 0.0
  %112 = vmatpush.msra.mxu0 0.0
  %113 = vmatpush.msra.mxu0 0.0
  %114 = vmatpush.msra.mxu0 0.0
  %115 = vmatpush.msra.mxu0 0.0
  %116 = vmatpush.msra.mxu0 0.0
  %117 = vmatpush.msra.mxu0 0.0
  %118 = vmatpush.msra.mxu0 %v59
  %119 = vmatmul.f32.gmra.mxu0 %v52
  %v120 = vpop.f32.mrf.mxu0
  %v121 = vadd.f32 %v44, %v120
  %122 = vdwg.mxu0
  %123 = vmatpush.msra.mxu0 0.0
  %124 = vmatpush.msra.mxu0 0.0
  %125 = vmatpush.msra.mxu0 0.0
  %126 = vmatpush.msra.mxu0 0.0
  %127 = vmatpush.msra.mxu0 0.0
  %128 = vmatpush.msra.mxu0 0.0
  %129 = vmatpush.msra.mxu0 0.0
  %130 = vmatpush.msra.mxu0 0.0
  %131 = vmatpush.msra.mxu0 0.0
  %132 = vmatpush.msra.mxu0 0.0
  %133 = vmatpush.msra.mxu0 0.0
  %134 = vmatpush.msra.mxu0 0.0
  %135 = vmatpush.msra.mxu0 0.0
  %136 = vmatpush.msra.mxu0 0.0
  %137 = vmatpush.msra.mxu0 0.0
  %138 = vmatpush.msra.mxu0 %v61
  %139 = vmatmul.f32.gmra.mxu0 %v52
  %v140 = vpop.f32.mrf.mxu0
  %v141 = vadd.f32 %v45, %v140
  %142 = vdwg.mxu0
  %v143 = vsel %vm54, %v81, 0.0
  %v144 = vsel %vm54, %v101, 0.0
  %v145 = vadd.f32 %v143, %v144
  %v146 = vsel %vm54, %v121, 0.0
  %v147 = vadd.f32 %v145, %v146
  %v148 = vsel %vm54, %v141, 0.0
  %v149 = vadd.f32 %v147, %v148
  %150 = vadd.xlane.f32.xlu0 %v149
  %v151 = vpop.xlane.xlu0 %150
  %v152 = vmul.f32 %v151, 0.001953125
  %v153 = vsub.f32 %v81, %v152
  %v154 = vsub.f32 %v101, %v152
  %v155 = vsub.f32 %v121, %v152
  %v156 = vsub.f32 %v141, %v152
  %v157 = vmul.f32 %v153, %v153
  %v158 = vmul.f32 %v154, %v154
  %v159 = vmul.f32 %v155, %v155
  %v160 = vmul.f32 %v156, %v156
  %v161 = vsel %vm54, %v157, 0.0
  %v162 = vsel %vm54, %v158, 0.0
  %v163 = vadd.f32 %v161, %v162
  %v164 = vsel %vm54, %v159, 0.0
  %v165 = vadd.f32 %v163, %v164
  %v166 = vsel %vm54, %v160, 0.0
  %v167 = vadd.f32 %v165, %v166
  %168 = vadd.xlane.f32.xlu0 %v167
  %v169 = vpop.xlane.xlu0 %168
  %v170 = vmul.f32 %v169, 0.001953125
  %v171 = vadd.f32 %v170, 1e-05
  %v172 = vrsqrt.pop %v171
  %v173 = vmul.f32 %v172, %v171
  %v174 = vmul.f32 %v173, %v172
  %v175 = vmul.f32 0.5, %v174
  %v176 = vsub.f32 1.5, %v175
  %v177 = vmul.f32 %v172, %v176
  %vm178 = vweird.f32 %v171
  %vm179 = vweird.f32 %v172
  %vm180 = vmor %vm178, %vm179
  %v181 = vsel %vm180, %v172, %v177
  %v182 = vmul.f32 %v153, %v181
  %v183 = vmul.f32 %v154, %v181
  %v184 = vmul.f32 %v155, %v181
  %v185 = vmul.f32 %v156, %v181
  %v186 = vld [vmem:[%s3] sm:$0xf]
  %188 = vset.pattern.permute.xlu0 0
  %189 = vperm.xlu0 %188, %v186
  %v190 = vpop.permute.xlu0 %189
  %v192 = vmul.f32 %v182, %v190
  %v193 = vmul.f32 %v183, %v190
  %v194 = vmul.f32 %v184, %v190
  %v195 = vmul.f32 %v185, %v190
  %v196 = vld [vmem:[%s4] sm:$0xf]
  %198 = vset.pattern.permute.xlu0 0
  %199 = vperm.xlu0 %198, %v196
  %v200 = vpop.permute.xlu0 %199
  %v202 = vadd.f32 %v192, %v200
  %v203 = vadd.f32 %v193, %v200
  %v204 = vadd.f32 %v194, %v200
  %v205 = vadd.f32 %v195, %v200
  %vm206 = vcmp.ge.f32.partialorder %v202, 0.0
  %vm207 = vcmp.ge.f32.partialorder %v203, 0.0
  %vm208 = vcmp.ge.f32.partialorder %v204, 0.0
  %vm209 = vcmp.ge.f32.partialorder %v205, 0.0
  %v210 = vld [vmem:[%s5] sm:$0xf]
  %212 = vset.pattern.permute.xlu0 0
  %213 = vperm.xlu0 %212, %v210
  %v214 = vpop.permute.xlu0 %213
  %v216 = vmul.f32 %v214, %v202
  %v217 = vmul.f32 %v214, %v203
  %v218 = vmul.f32 %v214, %v204
  %v219 = vmul.f32 %v214, %v205
  %v220 = vsel %vm206, %v202, %v216
  %v221 = vsel %vm207, %v203, %v217
  %v222 = vsel %vm208, %v204, %v218
  %v223 = vsel %vm209, %v205, %v219
  %v228 = vrot.slane %v221, 4
  %v229 = vrot.slane %v223, 4
  %v230 = vsel %vm54, %v220, %v228
  %v231 = vsel %vm54, %v222, %v229
  %234 = vst [vmem:[%s6] sm:$0xff] %v230
  %235 = vst [vmem:[%s6 + $0x8] sm:$0xff] %v231
  // Predicated region
  $region26: #{_lambda_.41} parent=0 // pred_check
    _
  $region27: #{_lambda_.41} parent=0 // pred_check_branch
    %237 = sbr.rel (0) target = $region29
  $region28: #{_lambda_.41} parent=0 // pred_region
    _
  $region29: #{_lambda_.41} parent=0 // pred_fallthru
    _
  // Predicated region
  $region30: #{_lambda_.41} parent=0 // pred_check
    _
  $region31: #{_lambda_.41} parent=0 // pred_check_branch
    %239 = sbr.rel (0) target = $region33
  $region32: #{_lambda_.41} parent=0 // pred_region
    _
  $region33: #{_lambda_.41} parent=0 // pred_fallthru
    _

// kernel: _lambda_.50
$region0: #{_lambda_.50}
  #allocation0 [shape = 'u32[]', space=smem, size = 0x4, offset = 0x4, fixed_abs, tag = 'smem constant byte address 0x4 - core index']
  #allocation1 [shape = 'u32[72,128]{1,0:T(1,128)}', space=vmem, size = 0x9000, scoped, tag = 'internal scratch']
  %s0 = inlined_call_operand.vmem [shape: f32[8,146], index: 0, kind: input, shape index: {}]
  %s1 = inlined_call_operand.vmem [shape: f32[8,9], index: 1, kind: input, shape index: {}]
  %s2 = inlined_call_operand.vmem [shape: f32[9,128], index: 2, kind: input, shape index: {}]
  %s3 = inlined_call_operand.vmem [shape: f32[8,1], index: 3, kind: input, shape index: {}]
  %s4 = inlined_call_operand.vmem [shape: f32[8,1], index: 4, kind: input, shape index: {}]
  %s5 = inlined_call_operand.vmem [shape: f32[8,1], index: 5, kind: input, shape index: {}]
  %s6 = inlined_call_operand.vmem [shape: f32[8,128], index: 6, kind: output, shape index: {}]
  %s7 = sld [smem:[#allocation0]]
  $region34: #{_lambda_.50} parent=0
    _
  %s9 = ssub.s32 1, %s7
  %s10 = scalar_select 0, %s9, %s7
  // Predicated region
  $region2: #{_lambda_.50} parent=0 // pred_check
    _
  $region3: #{_lambda_.50} parent=0 // pred_check_branch
    %12 = sbr.rel (0) target = $region5
  $region4: #{_lambda_.50} parent=0 // pred_region
    _
  $region5: #{_lambda_.50} parent=0 // pred_fallthru
    _
  // Predicated region
  $region6: #{_lambda_.50} parent=0 // pred_check
    _
  $region7: #{_lambda_.50} parent=0 // pred_check_branch
    %14 = sbr.rel (0) target = $region9
  $region8: #{_lambda_.50} parent=0 // pred_region
    _
  $region9: #{_lambda_.50} parent=0 // pred_fallthru
    _
  // Predicated region
  $region10: #{_lambda_.50} parent=0 // pred_check
    _
  $region11: #{_lambda_.50} parent=0 // pred_check_branch
    %16 = sbr.rel (0) target = $region13
  $region12: #{_lambda_.50} parent=0 // pred_region
    _
  $region13: #{_lambda_.50} parent=0 // pred_fallthru
    _
  // Predicated region
  $region14: #{_lambda_.50} parent=0 // pred_check
    _
  $region15: #{_lambda_.50} parent=0 // pred_check_branch
    %18 = sbr.rel (0) target = $region17
  $region16: #{_lambda_.50} parent=0 // pred_region
    _
  $region17: #{_lambda_.50} parent=0 // pred_fallthru
    _
  // Predicated region
  $region18: #{_lambda_.50} parent=0 // pred_check
    _
  $region19: #{_lambda_.50} parent=0 // pred_check_branch
    %20 = sbr.rel (0) target = $region21
  $region20: #{_lambda_.50} parent=0 // pred_region
    _
  $region21: #{_lambda_.50} parent=0 // pred_fallthru
    _
  // Predicated region
  $region22: #{_lambda_.50} parent=0 // pred_check
    _
  $region23: #{_lambda_.50} parent=0 // pred_check_branch
    %22 = sbr.rel (0) target = $region25
  $region24: #{_lambda_.50} parent=0 // pred_region
    _
  $region25: #{_lambda_.50} parent=0 // pred_fallthru
    _
  %v23 = vld [vmem:[%s0] sm:$0xff]
  %v24 = vld [vmem:[%s2] sm:$0x1]
  %v25 = vperm.slane %v24, 0
  %v26 = vmul.f32 %v23, %v25
  %v27 = vld [vmem:[%s1] sm:$0xff]
  %29 = vset.pattern.permute.xlu0 0
  %30 = vperm.xlu0 %29, %v27
  %v31 = vpop.permute.xlu0 %30
  %v33 = vmul.f32 %v26, %v31
  %v34 = vadd.f32 %v33, 0.0
  %v35 = vld [vmem:[%s0] sm:$0xff]
  %v36 = vld [vmem:[%s0 + $0x8] sm:$0xff]
  %v37 = vld [vmem:[%s2 + $0x1] sm:$0x1]
  %v38 = vperm.slane %v37, 0
  %40 = vrot.lane.b32.xlu0 %v38, 1
  %v41 = vpop.permute.xlu0 %40
  %v43 = vmul.f32 %v35, %v41
  %v44 = vmul.f32 %v36, %v41
  %45 = vset.pattern.permute.xlu0 1
  %46 = vperm.xlu0 %45, %v27
  %v47 = vpop.permute.xlu0 %46
  %v49 = vmul.f32 %v43, %v47
  %v50 = vmul.f32 %v44, %v47
  %53 = vrot.lane.b32.xlu0 %v49, 127
  %v54 = vpop.permute.xlu0 %53
  %55 = vrot.lane.b32.xlu0 %v50, 127
  %v56 = vpop.permute.xlu0 %55
  %vm57 = vcmask 1039360
  %v58 = vsel %vm57, %v54, %v56
  %v60 = vadd.f32 %v34, %v58
  %v61 = vld [vmem:[%s2 + $0x2] sm:$0x1]
  %v62 = vperm.slane %v61, 0
  %64 = vrot.lane.b32.xlu0 %v62, 2
  %v65 = vpop.permute.xlu0 %64
  %v67 = vmul.f32 %v35, %v65
  %v68 = vmul.f32 %v36, %v65
  %69 = vset.pattern.permute.xlu0 2
  %70 = vperm.xlu0 %69, %v27
  %v71 = vpop.permute.xlu0 %70
  %v73 = vmul.f32 %v67, %v71
  %v74 = vmul.f32 %v68, %v71
  %77 = vrot.lane.b32.xlu0 %v73, 126
  %v78 = vpop.permute.xlu0 %77
  %79 = vrot.lane.b32.xlu0 %v74, 126
  %v80 = vpop.permute.xlu0 %79
  %vm81 = vcmask 1031168
  %v82 = vsel %vm81, %v78, %v80
  %v84 = vadd.f32 %v60, %v82
  %v85 = vld [vmem:[%s2 + $0x3] sm:$0x1]
  %v86 = vperm.slane %v85, 0
  %88 = vrot.lane.b32.xlu0 %v86, 8
  %v89 = vpop.permute.xlu0 %88
  %v91 = vmul.f32 %v35, %v89
  %v92 = vmul.f32 %v36, %v89
  %93 = vset.pattern.permute.xlu0 3
  %94 = vperm.xlu0 %93, %v27
  %v95 = vpop.permute.xlu0 %94
  %v97 = vmul.f32 %v91, %v95
  %v98 = vmul.f32 %v92, %v95
  %101 = vrot.lane.b32.xlu0 %v97, 120
  %v102 = vpop.permute.xlu0 %101
  %103 = vrot.lane.b32.xlu0 %v98, 120
  %v104 = vpop.permute.xlu0 %103
  %vm105 = vcmask 982016
  %v106 = vsel %vm105, %v102, %v104
  %v108 = vadd.f32 %v84, %v106
  %109 = vset.pattern.permute.xlu0 4
  %110 = vperm.xlu0 %109, %v27
  %v111 = vpop.permute.xlu0 %110
  %v113 = vmul.f32 %v35, %v111
  %v114 = vmul.f32 %v36, %v111
  %117 = vrot.lane.b32.xlu0 %v113, 119
  %v118 = vpop.permute.xlu0 %117
  %119 = vrot.lane.b32.xlu0 %v114, 119
  %v120 = vpop.permute.xlu0 %119
  %vm121 = vcmask 973824
  %v122 = vsel %vm121, %v118, %v120
  %v124 = vadd.f32 %v108, %v122
  %v125 = vld [vmem:[%s2 + $0x5] sm:$0x1]
  %v126 = vperm.slane %v125, 0
  %128 = vrot.lane.b32.xlu0 %v126, 10
  %v129 = vpop.permute.xlu0 %128
  %v131 = vmul.f32 %v35, %v129
  %v132 = vmul.f32 %v36, %v129
  %133 = vset.pattern.permute.xlu0 5
  %134 = vperm.xlu0 %133, %v27
  %v135 = vpop.permute.xlu0 %134
  %v137 = vmul.f32 %v131, %v135
  %v138 = vmul.f32 %v132, %v135
  %141 = vrot.lane.b32.xlu0 %v137, 118
  %v142 = vpop.permute.xlu0 %141
  %143 = vrot.lane.b32.xlu0 %v138, 118
  %v144 = vpop.permute.xlu0 %143
  %vm145 = vcmask 965632
  %v146 = vsel %vm145, %v142, %v144
  %v148 = vadd.f32 %v124, %v146
  %v149 = vld [vmem:[%s2 + $0x6] sm:$0x1]
  %v150 = vperm.slane %v149, 0
  %152 = vrot.lane.b32.xlu0 %v150, 16
  %v153 = vpop.permute.xlu0 %152
  %v155 = vmul.f32 %v35, %v153
  %v156 = vmul.f32 %v36, %v153
  %157 = vset.pattern.permute.xlu0 6
  %158 = vperm.xlu0 %157, %v27
  %v159 = vpop.permute.xlu0 %158
  %v161 = vmul.f32 %v155, %v159
  %v162 = vmul.f32 %v156, %v159
  %165 = vrot.lane.b32.xlu0 %v161, 112
  %v166 = vpop.permute.xlu0 %165
  %167 = vrot.lane.b32.xlu0 %v162, 112
  %v168 = vpop.permute.xlu0 %167
  %vm169 = vcmask 916480
  %v170 = vsel %vm169, %v166, %v168
  %v172 = vadd.f32 %v148, %v170
  %v173 = vld [vmem:[%s2 + $0x7] sm:$0x1]
  %v174 = vperm.slane %v173, 0
  %176 = vrot.lane.b32.xlu0 %v174, 17
  %v177 = vpop.permute.xlu0 %176
  %v179 = vmul.f32 %v35, %v177
  %v180 = vmul.f32 %v36, %v177
  %181 = vset.pattern.permute.xlu0 7
  %182 = vperm.xlu0 %181, %v27
  %v183 = vpop.permute.xlu0 %182
  %v185 = vmul.f32 %v179, %v183
  %v186 = vmul.f32 %v180, %v183
  %189 = vrot.lane.b32.xlu0 %v185, 111
  %v190 = vpop.permute.xlu0 %189
  %191 = vrot.lane.b32.xlu0 %v186, 111
  %v192 = vpop.permute.xlu0 %191
  %vm193 = vcmask 908288
  %v194 = vsel %vm193, %v190, %v192
  %v196 = vadd.f32 %v172, %v194
  %v197 = vld [vmem:[%s2 + $0x8] sm:$0x1]
  %v198 = vperm.slane %v197, 0
  %200 = vrot.lane.b32.xlu0 %v198, 18
  %v201 = vpop.permute.xlu0 %200
  %v203 = vmul.f32 %v35, %v201
  %v204 = vmul.f32 %v36, %v201
  %205 = vset.pattern.permute.xlu0 8
  %206 = vperm.xlu0 %205, %v27
  %v207 = vpop.permute.xlu0 %206
  %v209 = vmul.f32 %v203, %v207
  %v210 = vmul.f32 %v204, %v207
  %213 = vrot.lane.b32.xlu0 %v209, 110
  %v214 = vpop.permute.xlu0 %213
  %215 = vrot.lane.b32.xlu0 %v210, 110
  %v216 = vpop.permute.xlu0 %215
  %vm217 = vcmask 900096
  %v218 = vsel %vm217, %v214, %v216
  %v220 = vadd.f32 %v196, %v218
  %221 = vadd.xlane.f32.xlu0 %v220
  %v222 = vpop.xlane.xlu0 %221
  %v223 = vmul.f32 %v222, 0.0078125
  %v224 = vsub.f32 %v220, %v223
  %v225 = vmul.f32 %v224, %v224
  %226 = vadd.xlane.f32.xlu0 %v225
  %v227 = vpop.xlane.xlu0 %226
  %v228 = vmul.f32 %v227, 0.0078125
  %v229 = vadd.f32 %v228, 1e-05
  %v230 = vrsqrt.pop %v229
  %v231 = vmul.f32 %v230, %v229
  %v232 = vmul.f32 %v231, %v230
  %v233 = vmul.f32 0.5, %v232
  %v234 = vsub.f32 1.5, %v233
  %v235 = vmul.f32 %v230, %v234
  %vm236 = vweird.f32 %v229
  %vm237 = vweird.f32 %v230
  %vm238 = vmor %vm236, %vm237
  %v239 = vsel %vm238, %v230, %v235
  %v240 = vmul.f32 %v224, %v239
  %v241 = vld [vmem:[%s3] sm:$0xff]
  %243 = vset.pattern.permute.xlu0 0
  %244 = vperm.xlu0 %243, %v241
  %v245 = vpop.permute.xlu0 %244
  %v247 = vmul.f32 %v240, %v245
  %v248 = vld [vmem:[%s4] sm:$0xff]
  %250 = vset.pattern.permute.xlu0 0
  %251 = vperm.xlu0 %250, %v248
  %v252 = vpop.permute.xlu0 %251
  %v254 = vadd.f32 %v247, %v252
  %vm255 = vcmp.ge.f32.partialorder %v254, 0.0
  %v256 = vld [vmem:[%s5] sm:$0xff]
  %258 = vset.pattern.permute.xlu0 0
  %259 = vperm.xlu0 %258, %v256
  %v260 = vpop.permute.xlu0 %259
  %v262 = vmul.f32 %v260, %v254
  %v263 = vsel %vm255, %v254, %v262
  %264 = vst [vmem:[%s6] sm:$0xff] %v263
  // Predicated region
  $region26: #{_lambda_.50} parent=0 // pred_check
    _
  $region27: #{_lambda_.50} parent=0 // pred_check_branch
    %266 = sbr.rel (0) target = $region29
  $region28: #{_lambda_.50} parent=0 // pred_region
    _
  $region29: #{_lambda_.50} parent=0 // pred_fallthru
    _
  // Predicated region
  $region30: #{_lambda_.50} parent=0 // pred_check
    _
  $region31: #{_lambda_.50} parent=0 // pred_check_branch
    %268 = sbr.rel (0) target = $region33
  $region32: #{_lambda_.50} parent=0 // pred_region
    _
  $region33: #{_lambda_.50} parent=0 // pred_fallthru
    _

// kernel: _lambda_.48
$region0: #{_lambda_.48}
  #allocation0 [shape = 'u32[]', space=smem, size = 0x4, offset = 0x4, fixed_abs, tag = 'smem constant byte address 0x4 - core index']
  #allocation1 [shape = 'u32[72,128]{1,0:T(1,128)}', space=vmem, size = 0x9000, scoped, tag = 'internal scratch']
  %s0 = inlined_call_operand.vmem [shape: f32[4,146], index: 0, kind: input, shape index: {}]
  %s1 = inlined_call_operand.vmem [shape: f32[9,8,4], index: 1, kind: input, shape index: {}]
  %s2 = inlined_call_operand.vmem [shape: f32[9,128], index: 2, kind: input, shape index: {}]
  %s3 = inlined_call_operand.vmem [shape: f32[8,128], index: 3, kind: input, shape index: {}]
  %s4 = inlined_call_operand.vmem [shape: f32[8,1], index: 4, kind: input, shape index: {}]
  %s5 = inlined_call_operand.vmem [shape: f32[8,1], index: 5, kind: input, shape index: {}]
  %s6 = inlined_call_operand.vmem [shape: f32[8,1], index: 6, kind: input, shape index: {}]
  %s7 = inlined_call_operand.vmem [shape: f32[8,128], index: 7, kind: output, shape index: {}]
  %s8 = sld [smem:[#allocation0]]
  $region38: #{_lambda_.48} parent=0
    _
  %s10 = ssub.s32 1, %s8
  %s11 = scalar_select 0, %s10, %s8
  // Predicated region
  $region2: #{_lambda_.48} parent=0 // pred_check
    _
  $region3: #{_lambda_.48} parent=0 // pred_check_branch
    %13 = sbr.rel (0) target = $region5
  $region4: #{_lambda_.48} parent=0 // pred_region
    _
  $region5: #{_lambda_.48} parent=0 // pred_fallthru
    _
  // Predicated region
  $region6: #{_lambda_.48} parent=0 // pred_check
    _
  $region7: #{_lambda_.48} parent=0 // pred_check_branch
    %15 = sbr.rel (0) target = $region9
  $region8: #{_lambda_.48} parent=0 // pred_region
    _
  $region9: #{_lambda_.48} parent=0 // pred_fallthru
    _
  // Predicated region
  $region10: #{_lambda_.48} parent=0 // pred_check
    _
  $region11: #{_lambda_.48} parent=0 // pred_check_branch
    %17 = sbr.rel (0) target = $region13
  $region12: #{_lambda_.48} parent=0 // pred_region
    _
  $region13: #{_lambda_.48} parent=0 // pred_fallthru
    _
  // Predicated region
  $region14: #{_lambda_.48} parent=0 // pred_check
    _
  $region15: #{_lambda_.48} parent=0 // pred_check_branch
    %19 = sbr.rel (0) target = $region17
  $region16: #{_lambda_.48} parent=0 // pred_region
    _
  $region17: #{_lambda_.48} parent=0 // pred_fallthru
    _
  // Predicated region
  $region18: #{_lambda_.48} parent=0 // pred_check
    _
  $region19: #{_lambda_.48} parent=0 // pred_check_branch
    %21 = sbr.rel (0) target = $region21
  $region20: #{_lambda_.48} parent=0 // pred_region
    _
  $region21: #{_lambda_.48} parent=0 // pred_fallthru
    _
  // Predicated region
  $region22: #{_lambda_.48} parent=0 // pred_check
    _
  $region23: #{_lambda_.48} parent=0 // pred_check_branch
    %23 = sbr.rel (0) target = $region25
  $region24: #{_lambda_.48} parent=0 // pred_region
    _
  $region25: #{_lambda_.48} parent=0 // pred_fallthru
    _
  // Predicated region
  $region26: #{_lambda_.48} parent=0 // pred_check
    _
  $region27: #{_lambda_.48} parent=0 // pred_check_branch
    %25 = sbr.rel (0) target = $region29
  $region28: #{_lambda_.48} parent=0 // pred_region
    _
  $region29: #{_lambda_.48} parent=0 // pred_fallthru
    _
  %v26 = vld [vmem:[%s0] sm:$0xf]
  %v27 = vld [vmem:[%s2] sm:$0x1]
  %v28 = vperm.slane %v27, 0
  %v29 = vmul.f32 %v26, %v28
  %v30 = vld [vmem:[%s1] sm:$0xff]
  %v31 = vld [vmem:[%s0] sm:$0xff]
  %v32 = vld [vmem:[%s2 + $0x1] sm:$0x1]
  %v33 = vperm.slane %v32, 0
  %35 = vrot.lane.b32.xlu0 %v33, 1
  %v36 = vpop.permute.xlu0 %35
  %v37 = vrot.slane %v36, 4
  %vm38 = vcmask 7168
  %v39 = vsel %vm38, %v37, %v36
  %v41 = vmul.f32 %v31, %v39
  %s42 = scalar_lea.vmem %s1, 8
  %v43 = vld [vmem:[%s42] sm:$0xff]
  %45 = vst [vmem:[#allocation1] ss:$2 sm:$0xff] %v41
  %v46 = vld.sshfl [vmem:[#allocation1] sm:$0xff pattern:$0x75316420]
  %v47 = vld.sshfl [vmem:[#allocation1 + $0x8] sm:$0xff pattern:$0x75316420]
  %48 = vrot.lane.b32.xlu0 %v46, 127
  %v49 = vpop.permute.xlu0 %48
  %50 = vrot.lane.b32.xlu0 %v47, 127
  %v51 = vpop.permute.xlu0 %50
  %vm52 = vcmask 1039360
  %v53 = vsel %vm52, %v49, %v51
  %vm54 = vcmask 31744
  %v56 = vsel %vm54, %v43, 0
  %vm58 = vcmask 1043456
  %v59 = vsel %vm58, %v53, 0
  %61 = vmatpush.msra.mxu0 0.0
  %62 = vmatpush.msra.mxu0 0.0
  %63 = vmatpush.msra.mxu0 0.0
  %64 = vmatpush.msra.mxu0 0.0
  %65 = vmatpush.msra.mxu0 0.0
  %66 = vmatpush.msra.mxu0 0.0
  %67 = vmatpush.msra.mxu0 0.0
  %68 = vmatpush.msra.mxu0 0.0
  %69 = vmatpush.msra.mxu0 0.0
  %70 = vmatpush.msra.mxu0 0.0
  %71 = vmatpush.msra.mxu0 0.0
  %72 = vmatpush.msra.mxu0 0.0
  %73 = vmatpush.msra.mxu0 0.0
  %74 = vmatpush.msra.mxu0 0.0
  %75 = vmatpush.msra.mxu0 0.0
  %76 = vmatpush.msra.mxu0 %v59
  %77 = vmatmul.f32.gmra.mxu0 %v56
  %v78 = vpop.f32.mrf.mxu0
  %v79 = vadd.f32 0.0, %v78
  %80 = vdwg.mxu0
  %v82 = vsel %vm54, %v30, 0
  %v85 = vsel %vm58, %v29, 0
  %87 = vmatpush.msra.mxu0 0.0
  %88 = vmatpush.msra.mxu0 0.0
  %89 = vmatpush.msra.mxu0 0.0
  %90 = vmatpush.msra.mxu0 0.0
  %91 = vmatpush.msra.mxu0 0.0
  %92 = vmatpush.msra.mxu0 0.0
  %93 = vmatpush.msra.mxu0 0.0
  %94 = vmatpush.msra.mxu0 0.0
  %95 = vmatpush.msra.mxu0 0.0
  %96 = vmatpush.msra.mxu0 0.0
  %97 = vmatpush.msra.mxu0 0.0
  %98 = vmatpush.msra.mxu0 0.0
  %99 = vmatpush.msra.mxu0 0.0
  %100 = vmatpush.msra.mxu0 0.0
  %101 = vmatpush.msra.mxu0 0.0
  %102 = vmatpush.msra.mxu0 %v85
  %103 = vmatmul.f32.gmra.mxu0 %v82
  %v104 = vpop.f32.mrf.mxu0
  %v105 = vadd.f32 %v79, %v104
  %106 = vdwg.mxu0
  %v107 = vld [vmem:[%s0] sm:$0xff]
  %v108 = vld [vmem:[%s2 + $0x2] sm:$0x1]
  %v109 = vperm.slane %v108, 0
  %111 = vrot.lane.b32.xlu0 %v109, 2
  %v112 = vpop.permute.xlu0 %111
  %v113 = vrot.slane %v112, 4
  %vm114 = vcmask 15360
  %v115 = vsel %vm114, %v113, %v112
  %v117 = vmul.f32 %v107, %v115
  %s118 = scalar_lea.vmem %s1, 16
  %v119 = vld [vmem:[%s118] sm:$0xff]
  %121 = vst [vmem:[#allocation1] ss:$2 sm:$0xff] %v117
  %v122 = vld.sshfl [vmem:[#allocation1] sm:$0xff pattern:$0x75316420]
  %v123 = vld.sshfl [vmem:[#allocation1 + $0x8] sm:$0xff pattern:$0x75316420]
  %124 = vrot.lane.b32.xlu0 %v122, 126
  %v125 = vpop.permute.xlu0 %124
  %126 = vrot.lane.b32.xlu0 %v123, 126
  %v127 = vpop.permute.xlu0 %126
  %vm128 = vcmask 1031168
  %v129 = vsel %vm128, %v125, %v127
  %v131 = vsel %vm54, %v119, 0
  %v133 = vsel %vm58, %v129, 0
  %135 = vmatpush.msra.mxu0 0.0
  %136 = vmatpush.msra.mxu0 0.0
  %137 = vmatpush.msra.mxu0 0.0
  %138 = vmatpush.msra.mxu0 0.0
  %139 = vmatpush.msra.mxu0 0.0
  %140 = vmatpush.msra.mxu0 0.0
  %141 = vmatpush.msra.mxu0 0.0
  %142 = vmatpush.msra.mxu0 0.0
  %143 = vmatpush.msra.mxu0 0.0
  %144 = vmatpush.msra.mxu0 0.0
  %145 = vmatpush.msra.mxu0 0.0
  %146 = vmatpush.msra.mxu0 0.0
  %147 = vmatpush.msra.mxu0 0.0
  %148 = vmatpush.msra.mxu0 0.0
  %149 = vmatpush.msra.mxu0 0.0
  %150 = vmatpush.msra.mxu0 %v133
  %151 = vmatmul.f32.gmra.mxu0 %v131
  %v152 = vpop.f32.mrf.mxu0
  %v153 = vadd.f32 0.0, %v152
  %154 = vdwg.mxu0
  %v155 = vadd.f32 %v105, %v153
  %v156 = vld [vmem:[%s0] sm:$0xff]
  %v157 = vld [vmem:[%s2 + $0x3] sm:$0x1]
  %v158 = vperm.slane %v157, 0
  %160 = vrot.lane.b32.xlu0 %v158, 8
  %v161 = vpop.permute.xlu0 %160
  %v162 = vrot.slane %v161, 4
  %vm163 = vcmask 64512
  %v164 = vsel %vm163, %v162, %v161
  %v166 = vmul.f32 %v156, %v164
  %s167 = scalar_lea.vmem %s1, 24
  %v168 = vld [vmem:[%s167] sm:$0xff]
  %170 = vst [vmem:[#allocation1] ss:$2 sm:$0xff] %v166
  %v171 = vld.sshfl [vmem:[#allocation1] sm:$0xff pattern:$0x75316420]
  %v172 = vld.sshfl [vmem:[#allocation1 + $0x8] sm:$0xff pattern:$0x75316420]
  %173 = vrot.lane.b32.xlu0 %v171, 120
  %v174 = vpop.permute.xlu0 %173
  %175 = vrot.lane.b32.xlu0 %v172, 120
  %v176 = vpop.permute.xlu0 %175
  %vm177 = vcmask 982016
  %v178 = vsel %vm177, %v174, %v176
  %v180 = vsel %vm54, %v168, 0
  %v182 = vsel %vm58, %v178, 0
  %184 = vmatpush.msra.mxu0 0.0
  %185 = vmatpush.msra.mxu0 0.0
  %186 = vmatpush.msra.mxu0 0.0
  %187 = vmatpush.msra.mxu0 0.0
  %188 = vmatpush.msra.mxu0 0.0
  %189 = vmatpush.msra.mxu0 0.0
  %190 = vmatpush.msra.mxu0 0.0
  %191 = vmatpush.msra.mxu0 0.0
  %192 = vmatpush.msra.mxu0 0.0
  %193 = vmatpush.msra.mxu0 0.0
  %194 = vmatpush.msra.mxu0 0.0
  %195 = vmatpush.msra.mxu0 0.0
  %196 = vmatpush.msra.mxu0 0.0
  %197 = vmatpush.msra.mxu0 0.0
  %198 = vmatpush.msra.mxu0 0.0
  %199 = vmatpush.msra.mxu0 %v182
  %200 = vmatmul.f32.gmra.mxu0 %v180
  %v201 = vpop.f32.mrf.mxu0
  %v202 = vadd.f32 0.0, %v201
  %203 = vdwg.mxu0
  %v204 = vadd.f32 %v155, %v202
  %v205 = vld [vmem:[%s0] sm:$0xff]
  %s206 = scalar_lea.vmem %s1, 32
  %v207 = vld [vmem:[%s206] sm:$0xff]
  %209 = vst [vmem:[#allocation1] ss:$2 sm:$0xff] %v205
  %v210 = vld.sshfl [vmem:[#allocation1] sm:$0xff pattern:$0x75316420]
  %v211 = vld.sshfl [vmem:[#allocation1 + $0x8] sm:$0xff pattern:$0x75316420]
  %212 = vrot.lane.b32.xlu0 %v210, 119
  %v213 = vpop.permute.xlu0 %212
  %214 = vrot.lane.b32.xlu0 %v211, 119
  %v215 = vpop.permute.xlu0 %214
  %vm216 = vcmask 973824
  %v217 = vsel %vm216, %v213, %v215
  %v219 = vsel %vm54, %v207, 0
  %v221 = vsel %vm58, %v217, 0
  %223 = vmatpush.msra.mxu0 0.0
  %224 = vmatpush.msra.mxu0 0.0
  %225 = vmatpush.msra.mxu0 0.0
  %226 = vmatpush.msra.mxu0 0.0
  %227 = vmatpush.msra.mxu0 0.0
  %228 = vmatpush.msra.mxu0 0.0
  %229 = vmatpush.msra.mxu0 0.0
  %230 = vmatpush.msra.mxu0 0.0
  %231 = vmatpush.msra.mxu0 0.0
  %232 = vmatpush.msra.mxu0 0.0
  %233 = vmatpush.msra.mxu0 0.0
  %234 = vmatpush.msra.mxu0 0.0
  %235 = vmatpush.msra.mxu0 0.0
  %236 = vmatpush.msra.mxu0 0.0
  %237 = vmatpush.msra.mxu0 0.0
  %238 = vmatpush.msra.mxu0 %v221
  %239 = vmatmul.f32.gmra.mxu0 %v219
  %v240 = vpop.f32.mrf.mxu0
  %v241 = vadd.f32 0.0, %v240
  %242 = vdwg.mxu0
  %v243 = vadd.f32 %v204, %v241
  %v244 = vld [vmem:[%s0] sm:$0xff]
  %v245 = vld [vmem:[%s2 + $0x5] sm:$0x1]
  %v246 = vperm.slane %v245, 0
  %248 = vrot.lane.b32.xlu0 %v246, 10
  %v249 = vpop.permute.xlu0 %248
  %v250 = vrot.slane %v249, 4
  %vm251 = vcmask 80896
  %v252 = vsel %vm251, %v250, %v249
  %v254 = vmul.f32 %v244, %v252
  %s255 = scalar_lea.vmem %s1, 40
  %v256 = vld [vmem:[%s255] sm:$0xff]
  %258 = vst [vmem:[#allocation1] ss:$2 sm:$0xff] %v254
  %v259 = vld.sshfl [vmem:[#allocation1] sm:$0xff pattern:$0x75316420]
  %v260 = vld.sshfl [vmem:[#allocation1 + $0x8] sm:$0xff pattern:$0x75316420]
  %261 = vrot.lane.b32.xlu0 %v259, 118
  %v262 = vpop.permute.xlu0 %261
  %263 = vrot.lane.b32.xlu0 %v260, 118
  %v264 = vpop.permute.xlu0 %263
  %vm265 = vcmask 965632
  %v266 = vsel %vm265, %v262, %v264
  %v268 = vsel %vm54, %v256, 0
  %v270 = vsel %vm58, %v266, 0
  %272 = vmatpush.msra.mxu0 0.0
  %273 = vmatpush.msra.mxu0 0.0
  %274 = vmatpush.msra.mxu0 0.0
  %275 = vmatpush.msra.mxu0 0.0
  %276 = vmatpush.msra.mxu0 0.0
  %277 = vmatpush.msra.mxu0 0.0
  %278 = vmatpush.msra.mxu0 0.0
  %279 = vmatpush.msra.mxu0 0.0
  %280 = vmatpush.msra.mxu0 0.0
  %281 = vmatpush.msra.mxu0 0.0
  %282 = vmatpush.msra.mxu0 0.0
  %283 = vmatpush.msra.mxu0 0.0
  %284 = vmatpush.msra.mxu0 0.0
  %285 = vmatpush.msra.mxu0 0.0
  %286 = vmatpush.msra.mxu0 0.0
  %287 = vmatpush.msra.mxu0 %v270
  %288 = vmatmul.f32.gmra.mxu0 %v268
  %v289 = vpop.f32.mrf.mxu0
  %v290 = vadd.f32 0.0, %v289
  %291 = vdwg.mxu0
  %v292 = vadd.f32 %v243, %v290
  %v293 = vld [vmem:[%s0] sm:$0xff]
  %v294 = vld [vmem:[%s2 + $0x6] sm:$0x1]
  %v295 = vperm.slane %v294, 0
  %297 = vrot.lane.b32.xlu0 %v295, 16
  %v298 = vpop.permute.xlu0 %297
  %v299 = vrot.slane %v298, 4
  %vm300 = vcmask 130048
  %v301 = vsel %vm300, %v299, %v298
  %v303 = vmul.f32 %v293, %v301
  %s304 = scalar_lea.vmem %s1, 48
  %v305 = vld [vmem:[%s304] sm:$0xff]
  %307 = vst [vmem:[#allocation1] ss:$2 sm:$0xff] %v303
  %v308 = vld.sshfl [vmem:[#allocation1] sm:$0xff pattern:$0x75316420]
  %v309 = vld.sshfl [vmem:[#allocation1 + $0x8] sm:$0xff pattern:$0x75316420]
  %310 = vrot.lane.b32.xlu0 %v308, 112
  %v311 = vpop.permute.xlu0 %310
  %312 = vrot.lane.b32.xlu0 %v309, 112
  %v313 = vpop.permute.xlu0 %312
  %vm314 = vcmask 916480
  %v315 = vsel %vm314, %v311, %v313
  %v317 = vsel %vm54, %v305, 0
  %v319 = vsel %vm58, %v315, 0
  %321 = vmatpush.msra.mxu0 0.0
  %322 = vmatpush.msra.mxu0 0.0
  %323 = vmatpush.msra.mxu0 0.0
  %324 = vmatpush.msra.mxu0 0.0
  %325 = vmatpush.msra.mxu0 0.0
  %326 = vmatpush.msra.mxu0 0.0
  %327 = vmatpush.msra.mxu0 0.0
  %328 = vmatpush.msra.mxu0 0.0
  %329 = vmatpush.msra.mxu0 0.0
  %330 = vmatpush.msra.mxu0 0.0
  %331 = vmatpush.msra.mxu0 0.0
  %332 = vmatpush.msra.mxu0 0.0
  %333 = vmatpush.msra.mxu0 0.0
  %334 = vmatpush.msra.mxu0 0.0
  %335 = vmatpush.msra.mxu0 0.0
  %336 = vmatpush.msra.mxu0 %v319
  %337 = vmatmul.f32.gmra.mxu0 %v317
  %v338 = vpop.f32.mrf.mxu0
  %v339 = vadd.f32 0.0, %v338
  %340 = vdwg.mxu0
  %v341 = vadd.f32 %v292, %v339
  %v342 = vld [vmem:[%s0] sm:$0xff]
  %v343 = vld [vmem:[%s2 + $0x7] sm:$0x1]
  %v344 = vperm.slane %v343, 0
  %346 = vrot.lane.b32.xlu0 %v344, 17
  %v347 = vpop.permute.xlu0 %346
  %v348 = vrot.slane %v347, 4
  %vm349 = vcmask 138240
  %v350 = vsel %vm349, %v348, %v347
  %v352 = vmul.f32 %v342, %v350
  %s353 = scalar_lea.vmem %s1, 56
  %v354 = vld [vmem:[%s353] sm:$0xff]
  %356 = vst [vmem:[#allocation1] ss:$2 sm:$0xff] %v352
  %v357 = vld.sshfl [vmem:[#allocation1] sm:$0xff pattern:$0x75316420]
  %v358 = vld.sshfl [vmem:[#allocation1 + $0x8] sm:$0xff pattern:$0x75316420]
  %359 = vrot.lane.b32.xlu0 %v357, 111
  %v360 = vpop.permute.xlu0 %359
  %361 = vrot.lane.b32.xlu0 %v358, 111
  %v362 = vpop.permute.xlu0 %361
  %vm363 = vcmask 908288
  %v364 = vsel %vm363, %v360, %v362
  %v366 = vsel %vm54, %v354, 0
  %v368 = vsel %vm58, %v364, 0
  %370 = vmatpush.msra.mxu0 0.0
  %371 = vmatpush.msra.mxu0 0.0
  %372 = vmatpush.msra.mxu0 0.0
  %373 = vmatpush.msra.mxu0 0.0
  %374 = vmatpush.msra.mxu0 0.0
  %375 = vmatpush.msra.mxu0 0.0
  %376 = vmatpush.msra.mxu0 0.0
  %377 = vmatpush.msra.mxu0 0.0
  %378 = vmatpush.msra.mxu0 0.0
  %379 = vmatpush.msra.mxu0 0.0
  %380 = vmatpush.msra.mxu0 0.0
  %381 = vmatpush.msra.mxu0 0.0
  %382 = vmatpush.msra.mxu0 0.0
  %383 = vmatpush.msra.mxu0 0.0
  %384 = vmatpush.msra.mxu0 0.0
  %385 = vmatpush.msra.mxu0 %v368
  %386 = vmatmul.f32.gmra.mxu0 %v366
  %v387 = vpop.f32.mrf.mxu0
  %v388 = vadd.f32 0.0, %v387
  %389 = vdwg.mxu0
  %v390 = vadd.f32 %v341, %v388
  %v391 = vld [vmem:[%s0] sm:$0xff]
  %v392 = vld [vmem:[%s2 + $0x8] sm:$0x1]
  %v393 = vperm.slane %v392, 0
  %395 = vrot.lane.b32.xlu0 %v393, 18
  %v396 = vpop.permute.xlu0 %395
  %v397 = vrot.slane %v396, 4
  %vm398 = vcmask 146432
  %v399 = vsel %vm398, %v397, %v396
  %v401 = vmul.f32 %v391, %v399
  %s402 = scalar_lea.vmem %s1, 64
  %v403 = vld [vmem:[%s402] sm:$0xff]
  %405 = vst [vmem:[#allocation1] ss:$2 sm:$0xff] %v401
  %v406 = vld.sshfl [vmem:[#allocation1] sm:$0xff pattern:$0x75316420]
  %v407 = vld.sshfl [vmem:[#allocation1 + $0x8] sm:$0xff pattern:$0x75316420]
  %408 = vrot.lane.b32.xlu0 %v406, 110
  %v409 = vpop.permute.xlu0 %408
  %410 = vrot.lane.b32.xlu0 %v407, 110
  %v411 = vpop.permute.xlu0 %410
  %vm412 = vcmask 900096
  %v413 = vsel %vm412, %v409, %v411
  %v415 = vsel %vm54, %v403, 0
  %v417 = vsel %vm58, %v413, 0
  %419 = vmatpush.msra.mxu0 0.0
  %420 = vmatpush.msra.mxu0 0.0
  %421 = vmatpush.msra.mxu0 0.0
  %422 = vmatpush.msra.mxu0 0.0
  %423 = vmatpush.msra.mxu0 0.0
  %424 = vmatpush.msra.mxu0 0.0
  %425 = vmatpush.msra.mxu0 0.0
  %426 = vmatpush.msra.mxu0 0.0
  %427 = vmatpush.msra.mxu0 0.0
  %428 = vmatpush.msra.mxu0 0.0
  %429 = vmatpush.msra.mxu0 0.0
  %430 = vmatpush.msra.mxu0 0.0
  %431 = vmatpush.msra.mxu0 0.0
  %432 = vmatpush.msra.mxu0 0.0
  %433 = vmatpush.msra.mxu0 0.0
  %434 = vmatpush.msra.mxu0 %v417
  %435 = vmatmul.f32.gmra.mxu0 %v415
  %v436 = vpop.f32.mrf.mxu0
  %v437 = vadd.f32 0.0, %v436
  %438 = vdwg.mxu0
  %v439 = vadd.f32 %v390, %v437
  %v440 = vld [vmem:[%s3] sm:$0xff]
  %v441 = vadd.f32 %v439, %v440
  %442 = vadd.xlane.f32.xlu0 %v441
  %v443 = vpop.xlane.xlu0 %442
  %v444 = vmul.f32 %v443, 0.0078125
  %v445 = vsub.f32 %v441, %v444
  %v446 = vmul.f32 %v445, %v445
  %447 = vadd.xlane.f32.xlu0 %v446
  %v448 = vpop.xlane.xlu0 %447
  %v449 = vmul.f32 %v448, 0.0078125
  %v450 = vadd.f32 %v449, 1e-05
  %v451 = vrsqrt.pop %v450
  %v452 = vmul.f32 %v451, %v450
  %v453 = vmul.f32 %v452, %v451
  %v454 = vmul.f32 0.5, %v453
  %v455 = vsub.f32 1.5, %v454
  %v456 = vmul.f32 %v451, %v455
  %vm457 = vweird.f32 %v450
  %vm458 = vweird.f32 %v451
  %vm459 = vmor %vm457, %vm458
  %v460 = vsel %vm459, %v451, %v456
  %v461 = vmul.f32 %v445, %v460
  %v462 = vld [vmem:[%s4] sm:$0xff]
  %464 = vset.pattern.permute.xlu0 0
  %465 = vperm.xlu0 %464, %v462
  %v466 = vpop.permute.xlu0 %465
  %v468 = vmul.f32 %v461, %v466
  %v469 = vld [vmem:[%s5] sm:$0xff]
  %471 = vset.pattern.permute.xlu0 0
  %472 = vperm.xlu0 %471, %v469
  %v473 = vpop.permute.xlu0 %472
  %v475 = vadd.f32 %v468, %v473
  %vm476 = vcmp.ge.f32.partialorder %v475, 0.0
  %v477 = vld [vmem:[%s6] sm:$0xff]
  %479 = vset.pattern.permute.xlu0 0
  %480 = vperm.xlu0 %479, %v477
  %v481 = vpop.permute.xlu0 %480
  %v483 = vmul.f32 %v481, %v475
  %v484 = vsel %vm476, %v475, %v483
  %485 = vst [vmem:[%s7] sm:$0xff] %v484
  // Predicated region
  $region30: #{_lambda_.48} parent=0 // pred_check
    _
  $region31: #{_lambda_.48} parent=0 // pred_check_branch
    %487 = sbr.rel (0) target = $region33
  $region32: #{_lambda_.48} parent=0 // pred_region
    _
  $region33: #{_lambda_.48} parent=0 // pred_fallthru
    _
  // Predicated region
  $region34: #{_lambda_.48} parent=0 // pred_check
    _
  $region35: #{_lambda_.48} parent=0 // pred_check_branch
    %489 = sbr.rel (0) target = $region37
  $region36: #{_lambda_.48} parent=0 // pred_region
    _
  $region37: #{_lambda_.48} parent=0 // pred_fallthru
    _

// kernel: _lambda_.49
$region0: #{_lambda_.49}
  #allocation0 [shape = 'u32[]', space=smem, size = 0x4, offset = 0x4, fixed_abs, tag = 'smem constant byte address 0x4 - core index']
  #allocation1 [shape = 'u32[72,128]{1,0:T(1,128)}', space=vmem, size = 0x9000, scoped, tag = 'internal scratch']
  %s0 = inlined_call_operand.vmem [shape: f32[4,42], index: 0, kind: input, shape index: {}]
  %s1 = inlined_call_operand.vmem [shape: f32[9,8,4], index: 1, kind: input, shape index: {}]
  %s2 = inlined_call_operand.vmem [shape: f32[9,32], index: 2, kind: input, shape index: {}]
  %s3 = inlined_call_operand.vmem [shape: f32[8,32], index: 3, kind: input, shape index: {}]
  %s4 = inlined_call_operand.vmem [shape: f32[8,1], index: 4, kind: input, shape index: {}]
  %s5 = inlined_call_operand.vmem [shape: f32[8,1], index: 5, kind: input, shape index: {}]
  %s6 = inlined_call_operand.vmem [shape: f32[8,1], index: 6, kind: input, shape index: {}]
  %s7 = inlined_call_operand.vmem [shape: f32[8,32], index: 7, kind: output, shape index: {}]
  %s8 = sld [smem:[#allocation0]]
  $region38: #{_lambda_.49} parent=0
    _
  %s10 = ssub.s32 1, %s8
  %s11 = scalar_select 0, %s10, %s8
  // Predicated region
  $region2: #{_lambda_.49} parent=0 // pred_check
    _
  $region3: #{_lambda_.49} parent=0 // pred_check_branch
    %13 = sbr.rel (0) target = $region5
  $region4: #{_lambda_.49} parent=0 // pred_region
    _
  $region5: #{_lambda_.49} parent=0 // pred_fallthru
    _
  // Predicated region
  $region6: #{_lambda_.49} parent=0 // pred_check
    _
  $region7: #{_lambda_.49} parent=0 // pred_check_branch
    %15 = sbr.rel (0) target = $region9
  $region8: #{_lambda_.49} parent=0 // pred_region
    _
  $region9: #{_lambda_.49} parent=0 // pred_fallthru
    _
  // Predicated region
  $region10: #{_lambda_.49} parent=0 // pred_check
    _
  $region11: #{_lambda_.49} parent=0 // pred_check_branch
    %17 = sbr.rel (0) target = $region13
  $region12: #{_lambda_.49} parent=0 // pred_region
    _
  $region13: #{_lambda_.49} parent=0 // pred_fallthru
    _
  // Predicated region
  $region14: #{_lambda_.49} parent=0 // pred_check
    _
  $region15: #{_lambda_.49} parent=0 // pred_check_branch
    %19 = sbr.rel (0) target = $region17
  $region16: #{_lambda_.49} parent=0 // pred_region
    _
  $region17: #{_lambda_.49} parent=0 // pred_fallthru
    _
  // Predicated region
  $region18: #{_lambda_.49} parent=0 // pred_check
    _
  $region19: #{_lambda_.49} parent=0 // pred_check_branch
    %21 = sbr.rel (0) target = $region21
  $region20: #{_lambda_.49} parent=0 // pred_region
    _
  $region21: #{_lambda_.49} parent=0 // pred_fallthru
    _
  // Predicated region
  $region22: #{_lambda_.49} parent=0 // pred_check
    _
  $region23: #{_lambda_.49} parent=0 // pred_check_branch
    %23 = sbr.rel (0) target = $region25
  $region24: #{_lambda_.49} parent=0 // pred_region
    _
  $region25: #{_lambda_.49} parent=0 // pred_fallthru
    _
  // Predicated region
  $region26: #{_lambda_.49} parent=0 // pred_check
    _
  $region27: #{_lambda_.49} parent=0 // pred_check_branch
    %25 = sbr.rel (0) target = $region29
  $region28: #{_lambda_.49} parent=0 // pred_region
    _
  $region29: #{_lambda_.49} parent=0 // pred_fallthru
    _
  %v26 = vld [vmem:[%s0] sm:$0xf]
  %v27 = vld [vmem:[%s2] sm:$0x1]
  %v28 = vperm.slane %v27, 0
  %v29 = vmul.f32 %v26, %v28
  %v30 = vld [vmem:[%s1] sm:$0xff]
  %v31 = vld [vmem:[%s2 + $0x1] sm:$0x1]
  %v32 = vperm.slane %v31, 0
  %34 = vrot.lane.b32.xlu0 %v32, 1
  %v35 = vpop.permute.xlu0 %34
  %v37 = vmul.f32 %v26, %v35
  %s38 = scalar_lea.vmem %s1, 8
  %v39 = vld [vmem:[%s38] sm:$0xff]
  %41 = vrot.lane.b32.xlu0 %v37, 127
  %v42 = vpop.permute.xlu0 %41
  %vm43 = vcmask 31744
  %v45 = vsel %vm43, %v39, 0
  %vm47 = vcmask 1043456
  %v48 = vsel %vm47, %v42, 0
  %50 = vmatpush.msra.mxu0 0.0
  %51 = vmatpush.msra.mxu0 0.0
  %52 = vmatpush.msra.mxu0 0.0
  %53 = vmatpush.msra.mxu0 0.0
  %54 = vmatpush.msra.mxu0 0.0
  %55 = vmatpush.msra.mxu0 0.0
  %56 = vmatpush.msra.mxu0 0.0
  %57 = vmatpush.msra.mxu0 0.0
  %58 = vmatpush.msra.mxu0 0.0
  %59 = vmatpush.msra.mxu0 0.0
  %60 = vmatpush.msra.mxu0 0.0
  %61 = vmatpush.msra.mxu0 0.0
  %62 = vmatpush.msra.mxu0 0.0
  %63 = vmatpush.msra.mxu0 0.0
  %64 = vmatpush.msra.mxu0 0.0
  %65 = vmatpush.msra.mxu0 %v48
  %66 = vmatmul.f32.gmra.mxu0 %v45
  %v67 = vpop.f32.mrf.mxu0
  %v68 = vadd.f32 0.0, %v67
  %69 = vdwg.mxu0
  %v71 = vsel %vm43, %v30, 0
  %v74 = vsel %vm47, %v29, 0
  %76 = vmatpush.msra.mxu0 0.0
  %77 = vmatpush.msra.mxu0 0.0
  %78 = vmatpush.msra.mxu0 0.0
  %79 = vmatpush.msra.mxu0 0.0
  %80 = vmatpush.msra.mxu0 0.0
  %81 = vmatpush.msra.mxu0 0.0
  %82 = vmatpush.msra.mxu0 0.0
  %83 = vmatpush.msra.mxu0 0.0
  %84 = vmatpush.msra.mxu0 0.0
  %85 = vmatpush.msra.mxu0 0.0
  %86 = vmatpush.msra.mxu0 0.0
  %87 = vmatpush.msra.mxu0 0.0
  %88 = vmatpush.msra.mxu0 0.0
  %89 = vmatpush.msra.mxu0 0.0
  %90 = vmatpush.msra.mxu0 0.0
  %91 = vmatpush.msra.mxu0 %v74
  %92 = vmatmul.f32.gmra.mxu0 %v71
  %v93 = vpop.f32.mrf.mxu0
  %v94 = vadd.f32 %v68, %v93
  %95 = vdwg.mxu0
  %v96 = vld [vmem:[%s2 + $0x2] sm:$0x1]
  %v97 = vperm.slane %v96, 0
  %99 = vrot.lane.b32.xlu0 %v97, 2
  %v100 = vpop.permute.xlu0 %99
  %v102 = vmul.f32 %v26, %v100
  %s103 = scalar_lea.vmem %s1, 16
  %v104 = vld [vmem:[%s103] sm:$0xff]
  %106 = vrot.lane.b32.xlu0 %v102, 126
  %v107 = vpop.permute.xlu0 %106
  %v109 = vsel %vm43, %v104, 0
  %v111 = vsel %vm47, %v107, 0
  %113 = vmatpush.msra.mxu0 0.0
  %114 = vmatpush.msra.mxu0 0.0
  %115 = vmatpush.msra.mxu0 0.0
  %116 = vmatpush.msra.mxu0 0.0
  %117 = vmatpush.msra.mxu0 0.0
  %118 = vmatpush.msra.mxu0 0.0
  %119 = vmatpush.msra.mxu0 0.0
  %120 = vmatpush.msra.mxu0 0.0
  %121 = vmatpush.msra.mxu0 0.0
  %122 = vmatpush.msra.mxu0 0.0
  %123 = vmatpush.msra.mxu0 0.0
  %124 = vmatpush.msra.mxu0 0.0
  %125 = vmatpush.msra.mxu0 0.0
  %126 = vmatpush.msra.mxu0 0.0
  %127 = vmatpush.msra.mxu0 0.0
  %128 = vmatpush.msra.mxu0 %v111
  %129 = vmatmul.f32.gmra.mxu0 %v109
  %v130 = vpop.f32.mrf.mxu0
  %v131 = vadd.f32 0.0, %v130
  %132 = vdwg.mxu0
  %v133 = vadd.f32 %v94, %v131
  %v134 = vld [vmem:[%s2 + $0x3] sm:$0x1]
  %v135 = vperm.slane %v134, 0
  %137 = vrot.lane.b32.xlu0 %v135, 4
  %v138 = vpop.permute.xlu0 %137
  %v140 = vmul.f32 %v26, %v138
  %s141 = scalar_lea.vmem %s1, 24
  %v142 = vld [vmem:[%s141] sm:$0xff]
  %144 = vrot.lane.b32.xlu0 %v140, 124
  %v145 = vpop.permute.xlu0 %144
  %v147 = vsel %vm43, %v142, 0
  %v149 = vsel %vm47, %v145, 0
  %151 = vmatpush.msra.mxu0 0.0
  %152 = vmatpush.msra.mxu0 0.0
  %153 = vmatpush.msra.mxu0 0.0
  %154 = vmatpush.msra.mxu0 0.0
  %155 = vmatpush.msra.mxu0 0.0
  %156 = vmatpush.msra.mxu0 0.0
  %157 = vmatpush.msra.mxu0 0.0
  %158 = vmatpush.msra.mxu0 0.0
  %159 = vmatpush.msra.mxu0 0.0
  %160 = vmatpush.msra.mxu0 0.0
  %161 = vmatpush.msra.mxu0 0.0
  %162 = vmatpush.msra.mxu0 0.0
  %163 = vmatpush.msra.mxu0 0.0
  %164 = vmatpush.msra.mxu0 0.0
  %165 = vmatpush.msra.mxu0 0.0
  %166 = vmatpush.msra.mxu0 %v149
  %167 = vmatmul.f32.gmra.mxu0 %v147
  %v168 = vpop.f32.mrf.mxu0
  %v169 = vadd.f32 0.0, %v168
  %170 = vdwg.mxu0
  %v171 = vadd.f32 %v133, %v169
  %s172 = scalar_lea.vmem %s1, 32
  %v173 = vld [vmem:[%s172] sm:$0xff]
  %175 = vrot.lane.b32.xlu0 %v26, 123
  %v176 = vpop.permute.xlu0 %175
  %v178 = vsel %vm43, %v173, 0
  %v180 = vsel %vm47, %v176, 0
  %182 = vmatpush.msra.mxu0 0.0
  %183 = vmatpush.msra.mxu0 0.0
  %184 = vmatpush.msra.mxu0 0.0
  %185 = vmatpush.msra.mxu0 0.0
  %186 = vmatpush.msra.mxu0 0.0
  %187 = vmatpush.msra.mxu0 0.0
  %188 = vmatpush.msra.mxu0 0.0
  %189 = vmatpush.msra.mxu0 0.0
  %190 = vmatpush.msra.mxu0 0.0
  %191 = vmatpush.msra.mxu0 0.0
  %192 = vmatpush.msra.mxu0 0.0
  %193 = vmatpush.msra.mxu0 0.0
  %194 = vmatpush.msra.mxu0 0.0
  %195 = vmatpush.msra.mxu0 0.0
  %196 = vmatpush.msra.mxu0 0.0
  %197 = vmatpush.msra.mxu0 %v180
  %198 = vmatmul.f32.gmra.mxu0 %v178
  %v199 = vpop.f32.mrf.mxu0
  %v200 = vadd.f32 0.0, %v199
  %201 = vdwg.mxu0
  %v202 = vadd.f32 %v171, %v200
  %v203 = vld [vmem:[%s2 + $0x5] sm:$0x1]
  %v204 = vperm.slane %v203, 0
  %206 = vrot.lane.b32.xlu0 %v204, 6
  %v207 = vpop.permute.xlu0 %206
  %v209 = vmul.f32 %v26, %v207
  %s210 = scalar_lea.vmem %s1, 40
  %v211 = vld [vmem:[%s210] sm:$0xff]
  %213 = vrot.lane.b32.xlu0 %v209, 122
  %v214 = vpop.permute.xlu0 %213
  %v216 = vsel %vm43, %v211, 0
  %v218 = vsel %vm47, %v214, 0
  %220 = vmatpush.msra.mxu0 0.0
  %221 = vmatpush.msra.mxu0 0.0
  %222 = vmatpush.msra.mxu0 0.0
  %223 = vmatpush.msra.mxu0 0.0
  %224 = vmatpush.msra.mxu0 0.0
  %225 = vmatpush.msra.mxu0 0.0
  %226 = vmatpush.msra.mxu0 0.0
  %227 = vmatpush.msra.mxu0 0.0
  %228 = vmatpush.msra.mxu0 0.0
  %229 = vmatpush.msra.mxu0 0.0
  %230 = vmatpush.msra.mxu0 0.0
  %231 = vmatpush.msra.mxu0 0.0
  %232 = vmatpush.msra.mxu0 0.0
  %233 = vmatpush.msra.mxu0 0.0
  %234 = vmatpush.msra.mxu0 0.0
  %235 = vmatpush.msra.mxu0 %v218
  %236 = vmatmul.f32.gmra.mxu0 %v216
  %v237 = vpop.f32.mrf.mxu0
  %v238 = vadd.f32 0.0, %v237
  %239 = vdwg.mxu0
  %v240 = vadd.f32 %v202, %v238
  %v241 = vld [vmem:[%s2 + $0x6] sm:$0x1]
  %v242 = vperm.slane %v241, 0
  %244 = vrot.lane.b32.xlu0 %v242, 8
  %v245 = vpop.permute.xlu0 %244
  %v247 = vmul.f32 %v26, %v245
  %s248 = scalar_lea.vmem %s1, 48
  %v249 = vld [vmem:[%s248] sm:$0xff]
  %251 = vrot.lane.b32.xlu0 %v247, 120
  %v252 = vpop.permute.xlu0 %251
  %v254 = vsel %vm43, %v249, 0
  %v256 = vsel %vm47, %v252, 0
  %258 = vmatpush.msra.mxu0 0.0
  %259 = vmatpush.msra.mxu0 0.0
  %260 = vmatpush.msra.mxu0 0.0
  %261 = vmatpush.msra.mxu0 0.0
  %262 = vmatpush.msra.mxu0 0.0
  %263 = vmatpush.msra.mxu0 0.0
  %264 = vmatpush.msra.mxu0 0.0
  %265 = vmatpush.msra.mxu0 0.0
  %266 = vmatpush.msra.mxu0 0.0
  %267 = vmatpush.msra.mxu0 0.0
  %268 = vmatpush.msra.mxu0 0.0
  %269 = vmatpush.msra.mxu0 0.0
  %270 = vmatpush.msra.mxu0 0.0
  %271 = vmatpush.msra.mxu0 0.0
  %272 = vmatpush.msra.mxu0 0.0
  %273 = vmatpush.msra.mxu0 %v256
  %274 = vmatmul.f32.gmra.mxu0 %v254
  %v275 = vpop.f32.mrf.mxu0
  %v276 = vadd.f32 0.0, %v275
  %277 = vdwg.mxu0
  %v278 = vadd.f32 %v240, %v276
  %v279 = vld [vmem:[%s2 + $0x7] sm:$0x1]
  %v280 = vperm.slane %v279, 0
  %282 = vrot.lane.b32.xlu0 %v280, 9
  %v283 = vpop.permute.xlu0 %282
  %v285 = vmul.f32 %v26, %v283
  %s286 = scalar_lea.vmem %s1, 56
  %v287 = vld [vmem:[%s286] sm:$0xff]
  %289 = vrot.lane.b32.xlu0 %v285, 119
  %v290 = vpop.permute.xlu0 %289
  %v292 = vsel %vm43, %v287, 0
  %v294 = vsel %vm47, %v290, 0
  %296 = vmatpush.msra.mxu0 0.0
  %297 = vmatpush.msra.mxu0 0.0
  %298 = vmatpush.msra.mxu0 0.0
  %299 = vmatpush.msra.mxu0 0.0
  %300 = vmatpush.msra.mxu0 0.0
  %301 = vmatpush.msra.mxu0 0.0
  %302 = vmatpush.msra.mxu0 0.0
  %303 = vmatpush.msra.mxu0 0.0
  %304 = vmatpush.msra.mxu0 0.0
  %305 = vmatpush.msra.mxu0 0.0
  %306 = vmatpush.msra.mxu0 0.0
  %307 = vmatpush.msra.mxu0 0.0
  %308 = vmatpush.msra.mxu0 0.0
  %309 = vmatpush.msra.mxu0 0.0
  %310 = vmatpush.msra.mxu0 0.0
  %311 = vmatpush.msra.mxu0 %v294
  %312 = vmatmul.f32.gmra.mxu0 %v292
  %v313 = vpop.f32.mrf.mxu0
  %v314 = vadd.f32 0.0, %v313
  %315 = vdwg.mxu0
  %v316 = vadd.f32 %v278, %v314
  %v317 = vld [vmem:[%s2 + $0x8] sm:$0x1]
  %v318 = vperm.slane %v317, 0
  %320 = vrot.lane.b32.xlu0 %v318, 10
  %v321 = vpop.permute.xlu0 %320
  %v323 = vmul.f32 %v26, %v321
  %s324 = scalar_lea.vmem %s1, 64
  %v325 = vld [vmem:[%s324] sm:$0xff]
  %327 = vrot.lane.b32.xlu0 %v323, 118
  %v328 = vpop.permute.xlu0 %327
  %v330 = vsel %vm43, %v325, 0
  %v332 = vsel %vm47, %v328, 0
  %334 = vmatpush.msra.mxu0 0.0
  %335 = vmatpush.msra.mxu0 0.0
  %336 = vmatpush.msra.mxu0 0.0
  %337 = vmatpush.msra.mxu0 0.0
  %338 = vmatpush.msra.mxu0 0.0
  %339 = vmatpush.msra.mxu0 0.0
  %340 = vmatpush.msra.mxu0 0.0
  %341 = vmatpush.msra.mxu0 0.0
  %342 = vmatpush.msra.mxu0 0.0
  %343 = vmatpush.msra.mxu0 0.0
  %344 = vmatpush.msra.mxu0 0.0
  %345 = vmatpush.msra.mxu0 0.0
  %346 = vmatpush.msra.mxu0 0.0
  %347 = vmatpush.msra.mxu0 0.0
  %348 = vmatpush.msra.mxu0 0.0
  %349 = vmatpush.msra.mxu0 %v332
  %350 = vmatmul.f32.gmra.mxu0 %v330
  %v351 = vpop.f32.mrf.mxu0
  %v352 = vadd.f32 0.0, %v351
  %353 = vdwg.mxu0
  %v354 = vadd.f32 %v316, %v352
  %v355 = vld [vmem:[%s3] sm:$0xff]
  %v356 = vadd.f32 %v354, %v355
  %vm357 = vcmask 261120
  %v358 = vsel %vm357, %v356, 0.0
  %359 = vadd.xlane.f32.xlu0 %v358
  %v360 = vpop.xlane.xlu0 %359
  %v361 = vmul.f32 %v360, 0.03125
  %v362 = vsub.f32 %v356, %v361
  %v363 = vmul.f32 %v362, %v362
  %v364 = vsel %vm357, %v363, 0.0
  %365 = vadd.xlane.f32.xlu0 %v364
  %v366 = vpop.xlane.xlu0 %365
  %v367 = vmul.f32 %v366, 0.03125
  %v368 = vadd.f32 %v367, 1e-05
  %v369 = vrsqrt.pop %v368
  %v370 = vmul.f32 %v369, %v368
  %v371 = vmul.f32 %v370, %v369
  %v372 = vmul.f32 0.5, %v371
  %v373 = vsub.f32 1.5, %v372
  %v374 = vmul.f32 %v369, %v373
  %vm375 = vweird.f32 %v368
  %vm376 = vweird.f32 %v369
  %vm377 = vmor %vm375, %vm376
  %v378 = vsel %vm377, %v369, %v374
  %v379 = vmul.f32 %v362, %v378
  %v380 = vld [vmem:[%s4] sm:$0xff]
  %382 = vset.pattern.permute.xlu0 0
  %383 = vperm.xlu0 %382, %v380
  %v384 = vpop.permute.xlu0 %383
  %v386 = vmul.f32 %v379, %v384
  %v387 = vld [vmem:[%s5] sm:$0xff]
  %389 = vset.pattern.permute.xlu0 0
  %390 = vperm.xlu0 %389, %v387
  %v391 = vpop.permute.xlu0 %390
  %v393 = vadd.f32 %v386, %v391
  %vm394 = vcmp.ge.f32.partialorder %v393, 0.0
  %v395 = vld [vmem:[%s6] sm:$0xff]
  %397 = vset.pattern.permute.xlu0 0
  %398 = vperm.xlu0 %397, %v395
  %v399 = vpop.permute.xlu0 %398
  %v401 = vmul.f32 %v399, %v393
  %v402 = vsel %vm394, %v393, %v401
  %403 = vst.msk [vmem:[%s7] sm:$0xff] %vm357, %v402
  // Predicated region
  $region30: #{_lambda_.49} parent=0 // pred_check
    _
  $region31: #{_lambda_.49} parent=0 // pred_check_branch
    %405 = sbr.rel (0) target = $region33
  $region32: #{_lambda_.49} parent=0 // pred_region
    _
  $region33: #{_lambda_.49} parent=0 // pred_fallthru
    _
  // Predicated region
  $region34: #{_lambda_.49} parent=0 // pred_check
    _
  $region35: #{_lambda_.49} parent=0 // pred_check_branch
    %407 = sbr.rel (0) target = $region37
  $region36: #{_lambda_.49} parent=0 // pred_region
    _
  $region37: #{_lambda_.49} parent=0 // pred_fallthru
    _

// kernel: _lambda_.51
$region0: #{_lambda_.51}
  #allocation0 [shape = 'u32[]', space=smem, size = 0x4, offset = 0x4, fixed_abs, tag = 'smem constant byte address 0x4 - core index']
  #allocation1 [shape = 'u32[72,128]{1,0:T(1,128)}', space=vmem, size = 0x9000, scoped, tag = 'internal scratch']
  %s0 = inlined_call_operand.vmem [shape: f32[8,42], index: 0, kind: input, shape index: {}]
  %s1 = inlined_call_operand.vmem [shape: f32[8,9], index: 1, kind: input, shape index: {}]
  %s2 = inlined_call_operand.vmem [shape: f32[9,32], index: 2, kind: input, shape index: {}]
  %s3 = inlined_call_operand.vmem [shape: f32[8,1], index: 3, kind: input, shape index: {}]
  %s4 = inlined_call_operand.vmem [shape: f32[8,1], index: 4, kind: input, shape index: {}]
  %s5 = inlined_call_operand.vmem [shape: f32[8,1], index: 5, kind: input, shape index: {}]
  %s6 = inlined_call_operand.vmem [shape: f32[8,32], index: 6, kind: output, shape index: {}]
  %s7 = sld [smem:[#allocation0]]
  $region34: #{_lambda_.51} parent=0
    _
  %s9 = ssub.s32 1, %s7
  %s10 = scalar_select 0, %s9, %s7
  // Predicated region
  $region2: #{_lambda_.51} parent=0 // pred_check
    _
  $region3: #{_lambda_.51} parent=0 // pred_check_branch
    %12 = sbr.rel (0) target = $region5
  $region4: #{_lambda_.51} parent=0 // pred_region
    _
  $region5: #{_lambda_.51} parent=0 // pred_fallthru
    _
  // Predicated region
  $region6: #{_lambda_.51} parent=0 // pred_check
    _
  $region7: #{_lambda_.51} parent=0 // pred_check_branch
    %14 = sbr.rel (0) target = $region9
  $region8: #{_lambda_.51} parent=0 // pred_region
    _
  $region9: #{_lambda_.51} parent=0 // pred_fallthru
    _
  // Predicated region
  $region10: #{_lambda_.51} parent=0 // pred_check
    _
  $region11: #{_lambda_.51} parent=0 // pred_check_branch
    %16 = sbr.rel (0) target = $region13
  $region12: #{_lambda_.51} parent=0 // pred_region
    _
  $region13: #{_lambda_.51} parent=0 // pred_fallthru
    _
  // Predicated region
  $region14: #{_lambda_.51} parent=0 // pred_check
    _
  $region15: #{_lambda_.51} parent=0 // pred_check_branch
    %18 = sbr.rel (0) target = $region17
  $region16: #{_lambda_.51} parent=0 // pred_region
    _
  $region17: #{_lambda_.51} parent=0 // pred_fallthru
    _
  // Predicated region
  $region18: #{_lambda_.51} parent=0 // pred_check
    _
  $region19: #{_lambda_.51} parent=0 // pred_check_branch
    %20 = sbr.rel (0) target = $region21
  $region20: #{_lambda_.51} parent=0 // pred_region
    _
  $region21: #{_lambda_.51} parent=0 // pred_fallthru
    _
  // Predicated region
  $region22: #{_lambda_.51} parent=0 // pred_check
    _
  $region23: #{_lambda_.51} parent=0 // pred_check_branch
    %22 = sbr.rel (0) target = $region25
  $region24: #{_lambda_.51} parent=0 // pred_region
    _
  $region25: #{_lambda_.51} parent=0 // pred_fallthru
    _
  %v23 = vld [vmem:[%s0] sm:$0xff]
  %v24 = vld [vmem:[%s2] sm:$0x1]
  %v25 = vperm.slane %v24, 0
  %v26 = vmul.f32 %v23, %v25
  %v27 = vld [vmem:[%s1] sm:$0xff]
  %29 = vset.pattern.permute.xlu0 0
  %30 = vperm.xlu0 %29, %v27
  %v31 = vpop.permute.xlu0 %30
  %v33 = vmul.f32 %v26, %v31
  %v34 = vadd.f32 %v33, 0.0
  %v35 = vld [vmem:[%s2 + $0x1] sm:$0x1]
  %v36 = vperm.slane %v35, 0
  %38 = vrot.lane.b32.xlu0 %v36, 1
  %v39 = vpop.permute.xlu0 %38
  %v41 = vmul.f32 %v23, %v39
  %42 = vset.pattern.permute.xlu0 1
  %43 = vperm.xlu0 %42, %v27
  %v44 = vpop.permute.xlu0 %43
  %v46 = vmul.f32 %v41, %v44
  %48 = vrot.lane.b32.xlu0 %v46, 127
  %v49 = vpop.permute.xlu0 %48
  %v51 = vadd.f32 %v34, %v49
  %v52 = vld [vmem:[%s2 + $0x2] sm:$0x1]
  %v53 = vperm.slane %v52, 0
  %55 = vrot.lane.b32.xlu0 %v53, 2
  %v56 = vpop.permute.xlu0 %55
  %v58 = vmul.f32 %v23, %v56
  %59 = vset.pattern.permute.xlu0 2
  %60 = vperm.xlu0 %59, %v27
  %v61 = vpop.permute.xlu0 %60
  %v63 = vmul.f32 %v58, %v61
  %65 = vrot.lane.b32.xlu0 %v63, 126
  %v66 = vpop.permute.xlu0 %65
  %v68 = vadd.f32 %v51, %v66
  %v69 = vld [vmem:[%s2 + $0x3] sm:$0x1]
  %v70 = vperm.slane %v69, 0
  %72 = vrot.lane.b32.xlu0 %v70, 4
  %v73 = vpop.permute.xlu0 %72
  %v75 = vmul.f32 %v23, %v73
  %76 = vset.pattern.permute.xlu0 3
  %77 = vperm.xlu0 %76, %v27
  %v78 = vpop.permute.xlu0 %77
  %v80 = vmul.f32 %v75, %v78
  %82 = vrot.lane.b32.xlu0 %v80, 124
  %v83 = vpop.permute.xlu0 %82
  %v85 = vadd.f32 %v68, %v83
  %86 = vset.pattern.permute.xlu0 4
  %87 = vperm.xlu0 %86, %v27
  %v88 = vpop.permute.xlu0 %87
  %v90 = vmul.f32 %v23, %v88
  %92 = vrot.lane.b32.xlu0 %v90, 123
  %v93 = vpop.permute.xlu0 %92
  %v95 = vadd.f32 %v85, %v93
  %v96 = vld [vmem:[%s2 + $0x5] sm:$0x1]
  %v97 = vperm.slane %v96, 0
  %99 = vrot.lane.b32.xlu0 %v97, 6
  %v100 = vpop.permute.xlu0 %99
  %v102 = vmul.f32 %v23, %v100
  %103 = vset.pattern.permute.xlu0 5
  %104 = vperm.xlu0 %103, %v27
  %v105 = vpop.permute.xlu0 %104
  %v107 = vmul.f32 %v102, %v105
  %109 = vrot.lane.b32.xlu0 %v107, 122
  %v110 = vpop.permute.xlu0 %109
  %v112 = vadd.f32 %v95, %v110
  %v113 = vld [vmem:[%s2 + $0x6] sm:$0x1]
  %v114 = vperm.slane %v113, 0
  %116 = vrot.lane.b32.xlu0 %v114, 8
  %v117 = vpop.permute.xlu0 %116
  %v119 = vmul.f32 %v23, %v117
  %120 = vset.pattern.permute.xlu0 6
  %121 = vperm.xlu0 %120, %v27
  %v122 = vpop.permute.xlu0 %121
  %v124 = vmul.f32 %v119, %v122
  %126 = vrot.lane.b32.xlu0 %v124, 120
  %v127 = vpop.permute.xlu0 %126
  %v129 = vadd.f32 %v112, %v127
  %v130 = vld [vmem:[%s2 + $0x7] sm:$0x1]
  %v131 = vperm.slane %v130, 0
  %133 = vrot.lane.b32.xlu0 %v131, 9
  %v134 = vpop.permute.xlu0 %133
  %v136 = vmul.f32 %v23, %v134
  %137 = vset.pattern.permute.xlu0 7
  %138 = vperm.xlu0 %137, %v27
  %v139 = vpop.permute.xlu0 %138
  %v141 = vmul.f32 %v136, %v139
  %143 = vrot.lane.b32.xlu0 %v141, 119
  %v144 = vpop.permute.xlu0 %143
  %v146 = vadd.f32 %v129, %v144
  %v147 = vld [vmem:[%s2 + $0x8] sm:$0x1]
  %v148 = vperm.slane %v147, 0
  %150 = vrot.lane.b32.xlu0 %v148, 10
  %v151 = vpop.permute.xlu0 %150
  %v153 = vmul.f32 %v23, %v151
  %154 = vset.pattern.permute.xlu0 8
  %155 = vperm.xlu0 %154, %v27
  %v156 = vpop.permute.xlu0 %155
  %v158 = vmul.f32 %v153, %v156
  %160 = vrot.lane.b32.xlu0 %v158, 118
  %v161 = vpop.permute.xlu0 %160
  %v163 = vadd.f32 %v146, %v161
  %vm164 = vcmask 261120
  %v165 = vsel %vm164, %v163, 0.0
  %166 = vadd.xlane.f32.xlu0 %v165
  %v167 = vpop.xlane.xlu0 %166
  %v168 = vmul.f32 %v167, 0.03125
  %v169 = vsub.f32 %v163, %v168
  %v170 = vmul.f32 %v169, %v169
  %v171 = vsel %vm164, %v170, 0.0
  %172 = vadd.xlane.f32.xlu0 %v171
  %v173 = vpop.xlane.xlu0 %172
  %v174 = vmul.f32 %v173, 0.03125
  %v175 = vadd.f32 %v174, 1e-05
  %v176 = vrsqrt.pop %v175
  %v177 = vmul.f32 %v176, %v175
  %v178 = vmul.f32 %v177, %v176
  %v179 = vmul.f32 0.5, %v178
  %v180 = vsub.f32 1.5, %v179
  %v181 = vmul.f32 %v176, %v180
  %vm182 = vweird.f32 %v175
  %vm183 = vweird.f32 %v176
  %vm184 = vmor %vm182, %vm183
  %v185 = vsel %vm184, %v176, %v181
  %v186 = vmul.f32 %v169, %v185
  %v187 = vld [vmem:[%s3] sm:$0xff]
  %189 = vset.pattern.permute.xlu0 0
  %190 = vperm.xlu0 %189, %v187
  %v191 = vpop.permute.xlu0 %190
  %v193 = vmul.f32 %v186, %v191
  %v194 = vld [vmem:[%s4] sm:$0xff]
  %196 = vset.pattern.permute.xlu0 0
  %197 = vperm.xlu0 %196, %v194
  %v198 = vpop.permute.xlu0 %197
  %v200 = vadd.f32 %v193, %v198
  %vm201 = vcmp.ge.f32.partialorder %v200, 0.0
  %v202 = vld [vmem:[%s5] sm:$0xff]
  %204 = vset.pattern.permute.xlu0 0
  %205 = vperm.xlu0 %204, %v202
  %v206 = vpop.permute.xlu0 %205
  %v208 = vmul.f32 %v206, %v200
  %v209 = vsel %vm201, %v200, %v208
  %210 = vst.msk [vmem:[%s6] sm:$0xff] %vm164, %v209
  // Predicated region
  $region26: #{_lambda_.51} parent=0 // pred_check
    _
  $region27: #{_lambda_.51} parent=0 // pred_check_branch
    %212 = sbr.rel (0) target = $region29
  $region28: #{_lambda_.51} parent=0 // pred_region
    _
  $region29: #{_lambda_.51} parent=0 // pred_fallthru
    _
  // Predicated region
  $region30: #{_lambda_.51} parent=0 // pred_check
    _
  $region31: #{_lambda_.51} parent=0 // pred_check_branch
    %214 = sbr.rel (0) target = $region33
  $region32: #{_lambda_.51} parent=0 // pred_region
    _
  $region33: #{_lambda_.51} parent=0 // pred_fallthru
    _

// kernel: _lambda_.56
$region0: #{_lambda_.56}
  #allocation0 [shape = 'u32[]', space=smem, size = 0x4, offset = 0x4, fixed_abs, tag = 'smem constant byte address 0x4 - core index']
  #allocation1 [shape = 'u32[72,128]{1,0:T(1,128)}', space=vmem, size = 0x9000, scoped, tag = 'internal scratch']
  %s0 = inlined_call_operand.vmem [shape: f32[8,14], index: 0, kind: input, shape index: {}]
  %s1 = inlined_call_operand.vmem [shape: f32[9,8,8], index: 1, kind: input, shape index: {}]
  %s2 = inlined_call_operand.vmem [shape: f32[9,8], index: 2, kind: input, shape index: {}]
  %s3 = inlined_call_operand.vmem [shape: f32[8,8], index: 3, kind: input, shape index: {}]
  %s4 = inlined_call_operand.vmem [shape: f32[8,1], index: 4, kind: input, shape index: {}]
  %s5 = inlined_call_operand.vmem [shape: f32[8,1], index: 5, kind: input, shape index: {}]
  %s6 = inlined_call_operand.vmem [shape: f32[8,1], index: 6, kind: input, shape index: {}]
  %s7 = inlined_call_operand.vmem [shape: f32[8,8], index: 7, kind: output, shape index: {}]
  %s8 = sld [smem:[#allocation0]]
  $region38: #{_lambda_.56} parent=0
    _
  %s10 = ssub.s32 1, %s8
  %s11 = scalar_select 0, %s10, %s8
  // Predicated region
  $region2: #{_lambda_.56} parent=0 // pred_check
    _
  $region3: #{_lambda_.56} parent=0 // pred_check_branch
    %13 = sbr.rel (0) target = $region5
  $region4: #{_lambda_.56} parent=0 // pred_region
    _
  $region5: #{_lambda_.56} parent=0 // pred_fallthru
    _
  // Predicated region
  $region6: #{_lambda_.56} parent=0 // pred_check
    _
  $region7: #{_lambda_.56} parent=0 // pred_check_branch
    %15 = sbr.rel (0) target = $region9
  $region8: #{_lambda_.56} parent=0 // pred_region
    _
  $region9: #{_lambda_.56} parent=0 // pred_fallthru
    _
  // Predicated region
  $region10: #{_lambda_.56} parent=0 // pred_check
    _
  $region11: #{_lambda_.56} parent=0 // pred_check_branch
    %17 = sbr.rel (0) target = $region13
  $region12: #{_lambda_.56} parent=0 // pred_region
    _
  $region13: #{_lambda_.56} parent=0 // pred_fallthru
    _
  // Predicated region
  $region14: #{_lambda_.56} parent=0 // pred_check
    _
  $region15: #{_lambda_.56} parent=0 // pred_check_branch
    %19 = sbr.rel (0) target = $region17
  $region16: #{_lambda_.56} parent=0 // pred_region
    _
  $region17: #{_lambda_.56} parent=0 // pred_fallthru
    _
  // Predicated region
  $region18: #{_lambda_.56} parent=0 // pred_check
    _
  $region19: #{_lambda_.56} parent=0 // pred_check_branch
    %21 = sbr.rel (0) target = $region21
  $region20: #{_lambda_.56} parent=0 // pred_region
    _
  $region21: #{_lambda_.56} parent=0 // pred_fallthru
    _
  // Predicated region
  $region22: #{_lambda_.56} parent=0 // pred_check
    _
  $region23: #{_lambda_.56} parent=0 // pred_check_branch
    %23 = sbr.rel (0) target = $region25
  $region24: #{_lambda_.56} parent=0 // pred_region
    _
  $region25: #{_lambda_.56} parent=0 // pred_fallthru
    _
  // Predicated region
  $region26: #{_lambda_.56} parent=0 // pred_check
    _
  $region27: #{_lambda_.56} parent=0 // pred_check_branch
    %25 = sbr.rel (0) target = $region29
  $region28: #{_lambda_.56} parent=0 // pred_region
    _
  $region29: #{_lambda_.56} parent=0 // pred_fallthru
    _
  %v26 = vld [vmem:[%s0] sm:$0xff]
  %v27 = vld [vmem:[%s2] sm:$0x1]
  %v28 = vperm.slane %v27, 0
  %v29 = vmul.f32 %v26, %v28
  %v30 = vld [vmem:[%s1] sm:$0xff]
  %v31 = vld [vmem:[%s2 + $0x1] sm:$0x1]
  %v32 = vperm.slane %v31, 0
  %34 = vrot.lane.b32.xlu0 %v32, 1
  %v35 = vpop.permute.xlu0 %34
  %v37 = vmul.f32 %v26, %v35
  %s38 = scalar_lea.vmem %s1, 8
  %v39 = vld [vmem:[%s38] sm:$0xff]
  %41 = vrot.lane.b32.xlu0 %v37, 127
  %v42 = vpop.permute.xlu0 %41
  %vm44 = vcmask 64512
  %v46 = vsel %vm44, %v39, 0
  %48 = vmatpush.msra.mxu0 0.0
  %49 = vmatpush.msra.mxu0 0.0
  %50 = vmatpush.msra.mxu0 0.0
  %51 = vmatpush.msra.mxu0 0.0
  %52 = vmatpush.msra.mxu0 0.0
  %53 = vmatpush.msra.mxu0 0.0
  %54 = vmatpush.msra.mxu0 0.0
  %55 = vmatpush.msra.mxu0 0.0
  %56 = vmatpush.msra.mxu0 0.0
  %57 = vmatpush.msra.mxu0 0.0
  %58 = vmatpush.msra.mxu0 0.0
  %59 = vmatpush.msra.mxu0 0.0
  %60 = vmatpush.msra.mxu0 0.0
  %61 = vmatpush.msra.mxu0 0.0
  %62 = vmatpush.msra.mxu0 0.0
  %63 = vmatpush.msra.mxu0 %v42
  %64 = vmatmul.f32.gmra.mxu0 %v46
  %v65 = vpop.f32.mrf.mxu0
  %v66 = vadd.f32 0.0, %v65
  %67 = vdwg.mxu0
  %v69 = vsel %vm44, %v30, 0
  %71 = vmatpush.msra.mxu0 0.0
  %72 = vmatpush.msra.mxu0 0.0
  %73 = vmatpush.msra.mxu0 0.0
  %74 = vmatpush.msra.mxu0 0.0
  %75 = vmatpush.msra.mxu0 0.0
  %76 = vmatpush.msra.mxu0 0.0
  %77 = vmatpush.msra.mxu0 0.0
  %78 = vmatpush.msra.mxu0 0.0
  %79 = vmatpush.msra.mxu0 0.0
  %80 = vmatpush.msra.mxu0 0.0
  %81 = vmatpush.msra.mxu0 0.0
  %82 = vmatpush.msra.mxu0 0.0
  %83 = vmatpush.msra.mxu0 0.0
  %84 = vmatpush.msra.mxu0 0.0
  %85 = vmatpush.msra.mxu0 0.0
  %86 = vmatpush.msra.mxu0 %v29
  %87 = vmatmul.f32.gmra.mxu0 %v69
  %v88 = vpop.f32.mrf.mxu0
  %v89 = vadd.f32 %v66, %v88
  %90 = vdwg.mxu0
  %v91 = vld [vmem:[%s2 + $0x2] sm:$0x1]
  %v92 = vperm.slane %v91, 0
  %94 = vrot.lane.b32.xlu0 %v92, 2
  %v95 = vpop.permute.xlu0 %94
  %v97 = vmul.f32 %v26, %v95
  %s98 = scalar_lea.vmem %s1, 16
  %v99 = vld [vmem:[%s98] sm:$0xff]
  %101 = vrot.lane.b32.xlu0 %v97, 126
  %v102 = vpop.permute.xlu0 %101
  %v105 = vsel %vm44, %v99, 0
  %107 = vmatpush.msra.mxu0 0.0
  %108 = vmatpush.msra.mxu0 0.0
  %109 = vmatpush.msra.mxu0 0.0
  %110 = vmatpush.msra.mxu0 0.0
  %111 = vmatpush.msra.mxu0 0.0
  %112 = vmatpush.msra.mxu0 0.0
  %113 = vmatpush.msra.mxu0 0.0
  %114 = vmatpush.msra.mxu0 0.0
  %115 = vmatpush.msra.mxu0 0.0
  %116 = vmatpush.msra.mxu0 0.0
  %117 = vmatpush.msra.mxu0 0.0
  %118 = vmatpush.msra.mxu0 0.0
  %119 = vmatpush.msra.mxu0 0.0
  %120 = vmatpush.msra.mxu0 0.0
  %121 = vmatpush.msra.mxu0 0.0
  %122 = vmatpush.msra.mxu0 %v102
  %123 = vmatmul.f32.gmra.mxu0 %v105
  %v124 = vpop.f32.mrf.mxu0
  %v125 = vadd.f32 0.0, %v124
  %126 = vdwg.mxu0
  %v127 = vadd.f32 %v89, %v125
  %v128 = vld [vmem:[%s2 + $0x3] sm:$0x1]
  %v129 = vperm.slane %v128, 0
  %131 = vrot.lane.b32.xlu0 %v129, 2
  %v132 = vpop.permute.xlu0 %131
  %v134 = vmul.f32 %v26, %v132
  %s135 = scalar_lea.vmem %s1, 24
  %v136 = vld [vmem:[%s135] sm:$0xff]
  %138 = vrot.lane.b32.xlu0 %v134, 126
  %v139 = vpop.permute.xlu0 %138
  %v142 = vsel %vm44, %v136, 0
  %144 = vmatpush.msra.mxu0 0.0
  %145 = vmatpush.msra.mxu0 0.0
  %146 = vmatpush.msra.mxu0 0.0
  %147 = vmatpush.msra.mxu0 0.0
  %148 = vmatpush.msra.mxu0 0.0
  %149 = vmatpush.msra.mxu0 0.0
  %150 = vmatpush.msra.mxu0 0.0
  %151 = vmatpush.msra.mxu0 0.0
  %152 = vmatpush.msra.mxu0 0.0
  %153 = vmatpush.msra.mxu0 0.0
  %154 = vmatpush.msra.mxu0 0.0
  %155 = vmatpush.msra.mxu0 0.0
  %156 = vmatpush.msra.mxu0 0.0
  %157 = vmatpush.msra.mxu0 0.0
  %158 = vmatpush.msra.mxu0 0.0
  %159 = vmatpush.msra.mxu0 %v139
  %160 = vmatmul.f32.gmra.mxu0 %v142
  %v161 = vpop.f32.mrf.mxu0
  %v162 = vadd.f32 0.0, %v161
  %163 = vdwg.mxu0
  %v164 = vadd.f32 %v127, %v162
  %s165 = scalar_lea.vmem %s1, 32
  %v166 = vld [vmem:[%s165] sm:$0xff]
  %168 = vrot.lane.b32.xlu0 %v26, 125
  %v169 = vpop.permute.xlu0 %168
  %v172 = vsel %vm44, %v166, 0
  %174 = vmatpush.msra.mxu0 0.0
  %175 = vmatpush.msra.mxu0 0.0
  %176 = vmatpush.msra.mxu0 0.0
  %177 = vmatpush.msra.mxu0 0.0
  %178 = vmatpush.msra.mxu0 0.0
  %179 = vmatpush.msra.mxu0 0.0
  %180 = vmatpush.msra.mxu0 0.0
  %181 = vmatpush.msra.mxu0 0.0
  %182 = vmatpush.msra.mxu0 0.0
  %183 = vmatpush.msra.mxu0 0.0
  %184 = vmatpush.msra.mxu0 0.0
  %185 = vmatpush.msra.mxu0 0.0
  %186 = vmatpush.msra.mxu0 0.0
  %187 = vmatpush.msra.mxu0 0.0
  %188 = vmatpush.msra.mxu0 0.0
  %189 = vmatpush.msra.mxu0 %v169
  %190 = vmatmul.f32.gmra.mxu0 %v172
  %v191 = vpop.f32.mrf.mxu0
  %v192 = vadd.f32 0.0, %v191
  %193 = vdwg.mxu0
  %v194 = vadd.f32 %v164, %v192
  %v195 = vld [vmem:[%s2 + $0x5] sm:$0x1]
  %v196 = vperm.slane %v195, 0
  %198 = vrot.lane.b32.xlu0 %v196, 4
  %v199 = vpop.permute.xlu0 %198
  %v201 = vmul.f32 %v26, %v199
  %s202 = scalar_lea.vmem %s1, 40
  %v203 = vld [vmem:[%s202] sm:$0xff]
  %205 = vrot.lane.b32.xlu0 %v201, 124
  %v206 = vpop.permute.xlu0 %205
  %v209 = vsel %vm44, %v203, 0
  %211 = vmatpush.msra.mxu0 0.0
  %212 = vmatpush.msra.mxu0 0.0
  %213 = vmatpush.msra.mxu0 0.0
  %214 = vmatpush.msra.mxu0 0.0
  %215 = vmatpush.msra.mxu0 0.0
  %216 = vmatpush.msra.mxu0 0.0
  %217 = vmatpush.msra.mxu0 0.0
  %218 = vmatpush.msra.mxu0 0.0
  %219 = vmatpush.msra.mxu0 0.0
  %220 = vmatpush.msra.mxu0 0.0
  %221 = vmatpush.msra.mxu0 0.0
  %222 = vmatpush.msra.mxu0 0.0
  %223 = vmatpush.msra.mxu0 0.0
  %224 = vmatpush.msra.mxu0 0.0
  %225 = vmatpush.msra.mxu0 0.0
  %226 = vmatpush.msra.mxu0 %v206
  %227 = vmatmul.f32.gmra.mxu0 %v209
  %v228 = vpop.f32.mrf.mxu0
  %v229 = vadd.f32 0.0, %v228
  %230 = vdwg.mxu0
  %v231 = vadd.f32 %v194, %v229
  %v232 = vld [vmem:[%s2 + $0x6] sm:$0x1]
  %v233 = vperm.slane %v232, 0
  %235 = vrot.lane.b32.xlu0 %v233, 4
  %v236 = vpop.permute.xlu0 %235
  %v238 = vmul.f32 %v26, %v236
  %s239 = scalar_lea.vmem %s1, 48
  %v240 = vld [vmem:[%s239] sm:$0xff]
  %242 = vrot.lane.b32.xlu0 %v238, 124
  %v243 = vpop.permute.xlu0 %242
  %v246 = vsel %vm44, %v240, 0
  %248 = vmatpush.msra.mxu0 0.0
  %249 = vmatpush.msra.mxu0 0.0
  %250 = vmatpush.msra.mxu0 0.0
  %251 = vmatpush.msra.mxu0 0.0
  %252 = vmatpush.msra.mxu0 0.0
  %253 = vmatpush.msra.mxu0 0.0
  %254 = vmatpush.msra.mxu0 0.0
  %255 = vmatpush.msra.mxu0 0.0
  %256 = vmatpush.msra.mxu0 0.0
  %257 = vmatpush.msra.mxu0 0.0
  %258 = vmatpush.msra.mxu0 0.0
  %259 = vmatpush.msra.mxu0 0.0
  %260 = vmatpush.msra.mxu0 0.0
  %261 = vmatpush.msra.mxu0 0.0
  %262 = vmatpush.msra.mxu0 0.0
  %263 = vmatpush.msra.mxu0 %v243
  %264 = vmatmul.f32.gmra.mxu0 %v246
  %v265 = vpop.f32.mrf.mxu0
  %v266 = vadd.f32 0.0, %v265
  %267 = vdwg.mxu0
  %v268 = vadd.f32 %v231, %v266
  %v269 = vld [vmem:[%s2 + $0x7] sm:$0x1]
  %v270 = vperm.slane %v269, 0
  %272 = vrot.lane.b32.xlu0 %v270, 5
  %v273 = vpop.permute.xlu0 %272
  %v275 = vmul.f32 %v26, %v273
  %s276 = scalar_lea.vmem %s1, 56
  %v277 = vld [vmem:[%s276] sm:$0xff]
  %279 = vrot.lane.b32.xlu0 %v275, 123
  %v280 = vpop.permute.xlu0 %279
  %v283 = vsel %vm44, %v277, 0
  %285 = vmatpush.msra.mxu0 0.0
  %286 = vmatpush.msra.mxu0 0.0
  %287 = vmatpush.msra.mxu0 0.0
  %288 = vmatpush.msra.mxu0 0.0
  %289 = vmatpush.msra.mxu0 0.0
  %290 = vmatpush.msra.mxu0 0.0
  %291 = vmatpush.msra.mxu0 0.0
  %292 = vmatpush.msra.mxu0 0.0
  %293 = vmatpush.msra.mxu0 0.0
  %294 = vmatpush.msra.mxu0 0.0
  %295 = vmatpush.msra.mxu0 0.0
  %296 = vmatpush.msra.mxu0 0.0
  %297 = vmatpush.msra.mxu0 0.0
  %298 = vmatpush.msra.mxu0 0.0
  %299 = vmatpush.msra.mxu0 0.0
  %300 = vmatpush.msra.mxu0 %v280
  %301 = vmatmul.f32.gmra.mxu0 %v283
  %v302 = vpop.f32.mrf.mxu0
  %v303 = vadd.f32 0.0, %v302
  %304 = vdwg.mxu0
  %v305 = vadd.f32 %v268, %v303
  %v306 = vld [vmem:[%s2 + $0x8] sm:$0x1]
  %v307 = vperm.slane %v306, 0
  %309 = vrot.lane.b32.xlu0 %v307, 6
  %v310 = vpop.permute.xlu0 %309
  %v312 = vmul.f32 %v26, %v310
  %s313 = scalar_lea.vmem %s1, 64
  %v314 = vld [vmem:[%s313] sm:$0xff]
  %316 = vrot.lane.b32.xlu0 %v312, 122
  %v317 = vpop.permute.xlu0 %316
  %v320 = vsel %vm44, %v314, 0
  %322 = vmatpush.msra.mxu0 0.0
  %323 = vmatpush.msra.mxu0 0.0
  %324 = vmatpush.msra.mxu0 0.0
  %325 = vmatpush.msra.mxu0 0.0
  %326 = vmatpush.msra.mxu0 0.0
  %327 = vmatpush.msra.mxu0 0.0
  %328 = vmatpush.msra.mxu0 0.0
  %329 = vmatpush.msra.mxu0 0.0
  %330 = vmatpush.msra.mxu0 0.0
  %331 = vmatpush.msra.mxu0 0.0
  %332 = vmatpush.msra.mxu0 0.0
  %333 = vmatpush.msra.mxu0 0.0
  %334 = vmatpush.msra.mxu0 0.0
  %335 = vmatpush.msra.mxu0 0.0
  %336 = vmatpush.msra.mxu0 0.0
  %337 = vmatpush.msra.mxu0 %v317
  %338 = vmatmul.f32.gmra.mxu0 %v320
  %v339 = vpop.f32.mrf.mxu0
  %v340 = vadd.f32 0.0, %v339
  %341 = vdwg.mxu0
  %v342 = vadd.f32 %v305, %v340
  %v343 = vld [vmem:[%s3] sm:$0xff]
  %v344 = vadd.f32 %v342, %v343
  %v345 = vsel %vm44, %v344, 0.0
  %346 = vadd.xlane.f32.xlu0 %v345
  %v347 = vpop.xlane.xlu0 %346
  %v348 = vmul.f32 %v347, 0.125
  %v349 = vsub.f32 %v344, %v348
  %v350 = vmul.f32 %v349, %v349
  %v351 = vsel %vm44, %v350, 0.0
  %352 = vadd.xlane.f32.xlu0 %v351
  %v353 = vpop.xlane.xlu0 %352
  %v354 = vmul.f32 %v353, 0.125
  %v355 = vadd.f32 %v354, 1e-05
  %v356 = vrsqrt.pop %v355
  %v357 = vmul.f32 %v356, %v355
  %v358 = vmul.f32 %v357, %v356
  %v359 = vmul.f32 0.5, %v358
  %v360 = vsub.f32 1.5, %v359
  %v361 = vmul.f32 %v356, %v360
  %vm362 = vweird.f32 %v355
  %vm363 = vweird.f32 %v356
  %vm364 = vmor %vm362, %vm363
  %v365 = vsel %vm364, %v356, %v361
  %v366 = vmul.f32 %v349, %v365
  %v367 = vld [vmem:[%s4] sm:$0xff]
  %369 = vset.pattern.permute.xlu0 0
  %370 = vperm.xlu0 %369, %v367
  %v371 = vpop.permute.xlu0 %370
  %v373 = vmul.f32 %v366, %v371
  %v374 = vld [vmem:[%s5] sm:$0xff]
  %376 = vset.pattern.permute.xlu0 0
  %377 = vperm.xlu0 %376, %v374
  %v378 = vpop.permute.xlu0 %377
  %v380 = vadd.f32 %v373, %v378
  %vm381 = vcmp.ge.f32.partialorder %v380, 0.0
  %v382 = vld [vmem:[%s6] sm:$0xff]
  %384 = vset.pattern.permute.xlu0 0
  %385 = vperm.xlu0 %384, %v382
  %v386 = vpop.permute.xlu0 %385
  %v388 = vmul.f32 %v386, %v380
  %v389 = vsel %vm381, %v380, %v388
  %390 = vst.msk [vmem:[%s7] sm:$0xff] %vm44, %v389
  // Predicated region
  $region30: #{_lambda_.56} parent=0 // pred_check
    _
  $region31: #{_lambda_.56} parent=0 // pred_check_branch
    %392 = sbr.rel (0) target = $region33
  $region32: #{_lambda_.56} parent=0 // pred_region
    _
  $region33: #{_lambda_.56} parent=0 // pred_fallthru
    _
  // Predicated region
  $region34: #{_lambda_.56} parent=0 // pred_check
    _
  $region35: #{_lambda_.56} parent=0 // pred_check_branch
    %394 = sbr.rel (0) target = $region37
  $region36: #{_lambda_.56} parent=0 // pred_region
    _
  $region37: #{_lambda_.56} parent=0 // pred_fallthru
    _

// kernel: _lambda_.54
$region0: #{_lambda_.54}
  #allocation0 [shape = 'u32[]', space=smem, size = 0x4, offset = 0x4, fixed_abs, tag = 'smem constant byte address 0x4 - core index']
  #allocation1 [shape = 'u32[72,128]{1,0:T(1,128)}', space=vmem, size = 0x9000, scoped, tag = 'internal scratch']
  %s0 = inlined_call_operand.vmem [shape: f32[8,14], index: 0, kind: input, shape index: {}]
  %s1 = inlined_call_operand.vmem [shape: f32[9,16,8], index: 1, kind: input, shape index: {}]
  %s2 = inlined_call_operand.vmem [shape: f32[9,8], index: 2, kind: input, shape index: {}]
  %s3 = inlined_call_operand.vmem [shape: f32[16,8], index: 3, kind: output, shape index: {}]
  %s4 = sld [smem:[#allocation0]]
  $region22: #{_lambda_.54} parent=0
    _
  %s6 = ssub.s32 1, %s4
  %s7 = scalar_select 0, %s6, %s4
  // Predicated region
  $region2: #{_lambda_.54} parent=0 // pred_check
    _
  $region3: #{_lambda_.54} parent=0 // pred_check_branch
    %9 = sbr.rel (0) target = $region5
  $region4: #{_lambda_.54} parent=0 // pred_region
    _
  $region5: #{_lambda_.54} parent=0 // pred_fallthru
    _
  // Predicated region
  $region6: #{_lambda_.54} parent=0 // pred_check
    _
  $region7: #{_lambda_.54} parent=0 // pred_check_branch
    %11 = sbr.rel (0) target = $region9
  $region8: #{_lambda_.54} parent=0 // pred_region
    _
  $region9: #{_lambda_.54} parent=0 // pred_fallthru
    _
  // Predicated region
  $region10: #{_lambda_.54} parent=0 // pred_check
    _
  $region11: #{_lambda_.54} parent=0 // pred_check_branch
    %13 = sbr.rel (0) target = $region13
  $region12: #{_lambda_.54} parent=0 // pred_region
    _
  $region13: #{_lambda_.54} parent=0 // pred_fallthru
    _
  %v14 = vld [vmem:[%s0] sm:$0xff]
  %v15 = vld [vmem:[%s2] sm:$0x1]
  %v16 = vperm.slane %v15, 0
  %v17 = vmul.f32 %v14, %v16
  %v18 = vld [vmem:[%s1] sm:$0xff]
  %v19 = vld [vmem:[%s1 + $0x8] sm:$0xff]
  %v20 = vld [vmem:[%s2 + $0x1] sm:$0x1]
  %v21 = vperm.slane %v20, 0
  %23 = vrot.lane.b32.xlu0 %v21, 1
  %v24 = vpop.permute.xlu0 %23
  %v26 = vmul.f32 %v14, %v24
  %s27 = scalar_lea.vmem %s1, 16
  %v28 = vld [vmem:[%s27] sm:$0xff]
  %v29 = vld [vmem:[%s27 + $0x8] sm:$0xff]
  %31 = vrot.lane.b32.xlu0 %v26, 127
  %v32 = vpop.permute.xlu0 %31
  %vm34 = vcmask 64512
  %v36 = vsel %vm34, %v28, 0
  %v39 = vsel %vm34, %v29, 0
  %41 = vmatpush.msra.mxu0 0.0
  %42 = vmatpush.msra.mxu0 0.0
  %43 = vmatpush.msra.mxu0 0.0
  %44 = vmatpush.msra.mxu0 0.0
  %45 = vmatpush.msra.mxu0 0.0
  %46 = vmatpush.msra.mxu0 0.0
  %47 = vmatpush.msra.mxu0 0.0
  %48 = vmatpush.msra.mxu0 0.0
  %49 = vmatpush.msra.mxu0 0.0
  %50 = vmatpush.msra.mxu0 0.0
  %51 = vmatpush.msra.mxu0 0.0
  %52 = vmatpush.msra.mxu0 0.0
  %53 = vmatpush.msra.mxu0 0.0
  %54 = vmatpush.msra.mxu0 0.0
  %55 = vmatpush.msra.mxu0 0.0
  %56 = vmatpush.msra.mxu0 %v32
  %57 = vmatmul.f32.gmra.mxu0 %v36
  %v58 = vpop.f32.mrf.mxu0
  %v59 = vadd.f32 0.0, %v58
  %60 = vmatmul.f32.gmra.mxu0 %v39
  %v61 = vpop.f32.mrf.mxu0
  %v62 = vadd.f32 0.0, %v61
  %63 = vdwg.mxu0
  %v65 = vsel %vm34, %v18, 0
  %v68 = vsel %vm34, %v19, 0
  %70 = vmatpush.msra.mxu0 0.0
  %71 = vmatpush.msra.mxu0 0.0
  %72 = vmatpush.msra.mxu0 0.0
  %73 = vmatpush.msra.mxu0 0.0
  %74 = vmatpush.msra.mxu0 0.0
  %75 = vmatpush.msra.mxu0 0.0
  %76 = vmatpush.msra.mxu0 0.0
  %77 = vmatpush.msra.mxu0 0.0
  %78 = vmatpush.msra.mxu0 0.0
  %79 = vmatpush.msra.mxu0 0.0
  %80 = vmatpush.msra.mxu0 0.0
  %81 = vmatpush.msra.mxu0 0.0
  %82 = vmatpush.msra.mxu0 0.0
  %83 = vmatpush.msra.mxu0 0.0
  %84 = vmatpush.msra.mxu0 0.0
  %85 = vmatpush.msra.mxu0 %v17
  %86 = vmatmul.f32.gmra.mxu0 %v65
  %v87 = vpop.f32.mrf.mxu0
  %v88 = vadd.f32 %v59, %v87
  %89 = vmatmul.f32.gmra.mxu0 %v68
  %v90 = vpop.f32.mrf.mxu0
  %v91 = vadd.f32 %v62, %v90
  %92 = vdwg.mxu0
  %v93 = vld [vmem:[%s2 + $0x2] sm:$0x1]
  %v94 = vperm.slane %v93, 0
  %96 = vrot.lane.b32.xlu0 %v94, 2
  %v97 = vpop.permute.xlu0 %96
  %v99 = vmul.f32 %v14, %v97
  %s100 = scalar_lea.vmem %s1, 32
  %v101 = vld [vmem:[%s100] sm:$0xff]
  %v102 = vld [vmem:[%s100 + $0x8] sm:$0xff]
  %104 = vrot.lane.b32.xlu0 %v99, 126
  %v105 = vpop.permute.xlu0 %104
  %v108 = vsel %vm34, %v101, 0
  %v111 = vsel %vm34, %v102, 0
  %113 = vmatpush.msra.mxu0 0.0
  %114 = vmatpush.msra.mxu0 0.0
  %115 = vmatpush.msra.mxu0 0.0
  %116 = vmatpush.msra.mxu0 0.0
  %117 = vmatpush.msra.mxu0 0.0
  %118 = vmatpush.msra.mxu0 0.0
  %119 = vmatpush.msra.mxu0 0.0
  %120 = vmatpush.msra.mxu0 0.0
  %121 = vmatpush.msra.mxu0 0.0
  %122 = vmatpush.msra.mxu0 0.0
  %123 = vmatpush.msra.mxu0 0.0
  %124 = vmatpush.msra.mxu0 0.0
  %125 = vmatpush.msra.mxu0 0.0
  %126 = vmatpush.msra.mxu0 0.0
  %127 = vmatpush.msra.mxu0 0.0
  %128 = vmatpush.msra.mxu0 %v105
  %129 = vmatmul.f32.gmra.mxu0 %v108
  %v130 = vpop.f32.mrf.mxu0
  %v131 = vadd.f32 0.0, %v130
  %132 = vmatmul.f32.gmra.mxu0 %v111
  %v133 = vpop.f32.mrf.mxu0
  %v134 = vadd.f32 0.0, %v133
  %135 = vdwg.mxu0
  %v136 = vadd.f32 %v88, %v131
  %v137 = vadd.f32 %v91, %v134
  %v138 = vld [vmem:[%s2 + $0x3] sm:$0x1]
  %v139 = vperm.slane %v138, 0
  %141 = vrot.lane.b32.xlu0 %v139, 2
  %v142 = vpop.permute.xlu0 %141
  %v144 = vmul.f32 %v14, %v142
  %s145 = scalar_lea.vmem %s1, 48
  %v146 = vld [vmem:[%s145] sm:$0xff]
  %v147 = vld [vmem:[%s145 + $0x8] sm:$0xff]
  %149 = vrot.lane.b32.xlu0 %v144, 126
  %v150 = vpop.permute.xlu0 %149
  %v153 = vsel %vm34, %v146, 0
  %v156 = vsel %vm34, %v147, 0
  %158 = vmatpush.msra.mxu0 0.0
  %159 = vmatpush.msra.mxu0 0.0
  %160 = vmatpush.msra.mxu0 0.0
  %161 = vmatpush.msra.mxu0 0.0
  %162 = vmatpush.msra.mxu0 0.0
  %163 = vmatpush.msra.mxu0 0.0
  %164 = vmatpush.msra.mxu0 0.0
  %165 = vmatpush.msra.mxu0 0.0
  %166 = vmatpush.msra.mxu0 0.0
  %167 = vmatpush.msra.mxu0 0.0
  %168 = vmatpush.msra.mxu0 0.0
  %169 = vmatpush.msra.mxu0 0.0
  %170 = vmatpush.msra.mxu0 0.0
  %171 = vmatpush.msra.mxu0 0.0
  %172 = vmatpush.msra.mxu0 0.0
  %173 = vmatpush.msra.mxu0 %v150
  %174 = vmatmul.f32.gmra.mxu0 %v153
  %v175 = vpop.f32.mrf.mxu0
  %v176 = vadd.f32 0.0, %v175
  %177 = vmatmul.f32.gmra.mxu0 %v156
  %v178 = vpop.f32.mrf.mxu0
  %v179 = vadd.f32 0.0, %v178
  %180 = vdwg.mxu0
  %v181 = vadd.f32 %v136, %v176
  %v182 = vadd.f32 %v137, %v179
  %s183 = scalar_lea.vmem %s1, 64
  %v184 = vld [vmem:[%s183] sm:$0xff]
  %v185 = vld [vmem:[%s183 + $0x8] sm:$0xff]
  %187 = vrot.lane.b32.xlu0 %v14, 125
  %v188 = vpop.permute.xlu0 %187
  %v191 = vsel %vm34, %v184, 0
  %v194 = vsel %vm34, %v185, 0
  %196 = vmatpush.msra.mxu0 0.0
  %197 = vmatpush.msra.mxu0 0.0
  %198 = vmatpush.msra.mxu0 0.0
  %199 = vmatpush.msra.mxu0 0.0
  %200 = vmatpush.msra.mxu0 0.0
  %201 = vmatpush.msra.mxu0 0.0
  %202 = vmatpush.msra.mxu0 0.0
  %203 = vmatpush.msra.mxu0 0.0
  %204 = vmatpush.msra.mxu0 0.0
  %205 = vmatpush.msra.mxu0 0.0
  %206 = vmatpush.msra.mxu0 0.0
  %207 = vmatpush.msra.mxu0 0.0
  %208 = vmatpush.msra.mxu0 0.0
  %209 = vmatpush.msra.mxu0 0.0
  %210 = vmatpush.msra.mxu0 0.0
  %211 = vmatpush.msra.mxu0 %v188
  %212 = vmatmul.f32.gmra.mxu0 %v191
  %v213 = vpop.f32.mrf.mxu0
  %v214 = vadd.f32 0.0, %v213
  %215 = vmatmul.f32.gmra.mxu0 %v194
  %v216 = vpop.f32.mrf.mxu0
  %v217 = vadd.f32 0.0, %v216
  %218 = vdwg.mxu0
  %v219 = vadd.f32 %v181, %v214
  %v220 = vadd.f32 %v182, %v217
  %v221 = vld [vmem:[%s2 + $0x5] sm:$0x1]
  %v222 = vperm.slane %v221, 0
  %224 = vrot.lane.b32.xlu0 %v222, 4
  %v225 = vpop.permute.xlu0 %224
  %v227 = vmul.f32 %v14, %v225
  %s228 = scalar_lea.vmem %s1, 80
  %v229 = vld [vmem:[%s228] sm:$0xff]
  %v230 = vld [vmem:[%s228 + $0x8] sm:$0xff]
  %232 = vrot.lane.b32.xlu0 %v227, 124
  %v233 = vpop.permute.xlu0 %232
  %v236 = vsel %vm34, %v229, 0
  %v239 = vsel %vm34, %v230, 0
  %241 = vmatpush.msra.mxu0 0.0
  %242 = vmatpush.msra.mxu0 0.0
  %243 = vmatpush.msra.mxu0 0.0
  %244 = vmatpush.msra.mxu0 0.0
  %245 = vmatpush.msra.mxu0 0.0
  %246 = vmatpush.msra.mxu0 0.0
  %247 = vmatpush.msra.mxu0 0.0
  %248 = vmatpush.msra.mxu0 0.0
  %249 = vmatpush.msra.mxu0 0.0
  %250 = vmatpush.msra.mxu0 0.0
  %251 = vmatpush.msra.mxu0 0.0
  %252 = vmatpush.msra.mxu0 0.0
  %253 = vmatpush.msra.mxu0 0.0
  %254 = vmatpush.msra.mxu0 0.0
  %255 = vmatpush.msra.mxu0 0.0
  %256 = vmatpush.msra.mxu0 %v233
  %257 = vmatmul.f32.gmra.mxu0 %v236
  %v258 = vpop.f32.mrf.mxu0
  %v259 = vadd.f32 0.0, %v258
  %260 = vmatmul.f32.gmra.mxu0 %v239
  %v261 = vpop.f32.mrf.mxu0
  %v262 = vadd.f32 0.0, %v261
  %263 = vdwg.mxu0
  %v264 = vadd.f32 %v219, %v259
  %v265 = vadd.f32 %v220, %v262
  %v266 = vld [vmem:[%s2 + $0x6] sm:$0x1]
  %v267 = vperm.slane %v266, 0
  %269 = vrot.lane.b32.xlu0 %v267, 4
  %v270 = vpop.permute.xlu0 %269
  %v272 = vmul.f32 %v14, %v270
  %s273 = scalar_lea.vmem %s1, 96
  %v274 = vld [vmem:[%s273] sm:$0xff]
  %v275 = vld [vmem:[%s273 + $0x8] sm:$0xff]
  %277 = vrot.lane.b32.xlu0 %v272, 124
  %v278 = vpop.permute.xlu0 %277
  %v281 = vsel %vm34, %v274, 0
  %v284 = vsel %vm34, %v275, 0
  %286 = vmatpush.msra.mxu0 0.0
  %287 = vmatpush.msra.mxu0 0.0
  %288 = vmatpush.msra.mxu0 0.0
  %289 = vmatpush.msra.mxu0 0.0
  %290 = vmatpush.msra.mxu0 0.0
  %291 = vmatpush.msra.mxu0 0.0
  %292 = vmatpush.msra.mxu0 0.0
  %293 = vmatpush.msra.mxu0 0.0
  %294 = vmatpush.msra.mxu0 0.0
  %295 = vmatpush.msra.mxu0 0.0
  %296 = vmatpush.msra.mxu0 0.0
  %297 = vmatpush.msra.mxu0 0.0
  %298 = vmatpush.msra.mxu0 0.0
  %299 = vmatpush.msra.mxu0 0.0
  %300 = vmatpush.msra.mxu0 0.0
  %301 = vmatpush.msra.mxu0 %v278
  %302 = vmatmul.f32.gmra.mxu0 %v281
  %v303 = vpop.f32.mrf.mxu0
  %v304 = vadd.f32 0.0, %v303
  %305 = vmatmul.f32.gmra.mxu0 %v284
  %v306 = vpop.f32.mrf.mxu0
  %v307 = vadd.f32 0.0, %v306
  %308 = vdwg.mxu0
  %v309 = vadd.f32 %v264, %v304
  %v310 = vadd.f32 %v265, %v307
  %v311 = vld [vmem:[%s2 + $0x7] sm:$0x1]
  %v312 = vperm.slane %v311, 0
  %314 = vrot.lane.b32.xlu0 %v312, 5
  %v315 = vpop.permute.xlu0 %314
  %v317 = vmul.f32 %v14, %v315
  %s318 = scalar_lea.vmem %s1, 112
  %v319 = vld [vmem:[%s318] sm:$0xff]
  %v320 = vld [vmem:[%s318 + $0x8] sm:$0xff]
  %322 = vrot.lane.b32.xlu0 %v317, 123
  %v323 = vpop.permute.xlu0 %322
  %v326 = vsel %vm34, %v319, 0
  %v329 = vsel %vm34, %v320, 0
  %331 = vmatpush.msra.mxu0 0.0
  %332 = vmatpush.msra.mxu0 0.0
  %333 = vmatpush.msra.mxu0 0.0
  %334 = vmatpush.msra.mxu0 0.0
  %335 = vmatpush.msra.mxu0 0.0
  %336 = vmatpush.msra.mxu0 0.0
  %337 = vmatpush.msra.mxu0 0.0
  %338 = vmatpush.msra.mxu0 0.0
  %339 = vmatpush.msra.mxu0 0.0
  %340 = vmatpush.msra.mxu0 0.0
  %341 = vmatpush.msra.mxu0 0.0
  %342 = vmatpush.msra.mxu0 0.0
  %343 = vmatpush.msra.mxu0 0.0
  %344 = vmatpush.msra.mxu0 0.0
  %345 = vmatpush.msra.mxu0 0.0
  %346 = vmatpush.msra.mxu0 %v323
  %347 = vmatmul.f32.gmra.mxu0 %v326
  %v348 = vpop.f32.mrf.mxu0
  %v349 = vadd.f32 0.0, %v348
  %350 = vmatmul.f32.gmra.mxu0 %v329
  %v351 = vpop.f32.mrf.mxu0
  %v352 = vadd.f32 0.0, %v351
  %353 = vdwg.mxu0
  %v354 = vadd.f32 %v309, %v349
  %v355 = vadd.f32 %v310, %v352
  %v356 = vld [vmem:[%s2 + $0x8] sm:$0x1]
  %v357 = vperm.slane %v356, 0
  %359 = vrot.lane.b32.xlu0 %v357, 6
  %v360 = vpop.permute.xlu0 %359
  %v362 = vmul.f32 %v14, %v360
  %s363 = scalar_lea.vmem %s1, 128
  %v364 = vld [vmem:[%s363] sm:$0xff]
  %v365 = vld [vmem:[%s363 + $0x8] sm:$0xff]
  %367 = vrot.lane.b32.xlu0 %v362, 122
  %v368 = vpop.permute.xlu0 %367
  %v371 = vsel %vm34, %v364, 0
  %v374 = vsel %vm34, %v365, 0
  %376 = vmatpush.msra.mxu0 0.0
  %377 = vmatpush.msra.mxu0 0.0
  %378 = vmatpush.msra.mxu0 0.0
  %379 = vmatpush.msra.mxu0 0.0
  %380 = vmatpush.msra.mxu0 0.0
  %381 = vmatpush.msra.mxu0 0.0
  %382 = vmatpush.msra.mxu0 0.0
  %383 = vmatpush.msra.mxu0 0.0
  %384 = vmatpush.msra.mxu0 0.0
  %385 = vmatpush.msra.mxu0 0.0
  %386 = vmatpush.msra.mxu0 0.0
  %387 = vmatpush.msra.mxu0 0.0
  %388 = vmatpush.msra.mxu0 0.0
  %389 = vmatpush.msra.mxu0 0.0
  %390 = vmatpush.msra.mxu0 0.0
  %391 = vmatpush.msra.mxu0 %v368
  %392 = vmatmul.f32.gmra.mxu0 %v371
  %v393 = vpop.f32.mrf.mxu0
  %v394 = vadd.f32 0.0, %v393
  %395 = vmatmul.f32.gmra.mxu0 %v374
  %v396 = vpop.f32.mrf.mxu0
  %v397 = vadd.f32 0.0, %v396
  %398 = vdwg.mxu0
  %v399 = vadd.f32 %v354, %v394
  %v400 = vadd.f32 %v355, %v397
  %401 = vst.msk [vmem:[%s3] sm:$0xff] %vm34, %v399
  %402 = vst.msk [vmem:[%s3 + $0x8] sm:$0xff] %vm34, %v400
  // Predicated region
  $region14: #{_lambda_.54} parent=0 // pred_check
    _
  $region15: #{_lambda_.54} parent=0 // pred_check_branch
    %404 = sbr.rel (0) target = $region17
  $region16: #{_lambda_.54} parent=0 // pred_region
    _
  $region17: #{_lambda_.54} parent=0 // pred_fallthru
    _
  // Predicated region
  $region18: #{_lambda_.54} parent=0 // pred_check
    _
  $region19: #{_lambda_.54} parent=0 // pred_check_branch
    %406 = sbr.rel (0) target = $region21
  $region20: #{_lambda_.54} parent=0 // pred_region
    _
  $region21: #{_lambda_.54} parent=0 // pred_fallthru
    _

// kernel: _lambda_.58
$region0: #{_lambda_.58}
  #allocation0 [shape = 'u32[]', space=smem, size = 0x4, offset = 0x4, fixed_abs, tag = 'smem constant byte address 0x4 - core index']
  #allocation1 [shape = 'u32[72,128]{1,0:T(1,128)}', space=vmem, size = 0x9000, scoped, tag = 'internal scratch']
  %s0 = inlined_call_operand.vmem [shape: f32[8,14], index: 0, kind: input, shape index: {}]
  %s1 = inlined_call_operand.vmem [shape: f32[8,9], index: 1, kind: input, shape index: {}]
  %s2 = inlined_call_operand.vmem [shape: f32[9,8], index: 2, kind: input, shape index: {}]
  %s3 = inlined_call_operand.vmem [shape: f32[8,1], index: 3, kind: input, shape index: {}]
  %s4 = inlined_call_operand.vmem [shape: f32[8,1], index: 4, kind: input, shape index: {}]
  %s5 = inlined_call_operand.vmem [shape: f32[8,1], index: 5, kind: input, shape index: {}]
  %s6 = inlined_call_operand.vmem [shape: f32[8,8], index: 6, kind: output, shape index: {}]
  %s7 = sld [smem:[#allocation0]]
  $region34: #{_lambda_.58} parent=0
    _
  %s9 = ssub.s32 1, %s7
  %s10 = scalar_select 0, %s9, %s7
  // Predicated region
  $region2: #{_lambda_.58} parent=0 // pred_check
    _
  $region3: #{_lambda_.58} parent=0 // pred_check_branch
    %12 = sbr.rel (0) target = $region5
  $region4: #{_lambda_.58} parent=0 // pred_region
    _
  $region5: #{_lambda_.58} parent=0 // pred_fallthru
    _
  // Predicated region
  $region6: #{_lambda_.58} parent=0 // pred_check
    _
  $region7: #{_lambda_.58} parent=0 // pred_check_branch
    %14 = sbr.rel (0) target = $region9
  $region8: #{_lambda_.58} parent=0 // pred_region
    _
  $region9: #{_lambda_.58} parent=0 // pred_fallthru
    _
  // Predicated region
  $region10: #{_lambda_.58} parent=0 // pred_check
    _
  $region11: #{_lambda_.58} parent=0 // pred_check_branch
    %16 = sbr.rel (0) target = $region13
  $region12: #{_lambda_.58} parent=0 // pred_region
    _
  $region13: #{_lambda_.58} parent=0 // pred_fallthru
    _
  // Predicated region
  $region14: #{_lambda_.58} parent=0 // pred_check
    _
  $region15: #{_lambda_.58} parent=0 // pred_check_branch
    %18 = sbr.rel (0) target = $region17
  $region16: #{_lambda_.58} parent=0 // pred_region
    _
  $region17: #{_lambda_.58} parent=0 // pred_fallthru
    _
  // Predicated region
  $region18: #{_lambda_.58} parent=0 // pred_check
    _
  $region19: #{_lambda_.58} parent=0 // pred_check_branch
    %20 = sbr.rel (0) target = $region21
  $region20: #{_lambda_.58} parent=0 // pred_region
    _
  $region21: #{_lambda_.58} parent=0 // pred_fallthru
    _
  // Predicated region
  $region22: #{_lambda_.58} parent=0 // pred_check
    _
  $region23: #{_lambda_.58} parent=0 // pred_check_branch
    %22 = sbr.rel (0) target = $region25
  $region24: #{_lambda_.58} parent=0 // pred_region
    _
  $region25: #{_lambda_.58} parent=0 // pred_fallthru
    _
  %v23 = vld [vmem:[%s0] sm:$0xff]
  %v24 = vld [vmem:[%s2] sm:$0x1]
  %v25 = vperm.slane %v24, 0
  %v26 = vmul.f32 %v23, %v25
  %v27 = vld [vmem:[%s1] sm:$0xff]
  %29 = vset.pattern.permute.xlu0 0
  %30 = vperm.xlu0 %29, %v27
  %v31 = vpop.permute.xlu0 %30
  %v33 = vmul.f32 %v26, %v31
  %v34 = vadd.f32 %v33, 0.0
  %v35 = vld [vmem:[%s2 + $0x1] sm:$0x1]
  %v36 = vperm.slane %v35, 0
  %38 = vrot.lane.b32.xlu0 %v36, 1
  %v39 = vpop.permute.xlu0 %38
  %v41 = vmul.f32 %v23, %v39
  %42 = vset.pattern.permute.xlu0 1
  %43 = vperm.xlu0 %42, %v27
  %v44 = vpop.permute.xlu0 %43
  %v46 = vmul.f32 %v41, %v44
  %48 = vrot.lane.b32.xlu0 %v46, 127
  %v49 = vpop.permute.xlu0 %48
  %v51 = vadd.f32 %v34, %v49
  %v52 = vld [vmem:[%s2 + $0x2] sm:$0x1]
  %v53 = vperm.slane %v52, 0
  %55 = vrot.lane.b32.xlu0 %v53, 2
  %v56 = vpop.permute.xlu0 %55
  %v58 = vmul.f32 %v23, %v56
  %59 = vset.pattern.permute.xlu0 2
  %60 = vperm.xlu0 %59, %v27
  %v61 = vpop.permute.xlu0 %60
  %v63 = vmul.f32 %v58, %v61
  %65 = vrot.lane.b32.xlu0 %v63, 126
  %v66 = vpop.permute.xlu0 %65
  %v68 = vadd.f32 %v51, %v66
  %v69 = vld [vmem:[%s2 + $0x3] sm:$0x1]
  %v70 = vperm.slane %v69, 0
  %72 = vrot.lane.b32.xlu0 %v70, 2
  %v73 = vpop.permute.xlu0 %72
  %v75 = vmul.f32 %v23, %v73
  %76 = vset.pattern.permute.xlu0 3
  %77 = vperm.xlu0 %76, %v27
  %v78 = vpop.permute.xlu0 %77
  %v80 = vmul.f32 %v75, %v78
  %82 = vrot.lane.b32.xlu0 %v80, 126
  %v83 = vpop.permute.xlu0 %82
  %v85 = vadd.f32 %v68, %v83
  %86 = vset.pattern.permute.xlu0 4
  %87 = vperm.xlu0 %86, %v27
  %v88 = vpop.permute.xlu0 %87
  %v90 = vmul.f32 %v23, %v88
  %92 = vrot.lane.b32.xlu0 %v90, 125
  %v93 = vpop.permute.xlu0 %92
  %v95 = vadd.f32 %v85, %v93
  %v96 = vld [vmem:[%s2 + $0x5] sm:$0x1]
  %v97 = vperm.slane %v96, 0
  %99 = vrot.lane.b32.xlu0 %v97, 4
  %v100 = vpop.permute.xlu0 %99
  %v102 = vmul.f32 %v23, %v100
  %103 = vset.pattern.permute.xlu0 5
  %104 = vperm.xlu0 %103, %v27
  %v105 = vpop.permute.xlu0 %104
  %v107 = vmul.f32 %v102, %v105
  %109 = vrot.lane.b32.xlu0 %v107, 124
  %v110 = vpop.permute.xlu0 %109
  %v112 = vadd.f32 %v95, %v110
  %v113 = vld [vmem:[%s2 + $0x6] sm:$0x1]
  %v114 = vperm.slane %v113, 0
  %116 = vrot.lane.b32.xlu0 %v114, 4
  %v117 = vpop.permute.xlu0 %116
  %v119 = vmul.f32 %v23, %v117
  %120 = vset.pattern.permute.xlu0 6
  %121 = vperm.xlu0 %120, %v27
  %v122 = vpop.permute.xlu0 %121
  %v124 = vmul.f32 %v119, %v122
  %126 = vrot.lane.b32.xlu0 %v124, 124
  %v127 = vpop.permute.xlu0 %126
  %v129 = vadd.f32 %v112, %v127
  %v130 = vld [vmem:[%s2 + $0x7] sm:$0x1]
  %v131 = vperm.slane %v130, 0
  %133 = vrot.lane.b32.xlu0 %v131, 5
  %v134 = vpop.permute.xlu0 %133
  %v136 = vmul.f32 %v23, %v134
  %137 = vset.pattern.permute.xlu0 7
  %138 = vperm.xlu0 %137, %v27
  %v139 = vpop.permute.xlu0 %138
  %v141 = vmul.f32 %v136, %v139
  %143 = vrot.lane.b32.xlu0 %v141, 123
  %v144 = vpop.permute.xlu0 %143
  %v146 = vadd.f32 %v129, %v144
  %v147 = vld [vmem:[%s2 + $0x8] sm:$0x1]
  %v148 = vperm.slane %v147, 0
  %150 = vrot.lane.b32.xlu0 %v148, 6
  %v151 = vpop.permute.xlu0 %150
  %v153 = vmul.f32 %v23, %v151
  %154 = vset.pattern.permute.xlu0 8
  %155 = vperm.xlu0 %154, %v27
  %v156 = vpop.permute.xlu0 %155
  %v158 = vmul.f32 %v153, %v156
  %160 = vrot.lane.b32.xlu0 %v158, 122
  %v161 = vpop.permute.xlu0 %160
  %v163 = vadd.f32 %v146, %v161
  %vm164 = vcmask 64512
  %v165 = vsel %vm164, %v163, 0.0
  %166 = vadd.xlane.f32.xlu0 %v165
  %v167 = vpop.xlane.xlu0 %166
  %v168 = vmul.f32 %v167, 0.125
  %v169 = vsub.f32 %v163, %v168
  %v170 = vmul.f32 %v169, %v169
  %v171 = vsel %vm164, %v170, 0.0
  %172 = vadd.xlane.f32.xlu0 %v171
  %v173 = vpop.xlane.xlu0 %172
  %v174 = vmul.f32 %v173, 0.125
  %v175 = vadd.f32 %v174, 1e-05
  %v176 = vrsqrt.pop %v175
  %v177 = vmul.f32 %v176, %v175
  %v178 = vmul.f32 %v177, %v176
  %v179 = vmul.f32 0.5, %v178
  %v180 = vsub.f32 1.5, %v179
  %v181 = vmul.f32 %v176, %v180
  %vm182 = vweird.f32 %v175
  %vm183 = vweird.f32 %v176
  %vm184 = vmor %vm182, %vm183
  %v185 = vsel %vm184, %v176, %v181
  %v186 = vmul.f32 %v169, %v185
  %v187 = vld [vmem:[%s3] sm:$0xff]
  %189 = vset.pattern.permute.xlu0 0
  %190 = vperm.xlu0 %189, %v187
  %v191 = vpop.permute.xlu0 %190
  %v193 = vmul.f32 %v186, %v191
  %v194 = vld [vmem:[%s4] sm:$0xff]
  %196 = vset.pattern.permute.xlu0 0
  %197 = vperm.xlu0 %196, %v194
  %v198 = vpop.permute.xlu0 %197
  %v200 = vadd.f32 %v193, %v198
  %vm201 = vcmp.ge.f32.partialorder %v200, 0.0
  %v202 = vld [vmem:[%s5] sm:$0xff]
  %204 = vset.pattern.permute.xlu0 0
  %205 = vperm.xlu0 %204, %v202
  %v206 = vpop.permute.xlu0 %205
  %v208 = vmul.f32 %v206, %v200
  %v209 = vsel %vm201, %v200, %v208
  %210 = vst.msk [vmem:[%s6] sm:$0xff] %vm164, %v209
  // Predicated region
  $region26: #{_lambda_.58} parent=0 // pred_check
    _
  $region27: #{_lambda_.58} parent=0 // pred_check_branch
    %212 = sbr.rel (0) target = $region29
  $region28: #{_lambda_.58} parent=0 // pred_region
    _
  $region29: #{_lambda_.58} parent=0 // pred_fallthru
    _
  // Predicated region
  $region30: #{_lambda_.58} parent=0 // pred_check
    _
  $region31: #{_lambda_.58} parent=0 // pred_check_branch
    %214 = sbr.rel (0) target = $region33
  $region32: #{_lambda_.58} parent=0 // pred_region
    _
  $region33: #{_lambda_.58} parent=0 // pred_fallthru
    _

// kernel: _lambda_.61
$region0: #{_lambda_.61}
  #allocation0 [shape = 'u32[]', space=smem, size = 0x4, offset = 0x4, fixed_abs, tag = 'smem constant byte address 0x4 - core index']
  #allocation1 [shape = 'u32[72,128]{1,0:T(1,128)}', space=vmem, size = 0x9000, scoped, tag = 'internal scratch']
  %s0 = inlined_call_operand.vmem [shape: f32[8,6], index: 0, kind: input, shape index: {}]
  %s1 = inlined_call_operand.vmem [shape: f32[1,16,8], index: 1, kind: input, shape index: {}]
  %s2 = inlined_call_operand.vmem [shape: f32[16,2], index: 2, kind: output, shape index: {}]
  %s3 = sld [smem:[#allocation0]]
  $region18: #{_lambda_.61} parent=0
    _
  %s5 = ssub.s32 1, %s3
  %s6 = scalar_select 0, %s5, %s3
  // Predicated region
  $region2: #{_lambda_.61} parent=0 // pred_check
    _
  $region3: #{_lambda_.61} parent=0 // pred_check_branch
    %8 = sbr.rel (0) target = $region5
  $region4: #{_lambda_.61} parent=0 // pred_region
    _
  $region5: #{_lambda_.61} parent=0 // pred_fallthru
    _
  // Predicated region
  $region6: #{_lambda_.61} parent=0 // pred_check
    _
  $region7: #{_lambda_.61} parent=0 // pred_check_branch
    %10 = sbr.rel (0) target = $region9
  $region8: #{_lambda_.61} parent=0 // pred_region
    _
  $region9: #{_lambda_.61} parent=0 // pred_fallthru
    _
  %v11 = vld [vmem:[%s0] sm:$0xff]
  %v12 = vld [vmem:[%s1] sm:$0xff]
  %v13 = vld [vmem:[%s1 + $0x8] sm:$0xff]
  %15 = vrot.lane.b32.xlu0 %v11, 126
  %v16 = vpop.permute.xlu0 %15
  %vm18 = vcmask 64512
  %v20 = vsel %vm18, %v12, 0
  %v23 = vsel %vm18, %v13, 0
  %25 = vmatpush.msra.mxu0 0.0
  %26 = vmatpush.msra.mxu0 0.0
  %27 = vmatpush.msra.mxu0 0.0
  %28 = vmatpush.msra.mxu0 0.0
  %29 = vmatpush.msra.mxu0 0.0
  %30 = vmatpush.msra.mxu0 0.0
  %31 = vmatpush.msra.mxu0 0.0
  %32 = vmatpush.msra.mxu0 0.0
  %33 = vmatpush.msra.mxu0 0.0
  %34 = vmatpush.msra.mxu0 0.0
  %35 = vmatpush.msra.mxu0 0.0
  %36 = vmatpush.msra.mxu0 0.0
  %37 = vmatpush.msra.mxu0 0.0
  %38 = vmatpush.msra.mxu0 0.0
  %39 = vmatpush.msra.mxu0 0.0
  %40 = vmatpush.msra.mxu0 %v16
  %41 = vmatmul.f32.gmra.mxu0 %v20
  %v42 = vpop.f32.mrf.mxu0
  %v43 = vadd.f32 0.0, %v42
  %44 = vmatmul.f32.gmra.mxu0 %v23
  %v45 = vpop.f32.mrf.mxu0
  %v46 = vadd.f32 0.0, %v45
  %47 = vdwg.mxu0
  %vm48 = vcmask 15360
  %49 = vst.msk [vmem:[%s2] sm:$0xff] %vm48, %v43
  %50 = vst.msk [vmem:[%s2 + $0x8] sm:$0xff] %vm48, %v46
  // Predicated region
  $region10: #{_lambda_.61} parent=0 // pred_check
    _
  $region11: #{_lambda_.61} parent=0 // pred_check_branch
    %52 = sbr.rel (0) target = $region13
  $region12: #{_lambda_.61} parent=0 // pred_region
    _
  $region13: #{_lambda_.61} parent=0 // pred_fallthru
    _
  // Predicated region
  $region14: #{_lambda_.61} parent=0 // pred_check
    _
  $region15: #{_lambda_.61} parent=0 // pred_check_branch
    %54 = sbr.rel (0) target = $region17
  $region16: #{_lambda_.61} parent=0 // pred_region
    _
  $region17: #{_lambda_.61} parent=0 // pred_fallthru
    _

// kernel: _lambda_.63
$region0: #{_lambda_.63}
  #allocation0 [shape = 'u32[]', space=smem, size = 0x4, offset = 0x4, fixed_abs, tag = 'smem constant byte address 0x4 - core index']
  #allocation1 [shape = 'u32[72,128]{1,0:T(1,128)}', space=vmem, size = 0x9000, scoped, tag = 'internal scratch']
  %s0 = inlined_call_operand.vmem [shape: f32[8,6], index: 0, kind: input, shape index: {}]
  %s1 = inlined_call_operand.vmem [shape: f32[1,8,8], index: 1, kind: input, shape index: {}]
  %s2 = inlined_call_operand.vmem [shape: f32[8,2], index: 2, kind: input, shape index: {}]
  %s3 = inlined_call_operand.vmem [shape: f32[8,1], index: 3, kind: input, shape index: {}]
  %s4 = inlined_call_operand.vmem [shape: f32[8,1], index: 4, kind: input, shape index: {}]
  %s5 = inlined_call_operand.vmem [shape: f32[8,1], index: 5, kind: input, shape index: {}]
  %s6 = inlined_call_operand.vmem [shape: f32[8,2], index: 6, kind: output, shape index: {}]
  %s7 = sld [smem:[#allocation0]]
  $region34: #{_lambda_.63} parent=0
    _
  %s9 = ssub.s32 1, %s7
  %s10 = scalar_select 0, %s9, %s7
  // Predicated region
  $region2: #{_lambda_.63} parent=0 // pred_check
    _
  $region3: #{_lambda_.63} parent=0 // pred_check_branch
    %12 = sbr.rel (0) target = $region5
  $region4: #{_lambda_.63} parent=0 // pred_region
    _
  $region5: #{_lambda_.63} parent=0 // pred_fallthru
    _
  // Predicated region
  $region6: #{_lambda_.63} parent=0 // pred_check
    _
  $region7: #{_lambda_.63} parent=0 // pred_check_branch
    %14 = sbr.rel (0) target = $region9
  $region8: #{_lambda_.63} parent=0 // pred_region
    _
  $region9: #{_lambda_.63} parent=0 // pred_fallthru
    _
  // Predicated region
  $region10: #{_lambda_.63} parent=0 // pred_check
    _
  $region11: #{_lambda_.63} parent=0 // pred_check_branch
    %16 = sbr.rel (0) target = $region13
  $region12: #{_lambda_.63} parent=0 // pred_region
    _
  $region13: #{_lambda_.63} parent=0 // pred_fallthru
    _
  // Predicated region
  $region14: #{_lambda_.63} parent=0 // pred_check
    _
  $region15: #{_lambda_.63} parent=0 // pred_check_branch
    %18 = sbr.rel (0) target = $region17
  $region16: #{_lambda_.63} parent=0 // pred_region
    _
  $region17: #{_lambda_.63} parent=0 // pred_fallthru
    _
  // Predicated region
  $region18: #{_lambda_.63} parent=0 // pred_check
    _
  $region19: #{_lambda_.63} parent=0 // pred_check_branch
    %20 = sbr.rel (0) target = $region21
  $region20: #{_lambda_.63} parent=0 // pred_region
    _
  $region21: #{_lambda_.63} parent=0 // pred_fallthru
    _
  // Predicated region
  $region22: #{_lambda_.63} parent=0 // pred_check
    _
  $region23: #{_lambda_.63} parent=0 // pred_check_branch
    %22 = sbr.rel (0) target = $region25
  $region24: #{_lambda_.63} parent=0 // pred_region
    _
  $region25: #{_lambda_.63} parent=0 // pred_fallthru
    _
  %v23 = vld [vmem:[%s0] sm:$0xff]
  %v24 = vld [vmem:[%s1] sm:$0xff]
  %v25 = vld [vmem:[%s2] sm:$0xff]
  %27 = vrot.lane.b32.xlu0 %v23, 126
  %v28 = vpop.permute.xlu0 %27
  %vm30 = vcmask 64512
  %v32 = vsel %vm30, %v24, 0
  %34 = vmatpush.msra.mxu0 0.0
  %35 = vmatpush.msra.mxu0 0.0
  %36 = vmatpush.msra.mxu0 0.0
  %37 = vmatpush.msra.mxu0 0.0
  %38 = vmatpush.msra.mxu0 0.0
  %39 = vmatpush.msra.mxu0 0.0
  %40 = vmatpush.msra.mxu0 0.0
  %41 = vmatpush.msra.mxu0 0.0
  %42 = vmatpush.msra.mxu0 0.0
  %43 = vmatpush.msra.mxu0 0.0
  %44 = vmatpush.msra.mxu0 0.0
  %45 = vmatpush.msra.mxu0 0.0
  %46 = vmatpush.msra.mxu0 0.0
  %47 = vmatpush.msra.mxu0 0.0
  %48 = vmatpush.msra.mxu0 0.0
  %49 = vmatpush.msra.mxu0 %v28
  %50 = vmatmul.f32.gmra.mxu0 %v32
  %v51 = vpop.f32.mrf.mxu0
  %v52 = vadd.f32 %v25, %v51
  %53 = vdwg.mxu0
  %vm54 = vcmask 15360
  %v55 = vsel %vm54, %v52, 0.0
  %56 = vadd.xlane.f32.xlu0 %v55
  %v57 = vpop.xlane.xlu0 %56
  %v58 = vmul.f32 %v57, 0.5
  %v59 = vsub.f32 %v52, %v58
  %v60 = vmul.f32 %v59, %v59
  %v61 = vsel %vm54, %v60, 0.0
  %62 = vadd.xlane.f32.xlu0 %v61
  %v63 = vpop.xlane.xlu0 %62
  %v64 = vmul.f32 %v63, 0.5
  %v65 = vadd.f32 %v64, 1e-05
  %v66 = vrsqrt.pop %v65
  %v67 = vmul.f32 %v66, %v65
  %v68 = vmul.f32 %v67, %v66
  %v69 = vmul.f32 0.5, %v68
  %v70 = vsub.f32 1.5, %v69
  %v71 = vmul.f32 %v66, %v70
  %vm72 = vweird.f32 %v65
  %vm73 = vweird.f32 %v66
  %vm74 = vmor %vm72, %vm73
  %v75 = vsel %vm74, %v66, %v71
  %v76 = vmul.f32 %v59, %v75
  %v77 = vld [vmem:[%s3] sm:$0xff]
  %79 = vset.pattern.permute.xlu0 0
  %80 = vperm.xlu0 %79, %v77
  %v81 = vpop.permute.xlu0 %80
  %v83 = vmul.f32 %v76, %v81
  %v84 = vld [vmem:[%s4] sm:$0xff]
  %86 = vset.pattern.permute.xlu0 0
  %87 = vperm.xlu0 %86, %v84
  %v88 = vpop.permute.xlu0 %87
  %v90 = vadd.f32 %v83, %v88
  %vm91 = vcmp.ge.f32.partialorder %v90, 0.0
  %v92 = vld [vmem:[%s5] sm:$0xff]
  %94 = vset.pattern.permute.xlu0 0
  %95 = vperm.xlu0 %94, %v92
  %v96 = vpop.permute.xlu0 %95
  %v98 = vmul.f32 %v96, %v90
  %v99 = vsel %vm91, %v90, %v98
  %100 = vst.msk [vmem:[%s6] sm:$0xff] %vm54, %v99
  // Predicated region
  $region26: #{_lambda_.63} parent=0 // pred_check
    _
  $region27: #{_lambda_.63} parent=0 // pred_check_branch
    %102 = sbr.rel (0) target = $region29
  $region28: #{_lambda_.63} parent=0 // pred_region
    _
  $region29: #{_lambda_.63} parent=0 // pred_fallthru
    _
  // Predicated region
  $region30: #{_lambda_.63} parent=0 // pred_check
    _
  $region31: #{_lambda_.63} parent=0 // pred_check_branch
    %104 = sbr.rel (0) target = $region33
  $region32: #{_lambda_.63} parent=0 // pred_region
    _
  $region33: #{_lambda_.63} parent=0 // pred_fallthru
    _

// kernel: _lambda_.65
$region0: #{_lambda_.65}
  #allocation0 [shape = 'u32[]', space=smem, size = 0x4, offset = 0x4, fixed_abs, tag = 'smem constant byte address 0x4 - core index']
  #allocation1 [shape = 'u32[72,128]{1,0:T(1,128)}', space=vmem, size = 0x9000, scoped, tag = 'internal scratch']
  %s0 = inlined_call_operand.vmem [shape: f32[8,6], index: 0, kind: input, shape index: {}]
  %s1 = inlined_call_operand.vmem [shape: f32[8,1], index: 1, kind: input, shape index: {}]
  %s2 = inlined_call_operand.vmem [shape: f32[8,1], index: 2, kind: input, shape index: {}]
  %s3 = inlined_call_operand.vmem [shape: f32[8,1], index: 3, kind: input, shape index: {}]
  %s4 = inlined_call_operand.vmem [shape: f32[8,1], index: 4, kind: input, shape index: {}]
  %s5 = inlined_call_operand.vmem [shape: f32[8,2], index: 5, kind: output, shape index: {}]
  %s6 = sld [smem:[#allocation0]]
  $region30: #{_lambda_.65} parent=0
    _
  %s8 = ssub.s32 1, %s6
  %s9 = scalar_select 0, %s8, %s6
  // Predicated region
  $region2: #{_lambda_.65} parent=0 // pred_check
    _
  $region3: #{_lambda_.65} parent=0 // pred_check_branch
    %11 = sbr.rel (0) target = $region5
  $region4: #{_lambda_.65} parent=0 // pred_region
    _
  $region5: #{_lambda_.65} parent=0 // pred_fallthru
    _
  // Predicated region
  $region6: #{_lambda_.65} parent=0 // pred_check
    _
  $region7: #{_lambda_.65} parent=0 // pred_check_branch
    %13 = sbr.rel (0) target = $region9
  $region8: #{_lambda_.65} parent=0 // pred_region
    _
  $region9: #{_lambda_.65} parent=0 // pred_fallthru
    _
  // Predicated region
  $region10: #{_lambda_.65} parent=0 // pred_check
    _
  $region11: #{_lambda_.65} parent=0 // pred_check_branch
    %15 = sbr.rel (0) target = $region13
  $region12: #{_lambda_.65} parent=0 // pred_region
    _
  $region13: #{_lambda_.65} parent=0 // pred_fallthru
    _
  // Predicated region
  $region14: #{_lambda_.65} parent=0 // pred_check
    _
  $region15: #{_lambda_.65} parent=0 // pred_check_branch
    %17 = sbr.rel (0) target = $region17
  $region16: #{_lambda_.65} parent=0 // pred_region
    _
  $region17: #{_lambda_.65} parent=0 // pred_fallthru
    _
  // Predicated region
  $region18: #{_lambda_.65} parent=0 // pred_check
    _
  $region19: #{_lambda_.65} parent=0 // pred_check_branch
    %19 = sbr.rel (0) target = $region21
  $region20: #{_lambda_.65} parent=0 // pred_region
    _
  $region21: #{_lambda_.65} parent=0 // pred_fallthru
    _
  %v20 = vld [vmem:[%s0] sm:$0xff]
  %v21 = vld [vmem:[%s1] sm:$0xff]
  %23 = vset.pattern.permute.xlu0 0
  %24 = vperm.xlu0 %23, %v21
  %v25 = vpop.permute.xlu0 %24
  %v27 = vmul.f32 %v20, %v25
  %v28 = vadd.f32 %v27, 0.0
  %30 = vrot.lane.b32.xlu0 %v28, 126
  %v31 = vpop.permute.xlu0 %30
  %vm33 = vcmask 15360
  %v34 = vsel %vm33, %v31, 0.0
  %35 = vadd.xlane.f32.xlu0 %v34
  %v36 = vpop.xlane.xlu0 %35
  %v37 = vmul.f32 %v36, 0.5
  %v38 = vsub.f32 %v28, %v37
  %v39 = vmul.f32 %v38, %v38
  %41 = vrot.lane.b32.xlu0 %v39, 126
  %v42 = vpop.permute.xlu0 %41
  %v44 = vsel %vm33, %v42, 0.0
  %45 = vadd.xlane.f32.xlu0 %v44
  %v46 = vpop.xlane.xlu0 %45
  %v47 = vmul.f32 %v46, 0.5
  %v48 = vadd.f32 %v47, 1e-05
  %v49 = vrsqrt.pop %v48
  %v50 = vmul.f32 %v49, %v48
  %v51 = vmul.f32 %v50, %v49
  %v52 = vmul.f32 0.5, %v51
  %v53 = vsub.f32 1.5, %v52
  %v54 = vmul.f32 %v49, %v53
  %vm55 = vweird.f32 %v48
  %vm56 = vweird.f32 %v49
  %vm57 = vmor %vm55, %vm56
  %v58 = vsel %vm57, %v49, %v54
  %v59 = vmul.f32 %v38, %v58
  %v60 = vld [vmem:[%s2] sm:$0xff]
  %62 = vset.pattern.permute.xlu0 0
  %63 = vperm.xlu0 %62, %v60
  %v64 = vpop.permute.xlu0 %63
  %v66 = vmul.f32 %v59, %v64
  %v67 = vld [vmem:[%s3] sm:$0xff]
  %69 = vset.pattern.permute.xlu0 0
  %70 = vperm.xlu0 %69, %v67
  %v71 = vpop.permute.xlu0 %70
  %v73 = vadd.f32 %v66, %v71
  %vm74 = vcmp.ge.f32.partialorder %v73, 0.0
  %v75 = vld [vmem:[%s4] sm:$0xff]
  %77 = vset.pattern.permute.xlu0 0
  %78 = vperm.xlu0 %77, %v75
  %v79 = vpop.permute.xlu0 %78
  %v81 = vmul.f32 %v79, %v73
  %v82 = vsel %vm74, %v73, %v81
  %84 = vrot.lane.b32.xlu0 %v82, 126
  %v85 = vpop.permute.xlu0 %84
  %87 = vst.msk [vmem:[%s5] sm:$0xff] %vm33, %v85
  // Predicated region
  $region22: #{_lambda_.65} parent=0 // pred_check
    _
  $region23: #{_lambda_.65} parent=0 // pred_check_branch
    %89 = sbr.rel (0) target = $region25
  $region24: #{_lambda_.65} parent=0 // pred_region
    _
  $region25: #{_lambda_.65} parent=0 // pred_fallthru
    _
  // Predicated region
  $region26: #{_lambda_.65} parent=0 // pred_check
    _
  $region27: #{_lambda_.65} parent=0 // pred_check_branch
    %91 = sbr.rel (0) target = $region29
  $region28: #{_lambda_.65} parent=0 // pred_region
    _
  $region29: #{_lambda_.65} parent=0 // pred_fallthru
    _

// kernel: _lambda_.55
$region0: #{_lambda_.55}
  #allocation0 [shape = 'u32[]', space=smem, size = 0x4, offset = 0x4, fixed_abs, tag = 'smem constant byte address 0x4 - core index']
  #allocation1 [shape = 'u32[72,128]{1,0:T(1,128)}', space=vmem, size = 0x9000, scoped, tag = 'internal scratch']
  %s0 = inlined_call_operand.vmem [shape: f32[8,42], index: 0, kind: input, shape index: {}]
  %s1 = inlined_call_operand.vmem [shape: f32[9,8,8], index: 1, kind: input, shape index: {}]
  %s2 = inlined_call_operand.vmem [shape: f32[9,32], index: 2, kind: input, shape index: {}]
  %s3 = inlined_call_operand.vmem [shape: f32[8,32], index: 3, kind: input, shape index: {}]
  %s4 = inlined_call_operand.vmem [shape: f32[8,1], index: 4, kind: input, shape index: {}]
  %s5 = inlined_call_operand.vmem [shape: f32[8,1], index: 5, kind: input, shape index: {}]
  %s6 = inlined_call_operand.vmem [shape: f32[8,1], index: 6, kind: input, shape index: {}]
  %s7 = inlined_call_operand.vmem [shape: f32[8,32], index: 7, kind: output, shape index: {}]
  %s8 = sld [smem:[#allocation0]]
  $region38: #{_lambda_.55} parent=0
    _
  %s10 = ssub.s32 1, %s8
  %s11 = scalar_select 0, %s10, %s8
  // Predicated region
  $region2: #{_lambda_.55} parent=0 // pred_check
    _
  $region3: #{_lambda_.55} parent=0 // pred_check_branch
    %13 = sbr.rel (0) target = $region5
  $region4: #{_lambda_.55} parent=0 // pred_region
    _
  $region5: #{_lambda_.55} parent=0 // pred_fallthru
    _
  // Predicated region
  $region6: #{_lambda_.55} parent=0 // pred_check
    _
  $region7: #{_lambda_.55} parent=0 // pred_check_branch
    %15 = sbr.rel (0) target = $region9
  $region8: #{_lambda_.55} parent=0 // pred_region
    _
  $region9: #{_lambda_.55} parent=0 // pred_fallthru
    _
  // Predicated region
  $region10: #{_lambda_.55} parent=0 // pred_check
    _
  $region11: #{_lambda_.55} parent=0 // pred_check_branch
    %17 = sbr.rel (0) target = $region13
  $region12: #{_lambda_.55} parent=0 // pred_region
    _
  $region13: #{_lambda_.55} parent=0 // pred_fallthru
    _
  // Predicated region
  $region14: #{_lambda_.55} parent=0 // pred_check
    _
  $region15: #{_lambda_.55} parent=0 // pred_check_branch
    %19 = sbr.rel (0) target = $region17
  $region16: #{_lambda_.55} parent=0 // pred_region
    _
  $region17: #{_lambda_.55} parent=0 // pred_fallthru
    _
  // Predicated region
  $region18: #{_lambda_.55} parent=0 // pred_check
    _
  $region19: #{_lambda_.55} parent=0 // pred_check_branch
    %21 = sbr.rel (0) target = $region21
  $region20: #{_lambda_.55} parent=0 // pred_region
    _
  $region21: #{_lambda_.55} parent=0 // pred_fallthru
    _
  // Predicated region
  $region22: #{_lambda_.55} parent=0 // pred_check
    _
  $region23: #{_lambda_.55} parent=0 // pred_check_branch
    %23 = sbr.rel (0) target = $region25
  $region24: #{_lambda_.55} parent=0 // pred_region
    _
  $region25: #{_lambda_.55} parent=0 // pred_fallthru
    _
  // Predicated region
  $region26: #{_lambda_.55} parent=0 // pred_check
    _
  $region27: #{_lambda_.55} parent=0 // pred_check_branch
    %25 = sbr.rel (0) target = $region29
  $region28: #{_lambda_.55} parent=0 // pred_region
    _
  $region29: #{_lambda_.55} parent=0 // pred_fallthru
    _
  %v26 = vld [vmem:[%s0] sm:$0xff]
  %v27 = vld [vmem:[%s2] sm:$0x1]
  %v28 = vperm.slane %v27, 0
  %v29 = vmul.f32 %v26, %v28
  %v30 = vld [vmem:[%s1] sm:$0xff]
  %v31 = vld [vmem:[%s2 + $0x1] sm:$0x1]
  %v32 = vperm.slane %v31, 0
  %34 = vrot.lane.b32.xlu0 %v32, 1
  %v35 = vpop.permute.xlu0 %34
  %v37 = vmul.f32 %v26, %v35
  %s38 = scalar_lea.vmem %s1, 8
  %v39 = vld [vmem:[%s38] sm:$0xff]
  %41 = vrot.lane.b32.xlu0 %v37, 127
  %v42 = vpop.permute.xlu0 %41
  %vm44 = vcmask 64512
  %v46 = vsel %vm44, %v39, 0
  %48 = vmatpush.msra.mxu0 0.0
  %49 = vmatpush.msra.mxu0 0.0
  %50 = vmatpush.msra.mxu0 0.0
  %51 = vmatpush.msra.mxu0 0.0
  %52 = vmatpush.msra.mxu0 0.0
  %53 = vmatpush.msra.mxu0 0.0
  %54 = vmatpush.msra.mxu0 0.0
  %55 = vmatpush.msra.mxu0 0.0
  %56 = vmatpush.msra.mxu0 0.0
  %57 = vmatpush.msra.mxu0 0.0
  %58 = vmatpush.msra.mxu0 0.0
  %59 = vmatpush.msra.mxu0 0.0
  %60 = vmatpush.msra.mxu0 0.0
  %61 = vmatpush.msra.mxu0 0.0
  %62 = vmatpush.msra.mxu0 0.0
  %63 = vmatpush.msra.mxu0 %v42
  %64 = vmatmul.f32.gmra.mxu0 %v46
  %v65 = vpop.f32.mrf.mxu0
  %v66 = vadd.f32 0.0, %v65
  %67 = vdwg.mxu0
  %v69 = vsel %vm44, %v30, 0
  %71 = vmatpush.msra.mxu0 0.0
  %72 = vmatpush.msra.mxu0 0.0
  %73 = vmatpush.msra.mxu0 0.0
  %74 = vmatpush.msra.mxu0 0.0
  %75 = vmatpush.msra.mxu0 0.0
  %76 = vmatpush.msra.mxu0 0.0
  %77 = vmatpush.msra.mxu0 0.0
  %78 = vmatpush.msra.mxu0 0.0
  %79 = vmatpush.msra.mxu0 0.0
  %80 = vmatpush.msra.mxu0 0.0
  %81 = vmatpush.msra.mxu0 0.0
  %82 = vmatpush.msra.mxu0 0.0
  %83 = vmatpush.msra.mxu0 0.0
  %84 = vmatpush.msra.mxu0 0.0
  %85 = vmatpush.msra.mxu0 0.0
  %86 = vmatpush.msra.mxu0 %v29
  %87 = vmatmul.f32.gmra.mxu0 %v69
  %v88 = vpop.f32.mrf.mxu0
  %v89 = vadd.f32 %v66, %v88
  %90 = vdwg.mxu0
  %v91 = vld [vmem:[%s2 + $0x2] sm:$0x1]
  %v92 = vperm.slane %v91, 0
  %94 = vrot.lane.b32.xlu0 %v92, 2
  %v95 = vpop.permute.xlu0 %94
  %v97 = vmul.f32 %v26, %v95
  %s98 = scalar_lea.vmem %s1, 16
  %v99 = vld [vmem:[%s98] sm:$0xff]
  %101 = vrot.lane.b32.xlu0 %v97, 126
  %v102 = vpop.permute.xlu0 %101
  %v105 = vsel %vm44, %v99, 0
  %107 = vmatpush.msra.mxu0 0.0
  %108 = vmatpush.msra.mxu0 0.0
  %109 = vmatpush.msra.mxu0 0.0
  %110 = vmatpush.msra.mxu0 0.0
  %111 = vmatpush.msra.mxu0 0.0
  %112 = vmatpush.msra.mxu0 0.0
  %113 = vmatpush.msra.mxu0 0.0
  %114 = vmatpush.msra.mxu0 0.0
  %115 = vmatpush.msra.mxu0 0.0
  %116 = vmatpush.msra.mxu0 0.0
  %117 = vmatpush.msra.mxu0 0.0
  %118 = vmatpush.msra.mxu0 0.0
  %119 = vmatpush.msra.mxu0 0.0
  %120 = vmatpush.msra.mxu0 0.0
  %121 = vmatpush.msra.mxu0 0.0
  %122 = vmatpush.msra.mxu0 %v102
  %123 = vmatmul.f32.gmra.mxu0 %v105
  %v124 = vpop.f32.mrf.mxu0
  %v125 = vadd.f32 0.0, %v124
  %126 = vdwg.mxu0
  %v127 = vadd.f32 %v89, %v125
  %v128 = vld [vmem:[%s2 + $0x3] sm:$0x1]
  %v129 = vperm.slane %v128, 0
  %131 = vrot.lane.b32.xlu0 %v129, 4
  %v132 = vpop.permute.xlu0 %131
  %v134 = vmul.f32 %v26, %v132
  %s135 = scalar_lea.vmem %s1, 24
  %v136 = vld [vmem:[%s135] sm:$0xff]
  %138 = vrot.lane.b32.xlu0 %v134, 124
  %v139 = vpop.permute.xlu0 %138
  %v142 = vsel %vm44, %v136, 0
  %144 = vmatpush.msra.mxu0 0.0
  %145 = vmatpush.msra.mxu0 0.0
  %146 = vmatpush.msra.mxu0 0.0
  %147 = vmatpush.msra.mxu0 0.0
  %148 = vmatpush.msra.mxu0 0.0
  %149 = vmatpush.msra.mxu0 0.0
  %150 = vmatpush.msra.mxu0 0.0
  %151 = vmatpush.msra.mxu0 0.0
  %152 = vmatpush.msra.mxu0 0.0
  %153 = vmatpush.msra.mxu0 0.0
  %154 = vmatpush.msra.mxu0 0.0
  %155 = vmatpush.msra.mxu0 0.0
  %156 = vmatpush.msra.mxu0 0.0
  %157 = vmatpush.msra.mxu0 0.0
  %158 = vmatpush.msra.mxu0 0.0
  %159 = vmatpush.msra.mxu0 %v139
  %160 = vmatmul.f32.gmra.mxu0 %v142
  %v161 = vpop.f32.mrf.mxu0
  %v162 = vadd.f32 0.0, %v161
  %163 = vdwg.mxu0
  %v164 = vadd.f32 %v127, %v162
  %s165 = scalar_lea.vmem %s1, 32
  %v166 = vld [vmem:[%s165] sm:$0xff]
  %168 = vrot.lane.b32.xlu0 %v26, 123
  %v169 = vpop.permute.xlu0 %168
  %v172 = vsel %vm44, %v166, 0
  %174 = vmatpush.msra.mxu0 0.0
  %175 = vmatpush.msra.mxu0 0.0
  %176 = vmatpush.msra.mxu0 0.0
  %177 = vmatpush.msra.mxu0 0.0
  %178 = vmatpush.msra.mxu0 0.0
  %179 = vmatpush.msra.mxu0 0.0
  %180 = vmatpush.msra.mxu0 0.0
  %181 = vmatpush.msra.mxu0 0.0
  %182 = vmatpush.msra.mxu0 0.0
  %183 = vmatpush.msra.mxu0 0.0
  %184 = vmatpush.msra.mxu0 0.0
  %185 = vmatpush.msra.mxu0 0.0
  %186 = vmatpush.msra.mxu0 0.0
  %187 = vmatpush.msra.mxu0 0.0
  %188 = vmatpush.msra.mxu0 0.0
  %189 = vmatpush.msra.mxu0 %v169
  %190 = vmatmul.f32.gmra.mxu0 %v172
  %v191 = vpop.f32.mrf.mxu0
  %v192 = vadd.f32 0.0, %v191
  %193 = vdwg.mxu0
  %v194 = vadd.f32 %v164, %v192
  %v195 = vld [vmem:[%s2 + $0x5] sm:$0x1]
  %v196 = vperm.slane %v195, 0
  %198 = vrot.lane.b32.xlu0 %v196, 6
  %v199 = vpop.permute.xlu0 %198
  %v201 = vmul.f32 %v26, %v199
  %s202 = scalar_lea.vmem %s1, 40
  %v203 = vld [vmem:[%s202] sm:$0xff]
  %205 = vrot.lane.b32.xlu0 %v201, 122
  %v206 = vpop.permute.xlu0 %205
  %v209 = vsel %vm44, %v203, 0
  %211 = vmatpush.msra.mxu0 0.0
  %212 = vmatpush.msra.mxu0 0.0
  %213 = vmatpush.msra.mxu0 0.0
  %214 = vmatpush.msra.mxu0 0.0
  %215 = vmatpush.msra.mxu0 0.0
  %216 = vmatpush.msra.mxu0 0.0
  %217 = vmatpush.msra.mxu0 0.0
  %218 = vmatpush.msra.mxu0 0.0
  %219 = vmatpush.msra.mxu0 0.0
  %220 = vmatpush.msra.mxu0 0.0
  %221 = vmatpush.msra.mxu0 0.0
  %222 = vmatpush.msra.mxu0 0.0
  %223 = vmatpush.msra.mxu0 0.0
  %224 = vmatpush.msra.mxu0 0.0
  %225 = vmatpush.msra.mxu0 0.0
  %226 = vmatpush.msra.mxu0 %v206
  %227 = vmatmul.f32.gmra.mxu0 %v209
  %v228 = vpop.f32.mrf.mxu0
  %v229 = vadd.f32 0.0, %v228
  %230 = vdwg.mxu0
  %v231 = vadd.f32 %v194, %v229
  %v232 = vld [vmem:[%s2 + $0x6] sm:$0x1]
  %v233 = vperm.slane %v232, 0
  %235 = vrot.lane.b32.xlu0 %v233, 8
  %v236 = vpop.permute.xlu0 %235
  %v238 = vmul.f32 %v26, %v236
  %s239 = scalar_lea.vmem %s1, 48
  %v240 = vld [vmem:[%s239] sm:$0xff]
  %242 = vrot.lane.b32.xlu0 %v238, 120
  %v243 = vpop.permute.xlu0 %242
  %v246 = vsel %vm44, %v240, 0
  %248 = vmatpush.msra.mxu0 0.0
  %249 = vmatpush.msra.mxu0 0.0
  %250 = vmatpush.msra.mxu0 0.0
  %251 = vmatpush.msra.mxu0 0.0
  %252 = vmatpush.msra.mxu0 0.0
  %253 = vmatpush.msra.mxu0 0.0
  %254 = vmatpush.msra.mxu0 0.0
  %255 = vmatpush.msra.mxu0 0.0
  %256 = vmatpush.msra.mxu0 0.0
  %257 = vmatpush.msra.mxu0 0.0
  %258 = vmatpush.msra.mxu0 0.0
  %259 = vmatpush.msra.mxu0 0.0
  %260 = vmatpush.msra.mxu0 0.0
  %261 = vmatpush.msra.mxu0 0.0
  %262 = vmatpush.msra.mxu0 0.0
  %263 = vmatpush.msra.mxu0 %v243
  %264 = vmatmul.f32.gmra.mxu0 %v246
  %v265 = vpop.f32.mrf.mxu0
  %v266 = vadd.f32 0.0, %v265
  %267 = vdwg.mxu0
  %v268 = vadd.f32 %v231, %v266
  %v269 = vld [vmem:[%s2 + $0x7] sm:$0x1]
  %v270 = vperm.slane %v269, 0
  %272 = vrot.lane.b32.xlu0 %v270, 9
  %v273 = vpop.permute.xlu0 %272
  %v275 = vmul.f32 %v26, %v273
  %s276 = scalar_lea.vmem %s1, 56
  %v277 = vld [vmem:[%s276] sm:$0xff]
  %279 = vrot.lane.b32.xlu0 %v275, 119
  %v280 = vpop.permute.xlu0 %279
  %v283 = vsel %vm44, %v277, 0
  %285 = vmatpush.msra.mxu0 0.0
  %286 = vmatpush.msra.mxu0 0.0
  %287 = vmatpush.msra.mxu0 0.0
  %288 = vmatpush.msra.mxu0 0.0
  %289 = vmatpush.msra.mxu0 0.0
  %290 = vmatpush.msra.mxu0 0.0
  %291 = vmatpush.msra.mxu0 0.0
  %292 = vmatpush.msra.mxu0 0.0
  %293 = vmatpush.msra.mxu0 0.0
  %294 = vmatpush.msra.mxu0 0.0
  %295 = vmatpush.msra.mxu0 0.0
  %296 = vmatpush.msra.mxu0 0.0
  %297 = vmatpush.msra.mxu0 0.0
  %298 = vmatpush.msra.mxu0 0.0
  %299 = vmatpush.msra.mxu0 0.0
  %300 = vmatpush.msra.mxu0 %v280
  %301 = vmatmul.f32.gmra.mxu0 %v283
  %v302 = vpop.f32.mrf.mxu0
  %v303 = vadd.f32 0.0, %v302
  %304 = vdwg.mxu0
  %v305 = vadd.f32 %v268, %v303
  %v306 = vld [vmem:[%s2 + $0x8] sm:$0x1]
  %v307 = vperm.slane %v306, 0
  %309 = vrot.lane.b32.xlu0 %v307, 10
  %v310 = vpop.permute.xlu0 %309
  %v312 = vmul.f32 %v26, %v310
  %s313 = scalar_lea.vmem %s1, 64
  %v314 = vld [vmem:[%s313] sm:$0xff]
  %316 = vrot.lane.b32.xlu0 %v312, 118
  %v317 = vpop.permute.xlu0 %316
  %v320 = vsel %vm44, %v314, 0
  %322 = vmatpush.msra.mxu0 0.0
  %323 = vmatpush.msra.mxu0 0.0
  %324 = vmatpush.msra.mxu0 0.0
  %325 = vmatpush.msra.mxu0 0.0
  %326 = vmatpush.msra.mxu0 0.0
  %327 = vmatpush.msra.mxu0 0.0
  %328 = vmatpush.msra.mxu0 0.0
  %329 = vmatpush.msra.mxu0 0.0
  %330 = vmatpush.msra.mxu0 0.0
  %331 = vmatpush.msra.mxu0 0.0
  %332 = vmatpush.msra.mxu0 0.0
  %333 = vmatpush.msra.mxu0 0.0
  %334 = vmatpush.msra.mxu0 0.0
  %335 = vmatpush.msra.mxu0 0.0
  %336 = vmatpush.msra.mxu0 0.0
  %337 = vmatpush.msra.mxu0 %v317
  %338 = vmatmul.f32.gmra.mxu0 %v320
  %v339 = vpop.f32.mrf.mxu0
  %v340 = vadd.f32 0.0, %v339
  %341 = vdwg.mxu0
  %v342 = vadd.f32 %v305, %v340
  %v343 = vld [vmem:[%s3] sm:$0xff]
  %v344 = vadd.f32 %v342, %v343
  %vm345 = vcmask 261120
  %v346 = vsel %vm345, %v344, 0.0
  %347 = vadd.xlane.f32.xlu0 %v346
  %v348 = vpop.xlane.xlu0 %347
  %v349 = vmul.f32 %v348, 0.03125
  %v350 = vsub.f32 %v344, %v349
  %v351 = vmul.f32 %v350, %v350
  %v352 = vsel %vm345, %v351, 0.0
  %353 = vadd.xlane.f32.xlu0 %v352
  %v354 = vpop.xlane.xlu0 %353
  %v355 = vmul.f32 %v354, 0.03125
  %v356 = vadd.f32 %v355, 1e-05
  %v357 = vrsqrt.pop %v356
  %v358 = vmul.f32 %v357, %v356
  %v359 = vmul.f32 %v358, %v357
  %v360 = vmul.f32 0.5, %v359
  %v361 = vsub.f32 1.5, %v360
  %v362 = vmul.f32 %v357, %v361
  %vm363 = vweird.f32 %v356
  %vm364 = vweird.f32 %v357
  %vm365 = vmor %vm363, %vm364
  %v366 = vsel %vm365, %v357, %v362
  %v367 = vmul.f32 %v350, %v366
  %v368 = vld [vmem:[%s4] sm:$0xff]
  %370 = vset.pattern.permute.xlu0 0
  %371 = vperm.xlu0 %370, %v368
  %v372 = vpop.permute.xlu0 %371
  %v374 = vmul.f32 %v367, %v372
  %v375 = vld [vmem:[%s5] sm:$0xff]
  %377 = vset.pattern.permute.xlu0 0
  %378 = vperm.xlu0 %377, %v375
  %v379 = vpop.permute.xlu0 %378
  %v381 = vadd.f32 %v374, %v379
  %vm382 = vcmp.ge.f32.partialorder %v381, 0.0
  %v383 = vld [vmem:[%s6] sm:$0xff]
  %385 = vset.pattern.permute.xlu0 0
  %386 = vperm.xlu0 %385, %v383
  %v387 = vpop.permute.xlu0 %386
  %v389 = vmul.f32 %v387, %v381
  %v390 = vsel %vm382, %v381, %v389
  %391 = vst.msk [vmem:[%s7] sm:$0xff] %vm345, %v390
  // Predicated region
  $region30: #{_lambda_.55} parent=0 // pred_check
    _
  $region31: #{_lambda_.55} parent=0 // pred_check_branch
    %393 = sbr.rel (0) target = $region33
  $region32: #{_lambda_.55} parent=0 // pred_region
    _
  $region33: #{_lambda_.55} parent=0 // pred_fallthru
    _
  // Predicated region
  $region34: #{_lambda_.55} parent=0 // pred_check
    _
  $region35: #{_lambda_.55} parent=0 // pred_check_branch
    %395 = sbr.rel (0) target = $region37
  $region36: #{_lambda_.55} parent=0 // pred_region
    _
  $region37: #{_lambda_.55} parent=0 // pred_fallthru
    _

</llo_original>
